<compile_context>
chip_gen: v7x
topology: tpu7x:2x2x1
jax: 0.10.0
libtpu: 0.0.40
codegen_flags: <defaults>
</compile_context>

<pallas_src>
import jax
import jax.numpy as jnp
import numpy as np
from jax import lax
from jax.experimental import pallas as pl
from jax.experimental.pallas import tpu as pltpu

_TB = 8  # images per grid step; VMEM stays ~7 MiB incl. double-buffered input on all gens


def _conv3x3(load_slab, w_ref, b_ref, z_ref, h, w):
    """3x3 'same' conv + bias + ReLU over a flattened zero-padded (h+2)x(w+2) plane.

    load_slab(off, m) returns rows [off, off+m) of the flat plane, shape (m, Cin), where
    row r*(w+2)+c holds padded pixel (r, c).  Output row o = y*(w+2)+x of z_ref
    (shape (h*(w+2), Cout)); columns x >= w are junk and never read downstream.
    """
    s = w + 2
    m = h * s
    cout = w_ref.shape[-1]
    acc = jnp.zeros((m, cout), jnp.float32)
    for t in range(9):
        kh, kw = divmod(t, 3)
        slab = load_slab(kh * s + kw, m).astype(jnp.bfloat16)   # (m, Cin) MXU operand
        acc = acc + jnp.dot(slab, w_ref[t], preferred_element_type=jnp.float32)
    z_ref[...] = jnp.maximum(acc + b_ref[...], 0.0)


def _pool2x2(z_ref, h, w, store):
    """2x2 / stride-2 max pool over the valid (h, w) region of a flat conv output
    (row stride w+2).  store(hp, wh, pooled_row) writes the (wh, Cout) pooled row."""
    s = w + 2
    wh = w // 2
    for hp in range(h // 2):
        r0 = (2 * hp) * s
        r1 = r0 + s
        p = jnp.maximum(
            jnp.maximum(z_ref[pl.ds(r0, wh, 2), :], z_ref[pl.ds(r0 + 1, wh, 2), :]),
            jnp.maximum(z_ref[pl.ds(r1, wh, 2), :], z_ref[pl.ds(r1 + 1, wh, 2), :]))
        store(hp, wh, p)


def _cnn2d_kernel(x_ref, w1_ref, b1_ref, w2_ref, b2_ref, w3_ref, b3_ref,
                  fw1_ref, fb1_ref, fw2_ref, fb2_ref, o_ref,
                  z1, xp2, z2, xp3, z3, flat):
    tb = x_ref.shape[0]

    # Zero the small inter-layer padded planes once per grid step (amortized over tb
    # images).  Their interiors are fully rewritten by every image's pooling, so only
    # the pad borders / slack rows rely on this memset.
    xp2[...] = jnp.zeros_like(xp2)
    xp3[...] = jnp.zeros_like(xp3)

    def per_image(bi, carry):
        # ---- layer 1: conv 131->32 on the wrapper-prepared 18x18 plane, 2x2 pool ----
        _conv3x3(lambda off, m: x_ref[bi, pl.ds(off, m), :], w1_ref, b1_ref, z1, 16, 16)

        def store1(hp, wh, p):
            xp2[pl.ds((hp + 1) * 10 + 1, wh), :] = p      # 8x8x32 interior of xp2
        _pool2x2(z1, 16, 16, store1)

        # ---- layer 2: conv 32->64, pool ----
        _conv3x3(lambda off, m: xp2[pl.ds(off, m), :], w2_ref, b2_ref, z2, 8, 8)

        def store2(hp, wh, p):
            xp3[pl.ds((hp + 1) * 6 + 1, wh), :] = p       # 4x4x64 interior of xp3
        _pool2x2(z2, 8, 8, store2)

        # ---- layer 3: conv 64->128, pool into the flat head input (row p = h*2+w) ----
        _conv3x3(lambda off, m: xp3[pl.ds(off, m), :], w3_ref, b3_ref, z3, 4, 4)

        def store3(hp, wh, p):
            flat[bi, pl.ds(2 * hp, wh), :] = p            # (4, 128) per image
        _pool2x2(z3, 4, 4, store3)
        return carry

    lax.fori_loop(0, tb, per_image, 0)

    # ---- batched MLP head: fc1 (512->32) as 4 matmuls of (tb,128)@(128,32), ReLU ----
    fl = flat[...].astype(jnp.bfloat16)                   # (tb, 4, 128)
    h1 = fb1_ref[...]
    for p in range(4):
        h1 = h1 + jnp.dot(fl[:, p, :], fw1_ref[p], preferred_element_type=jnp.float32)
    h1 = jnp.maximum(h1, 0.0)                             # (tb, 32)
    # fc4 (32->1) as broadcast-multiply + lane reduction, then sigmoid.
    logit = jnp.sum(h1 * fw2_ref[...], axis=-1, keepdims=True) + fb2_ref[...]
    o_ref[...] = 1.0 / (1.0 + jnp.exp(-logit))


@jax.jit
def cnn2d_forward(x_nchw, params):
    b = x_nchw.shape[0]
    tb = min(_TB, b)
    bp = ((b + tb - 1) // tb) * tb

    # Input prep in the wrapper (fused XLA, hidden under the pipelined input DMA):
    # NCHW->NHWC, 1-px zero pad to 18x18, flatten each image to a (324,131) plane, add
    # 4 zero slack rows (tap overreach on junk output columns), pad batch to mult of tb.
    x = jnp.transpose(x_nchw, (0, 2, 3, 1))
    x = jnp.pad(x, ((0, bp - b), (1, 1), (1, 1), (0, 0)))
    x = x.reshape(bp, 18 * 18, 131)
    x = jnp.pad(x, ((0, 0), (0, 4), (0, 0)))                        # (bp, 328, 131)

    w1 = params["w1"].reshape(9, 131, 32).astype(jnp.bfloat16)      # HWIO -> (tap, Cin, Cout)
    w2 = params["w2"].reshape(9, 32, 64).astype(jnp.bfloat16)
    w3 = params["w3"].reshape(9, 64, 128).astype(jnp.bfloat16)
    b1 = params["b1"].reshape(1, 32)
    b2 = params["b2"].reshape(1, 64)
    b3 = params["b3"].reshape(1, 128)
    # torch's x.view(B,-1) flattens (C,H,W); the kernel produces rows indexed by p=h*2+w
    # with channels on lanes, so permute fc1's input axis once here: (512,32)->(4,128,32).
    fw1 = (params["fw1"].reshape(128, 2, 2, 32).transpose(1, 2, 0, 3)
           .reshape(4, 128, 32).astype(jnp.bfloat16))
    fb1 = params["fb1"].reshape(1, 32)
    fw2 = params["fw2"].reshape(1, 32)
    fb2 = params["fb2"].reshape(1, 1)

    def fixed(ndim):
        return lambda i: (0,) * ndim

    out = pl.pallas_call(
        _cnn2d_kernel,
        grid=(bp // tb,),
        in_specs=[
            pl.BlockSpec((tb, 328, 131), lambda i: (i, 0, 0)),
            pl.BlockSpec(w1.shape, fixed(3)),
            pl.BlockSpec(b1.shape, fixed(2)),
            pl.BlockSpec(w2.shape, fixed(3)),
            pl.BlockSpec(b2.shape, fixed(2)),
            pl.BlockSpec(w3.shape, fixed(3)),
            pl.BlockSpec(b3.shape, fixed(2)),
            pl.BlockSpec(fw1.shape, fixed(3)),
            pl.BlockSpec(fb1.shape, fixed(2)),
            pl.BlockSpec(fw2.shape, fixed(2)),
            pl.BlockSpec(fb2.shape, fixed(2)),
        ],
        out_specs=pl.BlockSpec((tb, 1), lambda i: (i, 0)),
        out_shape=jax.ShapeDtypeStruct((bp, 1), jnp.float32),
        scratch_shapes=[
            pltpu.VMEM((288, 32), jnp.float32),     # z1 : conv1 out, row stride 18
            pltpu.VMEM((104, 32), jnp.float32),     # xp2: padded 10x10 plane (+slack)
            pltpu.VMEM((80, 64), jnp.float32),      # z2 : conv2 out, row stride 10
            pltpu.VMEM((40, 64), jnp.float32),      # xp3: padded 6x6 plane (+slack)
            pltpu.VMEM((24, 128), jnp.float32),     # z3 : conv3 out, row stride 6
            pltpu.VMEM((tb, 4, 128), jnp.float32),  # flat pooled L3 per image (p = h*2+w)
        ],
        compiler_params=pltpu.CompilerParams(dimension_semantics=("parallel",)),
    )(x, w1, b1, w2, b2, w3, b3, fw1, fb1, fw2, fb2)
    return out[:b]


# Pure-JAX reference (f32) for a correctness check of the fused kernel.
def cnn2d_reference(x_nchw, p):
    y = x_nchw
    for w, b in [(p["w1"], p["b1"]), (p["w2"], p["b2"]), (p["w3"], p["b3"])]:
        w_oihw = jnp.transpose(w, (3, 2, 0, 1))
        y = jax.lax.conv_general_dilated(
            y, w_oihw, window_strides=(1, 1), padding="SAME",
            dimension_numbers=("NCHW", "OIHW", "NCHW"))
        y = jax.nn.relu(y + b[None, :, None, None])
        y = jax.lax.reduce_window(y, -jnp.inf, jax.lax.max,
                                  (1, 1, 2, 2), (1, 1, 2, 2), "VALID")
    y = y.reshape(y.shape[0], -1)
    y = jax.nn.relu(y @ p["fw1"] + p["fb1"])
    y = jax.nn.sigmoid(y @ p["fw2"].T + p["fb2"])
    return y


def init_params(key):
    def unif(k, shape, fan_in):
        bound = 1.0 / np.sqrt(fan_in)
        return jax.random.uniform(k, shape, jnp.float32, -bound, bound)

    ks = jax.random.split(key, 10)
    return {
        # conv weights in HWIO
        "w1": unif(ks[0], (3, 3, 131, 32), 131 * 9), "b1": unif(ks[1], (32,), 131 * 9),
        "w2": unif(ks[2], (3, 3, 32, 64), 32 * 9),   "b2": unif(ks[3], (64,), 32 * 9),
        "w3": unif(ks[4], (3, 3, 64, 128), 64 * 9),  "b3": unif(ks[5], (128,), 64 * 9),
        # fc1 stored as (in=512, out=32); fc4 stored as torch's (out=1, in=32)
        "fw1": unif(ks[6], (512, 32), 512), "fb1": unif(ks[7], (1, 32), 512),
        "fw2": unif(ks[8], (1, 32), 32),    "fb2": unif(ks[9], (1, 1), 32),
    }


if __name__ == "__main__":
    key = jax.random.PRNGKey(0)
    k_x, k_p = jax.random.split(key)
    # The module forces Cin=131 and 16x16 spatial (fc1 expects 128*2*2 after 3 pools).
    x = jax.random.normal(k_x, (2, 131, 16, 16), jnp.float32)   # NCHW like PyTorch
    params = init_params(k_p)

    out = jax.block_until_ready(cnn2d_forward(x, params))
    assert out.shape == (2, 1)

    ref = cnn2d_reference(x, params)
    # bf16 MXU operands (convs + fc1) with f32 accumulation -> loose-ish tolerance.
    np.testing.assert_allclose(np.asarray(out), np.asarray(ref), rtol=3e-2, atol=3e-2)

    print("KERNEL_OK")
</pallas_src>

<mosaic_0001>
module attributes {stable_mosaic.version = 11 : i64} {
  func.func @_cnn2d_kernel(%arg0: i32, %arg1: memref<2x328x131xf32, #tpu.memory_space<vmem>>, %arg2: memref<9x131x32xbf16, #tpu.memory_space<vmem>>, %arg3: memref<1x32xf32, #tpu.memory_space<vmem>>, %arg4: memref<9x32x64xbf16, #tpu.memory_space<vmem>>, %arg5: memref<1x64xf32, #tpu.memory_space<vmem>>, %arg6: memref<9x64x128xbf16, #tpu.memory_space<vmem>>, %arg7: memref<1x128xf32, #tpu.memory_space<vmem>>, %arg8: memref<4x128x32xbf16, #tpu.memory_space<vmem>>, %arg9: memref<1x32xf32, #tpu.memory_space<vmem>>, %arg10: memref<1x32xf32, #tpu.memory_space<vmem>>, %arg11: memref<1x1xf32, #tpu.memory_space<vmem>>, %arg12: memref<2x1xf32, #tpu.memory_space<vmem>>, %arg13: memref<288x32xf32, #tpu.memory_space<vmem>>, %arg14: memref<104x32xf32, #tpu.memory_space<vmem>>, %arg15: memref<80x64xf32, #tpu.memory_space<vmem>>, %arg16: memref<40x64xf32, #tpu.memory_space<vmem>>, %arg17: memref<24x128xf32, #tpu.memory_space<vmem>>, %arg18: memref<2x4x128xf32, #tpu.memory_space<vmem>>) attributes {dimension_semantics = [#tpu.dimension_semantics<parallel>], iteration_bounds = array<i64: 1>, scalar_prefetch = 0 : i64, scratch_operands = 6 : i64, tpu.core_type = #tpu.core_type<tc>, window_params = [{transform_indices = @transform_0, window_bounds = array<i64: 2, 328, 131>}, {pipeline_mode = #tpu.pipeline_mode<synchronous>, transform_indices = @transform_1, window_bounds = array<i64: 9, 131, 32>}, {pipeline_mode = #tpu.pipeline_mode<synchronous>, transform_indices = @transform_2, window_bounds = array<i64: 1, 32>}, {pipeline_mode = #tpu.pipeline_mode<synchronous>, transform_indices = @transform_3, window_bounds = array<i64: 9, 32, 64>}, {pipeline_mode = #tpu.pipeline_mode<synchronous>, transform_indices = @transform_4, window_bounds = array<i64: 1, 64>}, {pipeline_mode = #tpu.pipeline_mode<synchronous>, transform_indices = @transform_5, window_bounds = array<i64: 9, 64, 128>}, {pipeline_mode = #tpu.pipeline_mode<synchronous>, transform_indices = @transform_6, window_bounds = array<i64: 1, 128>}, {pipeline_mode = #tpu.pipeline_mode<synchronous>, transform_indices = @transform_7, window_bounds = array<i64: 4, 128, 32>}, {pipeline_mode = #tpu.pipeline_mode<synchronous>, transform_indices = @transform_8, window_bounds = array<i64: 1, 32>}, {pipeline_mode = #tpu.pipeline_mode<synchronous>, transform_indices = @transform_9, window_bounds = array<i64: 1, 32>}, {pipeline_mode = #tpu.pipeline_mode<synchronous>, transform_indices = @transform_10, window_bounds = array<i64: 1, 1>}, {transform_indices = @transform_11, window_bounds = array<i64: 2, 1>}]} {
    %cst = arith.constant 0.000000e+00 : f32
    %0 = vector.broadcast %cst : f32 to vector<104x32xf32>
    %c0 = arith.constant 0 : index
    %c0_0 = arith.constant 0 : index
    %1 = vector.load %arg14[%c0, %c0_0] : memref<104x32xf32, #tpu.memory_space<vmem>>, vector<104x32xf32>
    tpu.vector_store %arg14[%c0, %c0_0], %0 {strides = array<i32>} : memref<104x32xf32, #tpu.memory_space<vmem>>, vector<104x32xf32>,
    %cst_1 = arith.constant 0.000000e+00 : f32
    %2 = vector.broadcast %cst_1 : f32 to vector<40x64xf32>
    %c0_2 = arith.constant 0 : index
    %c0_3 = arith.constant 0 : index
    %3 = vector.load %arg16[%c0_2, %c0_3] : memref<40x64xf32, #tpu.memory_space<vmem>>, vector<40x64xf32>
    tpu.vector_store %arg16[%c0_2, %c0_3], %2 {strides = array<i32>} : memref<40x64xf32, #tpu.memory_space<vmem>>, vector<40x64xf32>,
    %c0_i32 = arith.constant 0 : i32
    %c2_i32 = arith.constant 2 : i32
    %4 = arith.addi %c0_i32, %c2_i32 : i32
    %c1_i32 = arith.constant 1 : i32
    scf.for %arg19 = %c0_i32 to %4 step %c1_i32  : i32 {
      %cst_34 = arith.constant 0.000000e+00 : f32
      %51 = vector.broadcast %cst_34 : f32 to vector<288x32xf32>
      %52 = arith.index_cast %arg19 : i32 to index
      %c0_35 = arith.constant 0 : index
      %c0_36 = arith.constant 0 : index
      %53 = vector.load %arg1[%52, %c0_35, %c0_36] : memref<2x328x131xf32, #tpu.memory_space<vmem>>, vector<1x288x131xf32>
      %54 = vector.shape_cast %53 : vector<1x288x131xf32> to vector<288x131xf32>
      %55 = arith.truncf %54 : vector<288x131xf32> to vector<288x131xbf16>
      %c0_37 = arith.constant 0 : index
      %c0_38 = arith.constant 0 : index
      %c0_39 = arith.constant 0 : index
      %56 = vector.load %arg2[%c0_37, %c0_38, %c0_39] : memref<9x131x32xbf16, #tpu.memory_space<vmem>>, vector<1x131x32xbf16>
      %57 = vector.shape_cast %56 : vector<1x131x32xbf16> to vector<131x32xbf16>
      %cst_40 = arith.constant dense<0.000000e+00> : vector<288x32xf32>
      %58 = tpu.matmul %55, %57, %cst_40 {dimension_numbers = #tpu.dot_dimension_numbers<[1], [0], [0], [1], [0, 0, 1, 1], [], []>} : vector<288x131xbf16>, vector<131x32xbf16>, vector<288x32xf32> -> vector<288x32xf32>
      %59 = arith.addf %51, %58 : vector<288x32xf32>
      %60 = arith.index_cast %arg19 : i32 to index
      %c1_41 = arith.constant 1 : index
      %c0_42 = arith.constant 0 : index
      %61 = vector.load %arg1[%60, %c1_41, %c0_42] : memref<2x328x131xf32, #tpu.memory_space<vmem>>, vector<1x288x131xf32>
      %62 = vector.shape_cast %61 : vector<1x288x131xf32> to vector<288x131xf32>
      %63 = arith.truncf %62 : vector<288x131xf32> to vector<288x131xbf16>
      %c1_43 = arith.constant 1 : index
      %c0_44 = arith.constant 0 : index
      %c0_45 = arith.constant 0 : index
      %64 = vector.load %arg2[%c1_43, %c0_44, %c0_45] : memref<9x131x32xbf16, #tpu.memory_space<vmem>>, vector<1x131x32xbf16>
      %65 = vector.shape_cast %64 : vector<1x131x32xbf16> to vector<131x32xbf16>
      %cst_46 = arith.constant dense<0.000000e+00> : vector<288x32xf32>
      %66 = tpu.matmul %63, %65, %cst_46 {dimension_numbers = #tpu.dot_dimension_numbers<[1], [0], [0], [1], [0, 0, 1, 1], [], []>} : vector<288x131xbf16>, vector<131x32xbf16>, vector<288x32xf32> -> vector<288x32xf32>
      %67 = arith.addf %59, %66 : vector<288x32xf32>
      %68 = arith.index_cast %arg19 : i32 to index
      %c2_47 = arith.constant 2 : index
      %c0_48 = arith.constant 0 : index
      %69 = vector.load %arg1[%68, %c2_47, %c0_48] : memref<2x328x131xf32, #tpu.memory_space<vmem>>, vector<1x288x131xf32>
      %70 = vector.shape_cast %69 : vector<1x288x131xf32> to vector<288x131xf32>
      %71 = arith.truncf %70 : vector<288x131xf32> to vector<288x131xbf16>
      %c2_49 = arith.constant 2 : index
      %c0_50 = arith.constant 0 : index
      %c0_51 = arith.constant 0 : index
      %72 = vector.load %arg2[%c2_49, %c0_50, %c0_51] : memref<9x131x32xbf16, #tpu.memory_space<vmem>>, vector<1x131x32xbf16>
      %73 = vector.shape_cast %72 : vector<1x131x32xbf16> to vector<131x32xbf16>
      %cst_52 = arith.constant dense<0.000000e+00> : vector<288x32xf32>
      %74 = tpu.matmul %71, %73, %cst_52 {dimension_numbers = #tpu.dot_dimension_numbers<[1], [0], [0], [1], [0, 0, 1, 1], [], []>} : vector<288x131xbf16>, vector<131x32xbf16>, vector<288x32xf32> -> vector<288x32xf32>
      %75 = arith.addf %67, %74 : vector<288x32xf32>
      %76 = arith.index_cast %arg19 : i32 to index
      %c18 = arith.constant 18 : index
      %c0_53 = arith.constant 0 : index
      %77 = vector.load %arg1[%76, %c18, %c0_53] : memref<2x328x131xf32, #tpu.memory_space<vmem>>, vector<1x288x131xf32>
      %78 = vector.shape_cast %77 : vector<1x288x131xf32> to vector<288x131xf32>
      %79 = arith.truncf %78 : vector<288x131xf32> to vector<288x131xbf16>
      %c3_54 = arith.constant 3 : index
      %c0_55 = arith.constant 0 : index
      %c0_56 = arith.constant 0 : index
      %80 = vector.load %arg2[%c3_54, %c0_55, %c0_56] : memref<9x131x32xbf16, #tpu.memory_space<vmem>>, vector<1x131x32xbf16>
      %81 = vector.shape_cast %80 : vector<1x131x32xbf16> to vector<131x32xbf16>
      %cst_57 = arith.constant dense<0.000000e+00> : vector<288x32xf32>
      %82 = tpu.matmul %79, %81, %cst_57 {dimension_numbers = #tpu.dot_dimension_numbers<[1], [0], [0], [1], [0, 0, 1, 1], [], []>} : vector<288x131xbf16>, vector<131x32xbf16>, vector<288x32xf32> -> vector<288x32xf32>
      %83 = arith.addf %75, %82 : vector<288x32xf32>
      %84 = arith.index_cast %arg19 : i32 to index
      %c19 = arith.constant 19 : index
      %c0_58 = arith.constant 0 : index
      %85 = vector.load %arg1[%84, %c19, %c0_58] : memref<2x328x131xf32, #tpu.memory_space<vmem>>, vector<1x288x131xf32>
      %86 = vector.shape_cast %85 : vector<1x288x131xf32> to vector<288x131xf32>
      %87 = arith.truncf %86 : vector<288x131xf32> to vector<288x131xbf16>
      %c4 = arith.constant 4 : index
      %c0_59 = arith.constant 0 : index
      %c0_60 = arith.constant 0 : index
      %88 = vector.load %arg2[%c4, %c0_59, %c0_60] : memref<9x131x32xbf16, #tpu.memory_space<vmem>>, vector<1x131x32xbf16>
      %89 = vector.shape_cast %88 : vector<1x131x32xbf16> to vector<131x32xbf16>
      %cst_61 = arith.constant dense<0.000000e+00> : vector<288x32xf32>
      %90 = tpu.matmul %87, %89, %cst_61 {dimension_numbers = #tpu.dot_dimension_numbers<[1], [0], [0], [1], [0, 0, 1, 1], [], []>} : vector<288x131xbf16>, vector<131x32xbf16>, vector<288x32xf32> -> vector<288x32xf32>
      %91 = arith.addf %83, %90 : vector<288x32xf32>
      %92 = arith.index_cast %arg19 : i32 to index
      %c20 = arith.constant 20 : index
      %c0_62 = arith.constant 0 : index
      %93 = vector.load %arg1[%92, %c20, %c0_62] : memref<2x328x131xf32, #tpu.memory_space<vmem>>, vector<1x288x131xf32>
      %94 = vector.shape_cast %93 : vector<1x288x131xf32> to vector<288x131xf32>
      %95 = arith.truncf %94 : vector<288x131xf32> to vector<288x131xbf16>
      %c5 = arith.constant 5 : index
      %c0_63 = arith.constant 0 : index
      %c0_64 = arith.constant 0 : index
      %96 = vector.load %arg2[%c5, %c0_63, %c0_64] : memref<9x131x32xbf16, #tpu.memory_space<vmem>>, vector<1x131x32xbf16>
      %97 = vector.shape_cast %96 : vector<1x131x32xbf16> to vector<131x32xbf16>
      %cst_65 = arith.constant dense<0.000000e+00> : vector<288x32xf32>
      %98 = tpu.matmul %95, %97, %cst_65 {dimension_numbers = #tpu.dot_dimension_numbers<[1], [0], [0], [1], [0, 0, 1, 1], [], []>} : vector<288x131xbf16>, vector<131x32xbf16>, vector<288x32xf32> -> vector<288x32xf32>
      %99 = arith.addf %91, %98 : vector<288x32xf32>
      %100 = arith.index_cast %arg19 : i32 to index
      %c36 = arith.constant 36 : index
      %c0_66 = arith.constant 0 : index
      %101 = vector.load %arg1[%100, %c36, %c0_66] : memref<2x328x131xf32, #tpu.memory_space<vmem>>, vector<1x288x131xf32>
      %102 = vector.shape_cast %101 : vector<1x288x131xf32> to vector<288x131xf32>
      %103 = arith.truncf %102 : vector<288x131xf32> to vector<288x131xbf16>
      %c6 = arith.constant 6 : index
      %c0_67 = arith.constant 0 : index
      %c0_68 = arith.constant 0 : index
      %104 = vector.load %arg2[%c6, %c0_67, %c0_68] : memref<9x131x32xbf16, #tpu.memory_space<vmem>>, vector<1x131x32xbf16>
      %105 = vector.shape_cast %104 : vector<1x131x32xbf16> to vector<131x32xbf16>
      %cst_69 = arith.constant dense<0.000000e+00> : vector<288x32xf32>
      %106 = tpu.matmul %103, %105, %cst_69 {dimension_numbers = #tpu.dot_dimension_numbers<[1], [0], [0], [1], [0, 0, 1, 1], [], []>} : vector<288x131xbf16>, vector<131x32xbf16>, vector<288x32xf32> -> vector<288x32xf32>
      %107 = arith.addf %99, %106 : vector<288x32xf32>
      %108 = arith.index_cast %arg19 : i32 to index
      %c37 = arith.constant 37 : index
      %c0_70 = arith.constant 0 : index
      %109 = vector.load %arg1[%108, %c37, %c0_70] : memref<2x328x131xf32, #tpu.memory_space<vmem>>, vector<1x288x131xf32>
      %110 = vector.shape_cast %109 : vector<1x288x131xf32> to vector<288x131xf32>
      %111 = arith.truncf %110 : vector<288x131xf32> to vector<288x131xbf16>
      %c7 = arith.constant 7 : index
      %c0_71 = arith.constant 0 : index
      %c0_72 = arith.constant 0 : index
      %112 = vector.load %arg2[%c7, %c0_71, %c0_72] : memref<9x131x32xbf16, #tpu.memory_space<vmem>>, vector<1x131x32xbf16>
      %113 = vector.shape_cast %112 : vector<1x131x32xbf16> to vector<131x32xbf16>
      %cst_73 = arith.constant dense<0.000000e+00> : vector<288x32xf32>
      %114 = tpu.matmul %111, %113, %cst_73 {dimension_numbers = #tpu.dot_dimension_numbers<[1], [0], [0], [1], [0, 0, 1, 1], [], []>} : vector<288x131xbf16>, vector<131x32xbf16>, vector<288x32xf32> -> vector<288x32xf32>
      %115 = arith.addf %107, %114 : vector<288x32xf32>
      %116 = arith.index_cast %arg19 : i32 to index
      %c38 = arith.constant 38 : index
      %c0_74 = arith.constant 0 : index
      %117 = vector.load %arg1[%116, %c38, %c0_74] : memref<2x328x131xf32, #tpu.memory_space<vmem>>, vector<1x288x131xf32>
      %118 = vector.shape_cast %117 : vector<1x288x131xf32> to vector<288x131xf32>
      %119 = arith.truncf %118 : vector<288x131xf32> to vector<288x131xbf16>
      %c8 = arith.constant 8 : index
      %c0_75 = arith.constant 0 : index
      %c0_76 = arith.constant 0 : index
      %120 = vector.load %arg2[%c8, %c0_75, %c0_76] : memref<9x131x32xbf16, #tpu.memory_space<vmem>>, vector<1x131x32xbf16>
      %121 = vector.shape_cast %120 : vector<1x131x32xbf16> to vector<131x32xbf16>
      %cst_77 = arith.constant dense<0.000000e+00> : vector<288x32xf32>
      %122 = tpu.matmul %119, %121, %cst_77 {dimension_numbers = #tpu.dot_dimension_numbers<[1], [0], [0], [1], [0, 0, 1, 1], [], []>} : vector<288x131xbf16>, vector<131x32xbf16>, vector<288x32xf32> -> vector<288x32xf32>
      %123 = arith.addf %115, %122 : vector<288x32xf32>
      %c0_78 = arith.constant 0 : index
      %c0_79 = arith.constant 0 : index
      %124 = vector.load %arg3[%c0_78, %c0_79] : memref<1x32xf32, #tpu.memory_space<vmem>>, vector<1x32xf32>
      %125 = vector.broadcast %124 : vector<1x32xf32> to vector<288x32xf32>
      %126 = arith.addf %123, %125 : vector<288x32xf32>
      %cst_80 = arith.constant 0.000000e+00 : f32
      %127 = vector.broadcast %cst_80 : f32 to vector<288x32xf32>
      %128 = arith.maximumf %126, %127 : vector<288x32xf32>
      %c0_81 = arith.constant 0 : index
      %c0_82 = arith.constant 0 : index
      %129 = vector.load %arg13[%c0_81, %c0_82] : memref<288x32xf32, #tpu.memory_space<vmem>>, vector<288x32xf32>
      tpu.vector_store %arg13[%c0_81, %c0_82], %128 {strides = array<i32>} : memref<288x32xf32, #tpu.memory_space<vmem>>, vector<288x32xf32>,
      %c0_83 = arith.constant 0 : index
      %c0_84 = arith.constant 0 : index
      %130 = tpu.strided_load %arg13[%c0_83, %c0_84] {strides = array<i32: 2, 1>} : memref<288x32xf32, #tpu.memory_space<vmem>>, vector<8x32xf32>
      %c1_85 = arith.constant 1 : index
      %c0_86 = arith.constant 0 : index
      %131 = tpu.strided_load %arg13[%c1_85, %c0_86] {strides = array<i32: 2, 1>} : memref<288x32xf32, #tpu.memory_space<vmem>>, vector<8x32xf32>
      %132 = arith.maximumf %130, %131 : vector<8x32xf32>
      %c18_87 = arith.constant 18 : index
      %c0_88 = arith.constant 0 : index
      %133 = tpu.strided_load %arg13[%c18_87, %c0_88] {strides = array<i32: 2, 1>} : memref<288x32xf32, #tpu.memory_space<vmem>>, vector<8x32xf32>
      %c19_89 = arith.constant 19 : index
      %c0_90 = arith.constant 0 : index
      %134 = tpu.strided_load %arg13[%c19_89, %c0_90] {strides = array<i32: 2, 1>} : memref<288x32xf32, #tpu.memory_space<vmem>>, vector<8x32xf32>
      %135 = arith.maximumf %133, %134 : vector<8x32xf32>
      %136 = arith.maximumf %132, %135 : vector<8x32xf32>
      %c11 = arith.constant 11 : index
      %c0_91 = arith.constant 0 : index
      %137 = vector.load %arg14[%c11, %c0_91] : memref<104x32xf32, #tpu.memory_space<vmem>>, vector<8x32xf32>
      tpu.vector_store %arg14[%c11, %c0_91], %136 {strides = array<i32>} : memref<104x32xf32, #tpu.memory_space<vmem>>, vector<8x32xf32>,
      %c36_92 = arith.constant 36 : index
      %c0_93 = arith.constant 0 : index
      %138 = tpu.strided_load %arg13[%c36_92, %c0_93] {strides = array<i32: 2, 1>} : memref<288x32xf32, #tpu.memory_space<vmem>>, vector<8x32xf32>
      %c37_94 = arith.constant 37 : index
      %c0_95 = arith.constant 0 : index
      %139 = tpu.strided_load %arg13[%c37_94, %c0_95] {strides = array<i32: 2, 1>} : memref<288x32xf32, #tpu.memory_space<vmem>>, vector<8x32xf32>
      %140 = arith.maximumf %138, %139 : vector<8x32xf32>
      %c54 = arith.constant 54 : index
      %c0_96 = arith.constant 0 : index
      %141 = tpu.strided_load %arg13[%c54, %c0_96] {strides = array<i32: 2, 1>} : memref<288x32xf32, #tpu.memory_space<vmem>>, vector<8x32xf32>
      %c55 = arith.constant 55 : index
      %c0_97 = arith.constant 0 : index
      %142 = tpu.strided_load %arg13[%c55, %c0_97] {strides = array<i32: 2, 1>} : memref<288x32xf32, #tpu.memory_space<vmem>>, vector<8x32xf32>
      %143 = arith.maximumf %141, %142 : vector<8x32xf32>
      %144 = arith.maximumf %140, %143 : vector<8x32xf32>
      %c21 = arith.constant 21 : index
      %c0_98 = arith.constant 0 : index
      %145 = vector.load %arg14[%c21, %c0_98] : memref<104x32xf32, #tpu.memory_space<vmem>>, vector<8x32xf32>
      tpu.vector_store %arg14[%c21, %c0_98], %144 {strides = array<i32>} : memref<104x32xf32, #tpu.memory_space<vmem>>, vector<8x32xf32>,
      %c72 = arith.constant 72 : index
      %c0_99 = arith.constant 0 : index
      %146 = tpu.strided_load %arg13[%c72, %c0_99] {strides = array<i32: 2, 1>} : memref<288x32xf32, #tpu.memory_space<vmem>>, vector<8x32xf32>
      %c73 = arith.constant 73 : index
      %c0_100 = arith.constant 0 : index
      %147 = tpu.strided_load %arg13[%c73, %c0_100] {strides = array<i32: 2, 1>} : memref<288x32xf32, #tpu.memory_space<vmem>>, vector<8x32xf32>
      %148 = arith.maximumf %146, %147 : vector<8x32xf32>
      %c90 = arith.constant 90 : index
      %c0_101 = arith.constant 0 : index
      %149 = tpu.strided_load %arg13[%c90, %c0_101] {strides = array<i32: 2, 1>} : memref<288x32xf32, #tpu.memory_space<vmem>>, vector<8x32xf32>
      %c91 = arith.constant 91 : index
      %c0_102 = arith.constant 0 : index
      %150 = tpu.strided_load %arg13[%c91, %c0_102] {strides = array<i32: 2, 1>} : memref<288x32xf32, #tpu.memory_space<vmem>>, vector<8x32xf32>
      %151 = arith.maximumf %149, %150 : vector<8x32xf32>
      %152 = arith.maximumf %148, %151 : vector<8x32xf32>
      %c31 = arith.constant 31 : index
      %c0_103 = arith.constant 0 : index
      %153 = vector.load %arg14[%c31, %c0_103] : memref<104x32xf32, #tpu.memory_space<vmem>>, vector<8x32xf32>
      tpu.vector_store %arg14[%c31, %c0_103], %152 {strides = array<i32>} : memref<104x32xf32, #tpu.memory_space<vmem>>, vector<8x32xf32>,
      %c108 = arith.constant 108 : index
      %c0_104 = arith.constant 0 : index
      %154 = tpu.strided_load %arg13[%c108, %c0_104] {strides = array<i32: 2, 1>} : memref<288x32xf32, #tpu.memory_space<vmem>>, vector<8x32xf32>
      %c109 = arith.constant 109 : index
      %c0_105 = arith.constant 0 : index
      %155 = tpu.strided_load %arg13[%c109, %c0_105] {strides = array<i32: 2, 1>} : memref<288x32xf32, #tpu.memory_space<vmem>>, vector<8x32xf32>
      %156 = arith.maximumf %154, %155 : vector<8x32xf32>
      %c126 = arith.constant 126 : index
      %c0_106 = arith.constant 0 : index
      %157 = tpu.strided_load %arg13[%c126, %c0_106] {strides = array<i32: 2, 1>} : memref<288x32xf32, #tpu.memory_space<vmem>>, vector<8x32xf32>
      %c127 = arith.constant 127 : index
      %c0_107 = arith.constant 0 : index
      %158 = tpu.strided_load %arg13[%c127, %c0_107] {strides = array<i32: 2, 1>} : memref<288x32xf32, #tpu.memory_space<vmem>>, vector<8x32xf32>
      %159 = arith.maximumf %157, %158 : vector<8x32xf32>
      %160 = arith.maximumf %156, %159 : vector<8x32xf32>
      %c41 = arith.constant 41 : index
      %c0_108 = arith.constant 0 : index
      %161 = vector.load %arg14[%c41, %c0_108] : memref<104x32xf32, #tpu.memory_space<vmem>>, vector<8x32xf32>
      tpu.vector_store %arg14[%c41, %c0_108], %160 {strides = array<i32>} : memref<104x32xf32, #tpu.memory_space<vmem>>, vector<8x32xf32>,
      %c144 = arith.constant 144 : index
      %c0_109 = arith.constant 0 : index
      %162 = tpu.strided_load %arg13[%c144, %c0_109] {strides = array<i32: 2, 1>} : memref<288x32xf32, #tpu.memory_space<vmem>>, vector<8x32xf32>
      %c145 = arith.constant 145 : index
      %c0_110 = arith.constant 0 : index
      %163 = tpu.strided_load %arg13[%c145, %c0_110] {strides = array<i32: 2, 1>} : memref<288x32xf32, #tpu.memory_space<vmem>>, vector<8x32xf32>
      %164 = arith.maximumf %162, %163 : vector<8x32xf32>
      %c162 = arith.constant 162 : index
      %c0_111 = arith.constant 0 : index
      %165 = tpu.strided_load %arg13[%c162, %c0_111] {strides = array<i32: 2, 1>} : memref<288x32xf32, #tpu.memory_space<vmem>>, vector<8x32xf32>
      %c163 = arith.constant 163 : index
      %c0_112 = arith.constant 0 : index
      %166 = tpu.strided_load %arg13[%c163, %c0_112] {strides = array<i32: 2, 1>} : memref<288x32xf32, #tpu.memory_space<vmem>>, vector<8x32xf32>
      %167 = arith.maximumf %165, %166 : vector<8x32xf32>
      %168 = arith.maximumf %164, %167 : vector<8x32xf32>
      %c51 = arith.constant 51 : index
      %c0_113 = arith.constant 0 : index
      %169 = vector.load %arg14[%c51, %c0_113] : memref<104x32xf32, #tpu.memory_space<vmem>>, vector<8x32xf32>
      tpu.vector_store %arg14[%c51, %c0_113], %168 {strides = array<i32>} : memref<104x32xf32, #tpu.memory_space<vmem>>, vector<8x32xf32>,
      %c180 = arith.constant 180 : index
      %c0_114 = arith.constant 0 : index
      %170 = tpu.strided_load %arg13[%c180, %c0_114] {strides = array<i32: 2, 1>} : memref<288x32xf32, #tpu.memory_space<vmem>>, vector<8x32xf32>
      %c181 = arith.constant 181 : index
      %c0_115 = arith.constant 0 : index
      %171 = tpu.strided_load %arg13[%c181, %c0_115] {strides = array<i32: 2, 1>} : memref<288x32xf32, #tpu.memory_space<vmem>>, vector<8x32xf32>
      %172 = arith.maximumf %170, %171 : vector<8x32xf32>
      %c198 = arith.constant 198 : index
      %c0_116 = arith.constant 0 : index
      %173 = tpu.strided_load %arg13[%c198, %c0_116] {strides = array<i32: 2, 1>} : memref<288x32xf32, #tpu.memory_space<vmem>>, vector<8x32xf32>
      %c199 = arith.constant 199 : index
      %c0_117 = arith.constant 0 : index
      %174 = tpu.strided_load %arg13[%c199, %c0_117] {strides = array<i32: 2, 1>} : memref<288x32xf32, #tpu.memory_space<vmem>>, vector<8x32xf32>
      %175 = arith.maximumf %173, %174 : vector<8x32xf32>
      %176 = arith.maximumf %172, %175 : vector<8x32xf32>
      %c61 = arith.constant 61 : index
      %c0_118 = arith.constant 0 : index
      %177 = vector.load %arg14[%c61, %c0_118] : memref<104x32xf32, #tpu.memory_space<vmem>>, vector<8x32xf32>
      tpu.vector_store %arg14[%c61, %c0_118], %176 {strides = array<i32>} : memref<104x32xf32, #tpu.memory_space<vmem>>, vector<8x32xf32>,
      %c216 = arith.constant 216 : index
      %c0_119 = arith.constant 0 : index
      %178 = tpu.strided_load %arg13[%c216, %c0_119] {strides = array<i32: 2, 1>} : memref<288x32xf32, #tpu.memory_space<vmem>>, vector<8x32xf32>
      %c217 = arith.constant 217 : index
      %c0_120 = arith.constant 0 : index
      %179 = tpu.strided_load %arg13[%c217, %c0_120] {strides = array<i32: 2, 1>} : memref<288x32xf32, #tpu.memory_space<vmem>>, vector<8x32xf32>
      %180 = arith.maximumf %178, %179 : vector<8x32xf32>
      %c234 = arith.constant 234 : index
      %c0_121 = arith.constant 0 : index
      %181 = tpu.strided_load %arg13[%c234, %c0_121] {strides = array<i32: 2, 1>} : memref<288x32xf32, #tpu.memory_space<vmem>>, vector<8x32xf32>
      %c235 = arith.constant 235 : index
      %c0_122 = arith.constant 0 : index
      %182 = tpu.strided_load %arg13[%c235, %c0_122] {strides = array<i32: 2, 1>} : memref<288x32xf32, #tpu.memory_space<vmem>>, vector<8x32xf32>
      %183 = arith.maximumf %181, %182 : vector<8x32xf32>
      %184 = arith.maximumf %180, %183 : vector<8x32xf32>
      %c71 = arith.constant 71 : index
      %c0_123 = arith.constant 0 : index
      %185 = vector.load %arg14[%c71, %c0_123] : memref<104x32xf32, #tpu.memory_space<vmem>>, vector<8x32xf32>
      tpu.vector_store %arg14[%c71, %c0_123], %184 {strides = array<i32>} : memref<104x32xf32, #tpu.memory_space<vmem>>, vector<8x32xf32>,
      %c252 = arith.constant 252 : index
      %c0_124 = arith.constant 0 : index
      %186 = tpu.strided_load %arg13[%c252, %c0_124] {strides = array<i32: 2, 1>} : memref<288x32xf32, #tpu.memory_space<vmem>>, vector<8x32xf32>
      %c253 = arith.constant 253 : index
      %c0_125 = arith.constant 0 : index
      %187 = tpu.strided_load %arg13[%c253, %c0_125] {strides = array<i32: 2, 1>} : memref<288x32xf32, #tpu.memory_space<vmem>>, vector<8x32xf32>
      %188 = arith.maximumf %186, %187 : vector<8x32xf32>
      %c270 = arith.constant 270 : index
      %c0_126 = arith.constant 0 : index
      %189 = tpu.strided_load %arg13[%c270, %c0_126] {strides = array<i32: 2, 1>} : memref<288x32xf32, #tpu.memory_space<vmem>>, vector<8x32xf32>
      %c271 = arith.constant 271 : index
      %c0_127 = arith.constant 0 : index
      %190 = tpu.strided_load %arg13[%c271, %c0_127] {strides = array<i32: 2, 1>} : memref<288x32xf32, #tpu.memory_space<vmem>>, vector<8x32xf32>
      %191 = arith.maximumf %189, %190 : vector<8x32xf32>
      %192 = arith.maximumf %188, %191 : vector<8x32xf32>
      %c81 = arith.constant 81 : index
      %c0_128 = arith.constant 0 : index
      %193 = vector.load %arg14[%c81, %c0_128] : memref<104x32xf32, #tpu.memory_space<vmem>>, vector<8x32xf32>
      tpu.vector_store %arg14[%c81, %c0_128], %192 {strides = array<i32>} : memref<104x32xf32, #tpu.memory_space<vmem>>, vector<8x32xf32>,
      %cst_129 = arith.constant 0.000000e+00 : f32
      %194 = vector.broadcast %cst_129 : f32 to vector<80x64xf32>
      %c0_130 = arith.constant 0 : index
      %c0_131 = arith.constant 0 : index
      %195 = vector.load %arg14[%c0_130, %c0_131] : memref<104x32xf32, #tpu.memory_space<vmem>>, vector<80x32xf32>
      %196 = arith.truncf %195 : vector<80x32xf32> to vector<80x32xbf16>
      %c0_132 = arith.constant 0 : index
      %c0_133 = arith.constant 0 : index
      %c0_134 = arith.constant 0 : index
      %197 = vector.load %arg4[%c0_132, %c0_133, %c0_134] : memref<9x32x64xbf16, #tpu.memory_space<vmem>>, vector<1x32x64xbf16>
      %198 = vector.shape_cast %197 : vector<1x32x64xbf16> to vector<32x64xbf16>
      %cst_135 = arith.constant dense<0.000000e+00> : vector<80x64xf32>
      %199 = tpu.matmul %196, %198, %cst_135 {dimension_numbers = #tpu.dot_dimension_numbers<[1], [0], [0], [1], [0, 0, 1, 1], [], []>} : vector<80x32xbf16>, vector<32x64xbf16>, vector<80x64xf32> -> vector<80x64xf32>
      %200 = arith.addf %194, %199 : vector<80x64xf32>
      %c1_136 = arith.constant 1 : index
      %c0_137 = arith.constant 0 : index
      %201 = vector.load %arg14[%c1_136, %c0_137] : memref<104x32xf32, #tpu.memory_space<vmem>>, vector<80x32xf32>
      %202 = arith.truncf %201 : vector<80x32xf32> to vector<80x32xbf16>
      %c1_138 = arith.constant 1 : index
      %c0_139 = arith.constant 0 : index
      %c0_140 = arith.constant 0 : index
      %203 = vector.load %arg4[%c1_138, %c0_139, %c0_140] : memref<9x32x64xbf16, #tpu.memory_space<vmem>>, vector<1x32x64xbf16>
      %204 = vector.shape_cast %203 : vector<1x32x64xbf16> to vector<32x64xbf16>
      %cst_141 = arith.constant dense<0.000000e+00> : vector<80x64xf32>
      %205 = tpu.matmul %202, %204, %cst_141 {dimension_numbers = #tpu.dot_dimension_numbers<[1], [0], [0], [1], [0, 0, 1, 1], [], []>} : vector<80x32xbf16>, vector<32x64xbf16>, vector<80x64xf32> -> vector<80x64xf32>
      %206 = arith.addf %200, %205 : vector<80x64xf32>
      %c2_142 = arith.constant 2 : index
      %c0_143 = arith.constant 0 : index
      %207 = vector.load %arg14[%c2_142, %c0_143] : memref<104x32xf32, #tpu.memory_space<vmem>>, vector<80x32xf32>
      %208 = arith.truncf %207 : vector<80x32xf32> to vector<80x32xbf16>
      %c2_144 = arith.constant 2 : index
      %c0_145 = arith.constant 0 : index
      %c0_146 = arith.constant 0 : index
      %209 = vector.load %arg4[%c2_144, %c0_145, %c0_146] : memref<9x32x64xbf16, #tpu.memory_space<vmem>>, vector<1x32x64xbf16>
      %210 = vector.shape_cast %209 : vector<1x32x64xbf16> to vector<32x64xbf16>
      %cst_147 = arith.constant dense<0.000000e+00> : vector<80x64xf32>
      %211 = tpu.matmul %208, %210, %cst_147 {dimension_numbers = #tpu.dot_dimension_numbers<[1], [0], [0], [1], [0, 0, 1, 1], [], []>} : vector<80x32xbf16>, vector<32x64xbf16>, vector<80x64xf32> -> vector<80x64xf32>
      %212 = arith.addf %206, %211 : vector<80x64xf32>
      %c10 = arith.constant 10 : index
      %c0_148 = arith.constant 0 : index
      %213 = vector.load %arg14[%c10, %c0_148] : memref<104x32xf32, #tpu.memory_space<vmem>>, vector<80x32xf32>
      %214 = arith.truncf %213 : vector<80x32xf32> to vector<80x32xbf16>
      %c3_149 = arith.constant 3 : index
      %c0_150 = arith.constant 0 : index
      %c0_151 = arith.constant 0 : index
      %215 = vector.load %arg4[%c3_149, %c0_150, %c0_151] : memref<9x32x64xbf16, #tpu.memory_space<vmem>>, vector<1x32x64xbf16>
      %216 = vector.shape_cast %215 : vector<1x32x64xbf16> to vector<32x64xbf16>
      %cst_152 = arith.constant dense<0.000000e+00> : vector<80x64xf32>
      %217 = tpu.matmul %214, %216, %cst_152 {dimension_numbers = #tpu.dot_dimension_numbers<[1], [0], [0], [1], [0, 0, 1, 1], [], []>} : vector<80x32xbf16>, vector<32x64xbf16>, vector<80x64xf32> -> vector<80x64xf32>
      %218 = arith.addf %212, %217 : vector<80x64xf32>
      %c11_153 = arith.constant 11 : index
      %c0_154 = arith.constant 0 : index
      %219 = vector.load %arg14[%c11_153, %c0_154] : memref<104x32xf32, #tpu.memory_space<vmem>>, vector<80x32xf32>
      %220 = arith.truncf %219 : vector<80x32xf32> to vector<80x32xbf16>
      %c4_155 = arith.constant 4 : index
      %c0_156 = arith.constant 0 : index
      %c0_157 = arith.constant 0 : index
      %221 = vector.load %arg4[%c4_155, %c0_156, %c0_157] : memref<9x32x64xbf16, #tpu.memory_space<vmem>>, vector<1x32x64xbf16>
      %222 = vector.shape_cast %221 : vector<1x32x64xbf16> to vector<32x64xbf16>
      %cst_158 = arith.constant dense<0.000000e+00> : vector<80x64xf32>
      %223 = tpu.matmul %220, %222, %cst_158 {dimension_numbers = #tpu.dot_dimension_numbers<[1], [0], [0], [1], [0, 0, 1, 1], [], []>} : vector<80x32xbf16>, vector<32x64xbf16>, vector<80x64xf32> -> vector<80x64xf32>
      %224 = arith.addf %218, %223 : vector<80x64xf32>
      %c12 = arith.constant 12 : index
      %c0_159 = arith.constant 0 : index
      %225 = vector.load %arg14[%c12, %c0_159] : memref<104x32xf32, #tpu.memory_space<vmem>>, vector<80x32xf32>
      %226 = arith.truncf %225 : vector<80x32xf32> to vector<80x32xbf16>
      %c5_160 = arith.constant 5 : index
      %c0_161 = arith.constant 0 : index
      %c0_162 = arith.constant 0 : index
      %227 = vector.load %arg4[%c5_160, %c0_161, %c0_162] : memref<9x32x64xbf16, #tpu.memory_space<vmem>>, vector<1x32x64xbf16>
      %228 = vector.shape_cast %227 : vector<1x32x64xbf16> to vector<32x64xbf16>
      %cst_163 = arith.constant dense<0.000000e+00> : vector<80x64xf32>
      %229 = tpu.matmul %226, %228, %cst_163 {dimension_numbers = #tpu.dot_dimension_numbers<[1], [0], [0], [1], [0, 0, 1, 1], [], []>} : vector<80x32xbf16>, vector<32x64xbf16>, vector<80x64xf32> -> vector<80x64xf32>
      %230 = arith.addf %224, %229 : vector<80x64xf32>
      %c20_164 = arith.constant 20 : index
      %c0_165 = arith.constant 0 : index
      %231 = vector.load %arg14[%c20_164, %c0_165] : memref<104x32xf32, #tpu.memory_space<vmem>>, vector<80x32xf32>
      %232 = arith.truncf %231 : vector<80x32xf32> to vector<80x32xbf16>
      %c6_166 = arith.constant 6 : index
      %c0_167 = arith.constant 0 : index
      %c0_168 = arith.constant 0 : index
      %233 = vector.load %arg4[%c6_166, %c0_167, %c0_168] : memref<9x32x64xbf16, #tpu.memory_space<vmem>>, vector<1x32x64xbf16>
      %234 = vector.shape_cast %233 : vector<1x32x64xbf16> to vector<32x64xbf16>
      %cst_169 = arith.constant dense<0.000000e+00> : vector<80x64xf32>
      %235 = tpu.matmul %232, %234, %cst_169 {dimension_numbers = #tpu.dot_dimension_numbers<[1], [0], [0], [1], [0, 0, 1, 1], [], []>} : vector<80x32xbf16>, vector<32x64xbf16>, vector<80x64xf32> -> vector<80x64xf32>
      %236 = arith.addf %230, %235 : vector<80x64xf32>
      %c21_170 = arith.constant 21 : index
      %c0_171 = arith.constant 0 : index
      %237 = vector.load %arg14[%c21_170, %c0_171] : memref<104x32xf32, #tpu.memory_space<vmem>>, vector<80x32xf32>
      %238 = arith.truncf %237 : vector<80x32xf32> to vector<80x32xbf16>
      %c7_172 = arith.constant 7 : index
      %c0_173 = arith.constant 0 : index
      %c0_174 = arith.constant 0 : index
      %239 = vector.load %arg4[%c7_172, %c0_173, %c0_174] : memref<9x32x64xbf16, #tpu.memory_space<vmem>>, vector<1x32x64xbf16>
      %240 = vector.shape_cast %239 : vector<1x32x64xbf16> to vector<32x64xbf16>
      %cst_175 = arith.constant dense<0.000000e+00> : vector<80x64xf32>
      %241 = tpu.matmul %238, %240, %cst_175 {dimension_numbers = #tpu.dot_dimension_numbers<[1], [0], [0], [1], [0, 0, 1, 1], [], []>} : vector<80x32xbf16>, vector<32x64xbf16>, vector<80x64xf32> -> vector<80x64xf32>
      %242 = arith.addf %236, %241 : vector<80x64xf32>
      %c22 = arith.constant 22 : index
      %c0_176 = arith.constant 0 : index
      %243 = vector.load %arg14[%c22, %c0_176] : memref<104x32xf32, #tpu.memory_space<vmem>>, vector<80x32xf32>
      %244 = arith.truncf %243 : vector<80x32xf32> to vector<80x32xbf16>
      %c8_177 = arith.constant 8 : index
      %c0_178 = arith.constant 0 : index
      %c0_179 = arith.constant 0 : index
      %245 = vector.load %arg4[%c8_177, %c0_178, %c0_179] : memref<9x32x64xbf16, #tpu.memory_space<vmem>>, vector<1x32x64xbf16>
      %246 = vector.shape_cast %245 : vector<1x32x64xbf16> to vector<32x64xbf16>
      %cst_180 = arith.constant dense<0.000000e+00> : vector<80x64xf32>
      %247 = tpu.matmul %244, %246, %cst_180 {dimension_numbers = #tpu.dot_dimension_numbers<[1], [0], [0], [1], [0, 0, 1, 1], [], []>} : vector<80x32xbf16>, vector<32x64xbf16>, vector<80x64xf32> -> vector<80x64xf32>
      %248 = arith.addf %242, %247 : vector<80x64xf32>
      %c0_181 = arith.constant 0 : index
      %c0_182 = arith.constant 0 : index
      %249 = vector.load %arg5[%c0_181, %c0_182] : memref<1x64xf32, #tpu.memory_space<vmem>>, vector<1x64xf32>
      %250 = vector.broadcast %249 : vector<1x64xf32> to vector<80x64xf32>
      %251 = arith.addf %248, %250 : vector<80x64xf32>
      %cst_183 = arith.constant 0.000000e+00 : f32
      %252 = vector.broadcast %cst_183 : f32 to vector<80x64xf32>
      %253 = arith.maximumf %251, %252 : vector<80x64xf32>
      %c0_184 = arith.constant 0 : index
      %c0_185 = arith.constant 0 : index
      %254 = vector.load %arg15[%c0_184, %c0_185] : memref<80x64xf32, #tpu.memory_space<vmem>>, vector<80x64xf32>
      tpu.vector_store %arg15[%c0_184, %c0_185], %253 {strides = array<i32>} : memref<80x64xf32, #tpu.memory_space<vmem>>, vector<80x64xf32>,
      %c0_186 = arith.constant 0 : index
      %c0_187 = arith.constant 0 : index
      %255 = tpu.strided_load %arg15[%c0_186, %c0_187] {strides = array<i32: 2, 1>} : memref<80x64xf32, #tpu.memory_space<vmem>>, vector<4x64xf32>
      %c1_188 = arith.constant 1 : index
      %c0_189 = arith.constant 0 : index
      %256 = tpu.strided_load %arg15[%c1_188, %c0_189] {strides = array<i32: 2, 1>} : memref<80x64xf32, #tpu.memory_space<vmem>>, vector<4x64xf32>
      %257 = arith.maximumf %255, %256 : vector<4x64xf32>
      %c10_190 = arith.constant 10 : index
      %c0_191 = arith.constant 0 : index
      %258 = tpu.strided_load %arg15[%c10_190, %c0_191] {strides = array<i32: 2, 1>} : memref<80x64xf32, #tpu.memory_space<vmem>>, vector<4x64xf32>
      %c11_192 = arith.constant 11 : index
      %c0_193 = arith.constant 0 : index
      %259 = tpu.strided_load %arg15[%c11_192, %c0_193] {strides = array<i32: 2, 1>} : memref<80x64xf32, #tpu.memory_space<vmem>>, vector<4x64xf32>
      %260 = arith.maximumf %258, %259 : vector<4x64xf32>
      %261 = arith.maximumf %257, %260 : vector<4x64xf32>
      %c7_194 = arith.constant 7 : index
      %c0_195 = arith.constant 0 : index
      %262 = vector.load %arg16[%c7_194, %c0_195] : memref<40x64xf32, #tpu.memory_space<vmem>>, vector<4x64xf32>
      tpu.vector_store %arg16[%c7_194, %c0_195], %261 {strides = array<i32>} : memref<40x64xf32, #tpu.memory_space<vmem>>, vector<4x64xf32>,
      %c20_196 = arith.constant 20 : index
      %c0_197 = arith.constant 0 : index
      %263 = tpu.strided_load %arg15[%c20_196, %c0_197] {strides = array<i32: 2, 1>} : memref<80x64xf32, #tpu.memory_space<vmem>>, vector<4x64xf32>
      %c21_198 = arith.constant 21 : index
      %c0_199 = arith.constant 0 : index
      %264 = tpu.strided_load %arg15[%c21_198, %c0_199] {strides = array<i32: 2, 1>} : memref<80x64xf32, #tpu.memory_space<vmem>>, vector<4x64xf32>
      %265 = arith.maximumf %263, %264 : vector<4x64xf32>
      %c30 = arith.constant 30 : index
      %c0_200 = arith.constant 0 : index
      %266 = tpu.strided_load %arg15[%c30, %c0_200] {strides = array<i32: 2, 1>} : memref<80x64xf32, #tpu.memory_space<vmem>>, vector<4x64xf32>
      %c31_201 = arith.constant 31 : index
      %c0_202 = arith.constant 0 : index
      %267 = tpu.strided_load %arg15[%c31_201, %c0_202] {strides = array<i32: 2, 1>} : memref<80x64xf32, #tpu.memory_space<vmem>>, vector<4x64xf32>
      %268 = arith.maximumf %266, %267 : vector<4x64xf32>
      %269 = arith.maximumf %265, %268 : vector<4x64xf32>
      %c13 = arith.constant 13 : index
      %c0_203 = arith.constant 0 : index
      %270 = vector.load %arg16[%c13, %c0_203] : memref<40x64xf32, #tpu.memory_space<vmem>>, vector<4x64xf32>
      tpu.vector_store %arg16[%c13, %c0_203], %269 {strides = array<i32>} : memref<40x64xf32, #tpu.memory_space<vmem>>, vector<4x64xf32>,
      %c40 = arith.constant 40 : index
      %c0_204 = arith.constant 0 : index
      %271 = tpu.strided_load %arg15[%c40, %c0_204] {strides = array<i32: 2, 1>} : memref<80x64xf32, #tpu.memory_space<vmem>>, vector<4x64xf32>
      %c41_205 = arith.constant 41 : index
      %c0_206 = arith.constant 0 : index
      %272 = tpu.strided_load %arg15[%c41_205, %c0_206] {strides = array<i32: 2, 1>} : memref<80x64xf32, #tpu.memory_space<vmem>>, vector<4x64xf32>
      %273 = arith.maximumf %271, %272 : vector<4x64xf32>
      %c50 = arith.constant 50 : index
      %c0_207 = arith.constant 0 : index
      %274 = tpu.strided_load %arg15[%c50, %c0_207] {strides = array<i32: 2, 1>} : memref<80x64xf32, #tpu.memory_space<vmem>>, vector<4x64xf32>
      %c51_208 = arith.constant 51 : index
      %c0_209 = arith.constant 0 : index
      %275 = tpu.strided_load %arg15[%c51_208, %c0_209] {strides = array<i32: 2, 1>} : memref<80x64xf32, #tpu.memory_space<vmem>>, vector<4x64xf32>
      %276 = arith.maximumf %274, %275 : vector<4x64xf32>
      %277 = arith.maximumf %273, %276 : vector<4x64xf32>
      %c19_210 = arith.constant 19 : index
      %c0_211 = arith.constant 0 : index
      %278 = vector.load %arg16[%c19_210, %c0_211] : memref<40x64xf32, #tpu.memory_space<vmem>>, vector<4x64xf32>
      tpu.vector_store %arg16[%c19_210, %c0_211], %277 {strides = array<i32>} : memref<40x64xf32, #tpu.memory_space<vmem>>, vector<4x64xf32>,
      %c60 = arith.constant 60 : index
      %c0_212 = arith.constant 0 : index
      %279 = tpu.strided_load %arg15[%c60, %c0_212] {strides = array<i32: 2, 1>} : memref<80x64xf32, #tpu.memory_space<vmem>>, vector<4x64xf32>
      %c61_213 = arith.constant 61 : index
      %c0_214 = arith.constant 0 : index
      %280 = tpu.strided_load %arg15[%c61_213, %c0_214] {strides = array<i32: 2, 1>} : memref<80x64xf32, #tpu.memory_space<vmem>>, vector<4x64xf32>
      %281 = arith.maximumf %279, %280 : vector<4x64xf32>
      %c70 = arith.constant 70 : index
      %c0_215 = arith.constant 0 : index
      %282 = tpu.strided_load %arg15[%c70, %c0_215] {strides = array<i32: 2, 1>} : memref<80x64xf32, #tpu.memory_space<vmem>>, vector<4x64xf32>
      %c71_216 = arith.constant 71 : index
      %c0_217 = arith.constant 0 : index
      %283 = tpu.strided_load %arg15[%c71_216, %c0_217] {strides = array<i32: 2, 1>} : memref<80x64xf32, #tpu.memory_space<vmem>>, vector<4x64xf32>
      %284 = arith.maximumf %282, %283 : vector<4x64xf32>
      %285 = arith.maximumf %281, %284 : vector<4x64xf32>
      %c25 = arith.constant 25 : index
      %c0_218 = arith.constant 0 : index
      %286 = vector.load %arg16[%c25, %c0_218] : memref<40x64xf32, #tpu.memory_space<vmem>>, vector<4x64xf32>
      tpu.vector_store %arg16[%c25, %c0_218], %285 {strides = array<i32>} : memref<40x64xf32, #tpu.memory_space<vmem>>, vector<4x64xf32>,
      %cst_219 = arith.constant 0.000000e+00 : f32
      %287 = vector.broadcast %cst_219 : f32 to vector<24x128xf32>
      %c0_220 = arith.constant 0 : index
      %c0_221 = arith.constant 0 : index
      %288 = vector.load %arg16[%c0_220, %c0_221] : memref<40x64xf32, #tpu.memory_space<vmem>>, vector<24x64xf32>
      %289 = arith.truncf %288 : vector<24x64xf32> to vector<24x64xbf16>
      %c0_222 = arith.constant 0 : index
      %c0_223 = arith.constant 0 : index
      %c0_224 = arith.constant 0 : index
      %290 = vector.load %arg6[%c0_222, %c0_223, %c0_224] : memref<9x64x128xbf16, #tpu.memory_space<vmem>>, vector<1x64x128xbf16>
      %291 = vector.shape_cast %290 : vector<1x64x128xbf16> to vector<64x128xbf16>
      %cst_225 = arith.constant dense<0.000000e+00> : vector<24x128xf32>
      %292 = tpu.matmul %289, %291, %cst_225 {dimension_numbers = #tpu.dot_dimension_numbers<[1], [0], [0], [1], [0, 0, 1, 1], [], []>} : vector<24x64xbf16>, vector<64x128xbf16>, vector<24x128xf32> -> vector<24x128xf32>
      %293 = arith.addf %287, %292 : vector<24x128xf32>
      %c1_226 = arith.constant 1 : index
      %c0_227 = arith.constant 0 : index
      %294 = vector.load %arg16[%c1_226, %c0_227] : memref<40x64xf32, #tpu.memory_space<vmem>>, vector<24x64xf32>
      %295 = arith.truncf %294 : vector<24x64xf32> to vector<24x64xbf16>
      %c1_228 = arith.constant 1 : index
      %c0_229 = arith.constant 0 : index
      %c0_230 = arith.constant 0 : index
      %296 = vector.load %arg6[%c1_228, %c0_229, %c0_230] : memref<9x64x128xbf16, #tpu.memory_space<vmem>>, vector<1x64x128xbf16>
      %297 = vector.shape_cast %296 : vector<1x64x128xbf16> to vector<64x128xbf16>
      %cst_231 = arith.constant dense<0.000000e+00> : vector<24x128xf32>
      %298 = tpu.matmul %295, %297, %cst_231 {dimension_numbers = #tpu.dot_dimension_numbers<[1], [0], [0], [1], [0, 0, 1, 1], [], []>} : vector<24x64xbf16>, vector<64x128xbf16>, vector<24x128xf32> -> vector<24x128xf32>
      %299 = arith.addf %293, %298 : vector<24x128xf32>
      %c2_232 = arith.constant 2 : index
      %c0_233 = arith.constant 0 : index
      %300 = vector.load %arg16[%c2_232, %c0_233] : memref<40x64xf32, #tpu.memory_space<vmem>>, vector<24x64xf32>
      %301 = arith.truncf %300 : vector<24x64xf32> to vector<24x64xbf16>
      %c2_234 = arith.constant 2 : index
      %c0_235 = arith.constant 0 : index
      %c0_236 = arith.constant 0 : index
      %302 = vector.load %arg6[%c2_234, %c0_235, %c0_236] : memref<9x64x128xbf16, #tpu.memory_space<vmem>>, vector<1x64x128xbf16>
      %303 = vector.shape_cast %302 : vector<1x64x128xbf16> to vector<64x128xbf16>
      %cst_237 = arith.constant dense<0.000000e+00> : vector<24x128xf32>
      %304 = tpu.matmul %301, %303, %cst_237 {dimension_numbers = #tpu.dot_dimension_numbers<[1], [0], [0], [1], [0, 0, 1, 1], [], []>} : vector<24x64xbf16>, vector<64x128xbf16>, vector<24x128xf32> -> vector<24x128xf32>
      %305 = arith.addf %299, %304 : vector<24x128xf32>
      %c6_238 = arith.constant 6 : index
      %c0_239 = arith.constant 0 : index
      %306 = vector.load %arg16[%c6_238, %c0_239] : memref<40x64xf32, #tpu.memory_space<vmem>>, vector<24x64xf32>
      %307 = arith.truncf %306 : vector<24x64xf32> to vector<24x64xbf16>
      %c3_240 = arith.constant 3 : index
      %c0_241 = arith.constant 0 : index
      %c0_242 = arith.constant 0 : index
      %308 = vector.load %arg6[%c3_240, %c0_241, %c0_242] : memref<9x64x128xbf16, #tpu.memory_space<vmem>>, vector<1x64x128xbf16>
      %309 = vector.shape_cast %308 : vector<1x64x128xbf16> to vector<64x128xbf16>
      %cst_243 = arith.constant dense<0.000000e+00> : vector<24x128xf32>
      %310 = tpu.matmul %307, %309, %cst_243 {dimension_numbers = #tpu.dot_dimension_numbers<[1], [0], [0], [1], [0, 0, 1, 1], [], []>} : vector<24x64xbf16>, vector<64x128xbf16>, vector<24x128xf32> -> vector<24x128xf32>
      %311 = arith.addf %305, %310 : vector<24x128xf32>
      %c7_244 = arith.constant 7 : index
      %c0_245 = arith.constant 0 : index
      %312 = vector.load %arg16[%c7_244, %c0_245] : memref<40x64xf32, #tpu.memory_space<vmem>>, vector<24x64xf32>
      %313 = arith.truncf %312 : vector<24x64xf32> to vector<24x64xbf16>
      %c4_246 = arith.constant 4 : index
      %c0_247 = arith.constant 0 : index
      %c0_248 = arith.constant 0 : index
      %314 = vector.load %arg6[%c4_246, %c0_247, %c0_248] : memref<9x64x128xbf16, #tpu.memory_space<vmem>>, vector<1x64x128xbf16>
      %315 = vector.shape_cast %314 : vector<1x64x128xbf16> to vector<64x128xbf16>
      %cst_249 = arith.constant dense<0.000000e+00> : vector<24x128xf32>
      %316 = tpu.matmul %313, %315, %cst_249 {dimension_numbers = #tpu.dot_dimension_numbers<[1], [0], [0], [1], [0, 0, 1, 1], [], []>} : vector<24x64xbf16>, vector<64x128xbf16>, vector<24x128xf32> -> vector<24x128xf32>
      %317 = arith.addf %311, %316 : vector<24x128xf32>
      %c8_250 = arith.constant 8 : index
      %c0_251 = arith.constant 0 : index
      %318 = vector.load %arg16[%c8_250, %c0_251] : memref<40x64xf32, #tpu.memory_space<vmem>>, vector<24x64xf32>
      %319 = arith.truncf %318 : vector<24x64xf32> to vector<24x64xbf16>
      %c5_252 = arith.constant 5 : index
      %c0_253 = arith.constant 0 : index
      %c0_254 = arith.constant 0 : index
      %320 = vector.load %arg6[%c5_252, %c0_253, %c0_254] : memref<9x64x128xbf16, #tpu.memory_space<vmem>>, vector<1x64x128xbf16>
      %321 = vector.shape_cast %320 : vector<1x64x128xbf16> to vector<64x128xbf16>
      %cst_255 = arith.constant dense<0.000000e+00> : vector<24x128xf32>
      %322 = tpu.matmul %319, %321, %cst_255 {dimension_numbers = #tpu.dot_dimension_numbers<[1], [0], [0], [1], [0, 0, 1, 1], [], []>} : vector<24x64xbf16>, vector<64x128xbf16>, vector<24x128xf32> -> vector<24x128xf32>
      %323 = arith.addf %317, %322 : vector<24x128xf32>
      %c12_256 = arith.constant 12 : index
      %c0_257 = arith.constant 0 : index
      %324 = vector.load %arg16[%c12_256, %c0_257] : memref<40x64xf32, #tpu.memory_space<vmem>>, vector<24x64xf32>
      %325 = arith.truncf %324 : vector<24x64xf32> to vector<24x64xbf16>
      %c6_258 = arith.constant 6 : index
      %c0_259 = arith.constant 0 : index
      %c0_260 = arith.constant 0 : index
      %326 = vector.load %arg6[%c6_258, %c0_259, %c0_260] : memref<9x64x128xbf16, #tpu.memory_space<vmem>>, vector<1x64x128xbf16>
      %327 = vector.shape_cast %326 : vector<1x64x128xbf16> to vector<64x128xbf16>
      %cst_261 = arith.constant dense<0.000000e+00> : vector<24x128xf32>
      %328 = tpu.matmul %325, %327, %cst_261 {dimension_numbers = #tpu.dot_dimension_numbers<[1], [0], [0], [1], [0, 0, 1, 1], [], []>} : vector<24x64xbf16>, vector<64x128xbf16>, vector<24x128xf32> -> vector<24x128xf32>
      %329 = arith.addf %323, %328 : vector<24x128xf32>
      %c13_262 = arith.constant 13 : index
      %c0_263 = arith.constant 0 : index
      %330 = vector.load %arg16[%c13_262, %c0_263] : memref<40x64xf32, #tpu.memory_space<vmem>>, vector<24x64xf32>
      %331 = arith.truncf %330 : vector<24x64xf32> to vector<24x64xbf16>
      %c7_264 = arith.constant 7 : index
      %c0_265 = arith.constant 0 : index
      %c0_266 = arith.constant 0 : index
      %332 = vector.load %arg6[%c7_264, %c0_265, %c0_266] : memref<9x64x128xbf16, #tpu.memory_space<vmem>>, vector<1x64x128xbf16>
      %333 = vector.shape_cast %332 : vector<1x64x128xbf16> to vector<64x128xbf16>
      %cst_267 = arith.constant dense<0.000000e+00> : vector<24x128xf32>
      %334 = tpu.matmul %331, %333, %cst_267 {dimension_numbers = #tpu.dot_dimension_numbers<[1], [0], [0], [1], [0, 0, 1, 1], [], []>} : vector<24x64xbf16>, vector<64x128xbf16>, vector<24x128xf32> -> vector<24x128xf32>
      %335 = arith.addf %329, %334 : vector<24x128xf32>
      %c14 = arith.constant 14 : index
      %c0_268 = arith.constant 0 : index
      %336 = vector.load %arg16[%c14, %c0_268] : memref<40x64xf32, #tpu.memory_space<vmem>>, vector<24x64xf32>
      %337 = arith.truncf %336 : vector<24x64xf32> to vector<24x64xbf16>
      %c8_269 = arith.constant 8 : index
      %c0_270 = arith.constant 0 : index
      %c0_271 = arith.constant 0 : index
      %338 = vector.load %arg6[%c8_269, %c0_270, %c0_271] : memref<9x64x128xbf16, #tpu.memory_space<vmem>>, vector<1x64x128xbf16>
      %339 = vector.shape_cast %338 : vector<1x64x128xbf16> to vector<64x128xbf16>
      %cst_272 = arith.constant dense<0.000000e+00> : vector<24x128xf32>
      %340 = tpu.matmul %337, %339, %cst_272 {dimension_numbers = #tpu.dot_dimension_numbers<[1], [0], [0], [1], [0, 0, 1, 1], [], []>} : vector<24x64xbf16>, vector<64x128xbf16>, vector<24x128xf32> -> vector<24x128xf32>
      %341 = arith.addf %335, %340 : vector<24x128xf32>
      %c0_273 = arith.constant 0 : index
      %c0_274 = arith.constant 0 : index
      %342 = vector.load %arg7[%c0_273, %c0_274] : memref<1x128xf32, #tpu.memory_space<vmem>>, vector<1x128xf32>
      %343 = vector.broadcast %342 : vector<1x128xf32> to vector<24x128xf32>
      %344 = arith.addf %341, %343 : vector<24x128xf32>
      %cst_275 = arith.constant 0.000000e+00 : f32
      %345 = vector.broadcast %cst_275 : f32 to vector<24x128xf32>
      %346 = arith.maximumf %344, %345 : vector<24x128xf32>
      %c0_276 = arith.constant 0 : index
      %c0_277 = arith.constant 0 : index
      %347 = vector.load %arg17[%c0_276, %c0_277] : memref<24x128xf32, #tpu.memory_space<vmem>>, vector<24x128xf32>
      tpu.vector_store %arg17[%c0_276, %c0_277], %346 {strides = array<i32>} : memref<24x128xf32, #tpu.memory_space<vmem>>, vector<24x128xf32>,
      %c0_278 = arith.constant 0 : index
      %c0_279 = arith.constant 0 : index
      %348 = tpu.strided_load %arg17[%c0_278, %c0_279] {strides = array<i32: 2, 1>} : memref<24x128xf32, #tpu.memory_space<vmem>>, vector<2x128xf32>
      %c1_280 = arith.constant 1 : index
      %c0_281 = arith.constant 0 : index
      %349 = tpu.strided_load %arg17[%c1_280, %c0_281] {strides = array<i32: 2, 1>} : memref<24x128xf32, #tpu.memory_space<vmem>>, vector<2x128xf32>
      %350 = arith.maximumf %348, %349 : vector<2x128xf32>
      %c6_282 = arith.constant 6 : index
      %c0_283 = arith.constant 0 : index
      %351 = tpu.strided_load %arg17[%c6_282, %c0_283] {strides = array<i32: 2, 1>} : memref<24x128xf32, #tpu.memory_space<vmem>>, vector<2x128xf32>
      %c7_284 = arith.constant 7 : index
      %c0_285 = arith.constant 0 : index
      %352 = tpu.strided_load %arg17[%c7_284, %c0_285] {strides = array<i32: 2, 1>} : memref<24x128xf32, #tpu.memory_space<vmem>>, vector<2x128xf32>
      %353 = arith.maximumf %351, %352 : vector<2x128xf32>
      %354 = arith.maximumf %350, %353 : vector<2x128xf32>
      %355 = arith.index_cast %arg19 : i32 to index
      %c0_286 = arith.constant 0 : index
      %c0_287 = arith.constant 0 : index
      %356 = vector.load %arg18[%355, %c0_286, %c0_287] : memref<2x4x128xf32, #tpu.memory_space<vmem>>, vector<1x2x128xf32>
      %357 = vector.shape_cast %356 : vector<1x2x128xf32> to vector<2x128xf32>
      %358 = vector.shape_cast %354 : vector<2x128xf32> to vector<1x2x128xf32>
      tpu.vector_store %arg18[%355, %c0_286, %c0_287], %358 {strides = array<i32>} : memref<2x4x128xf32, #tpu.memory_space<vmem>>, vector<1x2x128xf32>,
      %c12_288 = arith.constant 12 : index
      %c0_289 = arith.constant 0 : index
      %359 = tpu.strided_load %arg17[%c12_288, %c0_289] {strides = array<i32: 2, 1>} : memref<24x128xf32, #tpu.memory_space<vmem>>, vector<2x128xf32>
      %c13_290 = arith.constant 13 : index
      %c0_291 = arith.constant 0 : index
      %360 = tpu.strided_load %arg17[%c13_290, %c0_291] {strides = array<i32: 2, 1>} : memref<24x128xf32, #tpu.memory_space<vmem>>, vector<2x128xf32>
      %361 = arith.maximumf %359, %360 : vector<2x128xf32>
      %c18_292 = arith.constant 18 : index
      %c0_293 = arith.constant 0 : index
      %362 = tpu.strided_load %arg17[%c18_292, %c0_293] {strides = array<i32: 2, 1>} : memref<24x128xf32, #tpu.memory_space<vmem>>, vector<2x128xf32>
      %c19_294 = arith.constant 19 : index
      %c0_295 = arith.constant 0 : index
      %363 = tpu.strided_load %arg17[%c19_294, %c0_295] {strides = array<i32: 2, 1>} : memref<24x128xf32, #tpu.memory_space<vmem>>, vector<2x128xf32>
      %364 = arith.maximumf %362, %363 : vector<2x128xf32>
      %365 = arith.maximumf %361, %364 : vector<2x128xf32>
      %366 = arith.index_cast %arg19 : i32 to index
      %c2_296 = arith.constant 2 : index
      %c0_297 = arith.constant 0 : index
      %367 = vector.load %arg18[%366, %c2_296, %c0_297] : memref<2x4x128xf32, #tpu.memory_space<vmem>>, vector<1x2x128xf32>
      %368 = vector.shape_cast %367 : vector<1x2x128xf32> to vector<2x128xf32>
      %369 = vector.shape_cast %365 : vector<2x128xf32> to vector<1x2x128xf32>
      tpu.vector_store %arg18[%366, %c2_296, %c0_297], %369 {strides = array<i32>} : memref<2x4x128xf32, #tpu.memory_space<vmem>>, vector<1x2x128xf32>,
    }
    %c2_i32_4 = arith.constant 2 : i32
    %c0_5 = arith.constant 0 : index
    %c0_6 = arith.constant 0 : index
    %c0_7 = arith.constant 0 : index
    %5 = vector.load %arg18[%c0_5, %c0_6, %c0_7] : memref<2x4x128xf32, #tpu.memory_space<vmem>>, vector<2x4x128xf32>
    %6 = arith.truncf %5 : vector<2x4x128xf32> to vector<2x4x128xbf16>
    %c0_8 = arith.constant 0 : index
    %c0_9 = arith.constant 0 : index
    %7 = vector.load %arg9[%c0_8, %c0_9] : memref<1x32xf32, #tpu.memory_space<vmem>>, vector<1x32xf32>
    %8 = vector.extract_strided_slice %6 {offsets = [0, 0, 0], sizes = [2, 1, 128], strides = [1, 1, 1]} : vector<2x4x128xbf16> to vector<2x1x128xbf16>
    %9 = vector.shape_cast %8 : vector<2x1x128xbf16> to vector<2x128xbf16>
    %c0_10 = arith.constant 0 : index
    %c0_11 = arith.constant 0 : index
    %c0_12 = arith.constant 0 : index
    %10 = vector.load %arg8[%c0_10, %c0_11, %c0_12] : memref<4x128x32xbf16, #tpu.memory_space<vmem>>, vector<1x128x32xbf16>
    %11 = vector.shape_cast %10 : vector<1x128x32xbf16> to vector<128x32xbf16>
    %cst_13 = arith.constant dense<0.000000e+00> : vector<2x32xf32>
    %12 = tpu.matmul %9, %11, %cst_13 {dimension_numbers = #tpu.dot_dimension_numbers<[1], [0], [0], [1], [0, 0, 1, 1], [], []>} : vector<2x128xbf16>, vector<128x32xbf16>, vector<2x32xf32> -> vector<2x32xf32>
    %13 = vector.broadcast %7 : vector<1x32xf32> to vector<2x32xf32>
    %14 = arith.addf %13, %12 : vector<2x32xf32>
    %15 = vector.extract_strided_slice %6 {offsets = [0, 1, 0], sizes = [2, 1, 128], strides = [1, 1, 1]} : vector<2x4x128xbf16> to vector<2x1x128xbf16>
    %16 = vector.shape_cast %15 : vector<2x1x128xbf16> to vector<2x128xbf16>
    %c1 = arith.constant 1 : index
    %c0_14 = arith.constant 0 : index
    %c0_15 = arith.constant 0 : index
    %17 = vector.load %arg8[%c1, %c0_14, %c0_15] : memref<4x128x32xbf16, #tpu.memory_space<vmem>>, vector<1x128x32xbf16>
    %18 = vector.shape_cast %17 : vector<1x128x32xbf16> to vector<128x32xbf16>
    %cst_16 = arith.constant dense<0.000000e+00> : vector<2x32xf32>
    %19 = tpu.matmul %16, %18, %cst_16 {dimension_numbers = #tpu.dot_dimension_numbers<[1], [0], [0], [1], [0, 0, 1, 1], [], []>} : vector<2x128xbf16>, vector<128x32xbf16>, vector<2x32xf32> -> vector<2x32xf32>
    %20 = arith.addf %14, %19 : vector<2x32xf32>
    %21 = vector.extract_strided_slice %6 {offsets = [0, 2, 0], sizes = [2, 1, 128], strides = [1, 1, 1]} : vector<2x4x128xbf16> to vector<2x1x128xbf16>
    %22 = vector.shape_cast %21 : vector<2x1x128xbf16> to vector<2x128xbf16>
    %c2 = arith.constant 2 : index
    %c0_17 = arith.constant 0 : index
    %c0_18 = arith.constant 0 : index
    %23 = vector.load %arg8[%c2, %c0_17, %c0_18] : memref<4x128x32xbf16, #tpu.memory_space<vmem>>, vector<1x128x32xbf16>
    %24 = vector.shape_cast %23 : vector<1x128x32xbf16> to vector<128x32xbf16>
    %cst_19 = arith.constant dense<0.000000e+00> : vector<2x32xf32>
    %25 = tpu.matmul %22, %24, %cst_19 {dimension_numbers = #tpu.dot_dimension_numbers<[1], [0], [0], [1], [0, 0, 1, 1], [], []>} : vector<2x128xbf16>, vector<128x32xbf16>, vector<2x32xf32> -> vector<2x32xf32>
    %26 = arith.addf %20, %25 : vector<2x32xf32>
    %27 = vector.extract_strided_slice %6 {offsets = [0, 3, 0], sizes = [2, 1, 128], strides = [1, 1, 1]} : vector<2x4x128xbf16> to vector<2x1x128xbf16>
    %28 = vector.shape_cast %27 : vector<2x1x128xbf16> to vector<2x128xbf16>
    %c3 = arith.constant 3 : index
    %c0_20 = arith.constant 0 : index
    %c0_21 = arith.constant 0 : index
    %29 = vector.load %arg8[%c3, %c0_20, %c0_21] : memref<4x128x32xbf16, #tpu.memory_space<vmem>>, vector<1x128x32xbf16>
    %30 = vector.shape_cast %29 : vector<1x128x32xbf16> to vector<128x32xbf16>
    %cst_22 = arith.constant dense<0.000000e+00> : vector<2x32xf32>
    %31 = tpu.matmul %28, %30, %cst_22 {dimension_numbers = #tpu.dot_dimension_numbers<[1], [0], [0], [1], [0, 0, 1, 1], [], []>} : vector<2x128xbf16>, vector<128x32xbf16>, vector<2x32xf32> -> vector<2x32xf32>
    %32 = arith.addf %26, %31 : vector<2x32xf32>
    %cst_23 = arith.constant 0.000000e+00 : f32
    %33 = vector.broadcast %cst_23 : f32 to vector<2x32xf32>
    %34 = arith.maximumf %32, %33 : vector<2x32xf32>
    %c0_24 = arith.constant 0 : index
    %c0_25 = arith.constant 0 : index
    %35 = vector.load %arg10[%c0_24, %c0_25] : memref<1x32xf32, #tpu.memory_space<vmem>>, vector<1x32xf32>
    %36 = vector.broadcast %35 : vector<1x32xf32> to vector<2x32xf32>
    %37 = arith.mulf %34, %36 : vector<2x32xf32>
    %cst_26 = arith.constant dense<0.000000e+00> : vector<2xf32>
    %38 = vector.multi_reduction <add>, %37, %cst_26 [1] : vector<2x32xf32> to vector<2xf32>
    %39 = vector.shape_cast %38 : vector<2xf32> to vector<2x1xf32>
    %c0_27 = arith.constant 0 : index
    %c0_28 = arith.constant 0 : index
    %40 = vector.load %arg11[%c0_27, %c0_28] : memref<1x1xf32, #tpu.memory_space<vmem>>, vector<1x1xf32>
    %41 = vector.broadcast %40 : vector<1x1xf32> to vector<2x1xf32>
    %42 = arith.addf %39, %41 : vector<2x1xf32>
    %cst_29 = arith.constant 0.000000e+00 : f32
    %43 = vector.broadcast %cst_29 : f32 to vector<2x1xf32>
    %44 = arith.subf %43, %42 : vector<2x1xf32>
    %45 = math.exp %44 : vector<2x1xf32>
    %cst_30 = arith.constant 1.000000e+00 : f32
    %46 = vector.broadcast %cst_30 : f32 to vector<2x1xf32>
    %47 = arith.addf %46, %45 : vector<2x1xf32>
    %cst_31 = arith.constant 1.000000e+00 : f32
    %48 = vector.broadcast %cst_31 : f32 to vector<2x1xf32>
    %49 = arith.divf %48, %47 : vector<2x1xf32>
    %c0_32 = arith.constant 0 : index
    %c0_33 = arith.constant 0 : index
    %50 = vector.load %arg12[%c0_32, %c0_33] : memref<2x1xf32, #tpu.memory_space<vmem>>, vector<2x1xf32>
    tpu.vector_store %arg12[%c0_32, %c0_33], %49 {strides = array<i32>} : memref<2x1xf32, #tpu.memory_space<vmem>>, vector<2x1xf32>,
    return
  }
  func.func @transform_0(%arg0: i32) -> (i32, i32, i32) {
    %c0_i32 = arith.constant 0 : i32
    %c0_i32_0 = arith.constant 0 : i32
    %c0_i32_1 = arith.constant 0 : i32
    return %arg0, %c0_i32, %c0_i32_0 : i32, i32, i32
  }
  func.func @transform_1(%arg0: i32) -> (i32, i32, i32) {
    %c0_i32 = arith.constant 0 : i32
    %c0_i32_0 = arith.constant 0 : i32
    %c0_i32_1 = arith.constant 0 : i32
    %c0_i32_2 = arith.constant 0 : i32
    return %c0_i32, %c0_i32_0, %c0_i32_1 : i32, i32, i32
  }
  func.func @transform_2(%arg0: i32) -> (i32, i32) {
    %c0_i32 = arith.constant 0 : i32
    %c0_i32_0 = arith.constant 0 : i32
    %c0_i32_1 = arith.constant 0 : i32
    return %c0_i32, %c0_i32_0 : i32, i32
  }
  func.func @transform_3(%arg0: i32) -> (i32, i32, i32) {
    %c0_i32 = arith.constant 0 : i32
    %c0_i32_0 = arith.constant 0 : i32
    %c0_i32_1 = arith.constant 0 : i32
    %c0_i32_2 = arith.constant 0 : i32
    return %c0_i32, %c0_i32_0, %c0_i32_1 : i32, i32, i32
  }
  func.func @transform_4(%arg0: i32) -> (i32, i32) {
    %c0_i32 = arith.constant 0 : i32
    %c0_i32_0 = arith.constant 0 : i32
    %c0_i32_1 = arith.constant 0 : i32
    return %c0_i32, %c0_i32_0 : i32, i32
  }
  func.func @transform_5(%arg0: i32) -> (i32, i32, i32) {
    %c0_i32 = arith.constant 0 : i32
    %c0_i32_0 = arith.constant 0 : i32
    %c0_i32_1 = arith.constant 0 : i32
    %c0_i32_2 = arith.constant 0 : i32
    return %c0_i32, %c0_i32_0, %c0_i32_1 : i32, i32, i32
  }
  func.func @transform_6(%arg0: i32) -> (i32, i32) {
    %c0_i32 = arith.constant 0 : i32
    %c0_i32_0 = arith.constant 0 : i32
    %c0_i32_1 = arith.constant 0 : i32
    return %c0_i32, %c0_i32_0 : i32, i32
  }
  func.func @transform_7(%arg0: i32) -> (i32, i32, i32) {
    %c0_i32 = arith.constant 0 : i32
    %c0_i32_0 = arith.constant 0 : i32
    %c0_i32_1 = arith.constant 0 : i32
    %c0_i32_2 = arith.constant 0 : i32
    return %c0_i32, %c0_i32_0, %c0_i32_1 : i32, i32, i32
  }
  func.func @transform_8(%arg0: i32) -> (i32, i32) {
    %c0_i32 = arith.constant 0 : i32
    %c0_i32_0 = arith.constant 0 : i32
    %c0_i32_1 = arith.constant 0 : i32
    return %c0_i32, %c0_i32_0 : i32, i32
  }
  func.func @transform_9(%arg0: i32) -> (i32, i32) {
    %c0_i32 = arith.constant 0 : i32
    %c0_i32_0 = arith.constant 0 : i32
    %c0_i32_1 = arith.constant 0 : i32
    return %c0_i32, %c0_i32_0 : i32, i32
  }
  func.func @transform_10(%arg0: i32) -> (i32, i32) {
    %c0_i32 = arith.constant 0 : i32
    %c0_i32_0 = arith.constant 0 : i32
    %c0_i32_1 = arith.constant 0 : i32
    return %c0_i32, %c0_i32_0 : i32, i32
  }
  func.func @transform_11(%arg0: i32) -> (i32, i32) {
    %c0_i32 = arith.constant 0 : i32
    %c0_i32_0 = arith.constant 0 : i32
    return %arg0, %c0_i32 : i32, i32
  }
}

</mosaic_0001>

<llo_original>
// kernel: cnn2d_forward.1
$region0: #{cnn2d_forward.1}
  #allocation0 [shape = 'u32[]', space=smem, size = 0x4, offset = 0x4, fixed_abs, tag = 'smem constant byte address 0x4 - core index']
  #allocation1 [shape = 'u32[144,128]{1,0:T(1,128)}', space=vmem, size = 0x12000, scoped, tag = 'internal scratch']
  #allocation2 [shape = 'f32[288,32]{1,0:T(8,128)}', space=vmem, size = 0x24000, scoped, tag = 'scratch operand']
  #allocation3 [shape = 'f32[104,32]{1,0:T(8,128)}', space=vmem, size = 0xd000, scoped, tag = 'scratch operand']
  #allocation4 [shape = 'f32[80,64]{1,0:T(8,128)}', space=vmem, size = 0xa000, scoped, tag = 'scratch operand']
  #allocation5 [shape = 'f32[40,64]{1,0:T(8,128)}', space=vmem, size = 0x5000, scoped, tag = 'scratch operand']
  #allocation6 [shape = 'f32[24,128]{1,0:T(8,128)}', space=vmem, size = 0x3000, scoped, tag = 'scratch operand']
  #allocation7 [shape = 'f32[2,4,128]{2,1,0:T(4,128)}', space=vmem, size = 0x1000, scoped, tag = 'scratch operand']
  #allocation8 [shape = 'f32[1,1]{1,0:T(1,128)S(1)}', space=vmem, size = 0x200, scoped, tag = 'scoped memory for cnn2d_forward.1']
  %s0 = inlined_call_operand.vmem [shape: f32[2,328,131], index: 0, kind: input, shape index: {}]
  %s1 = inlined_call_operand.vmem [shape: bf16[9,131,32], index: 1, kind: input, shape index: {}]
  %s2 = inlined_call_operand.vmem [shape: f32[1,32], index: 2, kind: input, shape index: {}]
  %s3 = inlined_call_operand.vmem [shape: bf16[9,32,64], index: 3, kind: input, shape index: {}]
  %s4 = inlined_call_operand.vmem [shape: f32[1,64], index: 4, kind: input, shape index: {}]
  %s5 = inlined_call_operand.vmem [shape: bf16[9,64,128], index: 5, kind: input, shape index: {}]
  %s6 = inlined_call_operand.vmem [shape: f32[1,128], index: 6, kind: input, shape index: {}]
  %s7 = inlined_call_operand.vmem [shape: bf16[4,128,32], index: 7, kind: input, shape index: {}]
  %s8 = inlined_call_operand.vmem [shape: f32[1,32], index: 8, kind: input, shape index: {}]
  %s9 = inlined_call_operand.vmem [shape: f32[1,32], index: 9, kind: input, shape index: {}]
  %s10 = inlined_call_operand.<no memory space> [shape: f32[1,1], index: 10, kind: input, shape index: {}]
  %s11 = inlined_call_operand.vmem [shape: f32[2,1], index: 11, kind: output, shape index: {}]
  %s12 = sld [smem:[#allocation0]]
  $region61: #{cnn2d_forward.1} parent=0
    _
  %s14 = ssub.s32 1, %s12
  %s15 = scalar_select 0, %s14, %s12
  %v16 = vstv %s10
  %17 = vst [vmem:[#allocation8] sm:$0x1] %v16
  // Predicated region
  $region2: #{cnn2d_forward.1} parent=0 // pred_check
    _
  $region3: #{cnn2d_forward.1} parent=0 // pred_check_branch
    %19 = sbr.rel (0) target = $region5
  $region4: #{cnn2d_forward.1} parent=0 // pred_region
    _
  $region5: #{cnn2d_forward.1} parent=0 // pred_fallthru
    _
  // Predicated region
  $region6: #{cnn2d_forward.1} parent=0 // pred_check
    _
  $region7: #{cnn2d_forward.1} parent=0 // pred_check_branch
    %21 = sbr.rel (0) target = $region9
  $region8: #{cnn2d_forward.1} parent=0 // pred_region
    _
  $region9: #{cnn2d_forward.1} parent=0 // pred_fallthru
    _
  // Predicated region
  $region10: #{cnn2d_forward.1} parent=0 // pred_check
    _
  $region11: #{cnn2d_forward.1} parent=0 // pred_check_branch
    %23 = sbr.rel (0) target = $region13
  $region12: #{cnn2d_forward.1} parent=0 // pred_region
    _
  $region13: #{cnn2d_forward.1} parent=0 // pred_fallthru
    _
  // Predicated region
  $region14: #{cnn2d_forward.1} parent=0 // pred_check
    _
  $region15: #{cnn2d_forward.1} parent=0 // pred_check_branch
    %25 = sbr.rel (0) target = $region17
  $region16: #{cnn2d_forward.1} parent=0 // pred_region
    _
  $region17: #{cnn2d_forward.1} parent=0 // pred_fallthru
    _
  // Predicated region
  $region18: #{cnn2d_forward.1} parent=0 // pred_check
    _
  $region19: #{cnn2d_forward.1} parent=0 // pred_check_branch
    %27 = sbr.rel (0) target = $region21
  $region20: #{cnn2d_forward.1} parent=0 // pred_region
    _
  $region21: #{cnn2d_forward.1} parent=0 // pred_fallthru
    _
  // Predicated region
  $region22: #{cnn2d_forward.1} parent=0 // pred_check
    _
  $region23: #{cnn2d_forward.1} parent=0 // pred_check_branch
    %29 = sbr.rel (0) target = $region25
  $region24: #{cnn2d_forward.1} parent=0 // pred_region
    _
  $region25: #{cnn2d_forward.1} parent=0 // pred_fallthru
    _
  // Predicated region
  $region26: #{cnn2d_forward.1} parent=0 // pred_check
    _
  $region27: #{cnn2d_forward.1} parent=0 // pred_check_branch
    %31 = sbr.rel (0) target = $region29
  $region28: #{cnn2d_forward.1} parent=0 // pred_region
    _
  $region29: #{cnn2d_forward.1} parent=0 // pred_fallthru
    _
  // Predicated region
  $region30: #{cnn2d_forward.1} parent=0 // pred_check
    _
  $region31: #{cnn2d_forward.1} parent=0 // pred_check_branch
    %33 = sbr.rel (0) target = $region33
  $region32: #{cnn2d_forward.1} parent=0 // pred_region
    _
  $region33: #{cnn2d_forward.1} parent=0 // pred_fallthru
    _
  // Predicated region
  $region34: #{cnn2d_forward.1} parent=0 // pred_check
    _
  $region35: #{cnn2d_forward.1} parent=0 // pred_check_branch
    %35 = sbr.rel (0) target = $region37
  $region36: #{cnn2d_forward.1} parent=0 // pred_region
    _
  $region37: #{cnn2d_forward.1} parent=0 // pred_fallthru
    _
  // Predicated region
  $region38: #{cnn2d_forward.1} parent=0 // pred_check
    _
  $region39: #{cnn2d_forward.1} parent=0 // pred_check_branch
    %37 = sbr.rel (0) target = $region41
  $region40: #{cnn2d_forward.1} parent=0 // pred_region
    _
  $region41: #{cnn2d_forward.1} parent=0 // pred_fallthru
    _
  // Predicated region
  $region42: #{cnn2d_forward.1} parent=0 // pred_check
    _
  $region43: #{cnn2d_forward.1} parent=0 // pred_check_branch
    %39 = sbr.rel (0) target = $region45
  $region44: #{cnn2d_forward.1} parent=0 // pred_region
    _
  $region45: #{cnn2d_forward.1} parent=0 // pred_fallthru
    _
  %vm41 = vcmask 261120
  %42 = vst.msk [vmem:[#allocation3] sm:$0xff] %vm41, 0.0
  %43 = vst.msk [vmem:[#allocation3 + $0x8] sm:$0xff] %vm41, 0.0
  %44 = vst.msk [vmem:[#allocation3 + $0x10] sm:$0xff] %vm41, 0.0
  %45 = vst.msk [vmem:[#allocation3 + $0x18] sm:$0xff] %vm41, 0.0
  %46 = vst.msk [vmem:[#allocation3 + $0x20] sm:$0xff] %vm41, 0.0
  %47 = vst.msk [vmem:[#allocation3 + $0x28] sm:$0xff] %vm41, 0.0
  %48 = vst.msk [vmem:[#allocation3 + $0x30] sm:$0xff] %vm41, 0.0
  %49 = vst.msk [vmem:[#allocation3 + $0x38] sm:$0xff] %vm41, 0.0
  %50 = vst.msk [vmem:[#allocation3 + $0x40] sm:$0xff] %vm41, 0.0
  %51 = vst.msk [vmem:[#allocation3 + $0x48] sm:$0xff] %vm41, 0.0
  %52 = vst.msk [vmem:[#allocation3 + $0x50] sm:$0xff] %vm41, 0.0
  %53 = vst.msk [vmem:[#allocation3 + $0x58] sm:$0xff] %vm41, 0.0
  %54 = vst.msk [vmem:[#allocation3 + $0x60] sm:$0xff] %vm41, 0.0
  %vm55 = vcmask 523264
  %56 = vst.msk [vmem:[#allocation5] sm:$0xff] %vm55, 0.0
  %57 = vst.msk [vmem:[#allocation5 + $0x8] sm:$0xff] %vm55, 0.0
  %58 = vst.msk [vmem:[#allocation5 + $0x10] sm:$0xff] %vm55, 0.0
  %59 = vst.msk [vmem:[#allocation5 + $0x18] sm:$0xff] %vm55, 0.0
  %60 = vst.msk [vmem:[#allocation5 + $0x20] sm:$0xff] %vm55, 0.0
  loop: start=0, step=1, limit=2
  $region46: #{cnn2d_forward.1} parent=0 // loop_pre_header
    _
  $region47: #{cnn2d_forward.1} parent=0 // loop_header
    %s62 = sphi 0, %s66
    %p63 = scmp.ge.s32.totalorder %s62, 2
  $region48: #{cnn2d_forward.1} parent=0 // loop_header_branch
    %65 = sbr.rel (%p63) target = $region52
  $region49: #{cnn2d_forward.1} parent=0 // loop_body
    %s67 = smul.u32 %s62, 82
    %s68 = smul.addr %s67, 8
    %s69 = scalar_lea.vmem %s0, %s68
    %v70 = vld [vmem:[%s69] sm:$0xff]
    %v71 = vld [vmem:[%s69 + $0x8] sm:$0xff]
    %v72 = vld [vmem:[%s69 + $0x10] sm:$0xff]
    %v73 = vld [vmem:[%s69 + $0x18] sm:$0xff]
    %v74 = vld [vmem:[%s69 + $0x20] sm:$0xff]
    %v75 = vld [vmem:[%s69 + $0x28] sm:$0xff]
    %v76 = vld [vmem:[%s69 + $0x30] sm:$0xff]
    %v77 = vld [vmem:[%s69 + $0x38] sm:$0xff]
    %v78 = vld [vmem:[%s69 + $0x40] sm:$0xff]
    %v79 = vld [vmem:[%s69 + $0x48] sm:$0xff]
    %v80 = vld [vmem:[%s69 + $0x50] sm:$0xff]
    %v81 = vld [vmem:[%s69 + $0x58] sm:$0xff]
    %v82 = vld [vmem:[%s69 + $0x60] sm:$0xff]
    %v83 = vld [vmem:[%s69 + $0x68] sm:$0xff]
    %v84 = vld [vmem:[%s69 + $0x70] sm:$0xff]
    %v85 = vld [vmem:[%s69 + $0x78] sm:$0xff]
    %v86 = vld [vmem:[%s69 + $0x80] sm:$0xff]
    %v87 = vld [vmem:[%s69 + $0x88] sm:$0xff]
    %v88 = vld [vmem:[%s69 + $0x90] sm:$0xff]
    %v89 = vld [vmem:[%s69 + $0x98] sm:$0xff]
    %v90 = vld [vmem:[%s69 + $0xa0] sm:$0xff]
    %v91 = vld [vmem:[%s69 + $0xa8] sm:$0xff]
    %v92 = vld [vmem:[%s69 + $0xb0] sm:$0xff]
    %v93 = vld [vmem:[%s69 + $0xb8] sm:$0xff]
    %v94 = vld [vmem:[%s69 + $0xc0] sm:$0xff]
    %v95 = vld [vmem:[%s69 + $0xc8] sm:$0xff]
    %v96 = vld [vmem:[%s69 + $0xd0] sm:$0xff]
    %v97 = vld [vmem:[%s69 + $0xd8] sm:$0xff]
    %v98 = vld [vmem:[%s69 + $0xe0] sm:$0xff]
    %v99 = vld [vmem:[%s69 + $0xe8] sm:$0xff]
    %v100 = vld [vmem:[%s69 + $0xf0] sm:$0xff]
    %v101 = vld [vmem:[%s69 + $0xf8] sm:$0xff]
    %v102 = vld [vmem:[%s69 + $0x100] sm:$0xff]
    %v103 = vld [vmem:[%s69 + $0x108] sm:$0xff]
    %v104 = vld [vmem:[%s69 + $0x110] sm:$0xff]
    %v105 = vld [vmem:[%s69 + $0x118] sm:$0xff]
    %v106 = vld [vmem:[%s69 + $0x120] sm:$0xff]
    %v107 = vld [vmem:[%s69 + $0x128] sm:$0xff]
    %v108 = vld [vmem:[%s69 + $0x130] sm:$0xff]
    %v109 = vld [vmem:[%s69 + $0x138] sm:$0xff]
    %v110 = vld [vmem:[%s69 + $0x140] sm:$0xff]
    %v111 = vld [vmem:[%s69 + $0x148] sm:$0xff]
    %v112 = vld [vmem:[%s69 + $0x150] sm:$0xff]
    %v113 = vld [vmem:[%s69 + $0x158] sm:$0xff]
    %v114 = vld [vmem:[%s69 + $0x160] sm:$0xff]
    %v115 = vld [vmem:[%s69 + $0x168] sm:$0xff]
    %v116 = vld [vmem:[%s69 + $0x170] sm:$0xff]
    %v117 = vld [vmem:[%s69 + $0x178] sm:$0xff]
    %v118 = vld [vmem:[%s69 + $0x180] sm:$0xff]
    %v119 = vld [vmem:[%s69 + $0x188] sm:$0xff]
    %v120 = vld [vmem:[%s69 + $0x190] sm:$0xff]
    %v121 = vld [vmem:[%s69 + $0x198] sm:$0xff]
    %v122 = vld [vmem:[%s69 + $0x1a0] sm:$0xff]
    %v123 = vld [vmem:[%s69 + $0x1a8] sm:$0xff]
    %v124 = vld [vmem:[%s69 + $0x1b0] sm:$0xff]
    %v125 = vld [vmem:[%s69 + $0x1b8] sm:$0xff]
    %v126 = vld [vmem:[%s69 + $0x1c0] sm:$0xff]
    %v127 = vld [vmem:[%s69 + $0x1c8] sm:$0xff]
    %v128 = vld [vmem:[%s69 + $0x1d0] sm:$0xff]
    %v129 = vld [vmem:[%s69 + $0x1d8] sm:$0xff]
    %v130 = vld [vmem:[%s69 + $0x1e0] sm:$0xff]
    %v131 = vld [vmem:[%s69 + $0x1e8] sm:$0xff]
    %v132 = vld [vmem:[%s69 + $0x1f0] sm:$0xff]
    %v133 = vld [vmem:[%s69 + $0x1f8] sm:$0xff]
    %v134 = vld [vmem:[%s69 + $0x200] sm:$0xff]
    %v135 = vld [vmem:[%s69 + $0x208] sm:$0xff]
    %v136 = vld [vmem:[%s69 + $0x210] sm:$0xff]
    %v137 = vld [vmem:[%s69 + $0x218] sm:$0xff]
    %v138 = vld [vmem:[%s69 + $0x220] sm:$0xff]
    %v139 = vld [vmem:[%s69 + $0x228] sm:$0xff]
    %v140 = vld [vmem:[%s69 + $0x230] sm:$0xff]
    %v141 = vld [vmem:[%s69 + $0x238] sm:$0xff]
    %v142 = vpack.c.bf16 %v72, %v70
    %v143 = vpack.c.bf16 %v73, %v71
    %v144 = vpack.c.bf16 %v76, %v74
    %v145 = vpack.c.bf16 %v77, %v75
    %v146 = vpack.c.bf16 %v80, %v78
    %v147 = vpack.c.bf16 %v81, %v79
    %v148 = vpack.c.bf16 %v84, %v82
    %v149 = vpack.c.bf16 %v85, %v83
    %v150 = vpack.c.bf16 %v88, %v86
    %v151 = vpack.c.bf16 %v89, %v87
    %v152 = vpack.c.bf16 %v92, %v90
    %v153 = vpack.c.bf16 %v93, %v91
    %v154 = vpack.c.bf16 %v96, %v94
    %v155 = vpack.c.bf16 %v97, %v95
    %v156 = vpack.c.bf16 %v100, %v98
    %v157 = vpack.c.bf16 %v101, %v99
    %v158 = vpack.c.bf16 %v104, %v102
    %v159 = vpack.c.bf16 %v105, %v103
    %v160 = vpack.c.bf16 %v108, %v106
    %v161 = vpack.c.bf16 %v109, %v107
    %v162 = vpack.c.bf16 %v112, %v110
    %v163 = vpack.c.bf16 %v113, %v111
    %v164 = vpack.c.bf16 %v116, %v114
    %v165 = vpack.c.bf16 %v117, %v115
    %v166 = vpack.c.bf16 %v120, %v118
    %v167 = vpack.c.bf16 %v121, %v119
    %v168 = vpack.c.bf16 %v124, %v122
    %v169 = vpack.c.bf16 %v125, %v123
    %v170 = vpack.c.bf16 %v128, %v126
    %v171 = vpack.c.bf16 %v129, %v127
    %v172 = vpack.c.bf16 %v132, %v130
    %v173 = vpack.c.bf16 %v133, %v131
    %v174 = vpack.c.bf16 %v136, %v134
    %v175 = vpack.c.bf16 %v137, %v135
    %v176 = vpack.c.bf16 %v140, %v138
    %v177 = vpack.c.bf16 %v141, %v139
    %v178 = vld [vmem:[%s1] sm:$0xf]
    %v179 = vld [vmem:[%s1 + $0x4] sm:$0xf]
    %v180 = vld [vmem:[%s1 + $0x8] sm:$0xf]
    %v181 = vld [vmem:[%s1 + $0xc] sm:$0xf]
    %v182 = vld [vmem:[%s1 + $0x10] sm:$0xf]
    %v183 = vld [vmem:[%s1 + $0x14] sm:$0xf]
    %v184 = vld [vmem:[%s1 + $0x18] sm:$0xf]
    %v185 = vld [vmem:[%s1 + $0x1c] sm:$0xf]
    %v186 = vld [vmem:[%s1 + $0x20] sm:$0xf]
    %v187 = vld [vmem:[%s1 + $0x24] sm:$0xf]
    %v188 = vld [vmem:[%s1 + $0x28] sm:$0xf]
    %v189 = vld [vmem:[%s1 + $0x2c] sm:$0xf]
    %v190 = vld [vmem:[%s1 + $0x30] sm:$0xf]
    %v191 = vld [vmem:[%s1 + $0x34] sm:$0xf]
    %v192 = vld [vmem:[%s1 + $0x38] sm:$0xf]
    %v193 = vld [vmem:[%s1 + $0x3c] sm:$0xf]
    %v194 = vld [vmem:[%s1 + $0x40] sm:$0x3]
    %v195 = vld [vmem:[%s69] sm:$0xfe]
    %v196 = vld [vmem:[%s69 + $0x8] sm:$0xfe]
    %v197 = vld [vmem:[%s69 + $0x240] sm:$0x1]
    %v198 = vld [vmem:[%s69 + $0x248] sm:$0x1]
    %v199 = vpack.c.bf16 %v72, %v195
    %v200 = vpack.c.bf16 %v73, %v196
    %v201 = vpack.c.bf16 %v197, %v197
    %v202 = vpack.c.bf16 %v198, %v198
    %s203 = scalar_lea.vmem %s1, 68
    %v204 = vld [vmem:[%s203] sm:$0xf]
    %v205 = vld [vmem:[%s203 + $0x4] sm:$0xf]
    %v206 = vld [vmem:[%s203 + $0x8] sm:$0xf]
    %v207 = vld [vmem:[%s203 + $0xc] sm:$0xf]
    %v208 = vld [vmem:[%s203 + $0x10] sm:$0xf]
    %v209 = vld [vmem:[%s203 + $0x14] sm:$0xf]
    %v210 = vld [vmem:[%s203 + $0x18] sm:$0xf]
    %v211 = vld [vmem:[%s203 + $0x1c] sm:$0xf]
    %v212 = vld [vmem:[%s203 + $0x20] sm:$0xf]
    %v213 = vld [vmem:[%s203 + $0x24] sm:$0xf]
    %v214 = vld [vmem:[%s203 + $0x28] sm:$0xf]
    %v215 = vld [vmem:[%s203 + $0x2c] sm:$0xf]
    %v216 = vld [vmem:[%s203 + $0x30] sm:$0xf]
    %v217 = vld [vmem:[%s203 + $0x34] sm:$0xf]
    %v218 = vld [vmem:[%s203 + $0x38] sm:$0xf]
    %v219 = vld [vmem:[%s203 + $0x3c] sm:$0xf]
    %v220 = vld [vmem:[%s203 + $0x40] sm:$0x3]
    %vm221 = vsmask.f32 7424
    %v223 = vshrl.u32 %v199, 16
    %v225 = vshll.u32 %v199, 16
    %v227 = vrot.slane %v225, 1
    %v228 = vor.u32 %v223, %v227
    %v230 = vshll.u32 %v144, 16
    %v232 = vrot.slane %v230, 1
    %v233 = vsel %vm221, %v228, %v232
    %v235 = vshrl.u32 %v200, 16
    %v237 = vshll.u32 %v200, 16
    %v239 = vrot.slane %v237, 1
    %v240 = vor.u32 %v235, %v239
    %v242 = vshll.u32 %v145, 16
    %v244 = vrot.slane %v242, 1
    %v245 = vsel %vm221, %v240, %v244
    %v246 = vshrl.u32 %v144, 16
    %v248 = vor.u32 %v246, %v232
    %v250 = vshll.u32 %v146, 16
    %v252 = vrot.slane %v250, 1
    %v253 = vsel %vm221, %v248, %v252
    %v254 = vshrl.u32 %v145, 16
    %v256 = vor.u32 %v254, %v244
    %v258 = vshll.u32 %v147, 16
    %v260 = vrot.slane %v258, 1
    %v261 = vsel %vm221, %v256, %v260
    %v262 = vshrl.u32 %v146, 16
    %v264 = vor.u32 %v262, %v252
    %v266 = vshll.u32 %v148, 16
    %v268 = vrot.slane %v266, 1
    %v269 = vsel %vm221, %v264, %v268
    %v270 = vshrl.u32 %v147, 16
    %v272 = vor.u32 %v270, %v260
    %v274 = vshll.u32 %v149, 16
    %v276 = vrot.slane %v274, 1
    %v277 = vsel %vm221, %v272, %v276
    %v278 = vshrl.u32 %v148, 16
    %v280 = vor.u32 %v278, %v268
    %v282 = vshll.u32 %v150, 16
    %v284 = vrot.slane %v282, 1
    %v285 = vsel %vm221, %v280, %v284
    %v286 = vshrl.u32 %v149, 16
    %v288 = vor.u32 %v286, %v276
    %v290 = vshll.u32 %v151, 16
    %v292 = vrot.slane %v290, 1
    %v293 = vsel %vm221, %v288, %v292
    %v294 = vshrl.u32 %v150, 16
    %v296 = vor.u32 %v294, %v284
    %v298 = vshll.u32 %v152, 16
    %v300 = vrot.slane %v298, 1
    %v301 = vsel %vm221, %v296, %v300
    %v302 = vshrl.u32 %v151, 16
    %v304 = vor.u32 %v302, %v292
    %v306 = vshll.u32 %v153, 16
    %v308 = vrot.slane %v306, 1
    %v309 = vsel %vm221, %v304, %v308
    %v310 = vshrl.u32 %v152, 16
    %v312 = vor.u32 %v310, %v300
    %v314 = vshll.u32 %v154, 16
    %v316 = vrot.slane %v314, 1
    %v317 = vsel %vm221, %v312, %v316
    %v318 = vshrl.u32 %v153, 16
    %v320 = vor.u32 %v318, %v308
    %v322 = vshll.u32 %v155, 16
    %v324 = vrot.slane %v322, 1
    %v325 = vsel %vm221, %v320, %v324
    %v326 = vshrl.u32 %v154, 16
    %v328 = vor.u32 %v326, %v316
    %v330 = vshll.u32 %v156, 16
    %v332 = vrot.slane %v330, 1
    %v333 = vsel %vm221, %v328, %v332
    %v334 = vshrl.u32 %v155, 16
    %v336 = vor.u32 %v334, %v324
    %v338 = vshll.u32 %v157, 16
    %v340 = vrot.slane %v338, 1
    %v341 = vsel %vm221, %v336, %v340
    %v342 = vshrl.u32 %v156, 16
    %v344 = vor.u32 %v342, %v332
    %v346 = vshll.u32 %v158, 16
    %v348 = vrot.slane %v346, 1
    %v349 = vsel %vm221, %v344, %v348
    %v350 = vshrl.u32 %v157, 16
    %v352 = vor.u32 %v350, %v340
    %v354 = vshll.u32 %v159, 16
    %v356 = vrot.slane %v354, 1
    %v357 = vsel %vm221, %v352, %v356
    %v358 = vshrl.u32 %v158, 16
    %v360 = vor.u32 %v358, %v348
    %v362 = vshll.u32 %v160, 16
    %v364 = vrot.slane %v362, 1
    %v365 = vsel %vm221, %v360, %v364
    %v366 = vshrl.u32 %v159, 16
    %v368 = vor.u32 %v366, %v356
    %v370 = vshll.u32 %v161, 16
    %v372 = vrot.slane %v370, 1
    %v373 = vsel %vm221, %v368, %v372
    %v374 = vshrl.u32 %v160, 16
    %v376 = vor.u32 %v374, %v364
    %v378 = vshll.u32 %v162, 16
    %v380 = vrot.slane %v378, 1
    %v381 = vsel %vm221, %v376, %v380
    %v382 = vshrl.u32 %v161, 16
    %v384 = vor.u32 %v382, %v372
    %v386 = vshll.u32 %v163, 16
    %v388 = vrot.slane %v386, 1
    %v389 = vsel %vm221, %v384, %v388
    %v390 = vshrl.u32 %v162, 16
    %v392 = vor.u32 %v390, %v380
    %v394 = vshll.u32 %v164, 16
    %v396 = vrot.slane %v394, 1
    %v397 = vsel %vm221, %v392, %v396
    %v398 = vshrl.u32 %v163, 16
    %v400 = vor.u32 %v398, %v388
    %v402 = vshll.u32 %v165, 16
    %v404 = vrot.slane %v402, 1
    %v405 = vsel %vm221, %v400, %v404
    %v406 = vshrl.u32 %v164, 16
    %v408 = vor.u32 %v406, %v396
    %v410 = vshll.u32 %v166, 16
    %v412 = vrot.slane %v410, 1
    %v413 = vsel %vm221, %v408, %v412
    %v414 = vshrl.u32 %v165, 16
    %v416 = vor.u32 %v414, %v404
    %v418 = vshll.u32 %v167, 16
    %v420 = vrot.slane %v418, 1
    %v421 = vsel %vm221, %v416, %v420
    %v422 = vshrl.u32 %v166, 16
    %v424 = vor.u32 %v422, %v412
    %v426 = vshll.u32 %v168, 16
    %v428 = vrot.slane %v426, 1
    %v429 = vsel %vm221, %v424, %v428
    %v430 = vshrl.u32 %v167, 16
    %v432 = vor.u32 %v430, %v420
    %v434 = vshll.u32 %v169, 16
    %v436 = vrot.slane %v434, 1
    %v437 = vsel %vm221, %v432, %v436
    %v438 = vshrl.u32 %v168, 16
    %v440 = vor.u32 %v438, %v428
    %v442 = vshll.u32 %v170, 16
    %v444 = vrot.slane %v442, 1
    %v445 = vsel %vm221, %v440, %v444
    %v446 = vshrl.u32 %v169, 16
    %v448 = vor.u32 %v446, %v436
    %v450 = vshll.u32 %v171, 16
    %v452 = vrot.slane %v450, 1
    %v453 = vsel %vm221, %v448, %v452
    %v454 = vshrl.u32 %v170, 16
    %v456 = vor.u32 %v454, %v444
    %v458 = vshll.u32 %v172, 16
    %v460 = vrot.slane %v458, 1
    %v461 = vsel %vm221, %v456, %v460
    %v462 = vshrl.u32 %v171, 16
    %v464 = vor.u32 %v462, %v452
    %v466 = vshll.u32 %v173, 16
    %v468 = vrot.slane %v466, 1
    %v469 = vsel %vm221, %v464, %v468
    %v470 = vshrl.u32 %v172, 16
    %v472 = vor.u32 %v470, %v460
    %v474 = vshll.u32 %v174, 16
    %v476 = vrot.slane %v474, 1
    %v477 = vsel %vm221, %v472, %v476
    %v478 = vshrl.u32 %v173, 16
    %v480 = vor.u32 %v478, %v468
    %v482 = vshll.u32 %v175, 16
    %v484 = vrot.slane %v482, 1
    %v485 = vsel %vm221, %v480, %v484
    %v486 = vshrl.u32 %v174, 16
    %v488 = vor.u32 %v486, %v476
    %v490 = vshll.u32 %v176, 16
    %v492 = vrot.slane %v490, 1
    %v493 = vsel %vm221, %v488, %v492
    %v494 = vshrl.u32 %v175, 16
    %v496 = vor.u32 %v494, %v484
    %v498 = vshll.u32 %v177, 16
    %v500 = vrot.slane %v498, 1
    %v501 = vsel %vm221, %v496, %v500
    %v502 = vshrl.u32 %v176, 16
    %v504 = vor.u32 %v502, %v492
    %v506 = vshll.u32 %v201, 16
    %v508 = vrot.slane %v506, 1
    %v509 = vsel %vm221, %v504, %v508
    %v510 = vshrl.u32 %v177, 16
    %v512 = vor.u32 %v510, %v500
    %v514 = vshll.u32 %v202, 16
    %v516 = vrot.slane %v514, 1
    %v517 = vsel %vm221, %v512, %v516
    %v553 = vunpack.c.l.b16 %v204
    %v554 = vunpack.c.l.b16 %v205
    %v555 = vunpack.c.l.b16 %v206
    %v556 = vunpack.c.l.b16 %v207
    %v557 = vunpack.c.l.b16 %v208
    %v558 = vunpack.c.l.b16 %v209
    %v559 = vunpack.c.l.b16 %v210
    %v560 = vunpack.c.l.b16 %v211
    %v561 = vunpack.c.l.b16 %v212
    %v562 = vunpack.c.l.b16 %v213
    %v563 = vunpack.c.l.b16 %v214
    %v564 = vunpack.c.l.b16 %v215
    %v565 = vunpack.c.l.b16 %v216
    %v566 = vunpack.c.l.b16 %v217
    %v567 = vunpack.c.l.b16 %v218
    %v568 = vunpack.c.l.b16 %v219
    %v569 = vunpack.c.l.b16 %v220
    %v570 = vpack.c.b16 %v554, %v553
    %v571 = vpack.c.b16 %v556, %v555
    %v572 = vpack.c.b16 %v558, %v557
    %v573 = vpack.c.b16 %v560, %v559
    %v574 = vpack.c.b16 %v562, %v561
    %v575 = vpack.c.b16 %v564, %v563
    %v576 = vpack.c.b16 %v566, %v565
    %v577 = vpack.c.b16 %v568, %v567
    %v578 = vpack.c.b16 %v569, %v569
    %vm587 = vcmask 23552
    %v589 = vsel %vm587, %v245, 0
    %v592 = vsel %vm587, %v261, 0
    %v595 = vsel %vm587, %v277, 0
    %v598 = vsel %vm587, %v293, 0
    %v601 = vsel %vm587, %v309, 0
    %v604 = vsel %vm587, %v325, 0
    %v607 = vsel %vm587, %v341, 0
    %v610 = vsel %vm587, %v357, 0
    %v613 = vsel %vm587, %v373, 0
    %v616 = vsel %vm587, %v389, 0
    %v619 = vsel %vm587, %v405, 0
    %v622 = vsel %vm587, %v421, 0
    %v625 = vsel %vm587, %v437, 0
    %v628 = vsel %vm587, %v453, 0
    %v631 = vsel %vm587, %v469, 0
    %v634 = vsel %vm587, %v485, 0
    %v637 = vsel %vm587, %v501, 0
    %v640 = vsel %vm587, %v517, 0
    %vm642 = vcmask 1040384
    %vm643 = vcmask 1041408
    %v644 = vsel %vm642, 4294967295, 65535
    %v645 = vsel %vm643, %v644, 0
    %v647 = vand.u32 %v578, %v645
    %649 = vmatprep.subr.bf16.mxu0 0
    %650 = vmatpush1.bf16.msra.mxu0 %v570
    %651 = vmatprep.subr.bf16.mxu0 0
    %652 = vmatpush1.bf16.msra.mxu0 %v571
    %653 = vmatprep.subr.bf16.mxu0 0
    %654 = vmatpush1.bf16.msra.mxu0 %v572
    %655 = vmatprep.subr.bf16.mxu0 0
    %656 = vmatpush1.bf16.msra.mxu0 %v573
    %657 = vmatprep.subr.bf16.mxu0 0
    %658 = vmatpush1.bf16.msra.mxu0 %v574
    %659 = vmatprep.subr.bf16.mxu0 0
    %660 = vmatpush1.bf16.msra.mxu0 %v575
    %661 = vmatprep.subr.bf16.mxu0 0
    %662 = vmatpush1.bf16.msra.mxu0 %v576
    %663 = vmatprep.subr.bf16.mxu0 0
    %664 = vmatpush1.bf16.msra.mxu0 %v577
    %665 = vmatprep.subr.bf16.mxu0 0
    %666 = vmatpush1.bf16.msra.mxu0 %v647
    %667 = vmatprep.subr.bf16.mxu0 0
    %668 = vmatpush1.bf16.msra.mxu0 0
    %669 = vmatprep.subr.bf16.mxu0 0
    %670 = vmatpush1.bf16.msra.mxu0 0
    %671 = vmatprep.subr.bf16.mxu0 0
    %672 = vmatpush1.bf16.msra.mxu0 0
    %673 = vmatprep.subr.bf16.mxu0 0
    %674 = vmatpush1.bf16.msra.mxu0 0
    %675 = vmatprep.subr.bf16.mxu0 0
    %676 = vmatpush1.bf16.msra.mxu0 0
    %677 = vmatprep.subr.bf16.mxu0 0
    %678 = vmatpush1.bf16.msra.mxu0 0
    %679 = vmatprep.subr.bf16.mxu0 0
    %680 = vmatpush1.bf16.msra.mxu0 0
    %681 = vmatprep.mubr.bf16.mxu0 %v589
    %682 = vmatmul.mubr.bf16.gmra.mrb[0].mxu0 %v233
    %v683 = vpop.f32.mrb[0].mxu0
    %v684 = vadd.f32 0.0, %v683
    %v685 = vpop.f32.mrb[0].mxu0
    %v686 = vpop.f32.mrb[0].mxu0
    %v687 = vadd.f32 0.0, %v686
    %v688 = vpop.f32.mrb[0].mxu0
    %689 = vmatprep.mubr.bf16.mxu0 %v592
    %690 = vmatmul.mubr.bf16.gmra.mrb[0].mxu0 %v253
    %v691 = vpop.f32.mrb[0].mxu0
    %v692 = vadd.f32 0.0, %v691
    %v693 = vpop.f32.mrb[0].mxu0
    %v694 = vpop.f32.mrb[0].mxu0
    %v695 = vadd.f32 0.0, %v694
    %v696 = vpop.f32.mrb[0].mxu0
    %697 = vmatprep.mubr.bf16.mxu0 %v595
    %698 = vmatmul.mubr.bf16.gmra.mrb[0].mxu0 %v269
    %v699 = vpop.f32.mrb[0].mxu0
    %v700 = vadd.f32 0.0, %v699
    %v701 = vpop.f32.mrb[0].mxu0
    %v702 = vpop.f32.mrb[0].mxu0
    %v703 = vadd.f32 0.0, %v702
    %v704 = vpop.f32.mrb[0].mxu0
    %705 = vmatprep.mubr.bf16.mxu0 %v598
    %706 = vmatmul.mubr.bf16.gmra.mrb[0].mxu0 %v285
    %v707 = vpop.f32.mrb[0].mxu0
    %v708 = vadd.f32 0.0, %v707
    %v709 = vpop.f32.mrb[0].mxu0
    %v710 = vpop.f32.mrb[0].mxu0
    %v711 = vadd.f32 0.0, %v710
    %v712 = vpop.f32.mrb[0].mxu0
    %713 = vmatprep.mubr.bf16.mxu0 %v601
    %714 = vmatmul.mubr.bf16.gmra.mrb[0].mxu0 %v301
    %v715 = vpop.f32.mrb[0].mxu0
    %v716 = vadd.f32 0.0, %v715
    %v717 = vpop.f32.mrb[0].mxu0
    %v718 = vpop.f32.mrb[0].mxu0
    %v719 = vadd.f32 0.0, %v718
    %v720 = vpop.f32.mrb[0].mxu0
    %721 = vmatprep.mubr.bf16.mxu0 %v604
    %722 = vmatmul.mubr.bf16.gmra.mrb[0].mxu0 %v317
    %v723 = vpop.f32.mrb[0].mxu0
    %v724 = vadd.f32 0.0, %v723
    %v725 = vpop.f32.mrb[0].mxu0
    %v726 = vpop.f32.mrb[0].mxu0
    %v727 = vadd.f32 0.0, %v726
    %v728 = vpop.f32.mrb[0].mxu0
    %729 = vmatprep.mubr.bf16.mxu0 %v607
    %730 = vmatmul.mubr.bf16.gmra.mrb[0].mxu0 %v333
    %v731 = vpop.f32.mrb[0].mxu0
    %v732 = vadd.f32 0.0, %v731
    %v733 = vpop.f32.mrb[0].mxu0
    %v734 = vpop.f32.mrb[0].mxu0
    %v735 = vadd.f32 0.0, %v734
    %v736 = vpop.f32.mrb[0].mxu0
    %737 = vmatprep.mubr.bf16.mxu0 %v610
    %738 = vmatmul.mubr.bf16.gmra.mrb[0].mxu0 %v349
    %v739 = vpop.f32.mrb[0].mxu0
    %v740 = vadd.f32 0.0, %v739
    %v741 = vpop.f32.mrb[0].mxu0
    %v742 = vpop.f32.mrb[0].mxu0
    %v743 = vadd.f32 0.0, %v742
    %v744 = vpop.f32.mrb[0].mxu0
    %745 = vmatprep.mubr.bf16.mxu0 %v613
    %746 = vmatmul.mubr.bf16.gmra.mrb[0].mxu0 %v365
    %v747 = vpop.f32.mrb[0].mxu0
    %v748 = vadd.f32 0.0, %v747
    %v749 = vpop.f32.mrb[0].mxu0
    %v750 = vpop.f32.mrb[0].mxu0
    %v751 = vadd.f32 0.0, %v750
    %v752 = vpop.f32.mrb[0].mxu0
    %753 = vmatprep.mubr.bf16.mxu0 %v616
    %754 = vmatmul.mubr.bf16.gmra.mrb[0].mxu0 %v381
    %v755 = vpop.f32.mrb[0].mxu0
    %v756 = vadd.f32 0.0, %v755
    %v757 = vpop.f32.mrb[0].mxu0
    %v758 = vpop.f32.mrb[0].mxu0
    %v759 = vadd.f32 0.0, %v758
    %v760 = vpop.f32.mrb[0].mxu0
    %761 = vmatprep.mubr.bf16.mxu0 %v619
    %762 = vmatmul.mubr.bf16.gmra.mrb[0].mxu0 %v397
    %v763 = vpop.f32.mrb[0].mxu0
    %v764 = vadd.f32 0.0, %v763
    %v765 = vpop.f32.mrb[0].mxu0
    %v766 = vpop.f32.mrb[0].mxu0
    %v767 = vadd.f32 0.0, %v766
    %v768 = vpop.f32.mrb[0].mxu0
    %769 = vmatprep.mubr.bf16.mxu0 %v622
    %770 = vmatmul.mubr.bf16.gmra.mrb[0].mxu0 %v413
    %v771 = vpop.f32.mrb[0].mxu0
    %v772 = vadd.f32 0.0, %v771
    %v773 = vpop.f32.mrb[0].mxu0
    %v774 = vpop.f32.mrb[0].mxu0
    %v775 = vadd.f32 0.0, %v774
    %v776 = vpop.f32.mrb[0].mxu0
    %777 = vmatprep.mubr.bf16.mxu0 %v625
    %778 = vmatmul.mubr.bf16.gmra.mrb[0].mxu0 %v429
    %v779 = vpop.f32.mrb[0].mxu0
    %v780 = vadd.f32 0.0, %v779
    %v781 = vpop.f32.mrb[0].mxu0
    %v782 = vpop.f32.mrb[0].mxu0
    %v783 = vadd.f32 0.0, %v782
    %v784 = vpop.f32.mrb[0].mxu0
    %785 = vmatprep.mubr.bf16.mxu0 %v628
    %786 = vmatmul.mubr.bf16.gmra.mrb[0].mxu0 %v445
    %v787 = vpop.f32.mrb[0].mxu0
    %v788 = vadd.f32 0.0, %v787
    %v789 = vpop.f32.mrb[0].mxu0
    %v790 = vpop.f32.mrb[0].mxu0
    %v791 = vadd.f32 0.0, %v790
    %v792 = vpop.f32.mrb[0].mxu0
    %793 = vmatprep.mubr.bf16.mxu0 %v631
    %794 = vmatmul.mubr.bf16.gmra.mrb[0].mxu0 %v461
    %v795 = vpop.f32.mrb[0].mxu0
    %v796 = vadd.f32 0.0, %v795
    %v797 = vpop.f32.mrb[0].mxu0
    %v798 = vpop.f32.mrb[0].mxu0
    %v799 = vadd.f32 0.0, %v798
    %v800 = vpop.f32.mrb[0].mxu0
    %801 = vmatprep.mubr.bf16.mxu0 %v634
    %802 = vmatmul.mubr.bf16.gmra.mrb[0].mxu0 %v477
    %v803 = vpop.f32.mrb[0].mxu0
    %v804 = vadd.f32 0.0, %v803
    %v805 = vpop.f32.mrb[0].mxu0
    %v806 = vpop.f32.mrb[0].mxu0
    %v807 = vadd.f32 0.0, %v806
    %v808 = vpop.f32.mrb[0].mxu0
    %809 = vmatprep.mubr.bf16.mxu0 %v637
    %810 = vmatmul.mubr.bf16.gmra.mrb[0].mxu0 %v493
    %v811 = vpop.f32.mrb[0].mxu0
    %v812 = vadd.f32 0.0, %v811
    %v813 = vpop.f32.mrb[0].mxu0
    %v814 = vpop.f32.mrb[0].mxu0
    %v815 = vadd.f32 0.0, %v814
    %v816 = vpop.f32.mrb[0].mxu0
    %817 = vmatprep.mubr.bf16.mxu0 %v640
    %818 = vmatmul.mubr.bf16.gmra.mrb[0].mxu0 %v509
    %v819 = vpop.f32.mrb[0].mxu0
    %v820 = vadd.f32 0.0, %v819
    %v821 = vpop.f32.mrb[0].mxu0
    %v822 = vpop.f32.mrb[0].mxu0
    %v823 = vadd.f32 0.0, %v822
    %v824 = vpop.f32.mrb[0].mxu0
    %825 = vdwg.mxu0
    %v843 = vunpack.c.l.b16 %v178
    %v844 = vunpack.c.l.b16 %v179
    %v845 = vunpack.c.l.b16 %v180
    %v846 = vunpack.c.l.b16 %v181
    %v847 = vunpack.c.l.b16 %v182
    %v848 = vunpack.c.l.b16 %v183
    %v849 = vunpack.c.l.b16 %v184
    %v850 = vunpack.c.l.b16 %v185
    %v851 = vunpack.c.l.b16 %v186
    %v852 = vunpack.c.l.b16 %v187
    %v853 = vunpack.c.l.b16 %v188
    %v854 = vunpack.c.l.b16 %v189
    %v855 = vunpack.c.l.b16 %v190
    %v856 = vunpack.c.l.b16 %v191
    %v857 = vunpack.c.l.b16 %v192
    %v858 = vunpack.c.l.b16 %v193
    %v859 = vunpack.c.l.b16 %v194
    %v860 = vpack.c.b16 %v844, %v843
    %v861 = vpack.c.b16 %v846, %v845
    %v862 = vpack.c.b16 %v848, %v847
    %v863 = vpack.c.b16 %v850, %v849
    %v864 = vpack.c.b16 %v852, %v851
    %v865 = vpack.c.b16 %v854, %v853
    %v866 = vpack.c.b16 %v856, %v855
    %v867 = vpack.c.b16 %v858, %v857
    %v868 = vpack.c.b16 %v859, %v859
    %v878 = vsel %vm587, %v143, 0
    %v880 = vsel %vm587, %v145, 0
    %v882 = vsel %vm587, %v147, 0
    %v884 = vsel %vm587, %v149, 0
    %v886 = vsel %vm587, %v151, 0
    %v888 = vsel %vm587, %v153, 0
    %v890 = vsel %vm587, %v155, 0
    %v892 = vsel %vm587, %v157, 0
    %v894 = vsel %vm587, %v159, 0
    %v896 = vsel %vm587, %v161, 0
    %v898 = vsel %vm587, %v163, 0
    %v900 = vsel %vm587, %v165, 0
    %v902 = vsel %vm587, %v167, 0
    %v904 = vsel %vm587, %v169, 0
    %v906 = vsel %vm587, %v171, 0
    %v908 = vsel %vm587, %v173, 0
    %v910 = vsel %vm587, %v175, 0
    %v912 = vsel %vm587, %v177, 0
    %v915 = vand.u32 %v868, %v645
    %917 = vmatprep.subr.bf16.mxu0 0
    %918 = vmatpush1.bf16.msra.mxu0 %v860
    %919 = vmatprep.subr.bf16.mxu0 0
    %920 = vmatpush1.bf16.msra.mxu0 %v861
    %921 = vmatprep.subr.bf16.mxu0 0
    %922 = vmatpush1.bf16.msra.mxu0 %v862
    %923 = vmatprep.subr.bf16.mxu0 0
    %924 = vmatpush1.bf16.msra.mxu0 %v863
    %925 = vmatprep.subr.bf16.mxu0 0
    %926 = vmatpush1.bf16.msra.mxu0 %v864
    %927 = vmatprep.subr.bf16.mxu0 0
    %928 = vmatpush1.bf16.msra.mxu0 %v865
    %929 = vmatprep.subr.bf16.mxu0 0
    %930 = vmatpush1.bf16.msra.mxu0 %v866
    %931 = vmatprep.subr.bf16.mxu0 0
    %932 = vmatpush1.bf16.msra.mxu0 %v867
    %933 = vmatprep.subr.bf16.mxu0 0
    %934 = vmatpush1.bf16.msra.mxu0 %v915
    %935 = vmatprep.subr.bf16.mxu0 0
    %936 = vmatpush1.bf16.msra.mxu0 0
    %937 = vmatprep.subr.bf16.mxu0 0
    %938 = vmatpush1.bf16.msra.mxu0 0
    %939 = vmatprep.subr.bf16.mxu0 0
    %940 = vmatpush1.bf16.msra.mxu0 0
    %941 = vmatprep.subr.bf16.mxu0 0
    %942 = vmatpush1.bf16.msra.mxu0 0
    %943 = vmatprep.subr.bf16.mxu0 0
    %944 = vmatpush1.bf16.msra.mxu0 0
    %945 = vmatprep.subr.bf16.mxu0 0
    %946 = vmatpush1.bf16.msra.mxu0 0
    %947 = vmatprep.subr.bf16.mxu0 0
    %948 = vmatpush1.bf16.msra.mxu0 0
    %949 = vmatprep.mubr.bf16.mxu0 %v878
    %950 = vmatmul.mubr.bf16.gmra.mrb[0].mxu0 %v142
    %v951 = vpop.f32.mrb[0].mxu0
    %v952 = vadd.f32 %v684, %v951
    %v953 = vpop.f32.mrb[0].mxu0
    %v954 = vpop.f32.mrb[0].mxu0
    %v955 = vadd.f32 %v687, %v954
    %v956 = vpop.f32.mrb[0].mxu0
    %957 = vmatprep.mubr.bf16.mxu0 %v880
    %958 = vmatmul.mubr.bf16.gmra.mrb[0].mxu0 %v144
    %v959 = vpop.f32.mrb[0].mxu0
    %v960 = vadd.f32 %v692, %v959
    %v961 = vpop.f32.mrb[0].mxu0
    %v962 = vpop.f32.mrb[0].mxu0
    %v963 = vadd.f32 %v695, %v962
    %v964 = vpop.f32.mrb[0].mxu0
    %965 = vmatprep.mubr.bf16.mxu0 %v882
    %966 = vmatmul.mubr.bf16.gmra.mrb[0].mxu0 %v146
    %v967 = vpop.f32.mrb[0].mxu0
    %v968 = vadd.f32 %v700, %v967
    %v969 = vpop.f32.mrb[0].mxu0
    %v970 = vpop.f32.mrb[0].mxu0
    %v971 = vadd.f32 %v703, %v970
    %v972 = vpop.f32.mrb[0].mxu0
    %973 = vmatprep.mubr.bf16.mxu0 %v884
    %974 = vmatmul.mubr.bf16.gmra.mrb[0].mxu0 %v148
    %v975 = vpop.f32.mrb[0].mxu0
    %v976 = vadd.f32 %v708, %v975
    %v977 = vpop.f32.mrb[0].mxu0
    %v978 = vpop.f32.mrb[0].mxu0
    %v979 = vadd.f32 %v711, %v978
    %v980 = vpop.f32.mrb[0].mxu0
    %981 = vmatprep.mubr.bf16.mxu0 %v886
    %982 = vmatmul.mubr.bf16.gmra.mrb[0].mxu0 %v150
    %v983 = vpop.f32.mrb[0].mxu0
    %v984 = vadd.f32 %v716, %v983
    %v985 = vpop.f32.mrb[0].mxu0
    %v986 = vpop.f32.mrb[0].mxu0
    %v987 = vadd.f32 %v719, %v986
    %v988 = vpop.f32.mrb[0].mxu0
    %989 = vmatprep.mubr.bf16.mxu0 %v888
    %990 = vmatmul.mubr.bf16.gmra.mrb[0].mxu0 %v152
    %v991 = vpop.f32.mrb[0].mxu0
    %v992 = vadd.f32 %v724, %v991
    %v993 = vpop.f32.mrb[0].mxu0
    %v994 = vpop.f32.mrb[0].mxu0
    %v995 = vadd.f32 %v727, %v994
    %v996 = vpop.f32.mrb[0].mxu0
    %997 = vmatprep.mubr.bf16.mxu0 %v890
    %998 = vmatmul.mubr.bf16.gmra.mrb[0].mxu0 %v154
    %v999 = vpop.f32.mrb[0].mxu0
    %v1000 = vadd.f32 %v732, %v999
    %v1001 = vpop.f32.mrb[0].mxu0
    %v1002 = vpop.f32.mrb[0].mxu0
    %v1003 = vadd.f32 %v735, %v1002
    %v1004 = vpop.f32.mrb[0].mxu0
    %1005 = vmatprep.mubr.bf16.mxu0 %v892
    %1006 = vmatmul.mubr.bf16.gmra.mrb[0].mxu0 %v156
    %v1007 = vpop.f32.mrb[0].mxu0
    %v1008 = vadd.f32 %v740, %v1007
    %v1009 = vpop.f32.mrb[0].mxu0
    %v1010 = vpop.f32.mrb[0].mxu0
    %v1011 = vadd.f32 %v743, %v1010
    %v1012 = vpop.f32.mrb[0].mxu0
    %1013 = vmatprep.mubr.bf16.mxu0 %v894
    %1014 = vmatmul.mubr.bf16.gmra.mrb[0].mxu0 %v158
    %v1015 = vpop.f32.mrb[0].mxu0
    %v1016 = vadd.f32 %v748, %v1015
    %v1017 = vpop.f32.mrb[0].mxu0
    %v1018 = vpop.f32.mrb[0].mxu0
    %v1019 = vadd.f32 %v751, %v1018
    %v1020 = vpop.f32.mrb[0].mxu0
    %1021 = vmatprep.mubr.bf16.mxu0 %v896
    %1022 = vmatmul.mubr.bf16.gmra.mrb[0].mxu0 %v160
    %v1023 = vpop.f32.mrb[0].mxu0
    %v1024 = vadd.f32 %v756, %v1023
    %v1025 = vpop.f32.mrb[0].mxu0
    %v1026 = vpop.f32.mrb[0].mxu0
    %v1027 = vadd.f32 %v759, %v1026
    %v1028 = vpop.f32.mrb[0].mxu0
    %1029 = vmatprep.mubr.bf16.mxu0 %v898
    %1030 = vmatmul.mubr.bf16.gmra.mrb[0].mxu0 %v162
    %v1031 = vpop.f32.mrb[0].mxu0
    %v1032 = vadd.f32 %v764, %v1031
    %v1033 = vpop.f32.mrb[0].mxu0
    %v1034 = vpop.f32.mrb[0].mxu0
    %v1035 = vadd.f32 %v767, %v1034
    %v1036 = vpop.f32.mrb[0].mxu0
    %1037 = vmatprep.mubr.bf16.mxu0 %v900
    %1038 = vmatmul.mubr.bf16.gmra.mrb[0].mxu0 %v164
    %v1039 = vpop.f32.mrb[0].mxu0
    %v1040 = vadd.f32 %v772, %v1039
    %v1041 = vpop.f32.mrb[0].mxu0
    %v1042 = vpop.f32.mrb[0].mxu0
    %v1043 = vadd.f32 %v775, %v1042
    %v1044 = vpop.f32.mrb[0].mxu0
    %1045 = vmatprep.mubr.bf16.mxu0 %v902
    %1046 = vmatmul.mubr.bf16.gmra.mrb[0].mxu0 %v166
    %v1047 = vpop.f32.mrb[0].mxu0
    %v1048 = vadd.f32 %v780, %v1047
    %v1049 = vpop.f32.mrb[0].mxu0
    %v1050 = vpop.f32.mrb[0].mxu0
    %v1051 = vadd.f32 %v783, %v1050
    %v1052 = vpop.f32.mrb[0].mxu0
    %1053 = vmatprep.mubr.bf16.mxu0 %v904
    %1054 = vmatmul.mubr.bf16.gmra.mrb[0].mxu0 %v168
    %v1055 = vpop.f32.mrb[0].mxu0
    %v1056 = vadd.f32 %v788, %v1055
    %v1057 = vpop.f32.mrb[0].mxu0
    %v1058 = vpop.f32.mrb[0].mxu0
    %v1059 = vadd.f32 %v791, %v1058
    %v1060 = vpop.f32.mrb[0].mxu0
    %1061 = vmatprep.mubr.bf16.mxu0 %v906
    %1062 = vmatmul.mubr.bf16.gmra.mrb[0].mxu0 %v170
    %v1063 = vpop.f32.mrb[0].mxu0
    %v1064 = vadd.f32 %v796, %v1063
    %v1065 = vpop.f32.mrb[0].mxu0
    %v1066 = vpop.f32.mrb[0].mxu0
    %v1067 = vadd.f32 %v799, %v1066
    %v1068 = vpop.f32.mrb[0].mxu0
    %1069 = vmatprep.mubr.bf16.mxu0 %v908
    %1070 = vmatmul.mubr.bf16.gmra.mrb[0].mxu0 %v172
    %v1071 = vpop.f32.mrb[0].mxu0
    %v1072 = vadd.f32 %v804, %v1071
    %v1073 = vpop.f32.mrb[0].mxu0
    %v1074 = vpop.f32.mrb[0].mxu0
    %v1075 = vadd.f32 %v807, %v1074
    %v1076 = vpop.f32.mrb[0].mxu0
    %1077 = vmatprep.mubr.bf16.mxu0 %v910
    %1078 = vmatmul.mubr.bf16.gmra.mrb[0].mxu0 %v174
    %v1079 = vpop.f32.mrb[0].mxu0
    %v1080 = vadd.f32 %v812, %v1079
    %v1081 = vpop.f32.mrb[0].mxu0
    %v1082 = vpop.f32.mrb[0].mxu0
    %v1083 = vadd.f32 %v815, %v1082
    %v1084 = vpop.f32.mrb[0].mxu0
    %1085 = vmatprep.mubr.bf16.mxu0 %v912
    %1086 = vmatmul.mubr.bf16.gmra.mrb[0].mxu0 %v176
    %v1087 = vpop.f32.mrb[0].mxu0
    %v1088 = vadd.f32 %v820, %v1087
    %v1089 = vpop.f32.mrb[0].mxu0
    %v1090 = vpop.f32.mrb[0].mxu0
    %v1091 = vadd.f32 %v823, %v1090
    %v1092 = vpop.f32.mrb[0].mxu0
    %1093 = vdwg.mxu0
    %v1094 = vld [vmem:[%s69] sm:$0xfc]
    %v1095 = vld [vmem:[%s69 + $0x8] sm:$0xfc]
    %v1096 = vld [vmem:[%s69 + $0x240] sm:$0x3]
    %v1097 = vld [vmem:[%s69 + $0x248] sm:$0x3]
    %v1098 = vpack.c.bf16 %v72, %v1094
    %v1099 = vpack.c.bf16 %v73, %v1095
    %v1100 = vpack.c.bf16 %v1096, %v1096
    %v1101 = vpack.c.bf16 %v1097, %v1097
    %s1102 = scalar_lea.vmem %s1, 136
    %v1103 = vld [vmem:[%s1102] sm:$0xf]
    %v1104 = vld [vmem:[%s1102 + $0x4] sm:$0xf]
    %v1105 = vld [vmem:[%s1102 + $0x8] sm:$0xf]
    %v1106 = vld [vmem:[%s1102 + $0xc] sm:$0xf]
    %v1107 = vld [vmem:[%s1102 + $0x10] sm:$0xf]
    %v1108 = vld [vmem:[%s1102 + $0x14] sm:$0xf]
    %v1109 = vld [vmem:[%s1102 + $0x18] sm:$0xf]
    %v1110 = vld [vmem:[%s1102 + $0x1c] sm:$0xf]
    %v1111 = vld [vmem:[%s1102 + $0x20] sm:$0xf]
    %v1112 = vld [vmem:[%s1102 + $0x24] sm:$0xf]
    %v1113 = vld [vmem:[%s1102 + $0x28] sm:$0xf]
    %v1114 = vld [vmem:[%s1102 + $0x2c] sm:$0xf]
    %v1115 = vld [vmem:[%s1102 + $0x30] sm:$0xf]
    %v1116 = vld [vmem:[%s1102 + $0x34] sm:$0xf]
    %v1117 = vld [vmem:[%s1102 + $0x38] sm:$0xf]
    %v1118 = vld [vmem:[%s1102 + $0x3c] sm:$0xf]
    %v1119 = vld [vmem:[%s1102 + $0x40] sm:$0x3]
    %vm1158 = vcmask 1046528
    %v1159 = vrot.slane %v1098, 1
    %v1160 = vrot.slane %v144, 1
    %v1161 = vsel %vm1158, %v1159, %v1160
    %v1162 = vrot.slane %v1099, 1
    %v1163 = vrot.slane %v145, 1
    %v1164 = vsel %vm1158, %v1162, %v1163
    %v1165 = vrot.slane %v146, 1
    %v1166 = vsel %vm1158, %v1160, %v1165
    %v1167 = vrot.slane %v147, 1
    %v1168 = vsel %vm1158, %v1163, %v1167
    %v1169 = vrot.slane %v148, 1
    %v1170 = vsel %vm1158, %v1165, %v1169
    %v1171 = vrot.slane %v149, 1
    %v1172 = vsel %vm1158, %v1167, %v1171
    %v1173 = vrot.slane %v150, 1
    %v1174 = vsel %vm1158, %v1169, %v1173
    %v1175 = vrot.slane %v151, 1
    %v1176 = vsel %vm1158, %v1171, %v1175
    %v1177 = vrot.slane %v152, 1
    %v1178 = vsel %vm1158, %v1173, %v1177
    %v1179 = vrot.slane %v153, 1
    %v1180 = vsel %vm1158, %v1175, %v1179
    %v1181 = vrot.slane %v154, 1
    %v1182 = vsel %vm1158, %v1177, %v1181
    %v1183 = vrot.slane %v155, 1
    %v1184 = vsel %vm1158, %v1179, %v1183
    %v1185 = vrot.slane %v156, 1
    %v1186 = vsel %vm1158, %v1181, %v1185
    %v1187 = vrot.slane %v157, 1
    %v1188 = vsel %vm1158, %v1183, %v1187
    %v1189 = vrot.slane %v158, 1
    %v1190 = vsel %vm1158, %v1185, %v1189
    %v1191 = vrot.slane %v159, 1
    %v1192 = vsel %vm1158, %v1187, %v1191
    %v1193 = vrot.slane %v160, 1
    %v1194 = vsel %vm1158, %v1189, %v1193
    %v1195 = vrot.slane %v161, 1
    %v1196 = vsel %vm1158, %v1191, %v1195
    %v1197 = vrot.slane %v162, 1
    %v1198 = vsel %vm1158, %v1193, %v1197
    %v1199 = vrot.slane %v163, 1
    %v1200 = vsel %vm1158, %v1195, %v1199
    %v1201 = vrot.slane %v164, 1
    %v1202 = vsel %vm1158, %v1197, %v1201
    %v1203 = vrot.slane %v165, 1
    %v1204 = vsel %vm1158, %v1199, %v1203
    %v1205 = vrot.slane %v166, 1
    %v1206 = vsel %vm1158, %v1201, %v1205
    %v1207 = vrot.slane %v167, 1
    %v1208 = vsel %vm1158, %v1203, %v1207
    %v1209 = vrot.slane %v168, 1
    %v1210 = vsel %vm1158, %v1205, %v1209
    %v1211 = vrot.slane %v169, 1
    %v1212 = vsel %vm1158, %v1207, %v1211
    %v1213 = vrot.slane %v170, 1
    %v1214 = vsel %vm1158, %v1209, %v1213
    %v1215 = vrot.slane %v171, 1
    %v1216 = vsel %vm1158, %v1211, %v1215
    %v1217 = vrot.slane %v172, 1
    %v1218 = vsel %vm1158, %v1213, %v1217
    %v1219 = vrot.slane %v173, 1
    %v1220 = vsel %vm1158, %v1215, %v1219
    %v1221 = vrot.slane %v174, 1
    %v1222 = vsel %vm1158, %v1217, %v1221
    %v1223 = vrot.slane %v175, 1
    %v1224 = vsel %vm1158, %v1219, %v1223
    %v1225 = vrot.slane %v176, 1
    %v1226 = vsel %vm1158, %v1221, %v1225
    %v1227 = vrot.slane %v177, 1
    %v1228 = vsel %vm1158, %v1223, %v1227
    %v1229 = vrot.slane %v1100, 1
    %v1230 = vsel %vm1158, %v1225, %v1229
    %v1231 = vrot.slane %v1101, 1
    %v1232 = vsel %vm1158, %v1227, %v1231
    %v1268 = vunpack.c.l.b16 %v1103
    %v1269 = vunpack.c.l.b16 %v1104
    %v1270 = vunpack.c.l.b16 %v1105
    %v1271 = vunpack.c.l.b16 %v1106
    %v1272 = vunpack.c.l.b16 %v1107
    %v1273 = vunpack.c.l.b16 %v1108
    %v1274 = vunpack.c.l.b16 %v1109
    %v1275 = vunpack.c.l.b16 %v1110
    %v1276 = vunpack.c.l.b16 %v1111
    %v1277 = vunpack.c.l.b16 %v1112
    %v1278 = vunpack.c.l.b16 %v1113
    %v1279 = vunpack.c.l.b16 %v1114
    %v1280 = vunpack.c.l.b16 %v1115
    %v1281 = vunpack.c.l.b16 %v1116
    %v1282 = vunpack.c.l.b16 %v1117
    %v1283 = vunpack.c.l.b16 %v1118
    %v1284 = vunpack.c.l.b16 %v1119
    %v1285 = vpack.c.b16 %v1269, %v1268
    %v1286 = vpack.c.b16 %v1271, %v1270
    %v1287 = vpack.c.b16 %v1273, %v1272
    %v1288 = vpack.c.b16 %v1275, %v1274
    %v1289 = vpack.c.b16 %v1277, %v1276
    %v1290 = vpack.c.b16 %v1279, %v1278
    %v1291 = vpack.c.b16 %v1281, %v1280
    %v1292 = vpack.c.b16 %v1283, %v1282
    %v1293 = vpack.c.b16 %v1284, %v1284
    %v1303 = vsel %vm587, %v1164, 0
    %v1306 = vsel %vm587, %v1168, 0
    %v1309 = vsel %vm587, %v1172, 0
    %v1312 = vsel %vm587, %v1176, 0
    %v1315 = vsel %vm587, %v1180, 0
    %v1318 = vsel %vm587, %v1184, 0
    %v1321 = vsel %vm587, %v1188, 0
    %v1324 = vsel %vm587, %v1192, 0
    %v1327 = vsel %vm587, %v1196, 0
    %v1330 = vsel %vm587, %v1200, 0
    %v1333 = vsel %vm587, %v1204, 0
    %v1336 = vsel %vm587, %v1208, 0
    %v1339 = vsel %vm587, %v1212, 0
    %v1342 = vsel %vm587, %v1216, 0
    %v1345 = vsel %vm587, %v1220, 0
    %v1348 = vsel %vm587, %v1224, 0
    %v1351 = vsel %vm587, %v1228, 0
    %v1354 = vsel %vm587, %v1232, 0
    %v1357 = vand.u32 %v1293, %v645
    %1359 = vmatprep.subr.bf16.mxu0 0
    %1360 = vmatpush1.bf16.msra.mxu0 %v1285
    %1361 = vmatprep.subr.bf16.mxu0 0
    %1362 = vmatpush1.bf16.msra.mxu0 %v1286
    %1363 = vmatprep.subr.bf16.mxu0 0
    %1364 = vmatpush1.bf16.msra.mxu0 %v1287
    %1365 = vmatprep.subr.bf16.mxu0 0
    %1366 = vmatpush1.bf16.msra.mxu0 %v1288
    %1367 = vmatprep.subr.bf16.mxu0 0
    %1368 = vmatpush1.bf16.msra.mxu0 %v1289
    %1369 = vmatprep.subr.bf16.mxu0 0
    %1370 = vmatpush1.bf16.msra.mxu0 %v1290
    %1371 = vmatprep.subr.bf16.mxu0 0
    %1372 = vmatpush1.bf16.msra.mxu0 %v1291
    %1373 = vmatprep.subr.bf16.mxu0 0
    %1374 = vmatpush1.bf16.msra.mxu0 %v1292
    %1375 = vmatprep.subr.bf16.mxu0 0
    %1376 = vmatpush1.bf16.msra.mxu0 %v1357
    %1377 = vmatprep.subr.bf16.mxu0 0
    %1378 = vmatpush1.bf16.msra.mxu0 0
    %1379 = vmatprep.subr.bf16.mxu0 0
    %1380 = vmatpush1.bf16.msra.mxu0 0
    %1381 = vmatprep.subr.bf16.mxu0 0
    %1382 = vmatpush1.bf16.msra.mxu0 0
    %1383 = vmatprep.subr.bf16.mxu0 0
    %1384 = vmatpush1.bf16.msra.mxu0 0
    %1385 = vmatprep.subr.bf16.mxu0 0
    %1386 = vmatpush1.bf16.msra.mxu0 0
    %1387 = vmatprep.subr.bf16.mxu0 0
    %1388 = vmatpush1.bf16.msra.mxu0 0
    %1389 = vmatprep.subr.bf16.mxu0 0
    %1390 = vmatpush1.bf16.msra.mxu0 0
    %1391 = vmatprep.mubr.bf16.mxu0 %v1303
    %1392 = vmatmul.mubr.bf16.gmra.mrb[0].mxu0 %v1161
    %v1393 = vpop.f32.mrb[0].mxu0
    %v1394 = vadd.f32 0.0, %v1393
    %v1395 = vpop.f32.mrb[0].mxu0
    %v1396 = vpop.f32.mrb[0].mxu0
    %v1397 = vadd.f32 0.0, %v1396
    %v1398 = vpop.f32.mrb[0].mxu0
    %1399 = vmatprep.mubr.bf16.mxu0 %v1306
    %1400 = vmatmul.mubr.bf16.gmra.mrb[0].mxu0 %v1166
    %v1401 = vpop.f32.mrb[0].mxu0
    %v1402 = vadd.f32 0.0, %v1401
    %v1403 = vpop.f32.mrb[0].mxu0
    %v1404 = vpop.f32.mrb[0].mxu0
    %v1405 = vadd.f32 0.0, %v1404
    %v1406 = vpop.f32.mrb[0].mxu0
    %1407 = vmatprep.mubr.bf16.mxu0 %v1309
    %1408 = vmatmul.mubr.bf16.gmra.mrb[0].mxu0 %v1170
    %v1409 = vpop.f32.mrb[0].mxu0
    %v1410 = vadd.f32 0.0, %v1409
    %v1411 = vpop.f32.mrb[0].mxu0
    %v1412 = vpop.f32.mrb[0].mxu0
    %v1413 = vadd.f32 0.0, %v1412
    %v1414 = vpop.f32.mrb[0].mxu0
    %1415 = vmatprep.mubr.bf16.mxu0 %v1312
    %1416 = vmatmul.mubr.bf16.gmra.mrb[0].mxu0 %v1174
    %v1417 = vpop.f32.mrb[0].mxu0
    %v1418 = vadd.f32 0.0, %v1417
    %v1419 = vpop.f32.mrb[0].mxu0
    %v1420 = vpop.f32.mrb[0].mxu0
    %v1421 = vadd.f32 0.0, %v1420
    %v1422 = vpop.f32.mrb[0].mxu0
    %1423 = vmatprep.mubr.bf16.mxu0 %v1315
    %1424 = vmatmul.mubr.bf16.gmra.mrb[0].mxu0 %v1178
    %v1425 = vpop.f32.mrb[0].mxu0
    %v1426 = vadd.f32 0.0, %v1425
    %v1427 = vpop.f32.mrb[0].mxu0
    %v1428 = vpop.f32.mrb[0].mxu0
    %v1429 = vadd.f32 0.0, %v1428
    %v1430 = vpop.f32.mrb[0].mxu0
    %1431 = vmatprep.mubr.bf16.mxu0 %v1318
    %1432 = vmatmul.mubr.bf16.gmra.mrb[0].mxu0 %v1182
    %v1433 = vpop.f32.mrb[0].mxu0
    %v1434 = vadd.f32 0.0, %v1433
    %v1435 = vpop.f32.mrb[0].mxu0
    %v1436 = vpop.f32.mrb[0].mxu0
    %v1437 = vadd.f32 0.0, %v1436
    %v1438 = vpop.f32.mrb[0].mxu0
    %1439 = vmatprep.mubr.bf16.mxu0 %v1321
    %1440 = vmatmul.mubr.bf16.gmra.mrb[0].mxu0 %v1186
    %v1441 = vpop.f32.mrb[0].mxu0
    %v1442 = vadd.f32 0.0, %v1441
    %v1443 = vpop.f32.mrb[0].mxu0
    %v1444 = vpop.f32.mrb[0].mxu0
    %v1445 = vadd.f32 0.0, %v1444
    %v1446 = vpop.f32.mrb[0].mxu0
    %1447 = vmatprep.mubr.bf16.mxu0 %v1324
    %1448 = vmatmul.mubr.bf16.gmra.mrb[0].mxu0 %v1190
    %v1449 = vpop.f32.mrb[0].mxu0
    %v1450 = vadd.f32 0.0, %v1449
    %v1451 = vpop.f32.mrb[0].mxu0
    %v1452 = vpop.f32.mrb[0].mxu0
    %v1453 = vadd.f32 0.0, %v1452
    %v1454 = vpop.f32.mrb[0].mxu0
    %1455 = vmatprep.mubr.bf16.mxu0 %v1327
    %1456 = vmatmul.mubr.bf16.gmra.mrb[0].mxu0 %v1194
    %v1457 = vpop.f32.mrb[0].mxu0
    %v1458 = vadd.f32 0.0, %v1457
    %v1459 = vpop.f32.mrb[0].mxu0
    %v1460 = vpop.f32.mrb[0].mxu0
    %v1461 = vadd.f32 0.0, %v1460
    %v1462 = vpop.f32.mrb[0].mxu0
    %1463 = vmatprep.mubr.bf16.mxu0 %v1330
    %1464 = vmatmul.mubr.bf16.gmra.mrb[0].mxu0 %v1198
    %v1465 = vpop.f32.mrb[0].mxu0
    %v1466 = vadd.f32 0.0, %v1465
    %v1467 = vpop.f32.mrb[0].mxu0
    %v1468 = vpop.f32.mrb[0].mxu0
    %v1469 = vadd.f32 0.0, %v1468
    %v1470 = vpop.f32.mrb[0].mxu0
    %1471 = vmatprep.mubr.bf16.mxu0 %v1333
    %1472 = vmatmul.mubr.bf16.gmra.mrb[0].mxu0 %v1202
    %v1473 = vpop.f32.mrb[0].mxu0
    %v1474 = vadd.f32 0.0, %v1473
    %v1475 = vpop.f32.mrb[0].mxu0
    %v1476 = vpop.f32.mrb[0].mxu0
    %v1477 = vadd.f32 0.0, %v1476
    %v1478 = vpop.f32.mrb[0].mxu0
    %1479 = vmatprep.mubr.bf16.mxu0 %v1336
    %1480 = vmatmul.mubr.bf16.gmra.mrb[0].mxu0 %v1206
    %v1481 = vpop.f32.mrb[0].mxu0
    %v1482 = vadd.f32 0.0, %v1481
    %v1483 = vpop.f32.mrb[0].mxu0
    %v1484 = vpop.f32.mrb[0].mxu0
    %v1485 = vadd.f32 0.0, %v1484
    %v1486 = vpop.f32.mrb[0].mxu0
    %1487 = vmatprep.mubr.bf16.mxu0 %v1339
    %1488 = vmatmul.mubr.bf16.gmra.mrb[0].mxu0 %v1210
    %v1489 = vpop.f32.mrb[0].mxu0
    %v1490 = vadd.f32 0.0, %v1489
    %v1491 = vpop.f32.mrb[0].mxu0
    %v1492 = vpop.f32.mrb[0].mxu0
    %v1493 = vadd.f32 0.0, %v1492
    %v1494 = vpop.f32.mrb[0].mxu0
    %1495 = vmatprep.mubr.bf16.mxu0 %v1342
    %1496 = vmatmul.mubr.bf16.gmra.mrb[0].mxu0 %v1214
    %v1497 = vpop.f32.mrb[0].mxu0
    %v1498 = vadd.f32 0.0, %v1497
    %v1499 = vpop.f32.mrb[0].mxu0
    %v1500 = vpop.f32.mrb[0].mxu0
    %v1501 = vadd.f32 0.0, %v1500
    %v1502 = vpop.f32.mrb[0].mxu0
    %1503 = vmatprep.mubr.bf16.mxu0 %v1345
    %1504 = vmatmul.mubr.bf16.gmra.mrb[0].mxu0 %v1218
    %v1505 = vpop.f32.mrb[0].mxu0
    %v1506 = vadd.f32 0.0, %v1505
    %v1507 = vpop.f32.mrb[0].mxu0
    %v1508 = vpop.f32.mrb[0].mxu0
    %v1509 = vadd.f32 0.0, %v1508
    %v1510 = vpop.f32.mrb[0].mxu0
    %1511 = vmatprep.mubr.bf16.mxu0 %v1348
    %1512 = vmatmul.mubr.bf16.gmra.mrb[0].mxu0 %v1222
    %v1513 = vpop.f32.mrb[0].mxu0
    %v1514 = vadd.f32 0.0, %v1513
    %v1515 = vpop.f32.mrb[0].mxu0
    %v1516 = vpop.f32.mrb[0].mxu0
    %v1517 = vadd.f32 0.0, %v1516
    %v1518 = vpop.f32.mrb[0].mxu0
    %1519 = vmatprep.mubr.bf16.mxu0 %v1351
    %1520 = vmatmul.mubr.bf16.gmra.mrb[0].mxu0 %v1226
    %v1521 = vpop.f32.mrb[0].mxu0
    %v1522 = vadd.f32 0.0, %v1521
    %v1523 = vpop.f32.mrb[0].mxu0
    %v1524 = vpop.f32.mrb[0].mxu0
    %v1525 = vadd.f32 0.0, %v1524
    %v1526 = vpop.f32.mrb[0].mxu0
    %1527 = vmatprep.mubr.bf16.mxu0 %v1354
    %1528 = vmatmul.mubr.bf16.gmra.mrb[0].mxu0 %v1230
    %v1529 = vpop.f32.mrb[0].mxu0
    %v1530 = vadd.f32 0.0, %v1529
    %v1531 = vpop.f32.mrb[0].mxu0
    %v1532 = vpop.f32.mrb[0].mxu0
    %v1533 = vadd.f32 0.0, %v1532
    %v1534 = vpop.f32.mrb[0].mxu0
    %1535 = vdwg.mxu0
    %v1536 = vadd.f32 %v952, %v1394
    %v1537 = vadd.f32 %v955, %v1397
    %v1538 = vadd.f32 %v960, %v1402
    %v1539 = vadd.f32 %v963, %v1405
    %v1540 = vadd.f32 %v968, %v1410
    %v1541 = vadd.f32 %v971, %v1413
    %v1542 = vadd.f32 %v976, %v1418
    %v1543 = vadd.f32 %v979, %v1421
    %v1544 = vadd.f32 %v984, %v1426
    %v1545 = vadd.f32 %v987, %v1429
    %v1546 = vadd.f32 %v992, %v1434
    %v1547 = vadd.f32 %v995, %v1437
    %v1548 = vadd.f32 %v1000, %v1442
    %v1549 = vadd.f32 %v1003, %v1445
    %v1550 = vadd.f32 %v1008, %v1450
    %v1551 = vadd.f32 %v1011, %v1453
    %v1552 = vadd.f32 %v1016, %v1458
    %v1553 = vadd.f32 %v1019, %v1461
    %v1554 = vadd.f32 %v1024, %v1466
    %v1555 = vadd.f32 %v1027, %v1469
    %v1556 = vadd.f32 %v1032, %v1474
    %v1557 = vadd.f32 %v1035, %v1477
    %v1558 = vadd.f32 %v1040, %v1482
    %v1559 = vadd.f32 %v1043, %v1485
    %v1560 = vadd.f32 %v1048, %v1490
    %v1561 = vadd.f32 %v1051, %v1493
    %v1562 = vadd.f32 %v1056, %v1498
    %v1563 = vadd.f32 %v1059, %v1501
    %v1564 = vadd.f32 %v1064, %v1506
    %v1565 = vadd.f32 %v1067, %v1509
    %v1566 = vadd.f32 %v1072, %v1514
    %v1567 = vadd.f32 %v1075, %v1517
    %v1568 = vadd.f32 %v1080, %v1522
    %v1569 = vadd.f32 %v1083, %v1525
    %v1570 = vadd.f32 %v1088, %v1530
    %v1571 = vadd.f32 %v1091, %v1533
    %v1572 = vld [vmem:[%s69 + $0x20] sm:$0xfc]
    %v1573 = vld [vmem:[%s69 + $0x28] sm:$0xfc]
    %v1574 = vld [vmem:[%s69 + $0x30] sm:$0xff]
    %v1575 = vld [vmem:[%s69 + $0x38] sm:$0xff]
    %v1576 = vld [vmem:[%s69 + $0x40] sm:$0xff]
    %v1577 = vld [vmem:[%s69 + $0x48] sm:$0xff]
    %v1578 = vld [vmem:[%s69 + $0x50] sm:$0xff]
    %v1579 = vld [vmem:[%s69 + $0x58] sm:$0xff]
    %v1580 = vld [vmem:[%s69 + $0x60] sm:$0xff]
    %v1581 = vld [vmem:[%s69 + $0x68] sm:$0xff]
    %v1582 = vld [vmem:[%s69 + $0x70] sm:$0xff]
    %v1583 = vld [vmem:[%s69 + $0x78] sm:$0xff]
    %v1584 = vld [vmem:[%s69 + $0x80] sm:$0xff]
    %v1585 = vld [vmem:[%s69 + $0x88] sm:$0xff]
    %v1586 = vld [vmem:[%s69 + $0x90] sm:$0xff]
    %v1587 = vld [vmem:[%s69 + $0x98] sm:$0xff]
    %v1588 = vld [vmem:[%s69 + $0xa0] sm:$0xff]
    %v1589 = vld [vmem:[%s69 + $0xa8] sm:$0xff]
    %v1590 = vld [vmem:[%s69 + $0xb0] sm:$0xff]
    %v1591 = vld [vmem:[%s69 + $0xb8] sm:$0xff]
    %v1592 = vld [vmem:[%s69 + $0xc0] sm:$0xff]
    %v1593 = vld [vmem:[%s69 + $0xc8] sm:$0xff]
    %v1594 = vld [vmem:[%s69 + $0xd0] sm:$0xff]
    %v1595 = vld [vmem:[%s69 + $0xd8] sm:$0xff]
    %v1596 = vld [vmem:[%s69 + $0xe0] sm:$0xff]
    %v1597 = vld [vmem:[%s69 + $0xe8] sm:$0xff]
    %v1598 = vld [vmem:[%s69 + $0xf0] sm:$0xff]
    %v1599 = vld [vmem:[%s69 + $0xf8] sm:$0xff]
    %v1600 = vld [vmem:[%s69 + $0x100] sm:$0xff]
    %v1601 = vld [vmem:[%s69 + $0x108] sm:$0xff]
    %v1602 = vld [vmem:[%s69 + $0x110] sm:$0xff]
    %v1603 = vld [vmem:[%s69 + $0x118] sm:$0xff]
    %v1604 = vld [vmem:[%s69 + $0x120] sm:$0xff]
    %v1605 = vld [vmem:[%s69 + $0x128] sm:$0xff]
    %v1606 = vld [vmem:[%s69 + $0x130] sm:$0xff]
    %v1607 = vld [vmem:[%s69 + $0x138] sm:$0xff]
    %v1608 = vld [vmem:[%s69 + $0x140] sm:$0xff]
    %v1609 = vld [vmem:[%s69 + $0x148] sm:$0xff]
    %v1610 = vld [vmem:[%s69 + $0x150] sm:$0xff]
    %v1611 = vld [vmem:[%s69 + $0x158] sm:$0xff]
    %v1612 = vld [vmem:[%s69 + $0x160] sm:$0xff]
    %v1613 = vld [vmem:[%s69 + $0x168] sm:$0xff]
    %v1614 = vld [vmem:[%s69 + $0x170] sm:$0xff]
    %v1615 = vld [vmem:[%s69 + $0x178] sm:$0xff]
    %v1616 = vld [vmem:[%s69 + $0x180] sm:$0xff]
    %v1617 = vld [vmem:[%s69 + $0x188] sm:$0xff]
    %v1618 = vld [vmem:[%s69 + $0x190] sm:$0xff]
    %v1619 = vld [vmem:[%s69 + $0x198] sm:$0xff]
    %v1620 = vld [vmem:[%s69 + $0x1a0] sm:$0xff]
    %v1621 = vld [vmem:[%s69 + $0x1a8] sm:$0xff]
    %v1622 = vld [vmem:[%s69 + $0x1b0] sm:$0xff]
    %v1623 = vld [vmem:[%s69 + $0x1b8] sm:$0xff]
    %v1624 = vld [vmem:[%s69 + $0x1c0] sm:$0xff]
    %v1625 = vld [vmem:[%s69 + $0x1c8] sm:$0xff]
    %v1626 = vld [vmem:[%s69 + $0x1d0] sm:$0xff]
    %v1627 = vld [vmem:[%s69 + $0x1d8] sm:$0xff]
    %v1628 = vld [vmem:[%s69 + $0x1e0] sm:$0xff]
    %v1629 = vld [vmem:[%s69 + $0x1e8] sm:$0xff]
    %v1630 = vld [vmem:[%s69 + $0x1f0] sm:$0xff]
    %v1631 = vld [vmem:[%s69 + $0x1f8] sm:$0xff]
    %v1632 = vld [vmem:[%s69 + $0x200] sm:$0xff]
    %v1633 = vld [vmem:[%s69 + $0x208] sm:$0xff]
    %v1634 = vld [vmem:[%s69 + $0x210] sm:$0xff]
    %v1635 = vld [vmem:[%s69 + $0x218] sm:$0xff]
    %v1636 = vld [vmem:[%s69 + $0x220] sm:$0xff]
    %v1637 = vld [vmem:[%s69 + $0x228] sm:$0xff]
    %v1638 = vld [vmem:[%s69 + $0x230] sm:$0xff]
    %v1639 = vld [vmem:[%s69 + $0x238] sm:$0xff]
    %v1640 = vld [vmem:[%s69 + $0x240] sm:$0xff]
    %v1641 = vld [vmem:[%s69 + $0x248] sm:$0xff]
    %v1642 = vld [vmem:[%s69 + $0x250] sm:$0xff]
    %v1643 = vld [vmem:[%s69 + $0x258] sm:$0xff]
    %v1644 = vld [vmem:[%s69 + $0x260] sm:$0x3]
    %v1645 = vld [vmem:[%s69 + $0x268] sm:$0x3]
    %v1646 = vpack.c.bf16 %v1574, %v1572
    %v1647 = vpack.c.bf16 %v1575, %v1573
    %v1648 = vpack.c.bf16 %v1578, %v1576
    %v1649 = vpack.c.bf16 %v1579, %v1577
    %v1650 = vpack.c.bf16 %v1582, %v1580
    %v1651 = vpack.c.bf16 %v1583, %v1581
    %v1652 = vpack.c.bf16 %v1586, %v1584
    %v1653 = vpack.c.bf16 %v1587, %v1585
    %v1654 = vpack.c.bf16 %v1590, %v1588
    %v1655 = vpack.c.bf16 %v1591, %v1589
    %v1656 = vpack.c.bf16 %v1594, %v1592
    %v1657 = vpack.c.bf16 %v1595, %v1593
    %v1658 = vpack.c.bf16 %v1598, %v1596
    %v1659 = vpack.c.bf16 %v1599, %v1597
    %v1660 = vpack.c.bf16 %v1602, %v1600
    %v1661 = vpack.c.bf16 %v1603, %v1601
    %v1662 = vpack.c.bf16 %v1606, %v1604
    %v1663 = vpack.c.bf16 %v1607, %v1605
    %v1664 = vpack.c.bf16 %v1610, %v1608
    %v1665 = vpack.c.bf16 %v1611, %v1609
    %v1666 = vpack.c.bf16 %v1614, %v1612
    %v1667 = vpack.c.bf16 %v1615, %v1613
    %v1668 = vpack.c.bf16 %v1618, %v1616
    %v1669 = vpack.c.bf16 %v1619, %v1617
    %v1670 = vpack.c.bf16 %v1622, %v1620
    %v1671 = vpack.c.bf16 %v1623, %v1621
    %v1672 = vpack.c.bf16 %v1626, %v1624
    %v1673 = vpack.c.bf16 %v1627, %v1625
    %v1674 = vpack.c.bf16 %v1630, %v1628
    %v1675 = vpack.c.bf16 %v1631, %v1629
    %v1676 = vpack.c.bf16 %v1634, %v1632
    %v1677 = vpack.c.bf16 %v1635, %v1633
    %v1678 = vpack.c.bf16 %v1638, %v1636
    %v1679 = vpack.c.bf16 %v1639, %v1637
    %v1680 = vpack.c.bf16 %v1642, %v1640
    %v1681 = vpack.c.bf16 %v1643, %v1641
    %v1682 = vpack.c.bf16 %v1644, %v1644
    %v1683 = vpack.c.bf16 %v1645, %v1645
    %s1684 = scalar_lea.vmem %s1, 204
    %v1685 = vld [vmem:[%s1684] sm:$0xf]
    %v1686 = vld [vmem:[%s1684 + $0x4] sm:$0xf]
    %v1687 = vld [vmem:[%s1684 + $0x8] sm:$0xf]
    %v1688 = vld [vmem:[%s1684 + $0xc] sm:$0xf]
    %v1689 = vld [vmem:[%s1684 + $0x10] sm:$0xf]
    %v1690 = vld [vmem:[%s1684 + $0x14] sm:$0xf]
    %v1691 = vld [vmem:[%s1684 + $0x18] sm:$0xf]
    %v1692 = vld [vmem:[%s1684 + $0x1c] sm:$0xf]
    %v1693 = vld [vmem:[%s1684 + $0x20] sm:$0xf]
    %v1694 = vld [vmem:[%s1684 + $0x24] sm:$0xf]
    %v1695 = vld [vmem:[%s1684 + $0x28] sm:$0xf]
    %v1696 = vld [vmem:[%s1684 + $0x2c] sm:$0xf]
    %v1697 = vld [vmem:[%s1684 + $0x30] sm:$0xf]
    %v1698 = vld [vmem:[%s1684 + $0x34] sm:$0xf]
    %v1699 = vld [vmem:[%s1684 + $0x38] sm:$0xf]
    %v1700 = vld [vmem:[%s1684 + $0x3c] sm:$0xf]
    %v1701 = vld [vmem:[%s1684 + $0x40] sm:$0x3]
    %v1740 = vrot.slane %v1646, 1
    %v1741 = vrot.slane %v1648, 1
    %v1742 = vsel %vm1158, %v1740, %v1741
    %v1743 = vrot.slane %v1647, 1
    %v1744 = vrot.slane %v1649, 1
    %v1745 = vsel %vm1158, %v1743, %v1744
    %v1746 = vrot.slane %v1650, 1
    %v1747 = vsel %vm1158, %v1741, %v1746
    %v1748 = vrot.slane %v1651, 1
    %v1749 = vsel %vm1158, %v1744, %v1748
    %v1750 = vrot.slane %v1652, 1
    %v1751 = vsel %vm1158, %v1746, %v1750
    %v1752 = vrot.slane %v1653, 1
    %v1753 = vsel %vm1158, %v1748, %v1752
    %v1754 = vrot.slane %v1654, 1
    %v1755 = vsel %vm1158, %v1750, %v1754
    %v1756 = vrot.slane %v1655, 1
    %v1757 = vsel %vm1158, %v1752, %v1756
    %v1758 = vrot.slane %v1656, 1
    %v1759 = vsel %vm1158, %v1754, %v1758
    %v1760 = vrot.slane %v1657, 1
    %v1761 = vsel %vm1158, %v1756, %v1760
    %v1762 = vrot.slane %v1658, 1
    %v1763 = vsel %vm1158, %v1758, %v1762
    %v1764 = vrot.slane %v1659, 1
    %v1765 = vsel %vm1158, %v1760, %v1764
    %v1766 = vrot.slane %v1660, 1
    %v1767 = vsel %vm1158, %v1762, %v1766
    %v1768 = vrot.slane %v1661, 1
    %v1769 = vsel %vm1158, %v1764, %v1768
    %v1770 = vrot.slane %v1662, 1
    %v1771 = vsel %vm1158, %v1766, %v1770
    %v1772 = vrot.slane %v1663, 1
    %v1773 = vsel %vm1158, %v1768, %v1772
    %v1774 = vrot.slane %v1664, 1
    %v1775 = vsel %vm1158, %v1770, %v1774
    %v1776 = vrot.slane %v1665, 1
    %v1777 = vsel %vm1158, %v1772, %v1776
    %v1778 = vrot.slane %v1666, 1
    %v1779 = vsel %vm1158, %v1774, %v1778
    %v1780 = vrot.slane %v1667, 1
    %v1781 = vsel %vm1158, %v1776, %v1780
    %v1782 = vrot.slane %v1668, 1
    %v1783 = vsel %vm1158, %v1778, %v1782
    %v1784 = vrot.slane %v1669, 1
    %v1785 = vsel %vm1158, %v1780, %v1784
    %v1786 = vrot.slane %v1670, 1
    %v1787 = vsel %vm1158, %v1782, %v1786
    %v1788 = vrot.slane %v1671, 1
    %v1789 = vsel %vm1158, %v1784, %v1788
    %v1790 = vrot.slane %v1672, 1
    %v1791 = vsel %vm1158, %v1786, %v1790
    %v1792 = vrot.slane %v1673, 1
    %v1793 = vsel %vm1158, %v1788, %v1792
    %v1794 = vrot.slane %v1674, 1
    %v1795 = vsel %vm1158, %v1790, %v1794
    %v1796 = vrot.slane %v1675, 1
    %v1797 = vsel %vm1158, %v1792, %v1796
    %v1798 = vrot.slane %v1676, 1
    %v1799 = vsel %vm1158, %v1794, %v1798
    %v1800 = vrot.slane %v1677, 1
    %v1801 = vsel %vm1158, %v1796, %v1800
    %v1802 = vrot.slane %v1678, 1
    %v1803 = vsel %vm1158, %v1798, %v1802
    %v1804 = vrot.slane %v1679, 1
    %v1805 = vsel %vm1158, %v1800, %v1804
    %v1806 = vrot.slane %v1680, 1
    %v1807 = vsel %vm1158, %v1802, %v1806
    %v1808 = vrot.slane %v1681, 1
    %v1809 = vsel %vm1158, %v1804, %v1808
    %v1810 = vrot.slane %v1682, 1
    %v1811 = vsel %vm1158, %v1806, %v1810
    %v1812 = vrot.slane %v1683, 1
    %v1813 = vsel %vm1158, %v1808, %v1812
    %v1849 = vunpack.c.l.b16 %v1685
    %v1850 = vunpack.c.l.b16 %v1686
    %v1851 = vunpack.c.l.b16 %v1687
    %v1852 = vunpack.c.l.b16 %v1688
    %v1853 = vunpack.c.l.b16 %v1689
    %v1854 = vunpack.c.l.b16 %v1690
    %v1855 = vunpack.c.l.b16 %v1691
    %v1856 = vunpack.c.l.b16 %v1692
    %v1857 = vunpack.c.l.b16 %v1693
    %v1858 = vunpack.c.l.b16 %v1694
    %v1859 = vunpack.c.l.b16 %v1695
    %v1860 = vunpack.c.l.b16 %v1696
    %v1861 = vunpack.c.l.b16 %v1697
    %v1862 = vunpack.c.l.b16 %v1698
    %v1863 = vunpack.c.l.b16 %v1699
    %v1864 = vunpack.c.l.b16 %v1700
    %v1865 = vunpack.c.l.b16 %v1701
    %v1866 = vpack.c.b16 %v1850, %v1849
    %v1867 = vpack.c.b16 %v1852, %v1851
    %v1868 = vpack.c.b16 %v1854, %v1853
    %v1869 = vpack.c.b16 %v1856, %v1855
    %v1870 = vpack.c.b16 %v1858, %v1857
    %v1871 = vpack.c.b16 %v1860, %v1859
    %v1872 = vpack.c.b16 %v1862, %v1861
    %v1873 = vpack.c.b16 %v1864, %v1863
    %v1874 = vpack.c.b16 %v1865, %v1865
    %v1884 = vsel %vm587, %v1745, 0
    %v1887 = vsel %vm587, %v1749, 0
    %v1890 = vsel %vm587, %v1753, 0
    %v1893 = vsel %vm587, %v1757, 0
    %v1896 = vsel %vm587, %v1761, 0
    %v1899 = vsel %vm587, %v1765, 0
    %v1902 = vsel %vm587, %v1769, 0
    %v1905 = vsel %vm587, %v1773, 0
    %v1908 = vsel %vm587, %v1777, 0
    %v1911 = vsel %vm587, %v1781, 0
    %v1914 = vsel %vm587, %v1785, 0
    %v1917 = vsel %vm587, %v1789, 0
    %v1920 = vsel %vm587, %v1793, 0
    %v1923 = vsel %vm587, %v1797, 0
    %v1926 = vsel %vm587, %v1801, 0
    %v1929 = vsel %vm587, %v1805, 0
    %v1932 = vsel %vm587, %v1809, 0
    %v1935 = vsel %vm587, %v1813, 0
    %v1938 = vand.u32 %v1874, %v645
    %1940 = vmatprep.subr.bf16.mxu0 0
    %1941 = vmatpush1.bf16.msra.mxu0 %v1866
    %1942 = vmatprep.subr.bf16.mxu0 0
    %1943 = vmatpush1.bf16.msra.mxu0 %v1867
    %1944 = vmatprep.subr.bf16.mxu0 0
    %1945 = vmatpush1.bf16.msra.mxu0 %v1868
    %1946 = vmatprep.subr.bf16.mxu0 0
    %1947 = vmatpush1.bf16.msra.mxu0 %v1869
    %1948 = vmatprep.subr.bf16.mxu0 0
    %1949 = vmatpush1.bf16.msra.mxu0 %v1870
    %1950 = vmatprep.subr.bf16.mxu0 0
    %1951 = vmatpush1.bf16.msra.mxu0 %v1871
    %1952 = vmatprep.subr.bf16.mxu0 0
    %1953 = vmatpush1.bf16.msra.mxu0 %v1872
    %1954 = vmatprep.subr.bf16.mxu0 0
    %1955 = vmatpush1.bf16.msra.mxu0 %v1873
    %1956 = vmatprep.subr.bf16.mxu0 0
    %1957 = vmatpush1.bf16.msra.mxu0 %v1938
    %1958 = vmatprep.subr.bf16.mxu0 0
    %1959 = vmatpush1.bf16.msra.mxu0 0
    %1960 = vmatprep.subr.bf16.mxu0 0
    %1961 = vmatpush1.bf16.msra.mxu0 0
    %1962 = vmatprep.subr.bf16.mxu0 0
    %1963 = vmatpush1.bf16.msra.mxu0 0
    %1964 = vmatprep.subr.bf16.mxu0 0
    %1965 = vmatpush1.bf16.msra.mxu0 0
    %1966 = vmatprep.subr.bf16.mxu0 0
    %1967 = vmatpush1.bf16.msra.mxu0 0
    %1968 = vmatprep.subr.bf16.mxu0 0
    %1969 = vmatpush1.bf16.msra.mxu0 0
    %1970 = vmatprep.subr.bf16.mxu0 0
    %1971 = vmatpush1.bf16.msra.mxu0 0
    %1972 = vmatprep.mubr.bf16.mxu0 %v1884
    %1973 = vmatmul.mubr.bf16.gmra.mrb[0].mxu0 %v1742
    %v1974 = vpop.f32.mrb[0].mxu0
    %v1975 = vadd.f32 0.0, %v1974
    %v1976 = vpop.f32.mrb[0].mxu0
    %v1977 = vpop.f32.mrb[0].mxu0
    %v1978 = vadd.f32 0.0, %v1977
    %v1979 = vpop.f32.mrb[0].mxu0
    %1980 = vmatprep.mubr.bf16.mxu0 %v1887
    %1981 = vmatmul.mubr.bf16.gmra.mrb[0].mxu0 %v1747
    %v1982 = vpop.f32.mrb[0].mxu0
    %v1983 = vadd.f32 0.0, %v1982
    %v1984 = vpop.f32.mrb[0].mxu0
    %v1985 = vpop.f32.mrb[0].mxu0
    %v1986 = vadd.f32 0.0, %v1985
    %v1987 = vpop.f32.mrb[0].mxu0
    %1988 = vmatprep.mubr.bf16.mxu0 %v1890
    %1989 = vmatmul.mubr.bf16.gmra.mrb[0].mxu0 %v1751
    %v1990 = vpop.f32.mrb[0].mxu0
    %v1991 = vadd.f32 0.0, %v1990
    %v1992 = vpop.f32.mrb[0].mxu0
    %v1993 = vpop.f32.mrb[0].mxu0
    %v1994 = vadd.f32 0.0, %v1993
    %v1995 = vpop.f32.mrb[0].mxu0
    %1996 = vmatprep.mubr.bf16.mxu0 %v1893
    %1997 = vmatmul.mubr.bf16.gmra.mrb[0].mxu0 %v1755
    %v1998 = vpop.f32.mrb[0].mxu0
    %v1999 = vadd.f32 0.0, %v1998
    %v2000 = vpop.f32.mrb[0].mxu0
    %v2001 = vpop.f32.mrb[0].mxu0
    %v2002 = vadd.f32 0.0, %v2001
    %v2003 = vpop.f32.mrb[0].mxu0
    %2004 = vmatprep.mubr.bf16.mxu0 %v1896
    %2005 = vmatmul.mubr.bf16.gmra.mrb[0].mxu0 %v1759
    %v2006 = vpop.f32.mrb[0].mxu0
    %v2007 = vadd.f32 0.0, %v2006
    %v2008 = vpop.f32.mrb[0].mxu0
    %v2009 = vpop.f32.mrb[0].mxu0
    %v2010 = vadd.f32 0.0, %v2009
    %v2011 = vpop.f32.mrb[0].mxu0
    %2012 = vmatprep.mubr.bf16.mxu0 %v1899
    %2013 = vmatmul.mubr.bf16.gmra.mrb[0].mxu0 %v1763
    %v2014 = vpop.f32.mrb[0].mxu0
    %v2015 = vadd.f32 0.0, %v2014
    %v2016 = vpop.f32.mrb[0].mxu0
    %v2017 = vpop.f32.mrb[0].mxu0
    %v2018 = vadd.f32 0.0, %v2017
    %v2019 = vpop.f32.mrb[0].mxu0
    %2020 = vmatprep.mubr.bf16.mxu0 %v1902
    %2021 = vmatmul.mubr.bf16.gmra.mrb[0].mxu0 %v1767
    %v2022 = vpop.f32.mrb[0].mxu0
    %v2023 = vadd.f32 0.0, %v2022
    %v2024 = vpop.f32.mrb[0].mxu0
    %v2025 = vpop.f32.mrb[0].mxu0
    %v2026 = vadd.f32 0.0, %v2025
    %v2027 = vpop.f32.mrb[0].mxu0
    %2028 = vmatprep.mubr.bf16.mxu0 %v1905
    %2029 = vmatmul.mubr.bf16.gmra.mrb[0].mxu0 %v1771
    %v2030 = vpop.f32.mrb[0].mxu0
    %v2031 = vadd.f32 0.0, %v2030
    %v2032 = vpop.f32.mrb[0].mxu0
    %v2033 = vpop.f32.mrb[0].mxu0
    %v2034 = vadd.f32 0.0, %v2033
    %v2035 = vpop.f32.mrb[0].mxu0
    %2036 = vmatprep.mubr.bf16.mxu0 %v1908
    %2037 = vmatmul.mubr.bf16.gmra.mrb[0].mxu0 %v1775
    %v2038 = vpop.f32.mrb[0].mxu0
    %v2039 = vadd.f32 0.0, %v2038
    %v2040 = vpop.f32.mrb[0].mxu0
    %v2041 = vpop.f32.mrb[0].mxu0
    %v2042 = vadd.f32 0.0, %v2041
    %v2043 = vpop.f32.mrb[0].mxu0
    %2044 = vmatprep.mubr.bf16.mxu0 %v1911
    %2045 = vmatmul.mubr.bf16.gmra.mrb[0].mxu0 %v1779
    %v2046 = vpop.f32.mrb[0].mxu0
    %v2047 = vadd.f32 0.0, %v2046
    %v2048 = vpop.f32.mrb[0].mxu0
    %v2049 = vpop.f32.mrb[0].mxu0
    %v2050 = vadd.f32 0.0, %v2049
    %v2051 = vpop.f32.mrb[0].mxu0
    %2052 = vmatprep.mubr.bf16.mxu0 %v1914
    %2053 = vmatmul.mubr.bf16.gmra.mrb[0].mxu0 %v1783
    %v2054 = vpop.f32.mrb[0].mxu0
    %v2055 = vadd.f32 0.0, %v2054
    %v2056 = vpop.f32.mrb[0].mxu0
    %v2057 = vpop.f32.mrb[0].mxu0
    %v2058 = vadd.f32 0.0, %v2057
    %v2059 = vpop.f32.mrb[0].mxu0
    %2060 = vmatprep.mubr.bf16.mxu0 %v1917
    %2061 = vmatmul.mubr.bf16.gmra.mrb[0].mxu0 %v1787
    %v2062 = vpop.f32.mrb[0].mxu0
    %v2063 = vadd.f32 0.0, %v2062
    %v2064 = vpop.f32.mrb[0].mxu0
    %v2065 = vpop.f32.mrb[0].mxu0
    %v2066 = vadd.f32 0.0, %v2065
    %v2067 = vpop.f32.mrb[0].mxu0
    %2068 = vmatprep.mubr.bf16.mxu0 %v1920
    %2069 = vmatmul.mubr.bf16.gmra.mrb[0].mxu0 %v1791
    %v2070 = vpop.f32.mrb[0].mxu0
    %v2071 = vadd.f32 0.0, %v2070
    %v2072 = vpop.f32.mrb[0].mxu0
    %v2073 = vpop.f32.mrb[0].mxu0
    %v2074 = vadd.f32 0.0, %v2073
    %v2075 = vpop.f32.mrb[0].mxu0
    %2076 = vmatprep.mubr.bf16.mxu0 %v1923
    %2077 = vmatmul.mubr.bf16.gmra.mrb[0].mxu0 %v1795
    %v2078 = vpop.f32.mrb[0].mxu0
    %v2079 = vadd.f32 0.0, %v2078
    %v2080 = vpop.f32.mrb[0].mxu0
    %v2081 = vpop.f32.mrb[0].mxu0
    %v2082 = vadd.f32 0.0, %v2081
    %v2083 = vpop.f32.mrb[0].mxu0
    %2084 = vmatprep.mubr.bf16.mxu0 %v1926
    %2085 = vmatmul.mubr.bf16.gmra.mrb[0].mxu0 %v1799
    %v2086 = vpop.f32.mrb[0].mxu0
    %v2087 = vadd.f32 0.0, %v2086
    %v2088 = vpop.f32.mrb[0].mxu0
    %v2089 = vpop.f32.mrb[0].mxu0
    %v2090 = vadd.f32 0.0, %v2089
    %v2091 = vpop.f32.mrb[0].mxu0
    %2092 = vmatprep.mubr.bf16.mxu0 %v1929
    %2093 = vmatmul.mubr.bf16.gmra.mrb[0].mxu0 %v1803
    %v2094 = vpop.f32.mrb[0].mxu0
    %v2095 = vadd.f32 0.0, %v2094
    %v2096 = vpop.f32.mrb[0].mxu0
    %v2097 = vpop.f32.mrb[0].mxu0
    %v2098 = vadd.f32 0.0, %v2097
    %v2099 = vpop.f32.mrb[0].mxu0
    %2100 = vmatprep.mubr.bf16.mxu0 %v1932
    %2101 = vmatmul.mubr.bf16.gmra.mrb[0].mxu0 %v1807
    %v2102 = vpop.f32.mrb[0].mxu0
    %v2103 = vadd.f32 0.0, %v2102
    %v2104 = vpop.f32.mrb[0].mxu0
    %v2105 = vpop.f32.mrb[0].mxu0
    %v2106 = vadd.f32 0.0, %v2105
    %v2107 = vpop.f32.mrb[0].mxu0
    %2108 = vmatprep.mubr.bf16.mxu0 %v1935
    %2109 = vmatmul.mubr.bf16.gmra.mrb[0].mxu0 %v1811
    %v2110 = vpop.f32.mrb[0].mxu0
    %v2111 = vadd.f32 0.0, %v2110
    %v2112 = vpop.f32.mrb[0].mxu0
    %v2113 = vpop.f32.mrb[0].mxu0
    %v2114 = vadd.f32 0.0, %v2113
    %v2115 = vpop.f32.mrb[0].mxu0
    %2116 = vdwg.mxu0
    %v2117 = vadd.f32 %v1536, %v1975
    %v2118 = vadd.f32 %v1537, %v1978
    %v2119 = vadd.f32 %v1538, %v1983
    %v2120 = vadd.f32 %v1539, %v1986
    %v2121 = vadd.f32 %v1540, %v1991
    %v2122 = vadd.f32 %v1541, %v1994
    %v2123 = vadd.f32 %v1542, %v1999
    %v2124 = vadd.f32 %v1543, %v2002
    %v2125 = vadd.f32 %v1544, %v2007
    %v2126 = vadd.f32 %v1545, %v2010
    %v2127 = vadd.f32 %v1546, %v2015
    %v2128 = vadd.f32 %v1547, %v2018
    %v2129 = vadd.f32 %v1548, %v2023
    %v2130 = vadd.f32 %v1549, %v2026
    %v2131 = vadd.f32 %v1550, %v2031
    %v2132 = vadd.f32 %v1551, %v2034
    %v2133 = vadd.f32 %v1552, %v2039
    %v2134 = vadd.f32 %v1553, %v2042
    %v2135 = vadd.f32 %v1554, %v2047
    %v2136 = vadd.f32 %v1555, %v2050
    %v2137 = vadd.f32 %v1556, %v2055
    %v2138 = vadd.f32 %v1557, %v2058
    %v2139 = vadd.f32 %v1558, %v2063
    %v2140 = vadd.f32 %v1559, %v2066
    %v2141 = vadd.f32 %v1560, %v2071
    %v2142 = vadd.f32 %v1561, %v2074
    %v2143 = vadd.f32 %v1562, %v2079
    %v2144 = vadd.f32 %v1563, %v2082
    %v2145 = vadd.f32 %v1564, %v2087
    %v2146 = vadd.f32 %v1565, %v2090
    %v2147 = vadd.f32 %v1566, %v2095
    %v2148 = vadd.f32 %v1567, %v2098
    %v2149 = vadd.f32 %v1568, %v2103
    %v2150 = vadd.f32 %v1569, %v2106
    %v2151 = vadd.f32 %v1570, %v2111
    %v2152 = vadd.f32 %v1571, %v2114
    %v2153 = vld [vmem:[%s69 + $0x20] sm:$0xf8]
    %v2154 = vld [vmem:[%s69 + $0x28] sm:$0xf8]
    %v2155 = vld [vmem:[%s69 + $0x260] sm:$0x7]
    %v2156 = vld [vmem:[%s69 + $0x268] sm:$0x7]
    %v2157 = vpack.c.bf16 %v1574, %v2153
    %v2158 = vpack.c.bf16 %v1575, %v2154
    %v2159 = vpack.c.bf16 %v2155, %v2155
    %v2160 = vpack.c.bf16 %v2156, %v2156
    %s2161 = scalar_lea.vmem %s1, 272
    %v2162 = vld [vmem:[%s2161] sm:$0xf]
    %v2163 = vld [vmem:[%s2161 + $0x4] sm:$0xf]
    %v2164 = vld [vmem:[%s2161 + $0x8] sm:$0xf]
    %v2165 = vld [vmem:[%s2161 + $0xc] sm:$0xf]
    %v2166 = vld [vmem:[%s2161 + $0x10] sm:$0xf]
    %v2167 = vld [vmem:[%s2161 + $0x14] sm:$0xf]
    %v2168 = vld [vmem:[%s2161 + $0x18] sm:$0xf]
    %v2169 = vld [vmem:[%s2161 + $0x1c] sm:$0xf]
    %v2170 = vld [vmem:[%s2161 + $0x20] sm:$0xf]
    %v2171 = vld [vmem:[%s2161 + $0x24] sm:$0xf]
    %v2172 = vld [vmem:[%s2161 + $0x28] sm:$0xf]
    %v2173 = vld [vmem:[%s2161 + $0x2c] sm:$0xf]
    %v2174 = vld [vmem:[%s2161 + $0x30] sm:$0xf]
    %v2175 = vld [vmem:[%s2161 + $0x34] sm:$0xf]
    %v2176 = vld [vmem:[%s2161 + $0x38] sm:$0xf]
    %v2177 = vld [vmem:[%s2161 + $0x3c] sm:$0xf]
    %v2178 = vld [vmem:[%s2161 + $0x40] sm:$0x3]
    %vm2179 = vsmask.f32 6400
    %v2181 = vshrl.u32 %v2157, 16
    %v2183 = vrot.slane %v2181, 1
    %v2184 = vshll.u32 %v2157, 16
    %v2186 = vrot.slane %v2184, 2
    %v2187 = vor.u32 %v2183, %v2186
    %v2189 = vshrl.u32 %v1648, 16
    %v2191 = vrot.slane %v2189, 1
    %v2192 = vshll.u32 %v1648, 16
    %v2194 = vrot.slane %v2192, 2
    %v2195 = vor.u32 %v2191, %v2194
    %v2196 = vsel %vm2179, %v2187, %v2195
    %v2198 = vshrl.u32 %v2158, 16
    %v2200 = vrot.slane %v2198, 1
    %v2201 = vshll.u32 %v2158, 16
    %v2203 = vrot.slane %v2201, 2
    %v2204 = vor.u32 %v2200, %v2203
    %v2206 = vshrl.u32 %v1649, 16
    %v2208 = vrot.slane %v2206, 1
    %v2209 = vshll.u32 %v1649, 16
    %v2211 = vrot.slane %v2209, 2
    %v2212 = vor.u32 %v2208, %v2211
    %v2213 = vsel %vm2179, %v2204, %v2212
    %v2215 = vshrl.u32 %v1650, 16
    %v2217 = vrot.slane %v2215, 1
    %v2218 = vshll.u32 %v1650, 16
    %v2220 = vrot.slane %v2218, 2
    %v2221 = vor.u32 %v2217, %v2220
    %v2222 = vsel %vm2179, %v2195, %v2221
    %v2224 = vshrl.u32 %v1651, 16
    %v2226 = vrot.slane %v2224, 1
    %v2227 = vshll.u32 %v1651, 16
    %v2229 = vrot.slane %v2227, 2
    %v2230 = vor.u32 %v2226, %v2229
    %v2231 = vsel %vm2179, %v2212, %v2230
    %v2233 = vshrl.u32 %v1652, 16
    %v2235 = vrot.slane %v2233, 1
    %v2236 = vshll.u32 %v1652, 16
    %v2238 = vrot.slane %v2236, 2
    %v2239 = vor.u32 %v2235, %v2238
    %v2240 = vsel %vm2179, %v2221, %v2239
    %v2242 = vshrl.u32 %v1653, 16
    %v2244 = vrot.slane %v2242, 1
    %v2245 = vshll.u32 %v1653, 16
    %v2247 = vrot.slane %v2245, 2
    %v2248 = vor.u32 %v2244, %v2247
    %v2249 = vsel %vm2179, %v2230, %v2248
    %v2251 = vshrl.u32 %v1654, 16
    %v2253 = vrot.slane %v2251, 1
    %v2254 = vshll.u32 %v1654, 16
    %v2256 = vrot.slane %v2254, 2
    %v2257 = vor.u32 %v2253, %v2256
    %v2258 = vsel %vm2179, %v2239, %v2257
    %v2260 = vshrl.u32 %v1655, 16
    %v2262 = vrot.slane %v2260, 1
    %v2263 = vshll.u32 %v1655, 16
    %v2265 = vrot.slane %v2263, 2
    %v2266 = vor.u32 %v2262, %v2265
    %v2267 = vsel %vm2179, %v2248, %v2266
    %v2269 = vshrl.u32 %v1656, 16
    %v2271 = vrot.slane %v2269, 1
    %v2272 = vshll.u32 %v1656, 16
    %v2274 = vrot.slane %v2272, 2
    %v2275 = vor.u32 %v2271, %v2274
    %v2276 = vsel %vm2179, %v2257, %v2275
    %v2278 = vshrl.u32 %v1657, 16
    %v2280 = vrot.slane %v2278, 1
    %v2281 = vshll.u32 %v1657, 16
    %v2283 = vrot.slane %v2281, 2
    %v2284 = vor.u32 %v2280, %v2283
    %v2285 = vsel %vm2179, %v2266, %v2284
    %v2287 = vshrl.u32 %v1658, 16
    %v2289 = vrot.slane %v2287, 1
    %v2290 = vshll.u32 %v1658, 16
    %v2292 = vrot.slane %v2290, 2
    %v2293 = vor.u32 %v2289, %v2292
    %v2294 = vsel %vm2179, %v2275, %v2293
    %v2296 = vshrl.u32 %v1659, 16
    %v2298 = vrot.slane %v2296, 1
    %v2299 = vshll.u32 %v1659, 16
    %v2301 = vrot.slane %v2299, 2
    %v2302 = vor.u32 %v2298, %v2301
    %v2303 = vsel %vm2179, %v2284, %v2302
    %v2305 = vshrl.u32 %v1660, 16
    %v2307 = vrot.slane %v2305, 1
    %v2308 = vshll.u32 %v1660, 16
    %v2310 = vrot.slane %v2308, 2
    %v2311 = vor.u32 %v2307, %v2310
    %v2312 = vsel %vm2179, %v2293, %v2311
    %v2314 = vshrl.u32 %v1661, 16
    %v2316 = vrot.slane %v2314, 1
    %v2317 = vshll.u32 %v1661, 16
    %v2319 = vrot.slane %v2317, 2
    %v2320 = vor.u32 %v2316, %v2319
    %v2321 = vsel %vm2179, %v2302, %v2320
    %v2323 = vshrl.u32 %v1662, 16
    %v2325 = vrot.slane %v2323, 1
    %v2326 = vshll.u32 %v1662, 16
    %v2328 = vrot.slane %v2326, 2
    %v2329 = vor.u32 %v2325, %v2328
    %v2330 = vsel %vm2179, %v2311, %v2329
    %v2332 = vshrl.u32 %v1663, 16
    %v2334 = vrot.slane %v2332, 1
    %v2335 = vshll.u32 %v1663, 16
    %v2337 = vrot.slane %v2335, 2
    %v2338 = vor.u32 %v2334, %v2337
    %v2339 = vsel %vm2179, %v2320, %v2338
    %v2341 = vshrl.u32 %v1664, 16
    %v2343 = vrot.slane %v2341, 1
    %v2344 = vshll.u32 %v1664, 16
    %v2346 = vrot.slane %v2344, 2
    %v2347 = vor.u32 %v2343, %v2346
    %v2348 = vsel %vm2179, %v2329, %v2347
    %v2350 = vshrl.u32 %v1665, 16
    %v2352 = vrot.slane %v2350, 1
    %v2353 = vshll.u32 %v1665, 16
    %v2355 = vrot.slane %v2353, 2
    %v2356 = vor.u32 %v2352, %v2355
    %v2357 = vsel %vm2179, %v2338, %v2356
    %v2359 = vshrl.u32 %v1666, 16
    %v2361 = vrot.slane %v2359, 1
    %v2362 = vshll.u32 %v1666, 16
    %v2364 = vrot.slane %v2362, 2
    %v2365 = vor.u32 %v2361, %v2364
    %v2366 = vsel %vm2179, %v2347, %v2365
    %v2368 = vshrl.u32 %v1667, 16
    %v2370 = vrot.slane %v2368, 1
    %v2371 = vshll.u32 %v1667, 16
    %v2373 = vrot.slane %v2371, 2
    %v2374 = vor.u32 %v2370, %v2373
    %v2375 = vsel %vm2179, %v2356, %v2374
    %v2377 = vshrl.u32 %v1668, 16
    %v2379 = vrot.slane %v2377, 1
    %v2380 = vshll.u32 %v1668, 16
    %v2382 = vrot.slane %v2380, 2
    %v2383 = vor.u32 %v2379, %v2382
    %v2384 = vsel %vm2179, %v2365, %v2383
    %v2386 = vshrl.u32 %v1669, 16
    %v2388 = vrot.slane %v2386, 1
    %v2389 = vshll.u32 %v1669, 16
    %v2391 = vrot.slane %v2389, 2
    %v2392 = vor.u32 %v2388, %v2391
    %v2393 = vsel %vm2179, %v2374, %v2392
    %v2395 = vshrl.u32 %v1670, 16
    %v2397 = vrot.slane %v2395, 1
    %v2398 = vshll.u32 %v1670, 16
    %v2400 = vrot.slane %v2398, 2
    %v2401 = vor.u32 %v2397, %v2400
    %v2402 = vsel %vm2179, %v2383, %v2401
    %v2404 = vshrl.u32 %v1671, 16
    %v2406 = vrot.slane %v2404, 1
    %v2407 = vshll.u32 %v1671, 16
    %v2409 = vrot.slane %v2407, 2
    %v2410 = vor.u32 %v2406, %v2409
    %v2411 = vsel %vm2179, %v2392, %v2410
    %v2413 = vshrl.u32 %v1672, 16
    %v2415 = vrot.slane %v2413, 1
    %v2416 = vshll.u32 %v1672, 16
    %v2418 = vrot.slane %v2416, 2
    %v2419 = vor.u32 %v2415, %v2418
    %v2420 = vsel %vm2179, %v2401, %v2419
    %v2422 = vshrl.u32 %v1673, 16
    %v2424 = vrot.slane %v2422, 1
    %v2425 = vshll.u32 %v1673, 16
    %v2427 = vrot.slane %v2425, 2
    %v2428 = vor.u32 %v2424, %v2427
    %v2429 = vsel %vm2179, %v2410, %v2428
    %v2431 = vshrl.u32 %v1674, 16
    %v2433 = vrot.slane %v2431, 1
    %v2434 = vshll.u32 %v1674, 16
    %v2436 = vrot.slane %v2434, 2
    %v2437 = vor.u32 %v2433, %v2436
    %v2438 = vsel %vm2179, %v2419, %v2437
    %v2440 = vshrl.u32 %v1675, 16
    %v2442 = vrot.slane %v2440, 1
    %v2443 = vshll.u32 %v1675, 16
    %v2445 = vrot.slane %v2443, 2
    %v2446 = vor.u32 %v2442, %v2445
    %v2447 = vsel %vm2179, %v2428, %v2446
    %v2449 = vshrl.u32 %v1676, 16
    %v2451 = vrot.slane %v2449, 1
    %v2452 = vshll.u32 %v1676, 16
    %v2454 = vrot.slane %v2452, 2
    %v2455 = vor.u32 %v2451, %v2454
    %v2456 = vsel %vm2179, %v2437, %v2455
    %v2458 = vshrl.u32 %v1677, 16
    %v2460 = vrot.slane %v2458, 1
    %v2461 = vshll.u32 %v1677, 16
    %v2463 = vrot.slane %v2461, 2
    %v2464 = vor.u32 %v2460, %v2463
    %v2465 = vsel %vm2179, %v2446, %v2464
    %v2467 = vshrl.u32 %v1678, 16
    %v2469 = vrot.slane %v2467, 1
    %v2470 = vshll.u32 %v1678, 16
    %v2472 = vrot.slane %v2470, 2
    %v2473 = vor.u32 %v2469, %v2472
    %v2474 = vsel %vm2179, %v2455, %v2473
    %v2476 = vshrl.u32 %v1679, 16
    %v2478 = vrot.slane %v2476, 1
    %v2479 = vshll.u32 %v1679, 16
    %v2481 = vrot.slane %v2479, 2
    %v2482 = vor.u32 %v2478, %v2481
    %v2483 = vsel %vm2179, %v2464, %v2482
    %v2485 = vshrl.u32 %v1680, 16
    %v2487 = vrot.slane %v2485, 1
    %v2488 = vshll.u32 %v1680, 16
    %v2490 = vrot.slane %v2488, 2
    %v2491 = vor.u32 %v2487, %v2490
    %v2492 = vsel %vm2179, %v2473, %v2491
    %v2494 = vshrl.u32 %v1681, 16
    %v2496 = vrot.slane %v2494, 1
    %v2497 = vshll.u32 %v1681, 16
    %v2499 = vrot.slane %v2497, 2
    %v2500 = vor.u32 %v2496, %v2499
    %v2501 = vsel %vm2179, %v2482, %v2500
    %v2503 = vshrl.u32 %v2159, 16
    %v2505 = vrot.slane %v2503, 1
    %v2506 = vshll.u32 %v2159, 16
    %v2508 = vrot.slane %v2506, 2
    %v2509 = vor.u32 %v2505, %v2508
    %v2510 = vsel %vm2179, %v2491, %v2509
    %v2512 = vshrl.u32 %v2160, 16
    %v2514 = vrot.slane %v2512, 1
    %v2515 = vshll.u32 %v2160, 16
    %v2517 = vrot.slane %v2515, 2
    %v2518 = vor.u32 %v2514, %v2517
    %v2519 = vsel %vm2179, %v2500, %v2518
    %v2555 = vunpack.c.l.b16 %v2162
    %v2556 = vunpack.c.l.b16 %v2163
    %v2557 = vunpack.c.l.b16 %v2164
    %v2558 = vunpack.c.l.b16 %v2165
    %v2559 = vunpack.c.l.b16 %v2166
    %v2560 = vunpack.c.l.b16 %v2167
    %v2561 = vunpack.c.l.b16 %v2168
    %v2562 = vunpack.c.l.b16 %v2169
    %v2563 = vunpack.c.l.b16 %v2170
    %v2564 = vunpack.c.l.b16 %v2171
    %v2565 = vunpack.c.l.b16 %v2172
    %v2566 = vunpack.c.l.b16 %v2173
    %v2567 = vunpack.c.l.b16 %v2174
    %v2568 = vunpack.c.l.b16 %v2175
    %v2569 = vunpack.c.l.b16 %v2176
    %v2570 = vunpack.c.l.b16 %v2177
    %v2571 = vunpack.c.l.b16 %v2178
    %v2572 = vpack.c.b16 %v2556, %v2555
    %v2573 = vpack.c.b16 %v2558, %v2557
    %v2574 = vpack.c.b16 %v2560, %v2559
    %v2575 = vpack.c.b16 %v2562, %v2561
    %v2576 = vpack.c.b16 %v2564, %v2563
    %v2577 = vpack.c.b16 %v2566, %v2565
    %v2578 = vpack.c.b16 %v2568, %v2567
    %v2579 = vpack.c.b16 %v2570, %v2569
    %v2580 = vpack.c.b16 %v2571, %v2571
    %v2590 = vsel %vm587, %v2213, 0
    %v2593 = vsel %vm587, %v2231, 0
    %v2596 = vsel %vm587, %v2249, 0
    %v2599 = vsel %vm587, %v2267, 0
    %v2602 = vsel %vm587, %v2285, 0
    %v2605 = vsel %vm587, %v2303, 0
    %v2608 = vsel %vm587, %v2321, 0
    %v2611 = vsel %vm587, %v2339, 0
    %v2614 = vsel %vm587, %v2357, 0
    %v2617 = vsel %vm587, %v2375, 0
    %v2620 = vsel %vm587, %v2393, 0
    %v2623 = vsel %vm587, %v2411, 0
    %v2626 = vsel %vm587, %v2429, 0
    %v2629 = vsel %vm587, %v2447, 0
    %v2632 = vsel %vm587, %v2465, 0
    %v2635 = vsel %vm587, %v2483, 0
    %v2638 = vsel %vm587, %v2501, 0
    %v2641 = vsel %vm587, %v2519, 0
    %v2644 = vand.u32 %v2580, %v645
    %2646 = vmatprep.subr.bf16.mxu0 0
    %2647 = vmatpush1.bf16.msra.mxu0 %v2572
    %2648 = vmatprep.subr.bf16.mxu0 0
    %2649 = vmatpush1.bf16.msra.mxu0 %v2573
    %2650 = vmatprep.subr.bf16.mxu0 0
    %2651 = vmatpush1.bf16.msra.mxu0 %v2574
    %2652 = vmatprep.subr.bf16.mxu0 0
    %2653 = vmatpush1.bf16.msra.mxu0 %v2575
    %2654 = vmatprep.subr.bf16.mxu0 0
    %2655 = vmatpush1.bf16.msra.mxu0 %v2576
    %2656 = vmatprep.subr.bf16.mxu0 0
    %2657 = vmatpush1.bf16.msra.mxu0 %v2577
    %2658 = vmatprep.subr.bf16.mxu0 0
    %2659 = vmatpush1.bf16.msra.mxu0 %v2578
    %2660 = vmatprep.subr.bf16.mxu0 0
    %2661 = vmatpush1.bf16.msra.mxu0 %v2579
    %2662 = vmatprep.subr.bf16.mxu0 0
    %2663 = vmatpush1.bf16.msra.mxu0 %v2644
    %2664 = vmatprep.subr.bf16.mxu0 0
    %2665 = vmatpush1.bf16.msra.mxu0 0
    %2666 = vmatprep.subr.bf16.mxu0 0
    %2667 = vmatpush1.bf16.msra.mxu0 0
    %2668 = vmatprep.subr.bf16.mxu0 0
    %2669 = vmatpush1.bf16.msra.mxu0 0
    %2670 = vmatprep.subr.bf16.mxu0 0
    %2671 = vmatpush1.bf16.msra.mxu0 0
    %2672 = vmatprep.subr.bf16.mxu0 0
    %2673 = vmatpush1.bf16.msra.mxu0 0
    %2674 = vmatprep.subr.bf16.mxu0 0
    %2675 = vmatpush1.bf16.msra.mxu0 0
    %2676 = vmatprep.subr.bf16.mxu0 0
    %2677 = vmatpush1.bf16.msra.mxu0 0
    %2678 = vmatprep.mubr.bf16.mxu0 %v2590
    %2679 = vmatmul.mubr.bf16.gmra.mrb[0].mxu0 %v2196
    %v2680 = vpop.f32.mrb[0].mxu0
    %v2681 = vadd.f32 0.0, %v2680
    %v2682 = vpop.f32.mrb[0].mxu0
    %v2683 = vpop.f32.mrb[0].mxu0
    %v2684 = vadd.f32 0.0, %v2683
    %v2685 = vpop.f32.mrb[0].mxu0
    %2686 = vmatprep.mubr.bf16.mxu0 %v2593
    %2687 = vmatmul.mubr.bf16.gmra.mrb[0].mxu0 %v2222
    %v2688 = vpop.f32.mrb[0].mxu0
    %v2689 = vadd.f32 0.0, %v2688
    %v2690 = vpop.f32.mrb[0].mxu0
    %v2691 = vpop.f32.mrb[0].mxu0
    %v2692 = vadd.f32 0.0, %v2691
    %v2693 = vpop.f32.mrb[0].mxu0
    %2694 = vmatprep.mubr.bf16.mxu0 %v2596
    %2695 = vmatmul.mubr.bf16.gmra.mrb[0].mxu0 %v2240
    %v2696 = vpop.f32.mrb[0].mxu0
    %v2697 = vadd.f32 0.0, %v2696
    %v2698 = vpop.f32.mrb[0].mxu0
    %v2699 = vpop.f32.mrb[0].mxu0
    %v2700 = vadd.f32 0.0, %v2699
    %v2701 = vpop.f32.mrb[0].mxu0
    %2702 = vmatprep.mubr.bf16.mxu0 %v2599
    %2703 = vmatmul.mubr.bf16.gmra.mrb[0].mxu0 %v2258
    %v2704 = vpop.f32.mrb[0].mxu0
    %v2705 = vadd.f32 0.0, %v2704
    %v2706 = vpop.f32.mrb[0].mxu0
    %v2707 = vpop.f32.mrb[0].mxu0
    %v2708 = vadd.f32 0.0, %v2707
    %v2709 = vpop.f32.mrb[0].mxu0
    %2710 = vmatprep.mubr.bf16.mxu0 %v2602
    %2711 = vmatmul.mubr.bf16.gmra.mrb[0].mxu0 %v2276
    %v2712 = vpop.f32.mrb[0].mxu0
    %v2713 = vadd.f32 0.0, %v2712
    %v2714 = vpop.f32.mrb[0].mxu0
    %v2715 = vpop.f32.mrb[0].mxu0
    %v2716 = vadd.f32 0.0, %v2715
    %v2717 = vpop.f32.mrb[0].mxu0
    %2718 = vmatprep.mubr.bf16.mxu0 %v2605
    %2719 = vmatmul.mubr.bf16.gmra.mrb[0].mxu0 %v2294
    %v2720 = vpop.f32.mrb[0].mxu0
    %v2721 = vadd.f32 0.0, %v2720
    %v2722 = vpop.f32.mrb[0].mxu0
    %v2723 = vpop.f32.mrb[0].mxu0
    %v2724 = vadd.f32 0.0, %v2723
    %v2725 = vpop.f32.mrb[0].mxu0
    %2726 = vmatprep.mubr.bf16.mxu0 %v2608
    %2727 = vmatmul.mubr.bf16.gmra.mrb[0].mxu0 %v2312
    %v2728 = vpop.f32.mrb[0].mxu0
    %v2729 = vadd.f32 0.0, %v2728
    %v2730 = vpop.f32.mrb[0].mxu0
    %v2731 = vpop.f32.mrb[0].mxu0
    %v2732 = vadd.f32 0.0, %v2731
    %v2733 = vpop.f32.mrb[0].mxu0
    %2734 = vmatprep.mubr.bf16.mxu0 %v2611
    %2735 = vmatmul.mubr.bf16.gmra.mrb[0].mxu0 %v2330
    %v2736 = vpop.f32.mrb[0].mxu0
    %v2737 = vadd.f32 0.0, %v2736
    %v2738 = vpop.f32.mrb[0].mxu0
    %v2739 = vpop.f32.mrb[0].mxu0
    %v2740 = vadd.f32 0.0, %v2739
    %v2741 = vpop.f32.mrb[0].mxu0
    %2742 = vmatprep.mubr.bf16.mxu0 %v2614
    %2743 = vmatmul.mubr.bf16.gmra.mrb[0].mxu0 %v2348
    %v2744 = vpop.f32.mrb[0].mxu0
    %v2745 = vadd.f32 0.0, %v2744
    %v2746 = vpop.f32.mrb[0].mxu0
    %v2747 = vpop.f32.mrb[0].mxu0
    %v2748 = vadd.f32 0.0, %v2747
    %v2749 = vpop.f32.mrb[0].mxu0
    %2750 = vmatprep.mubr.bf16.mxu0 %v2617
    %2751 = vmatmul.mubr.bf16.gmra.mrb[0].mxu0 %v2366
    %v2752 = vpop.f32.mrb[0].mxu0
    %v2753 = vadd.f32 0.0, %v2752
    %v2754 = vpop.f32.mrb[0].mxu0
    %v2755 = vpop.f32.mrb[0].mxu0
    %v2756 = vadd.f32 0.0, %v2755
    %v2757 = vpop.f32.mrb[0].mxu0
    %2758 = vmatprep.mubr.bf16.mxu0 %v2620
    %2759 = vmatmul.mubr.bf16.gmra.mrb[0].mxu0 %v2384
    %v2760 = vpop.f32.mrb[0].mxu0
    %v2761 = vadd.f32 0.0, %v2760
    %v2762 = vpop.f32.mrb[0].mxu0
    %v2763 = vpop.f32.mrb[0].mxu0
    %v2764 = vadd.f32 0.0, %v2763
    %v2765 = vpop.f32.mrb[0].mxu0
    %2766 = vmatprep.mubr.bf16.mxu0 %v2623
    %2767 = vmatmul.mubr.bf16.gmra.mrb[0].mxu0 %v2402
    %v2768 = vpop.f32.mrb[0].mxu0
    %v2769 = vadd.f32 0.0, %v2768
    %v2770 = vpop.f32.mrb[0].mxu0
    %v2771 = vpop.f32.mrb[0].mxu0
    %v2772 = vadd.f32 0.0, %v2771
    %v2773 = vpop.f32.mrb[0].mxu0
    %2774 = vmatprep.mubr.bf16.mxu0 %v2626
    %2775 = vmatmul.mubr.bf16.gmra.mrb[0].mxu0 %v2420
    %v2776 = vpop.f32.mrb[0].mxu0
    %v2777 = vadd.f32 0.0, %v2776
    %v2778 = vpop.f32.mrb[0].mxu0
    %v2779 = vpop.f32.mrb[0].mxu0
    %v2780 = vadd.f32 0.0, %v2779
    %v2781 = vpop.f32.mrb[0].mxu0
    %2782 = vmatprep.mubr.bf16.mxu0 %v2629
    %2783 = vmatmul.mubr.bf16.gmra.mrb[0].mxu0 %v2438
    %v2784 = vpop.f32.mrb[0].mxu0
    %v2785 = vadd.f32 0.0, %v2784
    %v2786 = vpop.f32.mrb[0].mxu0
    %v2787 = vpop.f32.mrb[0].mxu0
    %v2788 = vadd.f32 0.0, %v2787
    %v2789 = vpop.f32.mrb[0].mxu0
    %2790 = vmatprep.mubr.bf16.mxu0 %v2632
    %2791 = vmatmul.mubr.bf16.gmra.mrb[0].mxu0 %v2456
    %v2792 = vpop.f32.mrb[0].mxu0
    %v2793 = vadd.f32 0.0, %v2792
    %v2794 = vpop.f32.mrb[0].mxu0
    %v2795 = vpop.f32.mrb[0].mxu0
    %v2796 = vadd.f32 0.0, %v2795
    %v2797 = vpop.f32.mrb[0].mxu0
    %2798 = vmatprep.mubr.bf16.mxu0 %v2635
    %2799 = vmatmul.mubr.bf16.gmra.mrb[0].mxu0 %v2474
    %v2800 = vpop.f32.mrb[0].mxu0
    %v2801 = vadd.f32 0.0, %v2800
    %v2802 = vpop.f32.mrb[0].mxu0
    %v2803 = vpop.f32.mrb[0].mxu0
    %v2804 = vadd.f32 0.0, %v2803
    %v2805 = vpop.f32.mrb[0].mxu0
    %2806 = vmatprep.mubr.bf16.mxu0 %v2638
    %2807 = vmatmul.mubr.bf16.gmra.mrb[0].mxu0 %v2492
    %v2808 = vpop.f32.mrb[0].mxu0
    %v2809 = vadd.f32 0.0, %v2808
    %v2810 = vpop.f32.mrb[0].mxu0
    %v2811 = vpop.f32.mrb[0].mxu0
    %v2812 = vadd.f32 0.0, %v2811
    %v2813 = vpop.f32.mrb[0].mxu0
    %2814 = vmatprep.mubr.bf16.mxu0 %v2641
    %2815 = vmatmul.mubr.bf16.gmra.mrb[0].mxu0 %v2510
    %v2816 = vpop.f32.mrb[0].mxu0
    %v2817 = vadd.f32 0.0, %v2816
    %v2818 = vpop.f32.mrb[0].mxu0
    %v2819 = vpop.f32.mrb[0].mxu0
    %v2820 = vadd.f32 0.0, %v2819
    %v2821 = vpop.f32.mrb[0].mxu0
    %2822 = vdwg.mxu0
    %v2823 = vadd.f32 %v2117, %v2681
    %v2824 = vadd.f32 %v2118, %v2684
    %v2825 = vadd.f32 %v2119, %v2689
    %v2826 = vadd.f32 %v2120, %v2692
    %v2827 = vadd.f32 %v2121, %v2697
    %v2828 = vadd.f32 %v2122, %v2700
    %v2829 = vadd.f32 %v2123, %v2705
    %v2830 = vadd.f32 %v2124, %v2708
    %v2831 = vadd.f32 %v2125, %v2713
    %v2832 = vadd.f32 %v2126, %v2716
    %v2833 = vadd.f32 %v2127, %v2721
    %v2834 = vadd.f32 %v2128, %v2724
    %v2835 = vadd.f32 %v2129, %v2729
    %v2836 = vadd.f32 %v2130, %v2732
    %v2837 = vadd.f32 %v2131, %v2737
    %v2838 = vadd.f32 %v2132, %v2740
    %v2839 = vadd.f32 %v2133, %v2745
    %v2840 = vadd.f32 %v2134, %v2748
    %v2841 = vadd.f32 %v2135, %v2753
    %v2842 = vadd.f32 %v2136, %v2756
    %v2843 = vadd.f32 %v2137, %v2761
    %v2844 = vadd.f32 %v2138, %v2764
    %v2845 = vadd.f32 %v2139, %v2769
    %v2846 = vadd.f32 %v2140, %v2772
    %v2847 = vadd.f32 %v2141, %v2777
    %v2848 = vadd.f32 %v2142, %v2780
    %v2849 = vadd.f32 %v2143, %v2785
    %v2850 = vadd.f32 %v2144, %v2788
    %v2851 = vadd.f32 %v2145, %v2793
    %v2852 = vadd.f32 %v2146, %v2796
    %v2853 = vadd.f32 %v2147, %v2801
    %v2854 = vadd.f32 %v2148, %v2804
    %v2855 = vadd.f32 %v2149, %v2809
    %v2856 = vadd.f32 %v2150, %v2812
    %v2857 = vadd.f32 %v2151, %v2817
    %v2858 = vadd.f32 %v2152, %v2820
    %v2859 = vld [vmem:[%s69 + $0x20] sm:$0xf0]
    %v2860 = vld [vmem:[%s69 + $0x28] sm:$0xf0]
    %v2861 = vld [vmem:[%s69 + $0x260] sm:$0xf]
    %v2862 = vld [vmem:[%s69 + $0x268] sm:$0xf]
    %v2863 = vpack.c.bf16 %v1574, %v2859
    %v2864 = vpack.c.bf16 %v1575, %v2860
    %v2865 = vpack.c.bf16 %v2861, %v2861
    %v2866 = vpack.c.bf16 %v2862, %v2862
    %s2867 = scalar_lea.vmem %s1, 340
    %v2868 = vld [vmem:[%s2867] sm:$0xf]
    %v2869 = vld [vmem:[%s2867 + $0x4] sm:$0xf]
    %v2870 = vld [vmem:[%s2867 + $0x8] sm:$0xf]
    %v2871 = vld [vmem:[%s2867 + $0xc] sm:$0xf]
    %v2872 = vld [vmem:[%s2867 + $0x10] sm:$0xf]
    %v2873 = vld [vmem:[%s2867 + $0x14] sm:$0xf]
    %v2874 = vld [vmem:[%s2867 + $0x18] sm:$0xf]
    %v2875 = vld [vmem:[%s2867 + $0x1c] sm:$0xf]
    %v2876 = vld [vmem:[%s2867 + $0x20] sm:$0xf]
    %v2877 = vld [vmem:[%s2867 + $0x24] sm:$0xf]
    %v2878 = vld [vmem:[%s2867 + $0x28] sm:$0xf]
    %v2879 = vld [vmem:[%s2867 + $0x2c] sm:$0xf]
    %v2880 = vld [vmem:[%s2867 + $0x30] sm:$0xf]
    %v2881 = vld [vmem:[%s2867 + $0x34] sm:$0xf]
    %v2882 = vld [vmem:[%s2867 + $0x38] sm:$0xf]
    %v2883 = vld [vmem:[%s2867 + $0x3c] sm:$0xf]
    %v2884 = vld [vmem:[%s2867 + $0x40] sm:$0x3]
    %vm2889 = vcmask 1045504
    %v2890 = vrot.slane %v2863, 2
    %v2891 = vrot.slane %v1648, 2
    %v2892 = vsel %vm2889, %v2890, %v2891
    %v2893 = vrot.slane %v2864, 2
    %v2894 = vrot.slane %v1649, 2
    %v2895 = vsel %vm2889, %v2893, %v2894
    %v2896 = vrot.slane %v1650, 2
    %v2897 = vsel %vm2889, %v2891, %v2896
    %v2898 = vrot.slane %v1651, 2
    %v2899 = vsel %vm2889, %v2894, %v2898
    %v2900 = vrot.slane %v1652, 2
    %v2901 = vsel %vm2889, %v2896, %v2900
    %v2902 = vrot.slane %v1653, 2
    %v2903 = vsel %vm2889, %v2898, %v2902
    %v2904 = vrot.slane %v1654, 2
    %v2905 = vsel %vm2889, %v2900, %v2904
    %v2906 = vrot.slane %v1655, 2
    %v2907 = vsel %vm2889, %v2902, %v2906
    %v2908 = vrot.slane %v1656, 2
    %v2909 = vsel %vm2889, %v2904, %v2908
    %v2910 = vrot.slane %v1657, 2
    %v2911 = vsel %vm2889, %v2906, %v2910
    %v2912 = vrot.slane %v1658, 2
    %v2913 = vsel %vm2889, %v2908, %v2912
    %v2914 = vrot.slane %v1659, 2
    %v2915 = vsel %vm2889, %v2910, %v2914
    %v2916 = vrot.slane %v1660, 2
    %v2917 = vsel %vm2889, %v2912, %v2916
    %v2918 = vrot.slane %v1661, 2
    %v2919 = vsel %vm2889, %v2914, %v2918
    %v2920 = vrot.slane %v1662, 2
    %v2921 = vsel %vm2889, %v2916, %v2920
    %v2922 = vrot.slane %v1663, 2
    %v2923 = vsel %vm2889, %v2918, %v2922
    %v2924 = vrot.slane %v1664, 2
    %v2925 = vsel %vm2889, %v2920, %v2924
    %v2926 = vrot.slane %v1665, 2
    %v2927 = vsel %vm2889, %v2922, %v2926
    %v2928 = vrot.slane %v1666, 2
    %v2929 = vsel %vm2889, %v2924, %v2928
    %v2930 = vrot.slane %v1667, 2
    %v2931 = vsel %vm2889, %v2926, %v2930
    %v2932 = vrot.slane %v1668, 2
    %v2933 = vsel %vm2889, %v2928, %v2932
    %v2934 = vrot.slane %v1669, 2
    %v2935 = vsel %vm2889, %v2930, %v2934
    %v2936 = vrot.slane %v1670, 2
    %v2937 = vsel %vm2889, %v2932, %v2936
    %v2938 = vrot.slane %v1671, 2
    %v2939 = vsel %vm2889, %v2934, %v2938
    %v2940 = vrot.slane %v1672, 2
    %v2941 = vsel %vm2889, %v2936, %v2940
    %v2942 = vrot.slane %v1673, 2
    %v2943 = vsel %vm2889, %v2938, %v2942
    %v2944 = vrot.slane %v1674, 2
    %v2945 = vsel %vm2889, %v2940, %v2944
    %v2946 = vrot.slane %v1675, 2
    %v2947 = vsel %vm2889, %v2942, %v2946
    %v2948 = vrot.slane %v1676, 2
    %v2949 = vsel %vm2889, %v2944, %v2948
    %v2950 = vrot.slane %v1677, 2
    %v2951 = vsel %vm2889, %v2946, %v2950
    %v2952 = vrot.slane %v1678, 2
    %v2953 = vsel %vm2889, %v2948, %v2952
    %v2954 = vrot.slane %v1679, 2
    %v2955 = vsel %vm2889, %v2950, %v2954
    %v2956 = vrot.slane %v1680, 2
    %v2957 = vsel %vm2889, %v2952, %v2956
    %v2958 = vrot.slane %v1681, 2
    %v2959 = vsel %vm2889, %v2954, %v2958
    %v2960 = vrot.slane %v2865, 2
    %v2961 = vsel %vm2889, %v2956, %v2960
    %v2962 = vrot.slane %v2866, 2
    %v2963 = vsel %vm2889, %v2958, %v2962
    %v2999 = vunpack.c.l.b16 %v2868
    %v3000 = vunpack.c.l.b16 %v2869
    %v3001 = vunpack.c.l.b16 %v2870
    %v3002 = vunpack.c.l.b16 %v2871
    %v3003 = vunpack.c.l.b16 %v2872
    %v3004 = vunpack.c.l.b16 %v2873
    %v3005 = vunpack.c.l.b16 %v2874
    %v3006 = vunpack.c.l.b16 %v2875
    %v3007 = vunpack.c.l.b16 %v2876
    %v3008 = vunpack.c.l.b16 %v2877
    %v3009 = vunpack.c.l.b16 %v2878
    %v3010 = vunpack.c.l.b16 %v2879
    %v3011 = vunpack.c.l.b16 %v2880
    %v3012 = vunpack.c.l.b16 %v2881
    %v3013 = vunpack.c.l.b16 %v2882
    %v3014 = vunpack.c.l.b16 %v2883
    %v3015 = vunpack.c.l.b16 %v2884
    %v3016 = vpack.c.b16 %v3000, %v2999
    %v3017 = vpack.c.b16 %v3002, %v3001
    %v3018 = vpack.c.b16 %v3004, %v3003
    %v3019 = vpack.c.b16 %v3006, %v3005
    %v3020 = vpack.c.b16 %v3008, %v3007
    %v3021 = vpack.c.b16 %v3010, %v3009
    %v3022 = vpack.c.b16 %v3012, %v3011
    %v3023 = vpack.c.b16 %v3014, %v3013
    %v3024 = vpack.c.b16 %v3015, %v3015
    %v3034 = vsel %vm587, %v2895, 0
    %v3037 = vsel %vm587, %v2899, 0
    %v3040 = vsel %vm587, %v2903, 0
    %v3043 = vsel %vm587, %v2907, 0
    %v3046 = vsel %vm587, %v2911, 0
    %v3049 = vsel %vm587, %v2915, 0
    %v3052 = vsel %vm587, %v2919, 0
    %v3055 = vsel %vm587, %v2923, 0
    %v3058 = vsel %vm587, %v2927, 0
    %v3061 = vsel %vm587, %v2931, 0
    %v3064 = vsel %vm587, %v2935, 0
    %v3067 = vsel %vm587, %v2939, 0
    %v3070 = vsel %vm587, %v2943, 0
    %v3073 = vsel %vm587, %v2947, 0
    %v3076 = vsel %vm587, %v2951, 0
    %v3079 = vsel %vm587, %v2955, 0
    %v3082 = vsel %vm587, %v2959, 0
    %v3085 = vsel %vm587, %v2963, 0
    %v3088 = vand.u32 %v3024, %v645
    %3090 = vmatprep.subr.bf16.mxu0 0
    %3091 = vmatpush1.bf16.msra.mxu0 %v3016
    %3092 = vmatprep.subr.bf16.mxu0 0
    %3093 = vmatpush1.bf16.msra.mxu0 %v3017
    %3094 = vmatprep.subr.bf16.mxu0 0
    %3095 = vmatpush1.bf16.msra.mxu0 %v3018
    %3096 = vmatprep.subr.bf16.mxu0 0
    %3097 = vmatpush1.bf16.msra.mxu0 %v3019
    %3098 = vmatprep.subr.bf16.mxu0 0
    %3099 = vmatpush1.bf16.msra.mxu0 %v3020
    %3100 = vmatprep.subr.bf16.mxu0 0
    %3101 = vmatpush1.bf16.msra.mxu0 %v3021
    %3102 = vmatprep.subr.bf16.mxu0 0
    %3103 = vmatpush1.bf16.msra.mxu0 %v3022
    %3104 = vmatprep.subr.bf16.mxu0 0
    %3105 = vmatpush1.bf16.msra.mxu0 %v3023
    %3106 = vmatprep.subr.bf16.mxu0 0
    %3107 = vmatpush1.bf16.msra.mxu0 %v3088
    %3108 = vmatprep.subr.bf16.mxu0 0
    %3109 = vmatpush1.bf16.msra.mxu0 0
    %3110 = vmatprep.subr.bf16.mxu0 0
    %3111 = vmatpush1.bf16.msra.mxu0 0
    %3112 = vmatprep.subr.bf16.mxu0 0
    %3113 = vmatpush1.bf16.msra.mxu0 0
    %3114 = vmatprep.subr.bf16.mxu0 0
    %3115 = vmatpush1.bf16.msra.mxu0 0
    %3116 = vmatprep.subr.bf16.mxu0 0
    %3117 = vmatpush1.bf16.msra.mxu0 0
    %3118 = vmatprep.subr.bf16.mxu0 0
    %3119 = vmatpush1.bf16.msra.mxu0 0
    %3120 = vmatprep.subr.bf16.mxu0 0
    %3121 = vmatpush1.bf16.msra.mxu0 0
    %3122 = vmatprep.mubr.bf16.mxu0 %v3034
    %3123 = vmatmul.mubr.bf16.gmra.mrb[0].mxu0 %v2892
    %v3124 = vpop.f32.mrb[0].mxu0
    %v3125 = vadd.f32 0.0, %v3124
    %v3126 = vpop.f32.mrb[0].mxu0
    %v3127 = vpop.f32.mrb[0].mxu0
    %v3128 = vadd.f32 0.0, %v3127
    %v3129 = vpop.f32.mrb[0].mxu0
    %3130 = vmatprep.mubr.bf16.mxu0 %v3037
    %3131 = vmatmul.mubr.bf16.gmra.mrb[0].mxu0 %v2897
    %v3132 = vpop.f32.mrb[0].mxu0
    %v3133 = vadd.f32 0.0, %v3132
    %v3134 = vpop.f32.mrb[0].mxu0
    %v3135 = vpop.f32.mrb[0].mxu0
    %v3136 = vadd.f32 0.0, %v3135
    %v3137 = vpop.f32.mrb[0].mxu0
    %3138 = vmatprep.mubr.bf16.mxu0 %v3040
    %3139 = vmatmul.mubr.bf16.gmra.mrb[0].mxu0 %v2901
    %v3140 = vpop.f32.mrb[0].mxu0
    %v3141 = vadd.f32 0.0, %v3140
    %v3142 = vpop.f32.mrb[0].mxu0
    %v3143 = vpop.f32.mrb[0].mxu0
    %v3144 = vadd.f32 0.0, %v3143
    %v3145 = vpop.f32.mrb[0].mxu0
    %3146 = vmatprep.mubr.bf16.mxu0 %v3043
    %3147 = vmatmul.mubr.bf16.gmra.mrb[0].mxu0 %v2905
    %v3148 = vpop.f32.mrb[0].mxu0
    %v3149 = vadd.f32 0.0, %v3148
    %v3150 = vpop.f32.mrb[0].mxu0
    %v3151 = vpop.f32.mrb[0].mxu0
    %v3152 = vadd.f32 0.0, %v3151
    %v3153 = vpop.f32.mrb[0].mxu0
    %3154 = vmatprep.mubr.bf16.mxu0 %v3046
    %3155 = vmatmul.mubr.bf16.gmra.mrb[0].mxu0 %v2909
    %v3156 = vpop.f32.mrb[0].mxu0
    %v3157 = vadd.f32 0.0, %v3156
    %v3158 = vpop.f32.mrb[0].mxu0
    %v3159 = vpop.f32.mrb[0].mxu0
    %v3160 = vadd.f32 0.0, %v3159
    %v3161 = vpop.f32.mrb[0].mxu0
    %3162 = vmatprep.mubr.bf16.mxu0 %v3049
    %3163 = vmatmul.mubr.bf16.gmra.mrb[0].mxu0 %v2913
    %v3164 = vpop.f32.mrb[0].mxu0
    %v3165 = vadd.f32 0.0, %v3164
    %v3166 = vpop.f32.mrb[0].mxu0
    %v3167 = vpop.f32.mrb[0].mxu0
    %v3168 = vadd.f32 0.0, %v3167
    %v3169 = vpop.f32.mrb[0].mxu0
    %3170 = vmatprep.mubr.bf16.mxu0 %v3052
    %3171 = vmatmul.mubr.bf16.gmra.mrb[0].mxu0 %v2917
    %v3172 = vpop.f32.mrb[0].mxu0
    %v3173 = vadd.f32 0.0, %v3172
    %v3174 = vpop.f32.mrb[0].mxu0
    %v3175 = vpop.f32.mrb[0].mxu0
    %v3176 = vadd.f32 0.0, %v3175
    %v3177 = vpop.f32.mrb[0].mxu0
    %3178 = vmatprep.mubr.bf16.mxu0 %v3055
    %3179 = vmatmul.mubr.bf16.gmra.mrb[0].mxu0 %v2921
    %v3180 = vpop.f32.mrb[0].mxu0
    %v3181 = vadd.f32 0.0, %v3180
    %v3182 = vpop.f32.mrb[0].mxu0
    %v3183 = vpop.f32.mrb[0].mxu0
    %v3184 = vadd.f32 0.0, %v3183
    %v3185 = vpop.f32.mrb[0].mxu0
    %3186 = vmatprep.mubr.bf16.mxu0 %v3058
    %3187 = vmatmul.mubr.bf16.gmra.mrb[0].mxu0 %v2925
    %v3188 = vpop.f32.mrb[0].mxu0
    %v3189 = vadd.f32 0.0, %v3188
    %v3190 = vpop.f32.mrb[0].mxu0
    %v3191 = vpop.f32.mrb[0].mxu0
    %v3192 = vadd.f32 0.0, %v3191
    %v3193 = vpop.f32.mrb[0].mxu0
    %3194 = vmatprep.mubr.bf16.mxu0 %v3061
    %3195 = vmatmul.mubr.bf16.gmra.mrb[0].mxu0 %v2929
    %v3196 = vpop.f32.mrb[0].mxu0
    %v3197 = vadd.f32 0.0, %v3196
    %v3198 = vpop.f32.mrb[0].mxu0
    %v3199 = vpop.f32.mrb[0].mxu0
    %v3200 = vadd.f32 0.0, %v3199
    %v3201 = vpop.f32.mrb[0].mxu0
    %3202 = vmatprep.mubr.bf16.mxu0 %v3064
    %3203 = vmatmul.mubr.bf16.gmra.mrb[0].mxu0 %v2933
    %v3204 = vpop.f32.mrb[0].mxu0
    %v3205 = vadd.f32 0.0, %v3204
    %v3206 = vpop.f32.mrb[0].mxu0
    %v3207 = vpop.f32.mrb[0].mxu0
    %v3208 = vadd.f32 0.0, %v3207
    %v3209 = vpop.f32.mrb[0].mxu0
    %3210 = vmatprep.mubr.bf16.mxu0 %v3067
    %3211 = vmatmul.mubr.bf16.gmra.mrb[0].mxu0 %v2937
    %v3212 = vpop.f32.mrb[0].mxu0
    %v3213 = vadd.f32 0.0, %v3212
    %v3214 = vpop.f32.mrb[0].mxu0
    %v3215 = vpop.f32.mrb[0].mxu0
    %v3216 = vadd.f32 0.0, %v3215
    %v3217 = vpop.f32.mrb[0].mxu0
    %3218 = vmatprep.mubr.bf16.mxu0 %v3070
    %3219 = vmatmul.mubr.bf16.gmra.mrb[0].mxu0 %v2941
    %v3220 = vpop.f32.mrb[0].mxu0
    %v3221 = vadd.f32 0.0, %v3220
    %v3222 = vpop.f32.mrb[0].mxu0
    %v3223 = vpop.f32.mrb[0].mxu0
    %v3224 = vadd.f32 0.0, %v3223
    %v3225 = vpop.f32.mrb[0].mxu0
    %3226 = vmatprep.mubr.bf16.mxu0 %v3073
    %3227 = vmatmul.mubr.bf16.gmra.mrb[0].mxu0 %v2945
    %v3228 = vpop.f32.mrb[0].mxu0
    %v3229 = vadd.f32 0.0, %v3228
    %v3230 = vpop.f32.mrb[0].mxu0
    %v3231 = vpop.f32.mrb[0].mxu0
    %v3232 = vadd.f32 0.0, %v3231
    %v3233 = vpop.f32.mrb[0].mxu0
    %3234 = vmatprep.mubr.bf16.mxu0 %v3076
    %3235 = vmatmul.mubr.bf16.gmra.mrb[0].mxu0 %v2949
    %v3236 = vpop.f32.mrb[0].mxu0
    %v3237 = vadd.f32 0.0, %v3236
    %v3238 = vpop.f32.mrb[0].mxu0
    %v3239 = vpop.f32.mrb[0].mxu0
    %v3240 = vadd.f32 0.0, %v3239
    %v3241 = vpop.f32.mrb[0].mxu0
    %3242 = vmatprep.mubr.bf16.mxu0 %v3079
    %3243 = vmatmul.mubr.bf16.gmra.mrb[0].mxu0 %v2953
    %v3244 = vpop.f32.mrb[0].mxu0
    %v3245 = vadd.f32 0.0, %v3244
    %v3246 = vpop.f32.mrb[0].mxu0
    %v3247 = vpop.f32.mrb[0].mxu0
    %v3248 = vadd.f32 0.0, %v3247
    %v3249 = vpop.f32.mrb[0].mxu0
    %3250 = vmatprep.mubr.bf16.mxu0 %v3082
    %3251 = vmatmul.mubr.bf16.gmra.mrb[0].mxu0 %v2957
    %v3252 = vpop.f32.mrb[0].mxu0
    %v3253 = vadd.f32 0.0, %v3252
    %v3254 = vpop.f32.mrb[0].mxu0
    %v3255 = vpop.f32.mrb[0].mxu0
    %v3256 = vadd.f32 0.0, %v3255
    %v3257 = vpop.f32.mrb[0].mxu0
    %3258 = vmatprep.mubr.bf16.mxu0 %v3085
    %3259 = vmatmul.mubr.bf16.gmra.mrb[0].mxu0 %v2961
    %v3260 = vpop.f32.mrb[0].mxu0
    %v3261 = vadd.f32 0.0, %v3260
    %v3262 = vpop.f32.mrb[0].mxu0
    %v3263 = vpop.f32.mrb[0].mxu0
    %v3264 = vadd.f32 0.0, %v3263
    %v3265 = vpop.f32.mrb[0].mxu0
    %3266 = vdwg.mxu0
    %v3267 = vadd.f32 %v2823, %v3125
    %v3268 = vadd.f32 %v2824, %v3128
    %v3269 = vadd.f32 %v2825, %v3133
    %v3270 = vadd.f32 %v2826, %v3136
    %v3271 = vadd.f32 %v2827, %v3141
    %v3272 = vadd.f32 %v2828, %v3144
    %v3273 = vadd.f32 %v2829, %v3149
    %v3274 = vadd.f32 %v2830, %v3152
    %v3275 = vadd.f32 %v2831, %v3157
    %v3276 = vadd.f32 %v2832, %v3160
    %v3277 = vadd.f32 %v2833, %v3165
    %v3278 = vadd.f32 %v2834, %v3168
    %v3279 = vadd.f32 %v2835, %v3173
    %v3280 = vadd.f32 %v2836, %v3176
    %v3281 = vadd.f32 %v2837, %v3181
    %v3282 = vadd.f32 %v2838, %v3184
    %v3283 = vadd.f32 %v2839, %v3189
    %v3284 = vadd.f32 %v2840, %v3192
    %v3285 = vadd.f32 %v2841, %v3197
    %v3286 = vadd.f32 %v2842, %v3200
    %v3287 = vadd.f32 %v2843, %v3205
    %v3288 = vadd.f32 %v2844, %v3208
    %v3289 = vadd.f32 %v2845, %v3213
    %v3290 = vadd.f32 %v2846, %v3216
    %v3291 = vadd.f32 %v2847, %v3221
    %v3292 = vadd.f32 %v2848, %v3224
    %v3293 = vadd.f32 %v2849, %v3229
    %v3294 = vadd.f32 %v2850, %v3232
    %v3295 = vadd.f32 %v2851, %v3237
    %v3296 = vadd.f32 %v2852, %v3240
    %v3297 = vadd.f32 %v2853, %v3245
    %v3298 = vadd.f32 %v2854, %v3248
    %v3299 = vadd.f32 %v2855, %v3253
    %v3300 = vadd.f32 %v2856, %v3256
    %v3301 = vadd.f32 %v2857, %v3261
    %v3302 = vadd.f32 %v2858, %v3264
    %v3303 = vld [vmem:[%s69 + $0x40] sm:$0xf0]
    %v3304 = vld [vmem:[%s69 + $0x48] sm:$0xf0]
    %v3305 = vld [vmem:[%s69 + $0x50] sm:$0xff]
    %v3306 = vld [vmem:[%s69 + $0x58] sm:$0xff]
    %v3307 = vld [vmem:[%s69 + $0x60] sm:$0xff]
    %v3308 = vld [vmem:[%s69 + $0x68] sm:$0xff]
    %v3309 = vld [vmem:[%s69 + $0x70] sm:$0xff]
    %v3310 = vld [vmem:[%s69 + $0x78] sm:$0xff]
    %v3311 = vld [vmem:[%s69 + $0x80] sm:$0xff]
    %v3312 = vld [vmem:[%s69 + $0x88] sm:$0xff]
    %v3313 = vld [vmem:[%s69 + $0x90] sm:$0xff]
    %v3314 = vld [vmem:[%s69 + $0x98] sm:$0xff]
    %v3315 = vld [vmem:[%s69 + $0xa0] sm:$0xff]
    %v3316 = vld [vmem:[%s69 + $0xa8] sm:$0xff]
    %v3317 = vld [vmem:[%s69 + $0xb0] sm:$0xff]
    %v3318 = vld [vmem:[%s69 + $0xb8] sm:$0xff]
    %v3319 = vld [vmem:[%s69 + $0xc0] sm:$0xff]
    %v3320 = vld [vmem:[%s69 + $0xc8] sm:$0xff]
    %v3321 = vld [vmem:[%s69 + $0xd0] sm:$0xff]
    %v3322 = vld [vmem:[%s69 + $0xd8] sm:$0xff]
    %v3323 = vld [vmem:[%s69 + $0xe0] sm:$0xff]
    %v3324 = vld [vmem:[%s69 + $0xe8] sm:$0xff]
    %v3325 = vld [vmem:[%s69 + $0xf0] sm:$0xff]
    %v3326 = vld [vmem:[%s69 + $0xf8] sm:$0xff]
    %v3327 = vld [vmem:[%s69 + $0x100] sm:$0xff]
    %v3328 = vld [vmem:[%s69 + $0x108] sm:$0xff]
    %v3329 = vld [vmem:[%s69 + $0x110] sm:$0xff]
    %v3330 = vld [vmem:[%s69 + $0x118] sm:$0xff]
    %v3331 = vld [vmem:[%s69 + $0x120] sm:$0xff]
    %v3332 = vld [vmem:[%s69 + $0x128] sm:$0xff]
    %v3333 = vld [vmem:[%s69 + $0x130] sm:$0xff]
    %v3334 = vld [vmem:[%s69 + $0x138] sm:$0xff]
    %v3335 = vld [vmem:[%s69 + $0x140] sm:$0xff]
    %v3336 = vld [vmem:[%s69 + $0x148] sm:$0xff]
    %v3337 = vld [vmem:[%s69 + $0x150] sm:$0xff]
    %v3338 = vld [vmem:[%s69 + $0x158] sm:$0xff]
    %v3339 = vld [vmem:[%s69 + $0x160] sm:$0xff]
    %v3340 = vld [vmem:[%s69 + $0x168] sm:$0xff]
    %v3341 = vld [vmem:[%s69 + $0x170] sm:$0xff]
    %v3342 = vld [vmem:[%s69 + $0x178] sm:$0xff]
    %v3343 = vld [vmem:[%s69 + $0x180] sm:$0xff]
    %v3344 = vld [vmem:[%s69 + $0x188] sm:$0xff]
    %v3345 = vld [vmem:[%s69 + $0x190] sm:$0xff]
    %v3346 = vld [vmem:[%s69 + $0x198] sm:$0xff]
    %v3347 = vld [vmem:[%s69 + $0x1a0] sm:$0xff]
    %v3348 = vld [vmem:[%s69 + $0x1a8] sm:$0xff]
    %v3349 = vld [vmem:[%s69 + $0x1b0] sm:$0xff]
    %v3350 = vld [vmem:[%s69 + $0x1b8] sm:$0xff]
    %v3351 = vld [vmem:[%s69 + $0x1c0] sm:$0xff]
    %v3352 = vld [vmem:[%s69 + $0x1c8] sm:$0xff]
    %v3353 = vld [vmem:[%s69 + $0x1d0] sm:$0xff]
    %v3354 = vld [vmem:[%s69 + $0x1d8] sm:$0xff]
    %v3355 = vld [vmem:[%s69 + $0x1e0] sm:$0xff]
    %v3356 = vld [vmem:[%s69 + $0x1e8] sm:$0xff]
    %v3357 = vld [vmem:[%s69 + $0x1f0] sm:$0xff]
    %v3358 = vld [vmem:[%s69 + $0x1f8] sm:$0xff]
    %v3359 = vld [vmem:[%s69 + $0x200] sm:$0xff]
    %v3360 = vld [vmem:[%s69 + $0x208] sm:$0xff]
    %v3361 = vld [vmem:[%s69 + $0x210] sm:$0xff]
    %v3362 = vld [vmem:[%s69 + $0x218] sm:$0xff]
    %v3363 = vld [vmem:[%s69 + $0x220] sm:$0xff]
    %v3364 = vld [vmem:[%s69 + $0x228] sm:$0xff]
    %v3365 = vld [vmem:[%s69 + $0x230] sm:$0xff]
    %v3366 = vld [vmem:[%s69 + $0x238] sm:$0xff]
    %v3367 = vld [vmem:[%s69 + $0x240] sm:$0xff]
    %v3368 = vld [vmem:[%s69 + $0x248] sm:$0xff]
    %v3369 = vld [vmem:[%s69 + $0x250] sm:$0xff]
    %v3370 = vld [vmem:[%s69 + $0x258] sm:$0xff]
    %v3371 = vld [vmem:[%s69 + $0x260] sm:$0xff]
    %v3372 = vld [vmem:[%s69 + $0x268] sm:$0xff]
    %v3373 = vld [vmem:[%s69 + $0x270] sm:$0xff]
    %v3374 = vld [vmem:[%s69 + $0x278] sm:$0xff]
    %v3375 = vld [vmem:[%s69 + $0x280] sm:$0xf]
    %v3376 = vld [vmem:[%s69 + $0x288] sm:$0xf]
    %v3377 = vpack.c.bf16 %v3305, %v3303
    %v3378 = vpack.c.bf16 %v3306, %v3304
    %v3379 = vpack.c.bf16 %v3309, %v3307
    %v3380 = vpack.c.bf16 %v3310, %v3308
    %v3381 = vpack.c.bf16 %v3313, %v3311
    %v3382 = vpack.c.bf16 %v3314, %v3312
    %v3383 = vpack.c.bf16 %v3317, %v3315
    %v3384 = vpack.c.bf16 %v3318, %v3316
    %v3385 = vpack.c.bf16 %v3321, %v3319
    %v3386 = vpack.c.bf16 %v3322, %v3320
    %v3387 = vpack.c.bf16 %v3325, %v3323
    %v3388 = vpack.c.bf16 %v3326, %v3324
    %v3389 = vpack.c.bf16 %v3329, %v3327
    %v3390 = vpack.c.bf16 %v3330, %v3328
    %v3391 = vpack.c.bf16 %v3333, %v3331
    %v3392 = vpack.c.bf16 %v3334, %v3332
    %v3393 = vpack.c.bf16 %v3337, %v3335
    %v3394 = vpack.c.bf16 %v3338, %v3336
    %v3395 = vpack.c.bf16 %v3341, %v3339
    %v3396 = vpack.c.bf16 %v3342, %v3340
    %v3397 = vpack.c.bf16 %v3345, %v3343
    %v3398 = vpack.c.bf16 %v3346, %v3344
    %v3399 = vpack.c.bf16 %v3349, %v3347
    %v3400 = vpack.c.bf16 %v3350, %v3348
    %v3401 = vpack.c.bf16 %v3353, %v3351
    %v3402 = vpack.c.bf16 %v3354, %v3352
    %v3403 = vpack.c.bf16 %v3357, %v3355
    %v3404 = vpack.c.bf16 %v3358, %v3356
    %v3405 = vpack.c.bf16 %v3361, %v3359
    %v3406 = vpack.c.bf16 %v3362, %v3360
    %v3407 = vpack.c.bf16 %v3365, %v3363
    %v3408 = vpack.c.bf16 %v3366, %v3364
    %v3409 = vpack.c.bf16 %v3369, %v3367
    %v3410 = vpack.c.bf16 %v3370, %v3368
    %v3411 = vpack.c.bf16 %v3373, %v3371
    %v3412 = vpack.c.bf16 %v3374, %v3372
    %v3413 = vpack.c.bf16 %v3375, %v3375
    %v3414 = vpack.c.bf16 %v3376, %v3376
    %s3415 = scalar_lea.vmem %s1, 408
    %v3416 = vld [vmem:[%s3415] sm:$0xf]
    %v3417 = vld [vmem:[%s3415 + $0x4] sm:$0xf]
    %v3418 = vld [vmem:[%s3415 + $0x8] sm:$0xf]
    %v3419 = vld [vmem:[%s3415 + $0xc] sm:$0xf]
    %v3420 = vld [vmem:[%s3415 + $0x10] sm:$0xf]
    %v3421 = vld [vmem:[%s3415 + $0x14] sm:$0xf]
    %v3422 = vld [vmem:[%s3415 + $0x18] sm:$0xf]
    %v3423 = vld [vmem:[%s3415 + $0x1c] sm:$0xf]
    %v3424 = vld [vmem:[%s3415 + $0x20] sm:$0xf]
    %v3425 = vld [vmem:[%s3415 + $0x24] sm:$0xf]
    %v3426 = vld [vmem:[%s3415 + $0x28] sm:$0xf]
    %v3427 = vld [vmem:[%s3415 + $0x2c] sm:$0xf]
    %v3428 = vld [vmem:[%s3415 + $0x30] sm:$0xf]
    %v3429 = vld [vmem:[%s3415 + $0x34] sm:$0xf]
    %v3430 = vld [vmem:[%s3415 + $0x38] sm:$0xf]
    %v3431 = vld [vmem:[%s3415 + $0x3c] sm:$0xf]
    %v3432 = vld [vmem:[%s3415 + $0x40] sm:$0x3]
    %v3471 = vrot.slane %v3377, 2
    %v3472 = vrot.slane %v3379, 2
    %v3473 = vsel %vm2889, %v3471, %v3472
    %v3474 = vrot.slane %v3378, 2
    %v3475 = vrot.slane %v3380, 2
    %v3476 = vsel %vm2889, %v3474, %v3475
    %v3477 = vrot.slane %v3381, 2
    %v3478 = vsel %vm2889, %v3472, %v3477
    %v3479 = vrot.slane %v3382, 2
    %v3480 = vsel %vm2889, %v3475, %v3479
    %v3481 = vrot.slane %v3383, 2
    %v3482 = vsel %vm2889, %v3477, %v3481
    %v3483 = vrot.slane %v3384, 2
    %v3484 = vsel %vm2889, %v3479, %v3483
    %v3485 = vrot.slane %v3385, 2
    %v3486 = vsel %vm2889, %v3481, %v3485
    %v3487 = vrot.slane %v3386, 2
    %v3488 = vsel %vm2889, %v3483, %v3487
    %v3489 = vrot.slane %v3387, 2
    %v3490 = vsel %vm2889, %v3485, %v3489
    %v3491 = vrot.slane %v3388, 2
    %v3492 = vsel %vm2889, %v3487, %v3491
    %v3493 = vrot.slane %v3389, 2
    %v3494 = vsel %vm2889, %v3489, %v3493
    %v3495 = vrot.slane %v3390, 2
    %v3496 = vsel %vm2889, %v3491, %v3495
    %v3497 = vrot.slane %v3391, 2
    %v3498 = vsel %vm2889, %v3493, %v3497
    %v3499 = vrot.slane %v3392, 2
    %v3500 = vsel %vm2889, %v3495, %v3499
    %v3501 = vrot.slane %v3393, 2
    %v3502 = vsel %vm2889, %v3497, %v3501
    %v3503 = vrot.slane %v3394, 2
    %v3504 = vsel %vm2889, %v3499, %v3503
    %v3505 = vrot.slane %v3395, 2
    %v3506 = vsel %vm2889, %v3501, %v3505
    %v3507 = vrot.slane %v3396, 2
    %v3508 = vsel %vm2889, %v3503, %v3507
    %v3509 = vrot.slane %v3397, 2
    %v3510 = vsel %vm2889, %v3505, %v3509
    %v3511 = vrot.slane %v3398, 2
    %v3512 = vsel %vm2889, %v3507, %v3511
    %v3513 = vrot.slane %v3399, 2
    %v3514 = vsel %vm2889, %v3509, %v3513
    %v3515 = vrot.slane %v3400, 2
    %v3516 = vsel %vm2889, %v3511, %v3515
    %v3517 = vrot.slane %v3401, 2
    %v3518 = vsel %vm2889, %v3513, %v3517
    %v3519 = vrot.slane %v3402, 2
    %v3520 = vsel %vm2889, %v3515, %v3519
    %v3521 = vrot.slane %v3403, 2
    %v3522 = vsel %vm2889, %v3517, %v3521
    %v3523 = vrot.slane %v3404, 2
    %v3524 = vsel %vm2889, %v3519, %v3523
    %v3525 = vrot.slane %v3405, 2
    %v3526 = vsel %vm2889, %v3521, %v3525
    %v3527 = vrot.slane %v3406, 2
    %v3528 = vsel %vm2889, %v3523, %v3527
    %v3529 = vrot.slane %v3407, 2
    %v3530 = vsel %vm2889, %v3525, %v3529
    %v3531 = vrot.slane %v3408, 2
    %v3532 = vsel %vm2889, %v3527, %v3531
    %v3533 = vrot.slane %v3409, 2
    %v3534 = vsel %vm2889, %v3529, %v3533
    %v3535 = vrot.slane %v3410, 2
    %v3536 = vsel %vm2889, %v3531, %v3535
    %v3537 = vrot.slane %v3411, 2
    %v3538 = vsel %vm2889, %v3533, %v3537
    %v3539 = vrot.slane %v3412, 2
    %v3540 = vsel %vm2889, %v3535, %v3539
    %v3541 = vrot.slane %v3413, 2
    %v3542 = vsel %vm2889, %v3537, %v3541
    %v3543 = vrot.slane %v3414, 2
    %v3544 = vsel %vm2889, %v3539, %v3543
    %v3580 = vunpack.c.l.b16 %v3416
    %v3581 = vunpack.c.l.b16 %v3417
    %v3582 = vunpack.c.l.b16 %v3418
    %v3583 = vunpack.c.l.b16 %v3419
    %v3584 = vunpack.c.l.b16 %v3420
    %v3585 = vunpack.c.l.b16 %v3421
    %v3586 = vunpack.c.l.b16 %v3422
    %v3587 = vunpack.c.l.b16 %v3423
    %v3588 = vunpack.c.l.b16 %v3424
    %v3589 = vunpack.c.l.b16 %v3425
    %v3590 = vunpack.c.l.b16 %v3426
    %v3591 = vunpack.c.l.b16 %v3427
    %v3592 = vunpack.c.l.b16 %v3428
    %v3593 = vunpack.c.l.b16 %v3429
    %v3594 = vunpack.c.l.b16 %v3430
    %v3595 = vunpack.c.l.b16 %v3431
    %v3596 = vunpack.c.l.b16 %v3432
    %v3597 = vpack.c.b16 %v3581, %v3580
    %v3598 = vpack.c.b16 %v3583, %v3582
    %v3599 = vpack.c.b16 %v3585, %v3584
    %v3600 = vpack.c.b16 %v3587, %v3586
    %v3601 = vpack.c.b16 %v3589, %v3588
    %v3602 = vpack.c.b16 %v3591, %v3590
    %v3603 = vpack.c.b16 %v3593, %v3592
    %v3604 = vpack.c.b16 %v3595, %v3594
    %v3605 = vpack.c.b16 %v3596, %v3596
    %v3615 = vsel %vm587, %v3476, 0
    %v3618 = vsel %vm587, %v3480, 0
    %v3621 = vsel %vm587, %v3484, 0
    %v3624 = vsel %vm587, %v3488, 0
    %v3627 = vsel %vm587, %v3492, 0
    %v3630 = vsel %vm587, %v3496, 0
    %v3633 = vsel %vm587, %v3500, 0
    %v3636 = vsel %vm587, %v3504, 0
    %v3639 = vsel %vm587, %v3508, 0
    %v3642 = vsel %vm587, %v3512, 0
    %v3645 = vsel %vm587, %v3516, 0
    %v3648 = vsel %vm587, %v3520, 0
    %v3651 = vsel %vm587, %v3524, 0
    %v3654 = vsel %vm587, %v3528, 0
    %v3657 = vsel %vm587, %v3532, 0
    %v3660 = vsel %vm587, %v3536, 0
    %v3663 = vsel %vm587, %v3540, 0
    %v3666 = vsel %vm587, %v3544, 0
    %v3669 = vand.u32 %v3605, %v645
    %3671 = vmatprep.subr.bf16.mxu0 0
    %3672 = vmatpush1.bf16.msra.mxu0 %v3597
    %3673 = vmatprep.subr.bf16.mxu0 0
    %3674 = vmatpush1.bf16.msra.mxu0 %v3598
    %3675 = vmatprep.subr.bf16.mxu0 0
    %3676 = vmatpush1.bf16.msra.mxu0 %v3599
    %3677 = vmatprep.subr.bf16.mxu0 0
    %3678 = vmatpush1.bf16.msra.mxu0 %v3600
    %3679 = vmatprep.subr.bf16.mxu0 0
    %3680 = vmatpush1.bf16.msra.mxu0 %v3601
    %3681 = vmatprep.subr.bf16.mxu0 0
    %3682 = vmatpush1.bf16.msra.mxu0 %v3602
    %3683 = vmatprep.subr.bf16.mxu0 0
    %3684 = vmatpush1.bf16.msra.mxu0 %v3603
    %3685 = vmatprep.subr.bf16.mxu0 0
    %3686 = vmatpush1.bf16.msra.mxu0 %v3604
    %3687 = vmatprep.subr.bf16.mxu0 0
    %3688 = vmatpush1.bf16.msra.mxu0 %v3669
    %3689 = vmatprep.subr.bf16.mxu0 0
    %3690 = vmatpush1.bf16.msra.mxu0 0
    %3691 = vmatprep.subr.bf16.mxu0 0
    %3692 = vmatpush1.bf16.msra.mxu0 0
    %3693 = vmatprep.subr.bf16.mxu0 0
    %3694 = vmatpush1.bf16.msra.mxu0 0
    %3695 = vmatprep.subr.bf16.mxu0 0
    %3696 = vmatpush1.bf16.msra.mxu0 0
    %3697 = vmatprep.subr.bf16.mxu0 0
    %3698 = vmatpush1.bf16.msra.mxu0 0
    %3699 = vmatprep.subr.bf16.mxu0 0
    %3700 = vmatpush1.bf16.msra.mxu0 0
    %3701 = vmatprep.subr.bf16.mxu0 0
    %3702 = vmatpush1.bf16.msra.mxu0 0
    %3703 = vmatprep.mubr.bf16.mxu0 %v3615
    %3704 = vmatmul.mubr.bf16.gmra.mrb[0].mxu0 %v3473
    %v3705 = vpop.f32.mrb[0].mxu0
    %v3706 = vadd.f32 0.0, %v3705
    %v3707 = vpop.f32.mrb[0].mxu0
    %v3708 = vpop.f32.mrb[0].mxu0
    %v3709 = vadd.f32 0.0, %v3708
    %v3710 = vpop.f32.mrb[0].mxu0
    %3711 = vmatprep.mubr.bf16.mxu0 %v3618
    %3712 = vmatmul.mubr.bf16.gmra.mrb[0].mxu0 %v3478
    %v3713 = vpop.f32.mrb[0].mxu0
    %v3714 = vadd.f32 0.0, %v3713
    %v3715 = vpop.f32.mrb[0].mxu0
    %v3716 = vpop.f32.mrb[0].mxu0
    %v3717 = vadd.f32 0.0, %v3716
    %v3718 = vpop.f32.mrb[0].mxu0
    %3719 = vmatprep.mubr.bf16.mxu0 %v3621
    %3720 = vmatmul.mubr.bf16.gmra.mrb[0].mxu0 %v3482
    %v3721 = vpop.f32.mrb[0].mxu0
    %v3722 = vadd.f32 0.0, %v3721
    %v3723 = vpop.f32.mrb[0].mxu0
    %v3724 = vpop.f32.mrb[0].mxu0
    %v3725 = vadd.f32 0.0, %v3724
    %v3726 = vpop.f32.mrb[0].mxu0
    %3727 = vmatprep.mubr.bf16.mxu0 %v3624
    %3728 = vmatmul.mubr.bf16.gmra.mrb[0].mxu0 %v3486
    %v3729 = vpop.f32.mrb[0].mxu0
    %v3730 = vadd.f32 0.0, %v3729
    %v3731 = vpop.f32.mrb[0].mxu0
    %v3732 = vpop.f32.mrb[0].mxu0
    %v3733 = vadd.f32 0.0, %v3732
    %v3734 = vpop.f32.mrb[0].mxu0
    %3735 = vmatprep.mubr.bf16.mxu0 %v3627
    %3736 = vmatmul.mubr.bf16.gmra.mrb[0].mxu0 %v3490
    %v3737 = vpop.f32.mrb[0].mxu0
    %v3738 = vadd.f32 0.0, %v3737
    %v3739 = vpop.f32.mrb[0].mxu0
    %v3740 = vpop.f32.mrb[0].mxu0
    %v3741 = vadd.f32 0.0, %v3740
    %v3742 = vpop.f32.mrb[0].mxu0
    %3743 = vmatprep.mubr.bf16.mxu0 %v3630
    %3744 = vmatmul.mubr.bf16.gmra.mrb[0].mxu0 %v3494
    %v3745 = vpop.f32.mrb[0].mxu0
    %v3746 = vadd.f32 0.0, %v3745
    %v3747 = vpop.f32.mrb[0].mxu0
    %v3748 = vpop.f32.mrb[0].mxu0
    %v3749 = vadd.f32 0.0, %v3748
    %v3750 = vpop.f32.mrb[0].mxu0
    %3751 = vmatprep.mubr.bf16.mxu0 %v3633
    %3752 = vmatmul.mubr.bf16.gmra.mrb[0].mxu0 %v3498
    %v3753 = vpop.f32.mrb[0].mxu0
    %v3754 = vadd.f32 0.0, %v3753
    %v3755 = vpop.f32.mrb[0].mxu0
    %v3756 = vpop.f32.mrb[0].mxu0
    %v3757 = vadd.f32 0.0, %v3756
    %v3758 = vpop.f32.mrb[0].mxu0
    %3759 = vmatprep.mubr.bf16.mxu0 %v3636
    %3760 = vmatmul.mubr.bf16.gmra.mrb[0].mxu0 %v3502
    %v3761 = vpop.f32.mrb[0].mxu0
    %v3762 = vadd.f32 0.0, %v3761
    %v3763 = vpop.f32.mrb[0].mxu0
    %v3764 = vpop.f32.mrb[0].mxu0
    %v3765 = vadd.f32 0.0, %v3764
    %v3766 = vpop.f32.mrb[0].mxu0
    %3767 = vmatprep.mubr.bf16.mxu0 %v3639
    %3768 = vmatmul.mubr.bf16.gmra.mrb[0].mxu0 %v3506
    %v3769 = vpop.f32.mrb[0].mxu0
    %v3770 = vadd.f32 0.0, %v3769
    %v3771 = vpop.f32.mrb[0].mxu0
    %v3772 = vpop.f32.mrb[0].mxu0
    %v3773 = vadd.f32 0.0, %v3772
    %v3774 = vpop.f32.mrb[0].mxu0
    %3775 = vmatprep.mubr.bf16.mxu0 %v3642
    %3776 = vmatmul.mubr.bf16.gmra.mrb[0].mxu0 %v3510
    %v3777 = vpop.f32.mrb[0].mxu0
    %v3778 = vadd.f32 0.0, %v3777
    %v3779 = vpop.f32.mrb[0].mxu0
    %v3780 = vpop.f32.mrb[0].mxu0
    %v3781 = vadd.f32 0.0, %v3780
    %v3782 = vpop.f32.mrb[0].mxu0
    %3783 = vmatprep.mubr.bf16.mxu0 %v3645
    %3784 = vmatmul.mubr.bf16.gmra.mrb[0].mxu0 %v3514
    %v3785 = vpop.f32.mrb[0].mxu0
    %v3786 = vadd.f32 0.0, %v3785
    %v3787 = vpop.f32.mrb[0].mxu0
    %v3788 = vpop.f32.mrb[0].mxu0
    %v3789 = vadd.f32 0.0, %v3788
    %v3790 = vpop.f32.mrb[0].mxu0
    %3791 = vmatprep.mubr.bf16.mxu0 %v3648
    %3792 = vmatmul.mubr.bf16.gmra.mrb[0].mxu0 %v3518
    %v3793 = vpop.f32.mrb[0].mxu0
    %v3794 = vadd.f32 0.0, %v3793
    %v3795 = vpop.f32.mrb[0].mxu0
    %v3796 = vpop.f32.mrb[0].mxu0
    %v3797 = vadd.f32 0.0, %v3796
    %v3798 = vpop.f32.mrb[0].mxu0
    %3799 = vmatprep.mubr.bf16.mxu0 %v3651
    %3800 = vmatmul.mubr.bf16.gmra.mrb[0].mxu0 %v3522
    %v3801 = vpop.f32.mrb[0].mxu0
    %v3802 = vadd.f32 0.0, %v3801
    %v3803 = vpop.f32.mrb[0].mxu0
    %v3804 = vpop.f32.mrb[0].mxu0
    %v3805 = vadd.f32 0.0, %v3804
    %v3806 = vpop.f32.mrb[0].mxu0
    %3807 = vmatprep.mubr.bf16.mxu0 %v3654
    %3808 = vmatmul.mubr.bf16.gmra.mrb[0].mxu0 %v3526
    %v3809 = vpop.f32.mrb[0].mxu0
    %v3810 = vadd.f32 0.0, %v3809
    %v3811 = vpop.f32.mrb[0].mxu0
    %v3812 = vpop.f32.mrb[0].mxu0
    %v3813 = vadd.f32 0.0, %v3812
    %v3814 = vpop.f32.mrb[0].mxu0
    %3815 = vmatprep.mubr.bf16.mxu0 %v3657
    %3816 = vmatmul.mubr.bf16.gmra.mrb[0].mxu0 %v3530
    %v3817 = vpop.f32.mrb[0].mxu0
    %v3818 = vadd.f32 0.0, %v3817
    %v3819 = vpop.f32.mrb[0].mxu0
    %v3820 = vpop.f32.mrb[0].mxu0
    %v3821 = vadd.f32 0.0, %v3820
    %v3822 = vpop.f32.mrb[0].mxu0
    %3823 = vmatprep.mubr.bf16.mxu0 %v3660
    %3824 = vmatmul.mubr.bf16.gmra.mrb[0].mxu0 %v3534
    %v3825 = vpop.f32.mrb[0].mxu0
    %v3826 = vadd.f32 0.0, %v3825
    %v3827 = vpop.f32.mrb[0].mxu0
    %v3828 = vpop.f32.mrb[0].mxu0
    %v3829 = vadd.f32 0.0, %v3828
    %v3830 = vpop.f32.mrb[0].mxu0
    %3831 = vmatprep.mubr.bf16.mxu0 %v3663
    %3832 = vmatmul.mubr.bf16.gmra.mrb[0].mxu0 %v3538
    %v3833 = vpop.f32.mrb[0].mxu0
    %v3834 = vadd.f32 0.0, %v3833
    %v3835 = vpop.f32.mrb[0].mxu0
    %v3836 = vpop.f32.mrb[0].mxu0
    %v3837 = vadd.f32 0.0, %v3836
    %v3838 = vpop.f32.mrb[0].mxu0
    %3839 = vmatprep.mubr.bf16.mxu0 %v3666
    %3840 = vmatmul.mubr.bf16.gmra.mrb[0].mxu0 %v3542
    %v3841 = vpop.f32.mrb[0].mxu0
    %v3842 = vadd.f32 0.0, %v3841
    %v3843 = vpop.f32.mrb[0].mxu0
    %v3844 = vpop.f32.mrb[0].mxu0
    %v3845 = vadd.f32 0.0, %v3844
    %v3846 = vpop.f32.mrb[0].mxu0
    %3847 = vdwg.mxu0
    %v3848 = vadd.f32 %v3267, %v3706
    %v3849 = vadd.f32 %v3268, %v3709
    %v3850 = vadd.f32 %v3269, %v3714
    %v3851 = vadd.f32 %v3270, %v3717
    %v3852 = vadd.f32 %v3271, %v3722
    %v3853 = vadd.f32 %v3272, %v3725
    %v3854 = vadd.f32 %v3273, %v3730
    %v3855 = vadd.f32 %v3274, %v3733
    %v3856 = vadd.f32 %v3275, %v3738
    %v3857 = vadd.f32 %v3276, %v3741
    %v3858 = vadd.f32 %v3277, %v3746
    %v3859 = vadd.f32 %v3278, %v3749
    %v3860 = vadd.f32 %v3279, %v3754
    %v3861 = vadd.f32 %v3280, %v3757
    %v3862 = vadd.f32 %v3281, %v3762
    %v3863 = vadd.f32 %v3282, %v3765
    %v3864 = vadd.f32 %v3283, %v3770
    %v3865 = vadd.f32 %v3284, %v3773
    %v3866 = vadd.f32 %v3285, %v3778
    %v3867 = vadd.f32 %v3286, %v3781
    %v3868 = vadd.f32 %v3287, %v3786
    %v3869 = vadd.f32 %v3288, %v3789
    %v3870 = vadd.f32 %v3289, %v3794
    %v3871 = vadd.f32 %v3290, %v3797
    %v3872 = vadd.f32 %v3291, %v3802
    %v3873 = vadd.f32 %v3292, %v3805
    %v3874 = vadd.f32 %v3293, %v3810
    %v3875 = vadd.f32 %v3294, %v3813
    %v3876 = vadd.f32 %v3295, %v3818
    %v3877 = vadd.f32 %v3296, %v3821
    %v3878 = vadd.f32 %v3297, %v3826
    %v3879 = vadd.f32 %v3298, %v3829
    %v3880 = vadd.f32 %v3299, %v3834
    %v3881 = vadd.f32 %v3300, %v3837
    %v3882 = vadd.f32 %v3301, %v3842
    %v3883 = vadd.f32 %v3302, %v3845
    %v3884 = vld [vmem:[%s69 + $0x40] sm:$0xe0]
    %v3885 = vld [vmem:[%s69 + $0x48] sm:$0xe0]
    %v3886 = vld [vmem:[%s69 + $0x280] sm:$0x1f]
    %v3887 = vld [vmem:[%s69 + $0x288] sm:$0x1f]
    %v3888 = vpack.c.bf16 %v3305, %v3884
    %v3889 = vpack.c.bf16 %v3306, %v3885
    %v3890 = vpack.c.bf16 %v3886, %v3886
    %v3891 = vpack.c.bf16 %v3887, %v3887
    %s3892 = scalar_lea.vmem %s1, 476
    %v3893 = vld [vmem:[%s3892] sm:$0xf]
    %v3894 = vld [vmem:[%s3892 + $0x4] sm:$0xf]
    %v3895 = vld [vmem:[%s3892 + $0x8] sm:$0xf]
    %v3896 = vld [vmem:[%s3892 + $0xc] sm:$0xf]
    %v3897 = vld [vmem:[%s3892 + $0x10] sm:$0xf]
    %v3898 = vld [vmem:[%s3892 + $0x14] sm:$0xf]
    %v3899 = vld [vmem:[%s3892 + $0x18] sm:$0xf]
    %v3900 = vld [vmem:[%s3892 + $0x1c] sm:$0xf]
    %v3901 = vld [vmem:[%s3892 + $0x20] sm:$0xf]
    %v3902 = vld [vmem:[%s3892 + $0x24] sm:$0xf]
    %v3903 = vld [vmem:[%s3892 + $0x28] sm:$0xf]
    %v3904 = vld [vmem:[%s3892 + $0x2c] sm:$0xf]
    %v3905 = vld [vmem:[%s3892 + $0x30] sm:$0xf]
    %v3906 = vld [vmem:[%s3892 + $0x34] sm:$0xf]
    %v3907 = vld [vmem:[%s3892 + $0x38] sm:$0xf]
    %v3908 = vld [vmem:[%s3892 + $0x3c] sm:$0xf]
    %v3909 = vld [vmem:[%s3892 + $0x40] sm:$0x3]
    %vm3910 = vsmask.f32 5376
    %v3912 = vshrl.u32 %v3888, 16
    %v3914 = vrot.slane %v3912, 2
    %v3915 = vshll.u32 %v3888, 16
    %v3917 = vrot.slane %v3915, 3
    %v3918 = vor.u32 %v3914, %v3917
    %v3920 = vshrl.u32 %v3379, 16
    %v3922 = vrot.slane %v3920, 2
    %v3923 = vshll.u32 %v3379, 16
    %v3925 = vrot.slane %v3923, 3
    %v3926 = vor.u32 %v3922, %v3925
    %v3927 = vsel %vm3910, %v3918, %v3926
    %v3929 = vshrl.u32 %v3889, 16
    %v3931 = vrot.slane %v3929, 2
    %v3932 = vshll.u32 %v3889, 16
    %v3934 = vrot.slane %v3932, 3
    %v3935 = vor.u32 %v3931, %v3934
    %v3937 = vshrl.u32 %v3380, 16
    %v3939 = vrot.slane %v3937, 2
    %v3940 = vshll.u32 %v3380, 16
    %v3942 = vrot.slane %v3940, 3
    %v3943 = vor.u32 %v3939, %v3942
    %v3944 = vsel %vm3910, %v3935, %v3943
    %v3946 = vshrl.u32 %v3381, 16
    %v3948 = vrot.slane %v3946, 2
    %v3949 = vshll.u32 %v3381, 16
    %v3951 = vrot.slane %v3949, 3
    %v3952 = vor.u32 %v3948, %v3951
    %v3953 = vsel %vm3910, %v3926, %v3952
    %v3955 = vshrl.u32 %v3382, 16
    %v3957 = vrot.slane %v3955, 2
    %v3958 = vshll.u32 %v3382, 16
    %v3960 = vrot.slane %v3958, 3
    %v3961 = vor.u32 %v3957, %v3960
    %v3962 = vsel %vm3910, %v3943, %v3961
    %v3964 = vshrl.u32 %v3383, 16
    %v3966 = vrot.slane %v3964, 2
    %v3967 = vshll.u32 %v3383, 16
    %v3969 = vrot.slane %v3967, 3
    %v3970 = vor.u32 %v3966, %v3969
    %v3971 = vsel %vm3910, %v3952, %v3970
    %v3973 = vshrl.u32 %v3384, 16
    %v3975 = vrot.slane %v3973, 2
    %v3976 = vshll.u32 %v3384, 16
    %v3978 = vrot.slane %v3976, 3
    %v3979 = vor.u32 %v3975, %v3978
    %v3980 = vsel %vm3910, %v3961, %v3979
    %v3982 = vshrl.u32 %v3385, 16
    %v3984 = vrot.slane %v3982, 2
    %v3985 = vshll.u32 %v3385, 16
    %v3987 = vrot.slane %v3985, 3
    %v3988 = vor.u32 %v3984, %v3987
    %v3989 = vsel %vm3910, %v3970, %v3988
    %v3991 = vshrl.u32 %v3386, 16
    %v3993 = vrot.slane %v3991, 2
    %v3994 = vshll.u32 %v3386, 16
    %v3996 = vrot.slane %v3994, 3
    %v3997 = vor.u32 %v3993, %v3996
    %v3998 = vsel %vm3910, %v3979, %v3997
    %v4000 = vshrl.u32 %v3387, 16
    %v4002 = vrot.slane %v4000, 2
    %v4003 = vshll.u32 %v3387, 16
    %v4005 = vrot.slane %v4003, 3
    %v4006 = vor.u32 %v4002, %v4005
    %v4007 = vsel %vm3910, %v3988, %v4006
    %v4009 = vshrl.u32 %v3388, 16
    %v4011 = vrot.slane %v4009, 2
    %v4012 = vshll.u32 %v3388, 16
    %v4014 = vrot.slane %v4012, 3
    %v4015 = vor.u32 %v4011, %v4014
    %v4016 = vsel %vm3910, %v3997, %v4015
    %v4018 = vshrl.u32 %v3389, 16
    %v4020 = vrot.slane %v4018, 2
    %v4021 = vshll.u32 %v3389, 16
    %v4023 = vrot.slane %v4021, 3
    %v4024 = vor.u32 %v4020, %v4023
    %v4025 = vsel %vm3910, %v4006, %v4024
    %v4027 = vshrl.u32 %v3390, 16
    %v4029 = vrot.slane %v4027, 2
    %v4030 = vshll.u32 %v3390, 16
    %v4032 = vrot.slane %v4030, 3
    %v4033 = vor.u32 %v4029, %v4032
    %v4034 = vsel %vm3910, %v4015, %v4033
    %v4036 = vshrl.u32 %v3391, 16
    %v4038 = vrot.slane %v4036, 2
    %v4039 = vshll.u32 %v3391, 16
    %v4041 = vrot.slane %v4039, 3
    %v4042 = vor.u32 %v4038, %v4041
    %v4043 = vsel %vm3910, %v4024, %v4042
    %v4045 = vshrl.u32 %v3392, 16
    %v4047 = vrot.slane %v4045, 2
    %v4048 = vshll.u32 %v3392, 16
    %v4050 = vrot.slane %v4048, 3
    %v4051 = vor.u32 %v4047, %v4050
    %v4052 = vsel %vm3910, %v4033, %v4051
    %v4054 = vshrl.u32 %v3393, 16
    %v4056 = vrot.slane %v4054, 2
    %v4057 = vshll.u32 %v3393, 16
    %v4059 = vrot.slane %v4057, 3
    %v4060 = vor.u32 %v4056, %v4059
    %v4061 = vsel %vm3910, %v4042, %v4060
    %v4063 = vshrl.u32 %v3394, 16
    %v4065 = vrot.slane %v4063, 2
    %v4066 = vshll.u32 %v3394, 16
    %v4068 = vrot.slane %v4066, 3
    %v4069 = vor.u32 %v4065, %v4068
    %v4070 = vsel %vm3910, %v4051, %v4069
    %v4072 = vshrl.u32 %v3395, 16
    %v4074 = vrot.slane %v4072, 2
    %v4075 = vshll.u32 %v3395, 16
    %v4077 = vrot.slane %v4075, 3
    %v4078 = vor.u32 %v4074, %v4077
    %v4079 = vsel %vm3910, %v4060, %v4078
    %v4081 = vshrl.u32 %v3396, 16
    %v4083 = vrot.slane %v4081, 2
    %v4084 = vshll.u32 %v3396, 16
    %v4086 = vrot.slane %v4084, 3
    %v4087 = vor.u32 %v4083, %v4086
    %v4088 = vsel %vm3910, %v4069, %v4087
    %v4090 = vshrl.u32 %v3397, 16
    %v4092 = vrot.slane %v4090, 2
    %v4093 = vshll.u32 %v3397, 16
    %v4095 = vrot.slane %v4093, 3
    %v4096 = vor.u32 %v4092, %v4095
    %v4097 = vsel %vm3910, %v4078, %v4096
    %v4099 = vshrl.u32 %v3398, 16
    %v4101 = vrot.slane %v4099, 2
    %v4102 = vshll.u32 %v3398, 16
    %v4104 = vrot.slane %v4102, 3
    %v4105 = vor.u32 %v4101, %v4104
    %v4106 = vsel %vm3910, %v4087, %v4105
    %v4108 = vshrl.u32 %v3399, 16
    %v4110 = vrot.slane %v4108, 2
    %v4111 = vshll.u32 %v3399, 16
    %v4113 = vrot.slane %v4111, 3
    %v4114 = vor.u32 %v4110, %v4113
    %v4115 = vsel %vm3910, %v4096, %v4114
    %v4117 = vshrl.u32 %v3400, 16
    %v4119 = vrot.slane %v4117, 2
    %v4120 = vshll.u32 %v3400, 16
    %v4122 = vrot.slane %v4120, 3
    %v4123 = vor.u32 %v4119, %v4122
    %v4124 = vsel %vm3910, %v4105, %v4123
    %v4126 = vshrl.u32 %v3401, 16
    %v4128 = vrot.slane %v4126, 2
    %v4129 = vshll.u32 %v3401, 16
    %v4131 = vrot.slane %v4129, 3
    %v4132 = vor.u32 %v4128, %v4131
    %v4133 = vsel %vm3910, %v4114, %v4132
    %v4135 = vshrl.u32 %v3402, 16
    %v4137 = vrot.slane %v4135, 2
    %v4138 = vshll.u32 %v3402, 16
    %v4140 = vrot.slane %v4138, 3
    %v4141 = vor.u32 %v4137, %v4140
    %v4142 = vsel %vm3910, %v4123, %v4141
    %v4144 = vshrl.u32 %v3403, 16
    %v4146 = vrot.slane %v4144, 2
    %v4147 = vshll.u32 %v3403, 16
    %v4149 = vrot.slane %v4147, 3
    %v4150 = vor.u32 %v4146, %v4149
    %v4151 = vsel %vm3910, %v4132, %v4150
    %v4153 = vshrl.u32 %v3404, 16
    %v4155 = vrot.slane %v4153, 2
    %v4156 = vshll.u32 %v3404, 16
    %v4158 = vrot.slane %v4156, 3
    %v4159 = vor.u32 %v4155, %v4158
    %v4160 = vsel %vm3910, %v4141, %v4159
    %v4162 = vshrl.u32 %v3405, 16
    %v4164 = vrot.slane %v4162, 2
    %v4165 = vshll.u32 %v3405, 16
    %v4167 = vrot.slane %v4165, 3
    %v4168 = vor.u32 %v4164, %v4167
    %v4169 = vsel %vm3910, %v4150, %v4168
    %v4171 = vshrl.u32 %v3406, 16
    %v4173 = vrot.slane %v4171, 2
    %v4174 = vshll.u32 %v3406, 16
    %v4176 = vrot.slane %v4174, 3
    %v4177 = vor.u32 %v4173, %v4176
    %v4178 = vsel %vm3910, %v4159, %v4177
    %v4180 = vshrl.u32 %v3407, 16
    %v4182 = vrot.slane %v4180, 2
    %v4183 = vshll.u32 %v3407, 16
    %v4185 = vrot.slane %v4183, 3
    %v4186 = vor.u32 %v4182, %v4185
    %v4187 = vsel %vm3910, %v4168, %v4186
    %v4189 = vshrl.u32 %v3408, 16
    %v4191 = vrot.slane %v4189, 2
    %v4192 = vshll.u32 %v3408, 16
    %v4194 = vrot.slane %v4192, 3
    %v4195 = vor.u32 %v4191, %v4194
    %v4196 = vsel %vm3910, %v4177, %v4195
    %v4198 = vshrl.u32 %v3409, 16
    %v4200 = vrot.slane %v4198, 2
    %v4201 = vshll.u32 %v3409, 16
    %v4203 = vrot.slane %v4201, 3
    %v4204 = vor.u32 %v4200, %v4203
    %v4205 = vsel %vm3910, %v4186, %v4204
    %v4207 = vshrl.u32 %v3410, 16
    %v4209 = vrot.slane %v4207, 2
    %v4210 = vshll.u32 %v3410, 16
    %v4212 = vrot.slane %v4210, 3
    %v4213 = vor.u32 %v4209, %v4212
    %v4214 = vsel %vm3910, %v4195, %v4213
    %v4216 = vshrl.u32 %v3411, 16
    %v4218 = vrot.slane %v4216, 2
    %v4219 = vshll.u32 %v3411, 16
    %v4221 = vrot.slane %v4219, 3
    %v4222 = vor.u32 %v4218, %v4221
    %v4223 = vsel %vm3910, %v4204, %v4222
    %v4225 = vshrl.u32 %v3412, 16
    %v4227 = vrot.slane %v4225, 2
    %v4228 = vshll.u32 %v3412, 16
    %v4230 = vrot.slane %v4228, 3
    %v4231 = vor.u32 %v4227, %v4230
    %v4232 = vsel %vm3910, %v4213, %v4231
    %v4234 = vshrl.u32 %v3890, 16
    %v4236 = vrot.slane %v4234, 2
    %v4237 = vshll.u32 %v3890, 16
    %v4239 = vrot.slane %v4237, 3
    %v4240 = vor.u32 %v4236, %v4239
    %v4241 = vsel %vm3910, %v4222, %v4240
    %v4243 = vshrl.u32 %v3891, 16
    %v4245 = vrot.slane %v4243, 2
    %v4246 = vshll.u32 %v3891, 16
    %v4248 = vrot.slane %v4246, 3
    %v4249 = vor.u32 %v4245, %v4248
    %v4250 = vsel %vm3910, %v4231, %v4249
    %v4286 = vunpack.c.l.b16 %v3893
    %v4287 = vunpack.c.l.b16 %v3894
    %v4288 = vunpack.c.l.b16 %v3895
    %v4289 = vunpack.c.l.b16 %v3896
    %v4290 = vunpack.c.l.b16 %v3897
    %v4291 = vunpack.c.l.b16 %v3898
    %v4292 = vunpack.c.l.b16 %v3899
    %v4293 = vunpack.c.l.b16 %v3900
    %v4294 = vunpack.c.l.b16 %v3901
    %v4295 = vunpack.c.l.b16 %v3902
    %v4296 = vunpack.c.l.b16 %v3903
    %v4297 = vunpack.c.l.b16 %v3904
    %v4298 = vunpack.c.l.b16 %v3905
    %v4299 = vunpack.c.l.b16 %v3906
    %v4300 = vunpack.c.l.b16 %v3907
    %v4301 = vunpack.c.l.b16 %v3908
    %v4302 = vunpack.c.l.b16 %v3909
    %v4303 = vpack.c.b16 %v4287, %v4286
    %v4304 = vpack.c.b16 %v4289, %v4288
    %v4305 = vpack.c.b16 %v4291, %v4290
    %v4306 = vpack.c.b16 %v4293, %v4292
    %v4307 = vpack.c.b16 %v4295, %v4294
    %v4308 = vpack.c.b16 %v4297, %v4296
    %v4309 = vpack.c.b16 %v4299, %v4298
    %v4310 = vpack.c.b16 %v4301, %v4300
    %v4311 = vpack.c.b16 %v4302, %v4302
    %v4321 = vsel %vm587, %v3944, 0
    %v4324 = vsel %vm587, %v3962, 0
    %v4327 = vsel %vm587, %v3980, 0
    %v4330 = vsel %vm587, %v3998, 0
    %v4333 = vsel %vm587, %v4016, 0
    %v4336 = vsel %vm587, %v4034, 0
    %v4339 = vsel %vm587, %v4052, 0
    %v4342 = vsel %vm587, %v4070, 0
    %v4345 = vsel %vm587, %v4088, 0
    %v4348 = vsel %vm587, %v4106, 0
    %v4351 = vsel %vm587, %v4124, 0
    %v4354 = vsel %vm587, %v4142, 0
    %v4357 = vsel %vm587, %v4160, 0
    %v4360 = vsel %vm587, %v4178, 0
    %v4363 = vsel %vm587, %v4196, 0
    %v4366 = vsel %vm587, %v4214, 0
    %v4369 = vsel %vm587, %v4232, 0
    %v4372 = vsel %vm587, %v4250, 0
    %v4375 = vand.u32 %v4311, %v645
    %4377 = vmatprep.subr.bf16.mxu0 0
    %4378 = vmatpush1.bf16.msra.mxu0 %v4303
    %4379 = vmatprep.subr.bf16.mxu0 0
    %4380 = vmatpush1.bf16.msra.mxu0 %v4304
    %4381 = vmatprep.subr.bf16.mxu0 0
    %4382 = vmatpush1.bf16.msra.mxu0 %v4305
    %4383 = vmatprep.subr.bf16.mxu0 0
    %4384 = vmatpush1.bf16.msra.mxu0 %v4306
    %4385 = vmatprep.subr.bf16.mxu0 0
    %4386 = vmatpush1.bf16.msra.mxu0 %v4307
    %4387 = vmatprep.subr.bf16.mxu0 0
    %4388 = vmatpush1.bf16.msra.mxu0 %v4308
    %4389 = vmatprep.subr.bf16.mxu0 0
    %4390 = vmatpush1.bf16.msra.mxu0 %v4309
    %4391 = vmatprep.subr.bf16.mxu0 0
    %4392 = vmatpush1.bf16.msra.mxu0 %v4310
    %4393 = vmatprep.subr.bf16.mxu0 0
    %4394 = vmatpush1.bf16.msra.mxu0 %v4375
    %4395 = vmatprep.subr.bf16.mxu0 0
    %4396 = vmatpush1.bf16.msra.mxu0 0
    %4397 = vmatprep.subr.bf16.mxu0 0
    %4398 = vmatpush1.bf16.msra.mxu0 0
    %4399 = vmatprep.subr.bf16.mxu0 0
    %4400 = vmatpush1.bf16.msra.mxu0 0
    %4401 = vmatprep.subr.bf16.mxu0 0
    %4402 = vmatpush1.bf16.msra.mxu0 0
    %4403 = vmatprep.subr.bf16.mxu0 0
    %4404 = vmatpush1.bf16.msra.mxu0 0
    %4405 = vmatprep.subr.bf16.mxu0 0
    %4406 = vmatpush1.bf16.msra.mxu0 0
    %4407 = vmatprep.subr.bf16.mxu0 0
    %4408 = vmatpush1.bf16.msra.mxu0 0
    %4409 = vmatprep.mubr.bf16.mxu0 %v4321
    %4410 = vmatmul.mubr.bf16.gmra.mrb[0].mxu0 %v3927
    %v4411 = vpop.f32.mrb[0].mxu0
    %v4412 = vadd.f32 0.0, %v4411
    %v4413 = vpop.f32.mrb[0].mxu0
    %v4414 = vpop.f32.mrb[0].mxu0
    %v4415 = vadd.f32 0.0, %v4414
    %v4416 = vpop.f32.mrb[0].mxu0
    %4417 = vmatprep.mubr.bf16.mxu0 %v4324
    %4418 = vmatmul.mubr.bf16.gmra.mrb[0].mxu0 %v3953
    %v4419 = vpop.f32.mrb[0].mxu0
    %v4420 = vadd.f32 0.0, %v4419
    %v4421 = vpop.f32.mrb[0].mxu0
    %v4422 = vpop.f32.mrb[0].mxu0
    %v4423 = vadd.f32 0.0, %v4422
    %v4424 = vpop.f32.mrb[0].mxu0
    %4425 = vmatprep.mubr.bf16.mxu0 %v4327
    %4426 = vmatmul.mubr.bf16.gmra.mrb[0].mxu0 %v3971
    %v4427 = vpop.f32.mrb[0].mxu0
    %v4428 = vadd.f32 0.0, %v4427
    %v4429 = vpop.f32.mrb[0].mxu0
    %v4430 = vpop.f32.mrb[0].mxu0
    %v4431 = vadd.f32 0.0, %v4430
    %v4432 = vpop.f32.mrb[0].mxu0
    %4433 = vmatprep.mubr.bf16.mxu0 %v4330
    %4434 = vmatmul.mubr.bf16.gmra.mrb[0].mxu0 %v3989
    %v4435 = vpop.f32.mrb[0].mxu0
    %v4436 = vadd.f32 0.0, %v4435
    %v4437 = vpop.f32.mrb[0].mxu0
    %v4438 = vpop.f32.mrb[0].mxu0
    %v4439 = vadd.f32 0.0, %v4438
    %v4440 = vpop.f32.mrb[0].mxu0
    %4441 = vmatprep.mubr.bf16.mxu0 %v4333
    %4442 = vmatmul.mubr.bf16.gmra.mrb[0].mxu0 %v4007
    %v4443 = vpop.f32.mrb[0].mxu0
    %v4444 = vadd.f32 0.0, %v4443
    %v4445 = vpop.f32.mrb[0].mxu0
    %v4446 = vpop.f32.mrb[0].mxu0
    %v4447 = vadd.f32 0.0, %v4446
    %v4448 = vpop.f32.mrb[0].mxu0
    %4449 = vmatprep.mubr.bf16.mxu0 %v4336
    %4450 = vmatmul.mubr.bf16.gmra.mrb[0].mxu0 %v4025
    %v4451 = vpop.f32.mrb[0].mxu0
    %v4452 = vadd.f32 0.0, %v4451
    %v4453 = vpop.f32.mrb[0].mxu0
    %v4454 = vpop.f32.mrb[0].mxu0
    %v4455 = vadd.f32 0.0, %v4454
    %v4456 = vpop.f32.mrb[0].mxu0
    %4457 = vmatprep.mubr.bf16.mxu0 %v4339
    %4458 = vmatmul.mubr.bf16.gmra.mrb[0].mxu0 %v4043
    %v4459 = vpop.f32.mrb[0].mxu0
    %v4460 = vadd.f32 0.0, %v4459
    %v4461 = vpop.f32.mrb[0].mxu0
    %v4462 = vpop.f32.mrb[0].mxu0
    %v4463 = vadd.f32 0.0, %v4462
    %v4464 = vpop.f32.mrb[0].mxu0
    %4465 = vmatprep.mubr.bf16.mxu0 %v4342
    %4466 = vmatmul.mubr.bf16.gmra.mrb[0].mxu0 %v4061
    %v4467 = vpop.f32.mrb[0].mxu0
    %v4468 = vadd.f32 0.0, %v4467
    %v4469 = vpop.f32.mrb[0].mxu0
    %v4470 = vpop.f32.mrb[0].mxu0
    %v4471 = vadd.f32 0.0, %v4470
    %v4472 = vpop.f32.mrb[0].mxu0
    %4473 = vmatprep.mubr.bf16.mxu0 %v4345
    %4474 = vmatmul.mubr.bf16.gmra.mrb[0].mxu0 %v4079
    %v4475 = vpop.f32.mrb[0].mxu0
    %v4476 = vadd.f32 0.0, %v4475
    %v4477 = vpop.f32.mrb[0].mxu0
    %v4478 = vpop.f32.mrb[0].mxu0
    %v4479 = vadd.f32 0.0, %v4478
    %v4480 = vpop.f32.mrb[0].mxu0
    %4481 = vmatprep.mubr.bf16.mxu0 %v4348
    %4482 = vmatmul.mubr.bf16.gmra.mrb[0].mxu0 %v4097
    %v4483 = vpop.f32.mrb[0].mxu0
    %v4484 = vadd.f32 0.0, %v4483
    %v4485 = vpop.f32.mrb[0].mxu0
    %v4486 = vpop.f32.mrb[0].mxu0
    %v4487 = vadd.f32 0.0, %v4486
    %v4488 = vpop.f32.mrb[0].mxu0
    %4489 = vmatprep.mubr.bf16.mxu0 %v4351
    %4490 = vmatmul.mubr.bf16.gmra.mrb[0].mxu0 %v4115
    %v4491 = vpop.f32.mrb[0].mxu0
    %v4492 = vadd.f32 0.0, %v4491
    %v4493 = vpop.f32.mrb[0].mxu0
    %v4494 = vpop.f32.mrb[0].mxu0
    %v4495 = vadd.f32 0.0, %v4494
    %v4496 = vpop.f32.mrb[0].mxu0
    %4497 = vmatprep.mubr.bf16.mxu0 %v4354
    %4498 = vmatmul.mubr.bf16.gmra.mrb[0].mxu0 %v4133
    %v4499 = vpop.f32.mrb[0].mxu0
    %v4500 = vadd.f32 0.0, %v4499
    %v4501 = vpop.f32.mrb[0].mxu0
    %v4502 = vpop.f32.mrb[0].mxu0
    %v4503 = vadd.f32 0.0, %v4502
    %v4504 = vpop.f32.mrb[0].mxu0
    %4505 = vmatprep.mubr.bf16.mxu0 %v4357
    %4506 = vmatmul.mubr.bf16.gmra.mrb[0].mxu0 %v4151
    %v4507 = vpop.f32.mrb[0].mxu0
    %v4508 = vadd.f32 0.0, %v4507
    %v4509 = vpop.f32.mrb[0].mxu0
    %v4510 = vpop.f32.mrb[0].mxu0
    %v4511 = vadd.f32 0.0, %v4510
    %v4512 = vpop.f32.mrb[0].mxu0
    %4513 = vmatprep.mubr.bf16.mxu0 %v4360
    %4514 = vmatmul.mubr.bf16.gmra.mrb[0].mxu0 %v4169
    %v4515 = vpop.f32.mrb[0].mxu0
    %v4516 = vadd.f32 0.0, %v4515
    %v4517 = vpop.f32.mrb[0].mxu0
    %v4518 = vpop.f32.mrb[0].mxu0
    %v4519 = vadd.f32 0.0, %v4518
    %v4520 = vpop.f32.mrb[0].mxu0
    %4521 = vmatprep.mubr.bf16.mxu0 %v4363
    %4522 = vmatmul.mubr.bf16.gmra.mrb[0].mxu0 %v4187
    %v4523 = vpop.f32.mrb[0].mxu0
    %v4524 = vadd.f32 0.0, %v4523
    %v4525 = vpop.f32.mrb[0].mxu0
    %v4526 = vpop.f32.mrb[0].mxu0
    %v4527 = vadd.f32 0.0, %v4526
    %v4528 = vpop.f32.mrb[0].mxu0
    %4529 = vmatprep.mubr.bf16.mxu0 %v4366
    %4530 = vmatmul.mubr.bf16.gmra.mrb[0].mxu0 %v4205
    %v4531 = vpop.f32.mrb[0].mxu0
    %v4532 = vadd.f32 0.0, %v4531
    %v4533 = vpop.f32.mrb[0].mxu0
    %v4534 = vpop.f32.mrb[0].mxu0
    %v4535 = vadd.f32 0.0, %v4534
    %v4536 = vpop.f32.mrb[0].mxu0
    %4537 = vmatprep.mubr.bf16.mxu0 %v4369
    %4538 = vmatmul.mubr.bf16.gmra.mrb[0].mxu0 %v4223
    %v4539 = vpop.f32.mrb[0].mxu0
    %v4540 = vadd.f32 0.0, %v4539
    %v4541 = vpop.f32.mrb[0].mxu0
    %v4542 = vpop.f32.mrb[0].mxu0
    %v4543 = vadd.f32 0.0, %v4542
    %v4544 = vpop.f32.mrb[0].mxu0
    %4545 = vmatprep.mubr.bf16.mxu0 %v4372
    %4546 = vmatmul.mubr.bf16.gmra.mrb[0].mxu0 %v4241
    %v4547 = vpop.f32.mrb[0].mxu0
    %v4548 = vadd.f32 0.0, %v4547
    %v4549 = vpop.f32.mrb[0].mxu0
    %v4550 = vpop.f32.mrb[0].mxu0
    %v4551 = vadd.f32 0.0, %v4550
    %v4552 = vpop.f32.mrb[0].mxu0
    %4553 = vdwg.mxu0
    %v4554 = vadd.f32 %v3848, %v4412
    %v4555 = vadd.f32 %v3849, %v4415
    %v4556 = vadd.f32 %v3850, %v4420
    %v4557 = vadd.f32 %v3851, %v4423
    %v4558 = vadd.f32 %v3852, %v4428
    %v4559 = vadd.f32 %v3853, %v4431
    %v4560 = vadd.f32 %v3854, %v4436
    %v4561 = vadd.f32 %v3855, %v4439
    %v4562 = vadd.f32 %v3856, %v4444
    %v4563 = vadd.f32 %v3857, %v4447
    %v4564 = vadd.f32 %v3858, %v4452
    %v4565 = vadd.f32 %v3859, %v4455
    %v4566 = vadd.f32 %v3860, %v4460
    %v4567 = vadd.f32 %v3861, %v4463
    %v4568 = vadd.f32 %v3862, %v4468
    %v4569 = vadd.f32 %v3863, %v4471
    %v4570 = vadd.f32 %v3864, %v4476
    %v4571 = vadd.f32 %v3865, %v4479
    %v4572 = vadd.f32 %v3866, %v4484
    %v4573 = vadd.f32 %v3867, %v4487
    %v4574 = vadd.f32 %v3868, %v4492
    %v4575 = vadd.f32 %v3869, %v4495
    %v4576 = vadd.f32 %v3870, %v4500
    %v4577 = vadd.f32 %v3871, %v4503
    %v4578 = vadd.f32 %v3872, %v4508
    %v4579 = vadd.f32 %v3873, %v4511
    %v4580 = vadd.f32 %v3874, %v4516
    %v4581 = vadd.f32 %v3875, %v4519
    %v4582 = vadd.f32 %v3876, %v4524
    %v4583 = vadd.f32 %v3877, %v4527
    %v4584 = vadd.f32 %v3878, %v4532
    %v4585 = vadd.f32 %v3879, %v4535
    %v4586 = vadd.f32 %v3880, %v4540
    %v4587 = vadd.f32 %v3881, %v4543
    %v4588 = vadd.f32 %v3882, %v4548
    %v4589 = vadd.f32 %v3883, %v4551
    %v4590 = vld [vmem:[%s69 + $0x40] sm:$0xc0]
    %v4591 = vld [vmem:[%s69 + $0x48] sm:$0xc0]
    %v4592 = vld [vmem:[%s69 + $0x280] sm:$0x3f]
    %v4593 = vld [vmem:[%s69 + $0x288] sm:$0x3f]
    %v4594 = vpack.c.bf16 %v3305, %v4590
    %v4595 = vpack.c.bf16 %v3306, %v4591
    %v4596 = vpack.c.bf16 %v4592, %v4592
    %v4597 = vpack.c.bf16 %v4593, %v4593
    %s4598 = scalar_lea.vmem %s1, 544
    %v4599 = vld [vmem:[%s4598] sm:$0xf]
    %v4600 = vld [vmem:[%s4598 + $0x4] sm:$0xf]
    %v4601 = vld [vmem:[%s4598 + $0x8] sm:$0xf]
    %v4602 = vld [vmem:[%s4598 + $0xc] sm:$0xf]
    %v4603 = vld [vmem:[%s4598 + $0x10] sm:$0xf]
    %v4604 = vld [vmem:[%s4598 + $0x14] sm:$0xf]
    %v4605 = vld [vmem:[%s4598 + $0x18] sm:$0xf]
    %v4606 = vld [vmem:[%s4598 + $0x1c] sm:$0xf]
    %v4607 = vld [vmem:[%s4598 + $0x20] sm:$0xf]
    %v4608 = vld [vmem:[%s4598 + $0x24] sm:$0xf]
    %v4609 = vld [vmem:[%s4598 + $0x28] sm:$0xf]
    %v4610 = vld [vmem:[%s4598 + $0x2c] sm:$0xf]
    %v4611 = vld [vmem:[%s4598 + $0x30] sm:$0xf]
    %v4612 = vld [vmem:[%s4598 + $0x34] sm:$0xf]
    %v4613 = vld [vmem:[%s4598 + $0x38] sm:$0xf]
    %v4614 = vld [vmem:[%s4598 + $0x3c] sm:$0xf]
    %v4615 = vld [vmem:[%s4598 + $0x40] sm:$0x3]
    %vm4620 = vcmask 1044480
    %v4621 = vrot.slane %v4594, 3
    %v4622 = vrot.slane %v3379, 3
    %v4623 = vsel %vm4620, %v4621, %v4622
    %v4624 = vrot.slane %v4595, 3
    %v4625 = vrot.slane %v3380, 3
    %v4626 = vsel %vm4620, %v4624, %v4625
    %v4627 = vrot.slane %v3381, 3
    %v4628 = vsel %vm4620, %v4622, %v4627
    %v4629 = vrot.slane %v3382, 3
    %v4630 = vsel %vm4620, %v4625, %v4629
    %v4631 = vrot.slane %v3383, 3
    %v4632 = vsel %vm4620, %v4627, %v4631
    %v4633 = vrot.slane %v3384, 3
    %v4634 = vsel %vm4620, %v4629, %v4633
    %v4635 = vrot.slane %v3385, 3
    %v4636 = vsel %vm4620, %v4631, %v4635
    %v4637 = vrot.slane %v3386, 3
    %v4638 = vsel %vm4620, %v4633, %v4637
    %v4639 = vrot.slane %v3387, 3
    %v4640 = vsel %vm4620, %v4635, %v4639
    %v4641 = vrot.slane %v3388, 3
    %v4642 = vsel %vm4620, %v4637, %v4641
    %v4643 = vrot.slane %v3389, 3
    %v4644 = vsel %vm4620, %v4639, %v4643
    %v4645 = vrot.slane %v3390, 3
    %v4646 = vsel %vm4620, %v4641, %v4645
    %v4647 = vrot.slane %v3391, 3
    %v4648 = vsel %vm4620, %v4643, %v4647
    %v4649 = vrot.slane %v3392, 3
    %v4650 = vsel %vm4620, %v4645, %v4649
    %v4651 = vrot.slane %v3393, 3
    %v4652 = vsel %vm4620, %v4647, %v4651
    %v4653 = vrot.slane %v3394, 3
    %v4654 = vsel %vm4620, %v4649, %v4653
    %v4655 = vrot.slane %v3395, 3
    %v4656 = vsel %vm4620, %v4651, %v4655
    %v4657 = vrot.slane %v3396, 3
    %v4658 = vsel %vm4620, %v4653, %v4657
    %v4659 = vrot.slane %v3397, 3
    %v4660 = vsel %vm4620, %v4655, %v4659
    %v4661 = vrot.slane %v3398, 3
    %v4662 = vsel %vm4620, %v4657, %v4661
    %v4663 = vrot.slane %v3399, 3
    %v4664 = vsel %vm4620, %v4659, %v4663
    %v4665 = vrot.slane %v3400, 3
    %v4666 = vsel %vm4620, %v4661, %v4665
    %v4667 = vrot.slane %v3401, 3
    %v4668 = vsel %vm4620, %v4663, %v4667
    %v4669 = vrot.slane %v3402, 3
    %v4670 = vsel %vm4620, %v4665, %v4669
    %v4671 = vrot.slane %v3403, 3
    %v4672 = vsel %vm4620, %v4667, %v4671
    %v4673 = vrot.slane %v3404, 3
    %v4674 = vsel %vm4620, %v4669, %v4673
    %v4675 = vrot.slane %v3405, 3
    %v4676 = vsel %vm4620, %v4671, %v4675
    %v4677 = vrot.slane %v3406, 3
    %v4678 = vsel %vm4620, %v4673, %v4677
    %v4679 = vrot.slane %v3407, 3
    %v4680 = vsel %vm4620, %v4675, %v4679
    %v4681 = vrot.slane %v3408, 3
    %v4682 = vsel %vm4620, %v4677, %v4681
    %v4683 = vrot.slane %v3409, 3
    %v4684 = vsel %vm4620, %v4679, %v4683
    %v4685 = vrot.slane %v3410, 3
    %v4686 = vsel %vm4620, %v4681, %v4685
    %v4687 = vrot.slane %v3411, 3
    %v4688 = vsel %vm4620, %v4683, %v4687
    %v4689 = vrot.slane %v3412, 3
    %v4690 = vsel %vm4620, %v4685, %v4689
    %v4691 = vrot.slane %v4596, 3
    %v4692 = vsel %vm4620, %v4687, %v4691
    %v4693 = vrot.slane %v4597, 3
    %v4694 = vsel %vm4620, %v4689, %v4693
    %v4730 = vunpack.c.l.b16 %v4599
    %v4731 = vunpack.c.l.b16 %v4600
    %v4732 = vunpack.c.l.b16 %v4601
    %v4733 = vunpack.c.l.b16 %v4602
    %v4734 = vunpack.c.l.b16 %v4603
    %v4735 = vunpack.c.l.b16 %v4604
    %v4736 = vunpack.c.l.b16 %v4605
    %v4737 = vunpack.c.l.b16 %v4606
    %v4738 = vunpack.c.l.b16 %v4607
    %v4739 = vunpack.c.l.b16 %v4608
    %v4740 = vunpack.c.l.b16 %v4609
    %v4741 = vunpack.c.l.b16 %v4610
    %v4742 = vunpack.c.l.b16 %v4611
    %v4743 = vunpack.c.l.b16 %v4612
    %v4744 = vunpack.c.l.b16 %v4613
    %v4745 = vunpack.c.l.b16 %v4614
    %v4746 = vunpack.c.l.b16 %v4615
    %v4747 = vpack.c.b16 %v4731, %v4730
    %v4748 = vpack.c.b16 %v4733, %v4732
    %v4749 = vpack.c.b16 %v4735, %v4734
    %v4750 = vpack.c.b16 %v4737, %v4736
    %v4751 = vpack.c.b16 %v4739, %v4738
    %v4752 = vpack.c.b16 %v4741, %v4740
    %v4753 = vpack.c.b16 %v4743, %v4742
    %v4754 = vpack.c.b16 %v4745, %v4744
    %v4755 = vpack.c.b16 %v4746, %v4746
    %v4765 = vsel %vm587, %v4626, 0
    %v4768 = vsel %vm587, %v4630, 0
    %v4771 = vsel %vm587, %v4634, 0
    %v4774 = vsel %vm587, %v4638, 0
    %v4777 = vsel %vm587, %v4642, 0
    %v4780 = vsel %vm587, %v4646, 0
    %v4783 = vsel %vm587, %v4650, 0
    %v4786 = vsel %vm587, %v4654, 0
    %v4789 = vsel %vm587, %v4658, 0
    %v4792 = vsel %vm587, %v4662, 0
    %v4795 = vsel %vm587, %v4666, 0
    %v4798 = vsel %vm587, %v4670, 0
    %v4801 = vsel %vm587, %v4674, 0
    %v4804 = vsel %vm587, %v4678, 0
    %v4807 = vsel %vm587, %v4682, 0
    %v4810 = vsel %vm587, %v4686, 0
    %v4813 = vsel %vm587, %v4690, 0
    %v4816 = vsel %vm587, %v4694, 0
    %v4819 = vand.u32 %v4755, %v645
    %4821 = vmatprep.subr.bf16.mxu0 0
    %4822 = vmatpush1.bf16.msra.mxu0 %v4747
    %4823 = vmatprep.subr.bf16.mxu0 0
    %4824 = vmatpush1.bf16.msra.mxu0 %v4748
    %4825 = vmatprep.subr.bf16.mxu0 0
    %4826 = vmatpush1.bf16.msra.mxu0 %v4749
    %4827 = vmatprep.subr.bf16.mxu0 0
    %4828 = vmatpush1.bf16.msra.mxu0 %v4750
    %4829 = vmatprep.subr.bf16.mxu0 0
    %4830 = vmatpush1.bf16.msra.mxu0 %v4751
    %4831 = vmatprep.subr.bf16.mxu0 0
    %4832 = vmatpush1.bf16.msra.mxu0 %v4752
    %4833 = vmatprep.subr.bf16.mxu0 0
    %4834 = vmatpush1.bf16.msra.mxu0 %v4753
    %4835 = vmatprep.subr.bf16.mxu0 0
    %4836 = vmatpush1.bf16.msra.mxu0 %v4754
    %4837 = vmatprep.subr.bf16.mxu0 0
    %4838 = vmatpush1.bf16.msra.mxu0 %v4819
    %4839 = vmatprep.subr.bf16.mxu0 0
    %4840 = vmatpush1.bf16.msra.mxu0 0
    %4841 = vmatprep.subr.bf16.mxu0 0
    %4842 = vmatpush1.bf16.msra.mxu0 0
    %4843 = vmatprep.subr.bf16.mxu0 0
    %4844 = vmatpush1.bf16.msra.mxu0 0
    %4845 = vmatprep.subr.bf16.mxu0 0
    %4846 = vmatpush1.bf16.msra.mxu0 0
    %4847 = vmatprep.subr.bf16.mxu0 0
    %4848 = vmatpush1.bf16.msra.mxu0 0
    %4849 = vmatprep.subr.bf16.mxu0 0
    %4850 = vmatpush1.bf16.msra.mxu0 0
    %4851 = vmatprep.subr.bf16.mxu0 0
    %4852 = vmatpush1.bf16.msra.mxu0 0
    %4853 = vmatprep.mubr.bf16.mxu0 %v4765
    %4854 = vmatmul.mubr.bf16.gmra.mrb[0].mxu0 %v4623
    %v4855 = vpop.f32.mrb[0].mxu0
    %v4856 = vadd.f32 0.0, %v4855
    %v4857 = vpop.f32.mrb[0].mxu0
    %v4858 = vpop.f32.mrb[0].mxu0
    %v4859 = vadd.f32 0.0, %v4858
    %v4860 = vpop.f32.mrb[0].mxu0
    %4861 = vmatprep.mubr.bf16.mxu0 %v4768
    %4862 = vmatmul.mubr.bf16.gmra.mrb[0].mxu0 %v4628
    %v4863 = vpop.f32.mrb[0].mxu0
    %v4864 = vadd.f32 0.0, %v4863
    %v4865 = vpop.f32.mrb[0].mxu0
    %v4866 = vpop.f32.mrb[0].mxu0
    %v4867 = vadd.f32 0.0, %v4866
    %v4868 = vpop.f32.mrb[0].mxu0
    %4869 = vmatprep.mubr.bf16.mxu0 %v4771
    %4870 = vmatmul.mubr.bf16.gmra.mrb[0].mxu0 %v4632
    %v4871 = vpop.f32.mrb[0].mxu0
    %v4872 = vadd.f32 0.0, %v4871
    %v4873 = vpop.f32.mrb[0].mxu0
    %v4874 = vpop.f32.mrb[0].mxu0
    %v4875 = vadd.f32 0.0, %v4874
    %v4876 = vpop.f32.mrb[0].mxu0
    %4877 = vmatprep.mubr.bf16.mxu0 %v4774
    %4878 = vmatmul.mubr.bf16.gmra.mrb[0].mxu0 %v4636
    %v4879 = vpop.f32.mrb[0].mxu0
    %v4880 = vadd.f32 0.0, %v4879
    %v4881 = vpop.f32.mrb[0].mxu0
    %v4882 = vpop.f32.mrb[0].mxu0
    %v4883 = vadd.f32 0.0, %v4882
    %v4884 = vpop.f32.mrb[0].mxu0
    %4885 = vmatprep.mubr.bf16.mxu0 %v4777
    %4886 = vmatmul.mubr.bf16.gmra.mrb[0].mxu0 %v4640
    %v4887 = vpop.f32.mrb[0].mxu0
    %v4888 = vadd.f32 0.0, %v4887
    %v4889 = vpop.f32.mrb[0].mxu0
    %v4890 = vpop.f32.mrb[0].mxu0
    %v4891 = vadd.f32 0.0, %v4890
    %v4892 = vpop.f32.mrb[0].mxu0
    %4893 = vmatprep.mubr.bf16.mxu0 %v4780
    %4894 = vmatmul.mubr.bf16.gmra.mrb[0].mxu0 %v4644
    %v4895 = vpop.f32.mrb[0].mxu0
    %v4896 = vadd.f32 0.0, %v4895
    %v4897 = vpop.f32.mrb[0].mxu0
    %v4898 = vpop.f32.mrb[0].mxu0
    %v4899 = vadd.f32 0.0, %v4898
    %v4900 = vpop.f32.mrb[0].mxu0
    %4901 = vmatprep.mubr.bf16.mxu0 %v4783
    %4902 = vmatmul.mubr.bf16.gmra.mrb[0].mxu0 %v4648
    %v4903 = vpop.f32.mrb[0].mxu0
    %v4904 = vadd.f32 0.0, %v4903
    %v4905 = vpop.f32.mrb[0].mxu0
    %v4906 = vpop.f32.mrb[0].mxu0
    %v4907 = vadd.f32 0.0, %v4906
    %v4908 = vpop.f32.mrb[0].mxu0
    %4909 = vmatprep.mubr.bf16.mxu0 %v4786
    %4910 = vmatmul.mubr.bf16.gmra.mrb[0].mxu0 %v4652
    %v4911 = vpop.f32.mrb[0].mxu0
    %v4912 = vadd.f32 0.0, %v4911
    %v4913 = vpop.f32.mrb[0].mxu0
    %v4914 = vpop.f32.mrb[0].mxu0
    %v4915 = vadd.f32 0.0, %v4914
    %v4916 = vpop.f32.mrb[0].mxu0
    %4917 = vmatprep.mubr.bf16.mxu0 %v4789
    %4918 = vmatmul.mubr.bf16.gmra.mrb[0].mxu0 %v4656
    %v4919 = vpop.f32.mrb[0].mxu0
    %v4920 = vadd.f32 0.0, %v4919
    %v4921 = vpop.f32.mrb[0].mxu0
    %v4922 = vpop.f32.mrb[0].mxu0
    %v4923 = vadd.f32 0.0, %v4922
    %v4924 = vpop.f32.mrb[0].mxu0
    %4925 = vmatprep.mubr.bf16.mxu0 %v4792
    %4926 = vmatmul.mubr.bf16.gmra.mrb[0].mxu0 %v4660
    %v4927 = vpop.f32.mrb[0].mxu0
    %v4928 = vadd.f32 0.0, %v4927
    %v4929 = vpop.f32.mrb[0].mxu0
    %v4930 = vpop.f32.mrb[0].mxu0
    %v4931 = vadd.f32 0.0, %v4930
    %v4932 = vpop.f32.mrb[0].mxu0
    %4933 = vmatprep.mubr.bf16.mxu0 %v4795
    %4934 = vmatmul.mubr.bf16.gmra.mrb[0].mxu0 %v4664
    %v4935 = vpop.f32.mrb[0].mxu0
    %v4936 = vadd.f32 0.0, %v4935
    %v4937 = vpop.f32.mrb[0].mxu0
    %v4938 = vpop.f32.mrb[0].mxu0
    %v4939 = vadd.f32 0.0, %v4938
    %v4940 = vpop.f32.mrb[0].mxu0
    %4941 = vmatprep.mubr.bf16.mxu0 %v4798
    %4942 = vmatmul.mubr.bf16.gmra.mrb[0].mxu0 %v4668
    %v4943 = vpop.f32.mrb[0].mxu0
    %v4944 = vadd.f32 0.0, %v4943
    %v4945 = vpop.f32.mrb[0].mxu0
    %v4946 = vpop.f32.mrb[0].mxu0
    %v4947 = vadd.f32 0.0, %v4946
    %v4948 = vpop.f32.mrb[0].mxu0
    %4949 = vmatprep.mubr.bf16.mxu0 %v4801
    %4950 = vmatmul.mubr.bf16.gmra.mrb[0].mxu0 %v4672
    %v4951 = vpop.f32.mrb[0].mxu0
    %v4952 = vadd.f32 0.0, %v4951
    %v4953 = vpop.f32.mrb[0].mxu0
    %v4954 = vpop.f32.mrb[0].mxu0
    %v4955 = vadd.f32 0.0, %v4954
    %v4956 = vpop.f32.mrb[0].mxu0
    %4957 = vmatprep.mubr.bf16.mxu0 %v4804
    %4958 = vmatmul.mubr.bf16.gmra.mrb[0].mxu0 %v4676
    %v4959 = vpop.f32.mrb[0].mxu0
    %v4960 = vadd.f32 0.0, %v4959
    %v4961 = vpop.f32.mrb[0].mxu0
    %v4962 = vpop.f32.mrb[0].mxu0
    %v4963 = vadd.f32 0.0, %v4962
    %v4964 = vpop.f32.mrb[0].mxu0
    %4965 = vmatprep.mubr.bf16.mxu0 %v4807
    %4966 = vmatmul.mubr.bf16.gmra.mrb[0].mxu0 %v4680
    %v4967 = vpop.f32.mrb[0].mxu0
    %v4968 = vadd.f32 0.0, %v4967
    %v4969 = vpop.f32.mrb[0].mxu0
    %v4970 = vpop.f32.mrb[0].mxu0
    %v4971 = vadd.f32 0.0, %v4970
    %v4972 = vpop.f32.mrb[0].mxu0
    %4973 = vmatprep.mubr.bf16.mxu0 %v4810
    %4974 = vmatmul.mubr.bf16.gmra.mrb[0].mxu0 %v4684
    %v4975 = vpop.f32.mrb[0].mxu0
    %v4976 = vadd.f32 0.0, %v4975
    %v4977 = vpop.f32.mrb[0].mxu0
    %v4978 = vpop.f32.mrb[0].mxu0
    %v4979 = vadd.f32 0.0, %v4978
    %v4980 = vpop.f32.mrb[0].mxu0
    %4981 = vmatprep.mubr.bf16.mxu0 %v4813
    %4982 = vmatmul.mubr.bf16.gmra.mrb[0].mxu0 %v4688
    %v4983 = vpop.f32.mrb[0].mxu0
    %v4984 = vadd.f32 0.0, %v4983
    %v4985 = vpop.f32.mrb[0].mxu0
    %v4986 = vpop.f32.mrb[0].mxu0
    %v4987 = vadd.f32 0.0, %v4986
    %v4988 = vpop.f32.mrb[0].mxu0
    %4989 = vmatprep.mubr.bf16.mxu0 %v4816
    %4990 = vmatmul.mubr.bf16.gmra.mrb[0].mxu0 %v4692
    %v4991 = vpop.f32.mrb[0].mxu0
    %v4992 = vadd.f32 0.0, %v4991
    %v4993 = vpop.f32.mrb[0].mxu0
    %v4994 = vpop.f32.mrb[0].mxu0
    %v4995 = vadd.f32 0.0, %v4994
    %v4996 = vpop.f32.mrb[0].mxu0
    %4997 = vdwg.mxu0
    %v4998 = vadd.f32 %v4554, %v4856
    %v4999 = vadd.f32 %v4555, %v4859
    %v5000 = vadd.f32 %v4556, %v4864
    %v5001 = vadd.f32 %v4557, %v4867
    %v5002 = vadd.f32 %v4558, %v4872
    %v5003 = vadd.f32 %v4559, %v4875
    %v5004 = vadd.f32 %v4560, %v4880
    %v5005 = vadd.f32 %v4561, %v4883
    %v5006 = vadd.f32 %v4562, %v4888
    %v5007 = vadd.f32 %v4563, %v4891
    %v5008 = vadd.f32 %v4564, %v4896
    %v5009 = vadd.f32 %v4565, %v4899
    %v5010 = vadd.f32 %v4566, %v4904
    %v5011 = vadd.f32 %v4567, %v4907
    %v5012 = vadd.f32 %v4568, %v4912
    %v5013 = vadd.f32 %v4569, %v4915
    %v5014 = vadd.f32 %v4570, %v4920
    %v5015 = vadd.f32 %v4571, %v4923
    %v5016 = vadd.f32 %v4572, %v4928
    %v5017 = vadd.f32 %v4573, %v4931
    %v5018 = vadd.f32 %v4574, %v4936
    %v5019 = vadd.f32 %v4575, %v4939
    %v5020 = vadd.f32 %v4576, %v4944
    %v5021 = vadd.f32 %v4577, %v4947
    %v5022 = vadd.f32 %v4578, %v4952
    %v5023 = vadd.f32 %v4579, %v4955
    %v5024 = vadd.f32 %v4580, %v4960
    %v5025 = vadd.f32 %v4581, %v4963
    %v5026 = vadd.f32 %v4582, %v4968
    %v5027 = vadd.f32 %v4583, %v4971
    %v5028 = vadd.f32 %v4584, %v4976
    %v5029 = vadd.f32 %v4585, %v4979
    %v5030 = vadd.f32 %v4586, %v4984
    %v5031 = vadd.f32 %v4587, %v4987
    %v5032 = vadd.f32 %v4588, %v4992
    %v5033 = vadd.f32 %v4589, %v4995
    %v5034 = vld [vmem:[%s2] sm:$0x1]
    %v5036 = vlaneseq
    %v5037 = vshrl.u32 %v5036, 7
    %v5038 = vsub.s32 0, %v5037
    %v5039 = vrot.slane %v5034, %v5038
    %v5041 = vadd.f32 %v4998, %v5039
    %v5042 = vadd.f32 %v4999, %v5039
    %v5043 = vadd.f32 %v5000, %v5039
    %v5044 = vadd.f32 %v5001, %v5039
    %v5045 = vadd.f32 %v5002, %v5039
    %v5046 = vadd.f32 %v5003, %v5039
    %v5047 = vadd.f32 %v5004, %v5039
    %v5048 = vadd.f32 %v5005, %v5039
    %v5049 = vadd.f32 %v5006, %v5039
    %v5050 = vadd.f32 %v5007, %v5039
    %v5051 = vadd.f32 %v5008, %v5039
    %v5052 = vadd.f32 %v5009, %v5039
    %v5053 = vadd.f32 %v5010, %v5039
    %v5054 = vadd.f32 %v5011, %v5039
    %v5055 = vadd.f32 %v5012, %v5039
    %v5056 = vadd.f32 %v5013, %v5039
    %v5057 = vadd.f32 %v5014, %v5039
    %v5058 = vadd.f32 %v5015, %v5039
    %v5059 = vadd.f32 %v5016, %v5039
    %v5060 = vadd.f32 %v5017, %v5039
    %v5061 = vadd.f32 %v5018, %v5039
    %v5062 = vadd.f32 %v5019, %v5039
    %v5063 = vadd.f32 %v5020, %v5039
    %v5064 = vadd.f32 %v5021, %v5039
    %v5065 = vadd.f32 %v5022, %v5039
    %v5066 = vadd.f32 %v5023, %v5039
    %v5067 = vadd.f32 %v5024, %v5039
    %v5068 = vadd.f32 %v5025, %v5039
    %v5069 = vadd.f32 %v5026, %v5039
    %v5070 = vadd.f32 %v5027, %v5039
    %v5071 = vadd.f32 %v5028, %v5039
    %v5072 = vadd.f32 %v5029, %v5039
    %v5073 = vadd.f32 %v5030, %v5039
    %v5074 = vadd.f32 %v5031, %v5039
    %v5075 = vadd.f32 %v5032, %v5039
    %v5076 = vadd.f32 %v5033, %v5039
    %v5077 = vmax.f32 %v5041, 0.0
    %v5078 = vmax.f32 %v5042, 0.0
    %v5079 = vmax.f32 %v5043, 0.0
    %v5080 = vmax.f32 %v5044, 0.0
    %v5081 = vmax.f32 %v5045, 0.0
    %v5082 = vmax.f32 %v5046, 0.0
    %v5083 = vmax.f32 %v5047, 0.0
    %v5084 = vmax.f32 %v5048, 0.0
    %v5085 = vmax.f32 %v5049, 0.0
    %v5086 = vmax.f32 %v5050, 0.0
    %v5087 = vmax.f32 %v5051, 0.0
    %v5088 = vmax.f32 %v5052, 0.0
    %v5089 = vmax.f32 %v5053, 0.0
    %v5090 = vmax.f32 %v5054, 0.0
    %v5091 = vmax.f32 %v5055, 0.0
    %v5092 = vmax.f32 %v5056, 0.0
    %v5093 = vmax.f32 %v5057, 0.0
    %v5094 = vmax.f32 %v5058, 0.0
    %v5095 = vmax.f32 %v5059, 0.0
    %v5096 = vmax.f32 %v5060, 0.0
    %v5097 = vmax.f32 %v5061, 0.0
    %v5098 = vmax.f32 %v5062, 0.0
    %v5099 = vmax.f32 %v5063, 0.0
    %v5100 = vmax.f32 %v5064, 0.0
    %v5101 = vmax.f32 %v5065, 0.0
    %v5102 = vmax.f32 %v5066, 0.0
    %v5103 = vmax.f32 %v5067, 0.0
    %v5104 = vmax.f32 %v5068, 0.0
    %v5105 = vmax.f32 %v5069, 0.0
    %v5106 = vmax.f32 %v5070, 0.0
    %v5107 = vmax.f32 %v5071, 0.0
    %v5108 = vmax.f32 %v5072, 0.0
    %v5109 = vmax.f32 %v5073, 0.0
    %v5110 = vmax.f32 %v5074, 0.0
    %v5111 = vmax.f32 %v5075, 0.0
    %v5112 = vmax.f32 %v5076, 0.0
    %5113 = vst.msk [vmem:[#allocation2] sm:$0xff] %vm41, %v5077
    %5114 = vst.msk [vmem:[#allocation2 + $0x8] sm:$0xff] %vm41, %v5078
    %5115 = vst.msk [vmem:[#allocation2 + $0x10] sm:$0xff] %vm41, %v5079
    %5116 = vst.msk [vmem:[#allocation2 + $0x18] sm:$0xff] %vm41, %v5080
    %5117 = vst.msk [vmem:[#allocation2 + $0x20] sm:$0xff] %vm41, %v5081
    %5118 = vst.msk [vmem:[#allocation2 + $0x28] sm:$0xff] %vm41, %v5082
    %5119 = vst.msk [vmem:[#allocation2 + $0x30] sm:$0xff] %vm41, %v5083
    %5120 = vst.msk [vmem:[#allocation2 + $0x38] sm:$0xff] %vm41, %v5084
    %5121 = vst.msk [vmem:[#allocation2 + $0x40] sm:$0xff] %vm41, %v5085
    %5122 = vst.msk [vmem:[#allocation2 + $0x48] sm:$0xff] %vm41, %v5086
    %5123 = vst.msk [vmem:[#allocation2 + $0x50] sm:$0xff] %vm41, %v5087
    %5124 = vst.msk [vmem:[#allocation2 + $0x58] sm:$0xff] %vm41, %v5088
    %5125 = vst.msk [vmem:[#allocation2 + $0x60] sm:$0xff] %vm41, %v5089
    %5126 = vst.msk [vmem:[#allocation2 + $0x68] sm:$0xff] %vm41, %v5090
    %5127 = vst.msk [vmem:[#allocation2 + $0x70] sm:$0xff] %vm41, %v5091
    %5128 = vst.msk [vmem:[#allocation2 + $0x78] sm:$0xff] %vm41, %v5092
    %5129 = vst.msk [vmem:[#allocation2 + $0x80] sm:$0xff] %vm41, %v5093
    %5130 = vst.msk [vmem:[#allocation2 + $0x88] sm:$0xff] %vm41, %v5094
    %5131 = vst.msk [vmem:[#allocation2 + $0x90] sm:$0xff] %vm41, %v5095
    %5132 = vst.msk [vmem:[#allocation2 + $0x98] sm:$0xff] %vm41, %v5096
    %5133 = vst.msk [vmem:[#allocation2 + $0xa0] sm:$0xff] %vm41, %v5097
    %5134 = vst.msk [vmem:[#allocation2 + $0xa8] sm:$0xff] %vm41, %v5098
    %5135 = vst.msk [vmem:[#allocation2 + $0xb0] sm:$0xff] %vm41, %v5099
    %5136 = vst.msk [vmem:[#allocation2 + $0xb8] sm:$0xff] %vm41, %v5100
    %5137 = vst.msk [vmem:[#allocation2 + $0xc0] sm:$0xff] %vm41, %v5101
    %5138 = vst.msk [vmem:[#allocation2 + $0xc8] sm:$0xff] %vm41, %v5102
    %5139 = vst.msk [vmem:[#allocation2 + $0xd0] sm:$0xff] %vm41, %v5103
    %5140 = vst.msk [vmem:[#allocation2 + $0xd8] sm:$0xff] %vm41, %v5104
    %5141 = vst.msk [vmem:[#allocation2 + $0xe0] sm:$0xff] %vm41, %v5105
    %5142 = vst.msk [vmem:[#allocation2 + $0xe8] sm:$0xff] %vm41, %v5106
    %5143 = vst.msk [vmem:[#allocation2 + $0xf0] sm:$0xff] %vm41, %v5107
    %5144 = vst.msk [vmem:[#allocation2 + $0xf8] sm:$0xff] %vm41, %v5108
    %5145 = vst.msk [vmem:[#allocation2 + $0x100] sm:$0xff] %vm41, %v5109
    %5146 = vst.msk [vmem:[#allocation2 + $0x108] sm:$0xff] %vm41, %v5110
    %5147 = vst.msk [vmem:[#allocation2 + $0x110] sm:$0xff] %vm41, %v5111
    %5148 = vst.msk [vmem:[#allocation2 + $0x118] sm:$0xff] %vm41, %v5112
    %v5149 = vld [vmem:[#allocation2] ss:$2 sm:$0xff]
    %s5150 = scalar_lea.vmem [#allocation2], 1
    %v5151 = vld [vmem:[%s5150] ss:$2 sm:$0xff]
    %v5152 = vmax.f32 %v5149, %v5151
    %s5153 = scalar_lea.vmem [#allocation2], 18
    %v5154 = vld [vmem:[%s5153] ss:$2 sm:$0xff]
    %s5155 = scalar_lea.vmem [#allocation2], 19
    %v5156 = vld [vmem:[%s5155] ss:$2 sm:$0xff]
    %v5157 = vmax.f32 %v5154, %v5156
    %v5158 = vmax.f32 %v5152, %v5157
    %5159 = vst.msk [vmem:[#allocation3 + $0xb] sm:$0xff] %vm41, %v5158
    %s5160 = scalar_lea.vmem [#allocation2], 36
    %v5161 = vld [vmem:[%s5160] ss:$2 sm:$0xff]
    %s5162 = scalar_lea.vmem [#allocation2], 37
    %v5163 = vld [vmem:[%s5162] ss:$2 sm:$0xff]
    %v5164 = vmax.f32 %v5161, %v5163
    %s5165 = scalar_lea.vmem [#allocation2], 54
    %v5166 = vld [vmem:[%s5165] ss:$2 sm:$0xff]
    %s5167 = scalar_lea.vmem [#allocation2], 55
    %v5168 = vld [vmem:[%s5167] ss:$2 sm:$0xff]
    %v5169 = vmax.f32 %v5166, %v5168
    %v5170 = vmax.f32 %v5164, %v5169
    %5171 = vst.msk [vmem:[#allocation3 + $0x15] sm:$0xff] %vm41, %v5170
    %s5172 = scalar_lea.vmem [#allocation2], 72
    %v5173 = vld [vmem:[%s5172] ss:$2 sm:$0xff]
    %s5174 = scalar_lea.vmem [#allocation2], 73
    %v5175 = vld [vmem:[%s5174] ss:$2 sm:$0xff]
    %v5176 = vmax.f32 %v5173, %v5175
    %s5177 = scalar_lea.vmem [#allocation2], 90
    %v5178 = vld [vmem:[%s5177] ss:$2 sm:$0xff]
    %s5179 = scalar_lea.vmem [#allocation2], 91
    %v5180 = vld [vmem:[%s5179] ss:$2 sm:$0xff]
    %v5181 = vmax.f32 %v5178, %v5180
    %v5182 = vmax.f32 %v5176, %v5181
    %5183 = vst.msk [vmem:[#allocation3 + $0x1f] sm:$0xff] %vm41, %v5182
    %s5184 = scalar_lea.vmem [#allocation2], 108
    %v5185 = vld [vmem:[%s5184] ss:$2 sm:$0xff]
    %s5186 = scalar_lea.vmem [#allocation2], 109
    %v5187 = vld [vmem:[%s5186] ss:$2 sm:$0xff]
    %v5188 = vmax.f32 %v5185, %v5187
    %s5189 = scalar_lea.vmem [#allocation2], 126
    %v5190 = vld [vmem:[%s5189] ss:$2 sm:$0xff]
    %s5191 = scalar_lea.vmem [#allocation2], 127
    %v5192 = vld [vmem:[%s5191] ss:$2 sm:$0xff]
    %v5193 = vmax.f32 %v5190, %v5192
    %v5194 = vmax.f32 %v5188, %v5193
    %5195 = vst.msk [vmem:[#allocation3 + $0x29] sm:$0xff] %vm41, %v5194
    %s5196 = scalar_lea.vmem [#allocation2], 144
    %v5197 = vld [vmem:[%s5196] ss:$2 sm:$0xff]
    %s5198 = scalar_lea.vmem [#allocation2], 145
    %v5199 = vld [vmem:[%s5198] ss:$2 sm:$0xff]
    %v5200 = vmax.f32 %v5197, %v5199
    %s5201 = scalar_lea.vmem [#allocation2], 162
    %v5202 = vld [vmem:[%s5201] ss:$2 sm:$0xff]
    %s5203 = scalar_lea.vmem [#allocation2], 163
    %v5204 = vld [vmem:[%s5203] ss:$2 sm:$0xff]
    %v5205 = vmax.f32 %v5202, %v5204
    %v5206 = vmax.f32 %v5200, %v5205
    %5207 = vst.msk [vmem:[#allocation3 + $0x33] sm:$0xff] %vm41, %v5206
    %s5208 = scalar_lea.vmem [#allocation2], 180
    %v5209 = vld [vmem:[%s5208] ss:$2 sm:$0xff]
    %s5210 = scalar_lea.vmem [#allocation2], 181
    %v5211 = vld [vmem:[%s5210] ss:$2 sm:$0xff]
    %v5212 = vmax.f32 %v5209, %v5211
    %s5213 = scalar_lea.vmem [#allocation2], 198
    %v5214 = vld [vmem:[%s5213] ss:$2 sm:$0xff]
    %s5215 = scalar_lea.vmem [#allocation2], 199
    %v5216 = vld [vmem:[%s5215] ss:$2 sm:$0xff]
    %v5217 = vmax.f32 %v5214, %v5216
    %v5218 = vmax.f32 %v5212, %v5217
    %5219 = vst.msk [vmem:[#allocation3 + $0x3d] sm:$0xff] %vm41, %v5218
    %s5220 = scalar_lea.vmem [#allocation2], 216
    %v5221 = vld [vmem:[%s5220] ss:$2 sm:$0xff]
    %s5222 = scalar_lea.vmem [#allocation2], 217
    %v5223 = vld [vmem:[%s5222] ss:$2 sm:$0xff]
    %v5224 = vmax.f32 %v5221, %v5223
    %s5225 = scalar_lea.vmem [#allocation2], 234
    %v5226 = vld [vmem:[%s5225] ss:$2 sm:$0xff]
    %s5227 = scalar_lea.vmem [#allocation2], 235
    %v5228 = vld [vmem:[%s5227] ss:$2 sm:$0xff]
    %v5229 = vmax.f32 %v5226, %v5228
    %v5230 = vmax.f32 %v5224, %v5229
    %5231 = vst.msk [vmem:[#allocation3 + $0x47] sm:$0xff] %vm41, %v5230
    %s5232 = scalar_lea.vmem [#allocation2], 252
    %v5233 = vld [vmem:[%s5232] ss:$2 sm:$0xff]
    %s5234 = scalar_lea.vmem [#allocation2], 253
    %v5235 = vld [vmem:[%s5234] ss:$2 sm:$0xff]
    %v5236 = vmax.f32 %v5233, %v5235
    %s5237 = scalar_lea.vmem [#allocation2], 270
    %v5238 = vld [vmem:[%s5237] ss:$2 sm:$0xff]
    %s5239 = scalar_lea.vmem [#allocation2], 271
    %v5240 = vld [vmem:[%s5239] ss:$2 sm:$0xff]
    %v5241 = vmax.f32 %v5238, %v5240
    %v5242 = vmax.f32 %v5236, %v5241
    %5243 = vst.msk [vmem:[#allocation3 + $0x51] sm:$0xff] %vm41, %v5242
    %v5244 = vld [vmem:[#allocation3] sm:$0xff]
    %v5245 = vld [vmem:[#allocation3 + $0x8] sm:$0xff]
    %v5246 = vld [vmem:[#allocation3 + $0x10] sm:$0xff]
    %v5247 = vld [vmem:[#allocation3 + $0x18] sm:$0xff]
    %v5248 = vld [vmem:[#allocation3 + $0x20] sm:$0xff]
    %v5249 = vld [vmem:[#allocation3 + $0x28] sm:$0xff]
    %v5250 = vld [vmem:[#allocation3 + $0x30] sm:$0xff]
    %v5251 = vld [vmem:[#allocation3 + $0x38] sm:$0xff]
    %v5252 = vld [vmem:[#allocation3 + $0x40] sm:$0xff]
    %v5253 = vld [vmem:[#allocation3 + $0x48] sm:$0xff]
    %v5254 = vpack.c.bf16 %v5245, %v5244
    %v5255 = vpack.c.bf16 %v5247, %v5246
    %v5256 = vpack.c.bf16 %v5249, %v5248
    %v5257 = vpack.c.bf16 %v5251, %v5250
    %v5258 = vpack.c.bf16 %v5253, %v5252
    %v5259 = vld [vmem:[%s3] sm:$0xf]
    %v5260 = vld [vmem:[%s3 + $0x4] sm:$0xf]
    %v5261 = vld [vmem:[%s3 + $0x8] sm:$0xf]
    %v5262 = vld [vmem:[%s3 + $0xc] sm:$0xf]
    %v5263 = vld [vmem:[#allocation3 + $0x1] sm:$0xff]
    %v5264 = vld [vmem:[#allocation3 + $0x9] sm:$0xff]
    %v5265 = vld [vmem:[#allocation3 + $0x11] sm:$0xff]
    %v5266 = vld [vmem:[#allocation3 + $0x19] sm:$0xff]
    %v5267 = vld [vmem:[#allocation3 + $0x21] sm:$0xff]
    %v5268 = vld [vmem:[#allocation3 + $0x29] sm:$0xff]
    %v5269 = vld [vmem:[#allocation3 + $0x31] sm:$0xff]
    %v5270 = vld [vmem:[#allocation3 + $0x39] sm:$0xff]
    %v5271 = vld [vmem:[#allocation3 + $0x41] sm:$0xff]
    %v5272 = vld [vmem:[#allocation3 + $0x49] sm:$0xff]
    %v5273 = vpack.c.bf16 %v5264, %v5263
    %v5274 = vpack.c.bf16 %v5266, %v5265
    %v5275 = vpack.c.bf16 %v5268, %v5267
    %v5276 = vpack.c.bf16 %v5270, %v5269
    %v5277 = vpack.c.bf16 %v5272, %v5271
    %s5278 = scalar_lea.vmem %s3, 16
    %v5279 = vld [vmem:[%s5278] sm:$0xf]
    %v5280 = vld [vmem:[%s5278 + $0x4] sm:$0xf]
    %v5281 = vld [vmem:[%s5278 + $0x8] sm:$0xf]
    %v5282 = vld [vmem:[%s5278 + $0xc] sm:$0xf]
    %v5287 = vunpack.c.l.b16 %v5279
    %v5288 = vunpack.c.l.b16 %v5280
    %v5289 = vunpack.c.l.b16 %v5281
    %v5290 = vunpack.c.l.b16 %v5282
    %v5291 = vpack.c.b16 %v5288, %v5287
    %v5292 = vpack.c.b16 %v5290, %v5289
    %v5296 = vsel %vm41, %v5273, 0
    %v5299 = vsel %vm41, %v5274, 0
    %v5302 = vsel %vm41, %v5275, 0
    %v5305 = vsel %vm41, %v5276, 0
    %v5308 = vsel %vm41, %v5277, 0
    %5310 = vmatprep.subr.bf16.mxu0 0
    %5311 = vmatpush1.bf16.msra.mxu0 %v5291
    %5312 = vmatprep.subr.bf16.mxu0 0
    %5313 = vmatpush1.bf16.msra.mxu0 %v5292
    %5314 = vmatprep.subr.bf16.mxu0 0
    %5315 = vmatpush1.bf16.msra.mxu0 0
    %5316 = vmatprep.subr.bf16.mxu0 0
    %5317 = vmatpush1.bf16.msra.mxu0 0
    %5318 = vmatprep.subr.bf16.mxu0 0
    %5319 = vmatpush1.bf16.msra.mxu0 0
    %5320 = vmatprep.subr.bf16.mxu0 0
    %5321 = vmatpush1.bf16.msra.mxu0 0
    %5322 = vmatprep.subr.bf16.mxu0 0
    %5323 = vmatpush1.bf16.msra.mxu0 0
    %5324 = vmatprep.subr.bf16.mxu0 0
    %5325 = vmatpush1.bf16.msra.mxu0 0
    %5326 = vmatprep.subr.bf16.mxu0 0
    %5327 = vmatpush1.bf16.msra.mxu0 0
    %5328 = vmatprep.subr.bf16.mxu0 0
    %5329 = vmatpush1.bf16.msra.mxu0 0
    %5330 = vmatprep.subr.bf16.mxu0 0
    %5331 = vmatpush1.bf16.msra.mxu0 0
    %5332 = vmatprep.subr.bf16.mxu0 0
    %5333 = vmatpush1.bf16.msra.mxu0 0
    %5334 = vmatprep.subr.bf16.mxu0 0
    %5335 = vmatpush1.bf16.msra.mxu0 0
    %5336 = vmatprep.subr.bf16.mxu0 0
    %5337 = vmatpush1.bf16.msra.mxu0 0
    %5338 = vmatprep.subr.bf16.mxu0 0
    %5339 = vmatpush1.bf16.msra.mxu0 0
    %5340 = vmatprep.subr.bf16.mxu0 0
    %5341 = vmatpush1.bf16.msra.mxu0 0
    %5342 = vmatprep.mubr.bf16.mxu0 0
    %5343 = vmatmul.mubr.bf16.gmra.mrb[0].mxu0 %v5296
    %v5344 = vpop.f32.mrb[0].mxu0
    %v5345 = vadd.f32 0.0, %v5344
    %v5346 = vpop.f32.mrb[0].mxu0
    %v5347 = vpop.f32.mrb[0].mxu0
    %v5348 = vadd.f32 0.0, %v5347
    %v5349 = vpop.f32.mrb[0].mxu0
    %5350 = vmatprep.mubr.bf16.mxu0 0
    %5351 = vmatmul.mubr.bf16.gmra.mrb[0].mxu0 %v5299
    %v5352 = vpop.f32.mrb[0].mxu0
    %v5353 = vadd.f32 0.0, %v5352
    %v5354 = vpop.f32.mrb[0].mxu0
    %v5355 = vpop.f32.mrb[0].mxu0
    %v5356 = vadd.f32 0.0, %v5355
    %v5357 = vpop.f32.mrb[0].mxu0
    %5358 = vmatprep.mubr.bf16.mxu0 0
    %5359 = vmatmul.mubr.bf16.gmra.mrb[0].mxu0 %v5302
    %v5360 = vpop.f32.mrb[0].mxu0
    %v5361 = vadd.f32 0.0, %v5360
    %v5362 = vpop.f32.mrb[0].mxu0
    %v5363 = vpop.f32.mrb[0].mxu0
    %v5364 = vadd.f32 0.0, %v5363
    %v5365 = vpop.f32.mrb[0].mxu0
    %5366 = vmatprep.mubr.bf16.mxu0 0
    %5367 = vmatmul.mubr.bf16.gmra.mrb[0].mxu0 %v5305
    %v5368 = vpop.f32.mrb[0].mxu0
    %v5369 = vadd.f32 0.0, %v5368
    %v5370 = vpop.f32.mrb[0].mxu0
    %v5371 = vpop.f32.mrb[0].mxu0
    %v5372 = vadd.f32 0.0, %v5371
    %v5373 = vpop.f32.mrb[0].mxu0
    %5374 = vmatprep.mubr.bf16.mxu0 0
    %5375 = vmatmul.mubr.bf16.gmra.mrb[0].mxu0 %v5308
    %v5376 = vpop.f32.mrb[0].mxu0
    %v5377 = vadd.f32 0.0, %v5376
    %v5378 = vpop.f32.mrb[0].mxu0
    %v5379 = vpop.f32.mrb[0].mxu0
    %v5380 = vadd.f32 0.0, %v5379
    %v5381 = vpop.f32.mrb[0].mxu0
    %5382 = vdwg.mxu0
    %v5387 = vunpack.c.l.b16 %v5259
    %v5388 = vunpack.c.l.b16 %v5260
    %v5389 = vunpack.c.l.b16 %v5261
    %v5390 = vunpack.c.l.b16 %v5262
    %v5391 = vpack.c.b16 %v5388, %v5387
    %v5392 = vpack.c.b16 %v5390, %v5389
    %v5396 = vsel %vm41, %v5254, 0
    %v5399 = vsel %vm41, %v5255, 0
    %v5402 = vsel %vm41, %v5256, 0
    %v5405 = vsel %vm41, %v5257, 0
    %v5408 = vsel %vm41, %v5258, 0
    %5410 = vmatprep.subr.bf16.mxu0 0
    %5411 = vmatpush1.bf16.msra.mxu0 %v5391
    %5412 = vmatprep.subr.bf16.mxu0 0
    %5413 = vmatpush1.bf16.msra.mxu0 %v5392
    %5414 = vmatprep.subr.bf16.mxu0 0
    %5415 = vmatpush1.bf16.msra.mxu0 0
    %5416 = vmatprep.subr.bf16.mxu0 0
    %5417 = vmatpush1.bf16.msra.mxu0 0
    %5418 = vmatprep.subr.bf16.mxu0 0
    %5419 = vmatpush1.bf16.msra.mxu0 0
    %5420 = vmatprep.subr.bf16.mxu0 0
    %5421 = vmatpush1.bf16.msra.mxu0 0
    %5422 = vmatprep.subr.bf16.mxu0 0
    %5423 = vmatpush1.bf16.msra.mxu0 0
    %5424 = vmatprep.subr.bf16.mxu0 0
    %5425 = vmatpush1.bf16.msra.mxu0 0
    %5426 = vmatprep.subr.bf16.mxu0 0
    %5427 = vmatpush1.bf16.msra.mxu0 0
    %5428 = vmatprep.subr.bf16.mxu0 0
    %5429 = vmatpush1.bf16.msra.mxu0 0
    %5430 = vmatprep.subr.bf16.mxu0 0
    %5431 = vmatpush1.bf16.msra.mxu0 0
    %5432 = vmatprep.subr.bf16.mxu0 0
    %5433 = vmatpush1.bf16.msra.mxu0 0
    %5434 = vmatprep.subr.bf16.mxu0 0
    %5435 = vmatpush1.bf16.msra.mxu0 0
    %5436 = vmatprep.subr.bf16.mxu0 0
    %5437 = vmatpush1.bf16.msra.mxu0 0
    %5438 = vmatprep.subr.bf16.mxu0 0
    %5439 = vmatpush1.bf16.msra.mxu0 0
    %5440 = vmatprep.subr.bf16.mxu0 0
    %5441 = vmatpush1.bf16.msra.mxu0 0
    %5442 = vmatprep.mubr.bf16.mxu0 0
    %5443 = vmatmul.mubr.bf16.gmra.mrb[0].mxu0 %v5396
    %v5444 = vpop.f32.mrb[0].mxu0
    %v5445 = vadd.f32 %v5345, %v5444
    %v5446 = vpop.f32.mrb[0].mxu0
    %v5447 = vpop.f32.mrb[0].mxu0
    %v5448 = vadd.f32 %v5348, %v5447
    %v5449 = vpop.f32.mrb[0].mxu0
    %5450 = vmatprep.mubr.bf16.mxu0 0
    %5451 = vmatmul.mubr.bf16.gmra.mrb[0].mxu0 %v5399
    %v5452 = vpop.f32.mrb[0].mxu0
    %v5453 = vadd.f32 %v5353, %v5452
    %v5454 = vpop.f32.mrb[0].mxu0
    %v5455 = vpop.f32.mrb[0].mxu0
    %v5456 = vadd.f32 %v5356, %v5455
    %v5457 = vpop.f32.mrb[0].mxu0
    %5458 = vmatprep.mubr.bf16.mxu0 0
    %5459 = vmatmul.mubr.bf16.gmra.mrb[0].mxu0 %v5402
    %v5460 = vpop.f32.mrb[0].mxu0
    %v5461 = vadd.f32 %v5361, %v5460
    %v5462 = vpop.f32.mrb[0].mxu0
    %v5463 = vpop.f32.mrb[0].mxu0
    %v5464 = vadd.f32 %v5364, %v5463
    %v5465 = vpop.f32.mrb[0].mxu0
    %5466 = vmatprep.mubr.bf16.mxu0 0
    %5467 = vmatmul.mubr.bf16.gmra.mrb[0].mxu0 %v5405
    %v5468 = vpop.f32.mrb[0].mxu0
    %v5469 = vadd.f32 %v5369, %v5468
    %v5470 = vpop.f32.mrb[0].mxu0
    %v5471 = vpop.f32.mrb[0].mxu0
    %v5472 = vadd.f32 %v5372, %v5471
    %v5473 = vpop.f32.mrb[0].mxu0
    %5474 = vmatprep.mubr.bf16.mxu0 0
    %5475 = vmatmul.mubr.bf16.gmra.mrb[0].mxu0 %v5408
    %v5476 = vpop.f32.mrb[0].mxu0
    %v5477 = vadd.f32 %v5377, %v5476
    %v5478 = vpop.f32.mrb[0].mxu0
    %v5479 = vpop.f32.mrb[0].mxu0
    %v5480 = vadd.f32 %v5380, %v5479
    %v5481 = vpop.f32.mrb[0].mxu0
    %5482 = vdwg.mxu0
    %v5483 = vld [vmem:[#allocation3 + $0x2] sm:$0xff]
    %v5484 = vld [vmem:[#allocation3 + $0xa] sm:$0xff]
    %v5485 = vld [vmem:[#allocation3 + $0x12] sm:$0xff]
    %v5486 = vld [vmem:[#allocation3 + $0x1a] sm:$0xff]
    %v5487 = vld [vmem:[#allocation3 + $0x22] sm:$0xff]
    %v5488 = vld [vmem:[#allocation3 + $0x2a] sm:$0xff]
    %v5489 = vld [vmem:[#allocation3 + $0x32] sm:$0xff]
    %v5490 = vld [vmem:[#allocation3 + $0x3a] sm:$0xff]
    %v5491 = vld [vmem:[#allocation3 + $0x42] sm:$0xff]
    %v5492 = vld [vmem:[#allocation3 + $0x4a] sm:$0xff]
    %v5493 = vpack.c.bf16 %v5484, %v5483
    %v5494 = vpack.c.bf16 %v5486, %v5485
    %v5495 = vpack.c.bf16 %v5488, %v5487
    %v5496 = vpack.c.bf16 %v5490, %v5489
    %v5497 = vpack.c.bf16 %v5492, %v5491
    %s5498 = scalar_lea.vmem %s3, 32
    %v5499 = vld [vmem:[%s5498] sm:$0xf]
    %v5500 = vld [vmem:[%s5498 + $0x4] sm:$0xf]
    %v5501 = vld [vmem:[%s5498 + $0x8] sm:$0xf]
    %v5502 = vld [vmem:[%s5498 + $0xc] sm:$0xf]
    %v5507 = vunpack.c.l.b16 %v5499
    %v5508 = vunpack.c.l.b16 %v5500
    %v5509 = vunpack.c.l.b16 %v5501
    %v5510 = vunpack.c.l.b16 %v5502
    %v5511 = vpack.c.b16 %v5508, %v5507
    %v5512 = vpack.c.b16 %v5510, %v5509
    %v5516 = vsel %vm41, %v5493, 0
    %v5519 = vsel %vm41, %v5494, 0
    %v5522 = vsel %vm41, %v5495, 0
    %v5525 = vsel %vm41, %v5496, 0
    %v5528 = vsel %vm41, %v5497, 0
    %5530 = vmatprep.subr.bf16.mxu0 0
    %5531 = vmatpush1.bf16.msra.mxu0 %v5511
    %5532 = vmatprep.subr.bf16.mxu0 0
    %5533 = vmatpush1.bf16.msra.mxu0 %v5512
    %5534 = vmatprep.subr.bf16.mxu0 0
    %5535 = vmatpush1.bf16.msra.mxu0 0
    %5536 = vmatprep.subr.bf16.mxu0 0
    %5537 = vmatpush1.bf16.msra.mxu0 0
    %5538 = vmatprep.subr.bf16.mxu0 0
    %5539 = vmatpush1.bf16.msra.mxu0 0
    %5540 = vmatprep.subr.bf16.mxu0 0
    %5541 = vmatpush1.bf16.msra.mxu0 0
    %5542 = vmatprep.subr.bf16.mxu0 0
    %5543 = vmatpush1.bf16.msra.mxu0 0
    %5544 = vmatprep.subr.bf16.mxu0 0
    %5545 = vmatpush1.bf16.msra.mxu0 0
    %5546 = vmatprep.subr.bf16.mxu0 0
    %5547 = vmatpush1.bf16.msra.mxu0 0
    %5548 = vmatprep.subr.bf16.mxu0 0
    %5549 = vmatpush1.bf16.msra.mxu0 0
    %5550 = vmatprep.subr.bf16.mxu0 0
    %5551 = vmatpush1.bf16.msra.mxu0 0
    %5552 = vmatprep.subr.bf16.mxu0 0
    %5553 = vmatpush1.bf16.msra.mxu0 0
    %5554 = vmatprep.subr.bf16.mxu0 0
    %5555 = vmatpush1.bf16.msra.mxu0 0
    %5556 = vmatprep.subr.bf16.mxu0 0
    %5557 = vmatpush1.bf16.msra.mxu0 0
    %5558 = vmatprep.subr.bf16.mxu0 0
    %5559 = vmatpush1.bf16.msra.mxu0 0
    %5560 = vmatprep.subr.bf16.mxu0 0
    %5561 = vmatpush1.bf16.msra.mxu0 0
    %5562 = vmatprep.mubr.bf16.mxu0 0
    %5563 = vmatmul.mubr.bf16.gmra.mrb[0].mxu0 %v5516
    %v5564 = vpop.f32.mrb[0].mxu0
    %v5565 = vadd.f32 0.0, %v5564
    %v5566 = vpop.f32.mrb[0].mxu0
    %v5567 = vpop.f32.mrb[0].mxu0
    %v5568 = vadd.f32 0.0, %v5567
    %v5569 = vpop.f32.mrb[0].mxu0
    %5570 = vmatprep.mubr.bf16.mxu0 0
    %5571 = vmatmul.mubr.bf16.gmra.mrb[0].mxu0 %v5519
    %v5572 = vpop.f32.mrb[0].mxu0
    %v5573 = vadd.f32 0.0, %v5572
    %v5574 = vpop.f32.mrb[0].mxu0
    %v5575 = vpop.f32.mrb[0].mxu0
    %v5576 = vadd.f32 0.0, %v5575
    %v5577 = vpop.f32.mrb[0].mxu0
    %5578 = vmatprep.mubr.bf16.mxu0 0
    %5579 = vmatmul.mubr.bf16.gmra.mrb[0].mxu0 %v5522
    %v5580 = vpop.f32.mrb[0].mxu0
    %v5581 = vadd.f32 0.0, %v5580
    %v5582 = vpop.f32.mrb[0].mxu0
    %v5583 = vpop.f32.mrb[0].mxu0
    %v5584 = vadd.f32 0.0, %v5583
    %v5585 = vpop.f32.mrb[0].mxu0
    %5586 = vmatprep.mubr.bf16.mxu0 0
    %5587 = vmatmul.mubr.bf16.gmra.mrb[0].mxu0 %v5525
    %v5588 = vpop.f32.mrb[0].mxu0
    %v5589 = vadd.f32 0.0, %v5588
    %v5590 = vpop.f32.mrb[0].mxu0
    %v5591 = vpop.f32.mrb[0].mxu0
    %v5592 = vadd.f32 0.0, %v5591
    %v5593 = vpop.f32.mrb[0].mxu0
    %5594 = vmatprep.mubr.bf16.mxu0 0
    %5595 = vmatmul.mubr.bf16.gmra.mrb[0].mxu0 %v5528
    %v5596 = vpop.f32.mrb[0].mxu0
    %v5597 = vadd.f32 0.0, %v5596
    %v5598 = vpop.f32.mrb[0].mxu0
    %v5599 = vpop.f32.mrb[0].mxu0
    %v5600 = vadd.f32 0.0, %v5599
    %v5601 = vpop.f32.mrb[0].mxu0
    %5602 = vdwg.mxu0
    %v5603 = vadd.f32 %v5445, %v5565
    %v5604 = vadd.f32 %v5448, %v5568
    %v5605 = vadd.f32 %v5453, %v5573
    %v5606 = vadd.f32 %v5456, %v5576
    %v5607 = vadd.f32 %v5461, %v5581
    %v5608 = vadd.f32 %v5464, %v5584
    %v5609 = vadd.f32 %v5469, %v5589
    %v5610 = vadd.f32 %v5472, %v5592
    %v5611 = vadd.f32 %v5477, %v5597
    %v5612 = vadd.f32 %v5480, %v5600
    %v5613 = vld [vmem:[#allocation3 + $0xa] sm:$0xff]
    %v5614 = vld [vmem:[#allocation3 + $0x12] sm:$0xff]
    %v5615 = vld [vmem:[#allocation3 + $0x1a] sm:$0xff]
    %v5616 = vld [vmem:[#allocation3 + $0x22] sm:$0xff]
    %v5617 = vld [vmem:[#allocation3 + $0x2a] sm:$0xff]
    %v5618 = vld [vmem:[#allocation3 + $0x32] sm:$0xff]
    %v5619 = vld [vmem:[#allocation3 + $0x3a] sm:$0xff]
    %v5620 = vld [vmem:[#allocation3 + $0x42] sm:$0xff]
    %v5621 = vld [vmem:[#allocation3 + $0x4a] sm:$0xff]
    %v5622 = vld [vmem:[#allocation3 + $0x52] sm:$0xff]
    %v5623 = vpack.c.bf16 %v5614, %v5613
    %v5624 = vpack.c.bf16 %v5616, %v5615
    %v5625 = vpack.c.bf16 %v5618, %v5617
    %v5626 = vpack.c.bf16 %v5620, %v5619
    %v5627 = vpack.c.bf16 %v5622, %v5621
    %s5628 = scalar_lea.vmem %s3, 48
    %v5629 = vld [vmem:[%s5628] sm:$0xf]
    %v5630 = vld [vmem:[%s5628 + $0x4] sm:$0xf]
    %v5631 = vld [vmem:[%s5628 + $0x8] sm:$0xf]
    %v5632 = vld [vmem:[%s5628 + $0xc] sm:$0xf]
    %v5637 = vunpack.c.l.b16 %v5629
    %v5638 = vunpack.c.l.b16 %v5630
    %v5639 = vunpack.c.l.b16 %v5631
    %v5640 = vunpack.c.l.b16 %v5632
    %v5641 = vpack.c.b16 %v5638, %v5637
    %v5642 = vpack.c.b16 %v5640, %v5639
    %v5646 = vsel %vm41, %v5623, 0
    %v5649 = vsel %vm41, %v5624, 0
    %v5652 = vsel %vm41, %v5625, 0
    %v5655 = vsel %vm41, %v5626, 0
    %v5658 = vsel %vm41, %v5627, 0
    %5660 = vmatprep.subr.bf16.mxu0 0
    %5661 = vmatpush1.bf16.msra.mxu0 %v5641
    %5662 = vmatprep.subr.bf16.mxu0 0
    %5663 = vmatpush1.bf16.msra.mxu0 %v5642
    %5664 = vmatprep.subr.bf16.mxu0 0
    %5665 = vmatpush1.bf16.msra.mxu0 0
    %5666 = vmatprep.subr.bf16.mxu0 0
    %5667 = vmatpush1.bf16.msra.mxu0 0
    %5668 = vmatprep.subr.bf16.mxu0 0
    %5669 = vmatpush1.bf16.msra.mxu0 0
    %5670 = vmatprep.subr.bf16.mxu0 0
    %5671 = vmatpush1.bf16.msra.mxu0 0
    %5672 = vmatprep.subr.bf16.mxu0 0
    %5673 = vmatpush1.bf16.msra.mxu0 0
    %5674 = vmatprep.subr.bf16.mxu0 0
    %5675 = vmatpush1.bf16.msra.mxu0 0
    %5676 = vmatprep.subr.bf16.mxu0 0
    %5677 = vmatpush1.bf16.msra.mxu0 0
    %5678 = vmatprep.subr.bf16.mxu0 0
    %5679 = vmatpush1.bf16.msra.mxu0 0
    %5680 = vmatprep.subr.bf16.mxu0 0
    %5681 = vmatpush1.bf16.msra.mxu0 0
    %5682 = vmatprep.subr.bf16.mxu0 0
    %5683 = vmatpush1.bf16.msra.mxu0 0
    %5684 = vmatprep.subr.bf16.mxu0 0
    %5685 = vmatpush1.bf16.msra.mxu0 0
    %5686 = vmatprep.subr.bf16.mxu0 0
    %5687 = vmatpush1.bf16.msra.mxu0 0
    %5688 = vmatprep.subr.bf16.mxu0 0
    %5689 = vmatpush1.bf16.msra.mxu0 0
    %5690 = vmatprep.subr.bf16.mxu0 0
    %5691 = vmatpush1.bf16.msra.mxu0 0
    %5692 = vmatprep.mubr.bf16.mxu0 0
    %5693 = vmatmul.mubr.bf16.gmra.mrb[0].mxu0 %v5646
    %v5694 = vpop.f32.mrb[0].mxu0
    %v5695 = vadd.f32 0.0, %v5694
    %v5696 = vpop.f32.mrb[0].mxu0
    %v5697 = vpop.f32.mrb[0].mxu0
    %v5698 = vadd.f32 0.0, %v5697
    %v5699 = vpop.f32.mrb[0].mxu0
    %5700 = vmatprep.mubr.bf16.mxu0 0
    %5701 = vmatmul.mubr.bf16.gmra.mrb[0].mxu0 %v5649
    %v5702 = vpop.f32.mrb[0].mxu0
    %v5703 = vadd.f32 0.0, %v5702
    %v5704 = vpop.f32.mrb[0].mxu0
    %v5705 = vpop.f32.mrb[0].mxu0
    %v5706 = vadd.f32 0.0, %v5705
    %v5707 = vpop.f32.mrb[0].mxu0
    %5708 = vmatprep.mubr.bf16.mxu0 0
    %5709 = vmatmul.mubr.bf16.gmra.mrb[0].mxu0 %v5652
    %v5710 = vpop.f32.mrb[0].mxu0
    %v5711 = vadd.f32 0.0, %v5710
    %v5712 = vpop.f32.mrb[0].mxu0
    %v5713 = vpop.f32.mrb[0].mxu0
    %v5714 = vadd.f32 0.0, %v5713
    %v5715 = vpop.f32.mrb[0].mxu0
    %5716 = vmatprep.mubr.bf16.mxu0 0
    %5717 = vmatmul.mubr.bf16.gmra.mrb[0].mxu0 %v5655
    %v5718 = vpop.f32.mrb[0].mxu0
    %v5719 = vadd.f32 0.0, %v5718
    %v5720 = vpop.f32.mrb[0].mxu0
    %v5721 = vpop.f32.mrb[0].mxu0
    %v5722 = vadd.f32 0.0, %v5721
    %v5723 = vpop.f32.mrb[0].mxu0
    %5724 = vmatprep.mubr.bf16.mxu0 0
    %5725 = vmatmul.mubr.bf16.gmra.mrb[0].mxu0 %v5658
    %v5726 = vpop.f32.mrb[0].mxu0
    %v5727 = vadd.f32 0.0, %v5726
    %v5728 = vpop.f32.mrb[0].mxu0
    %v5729 = vpop.f32.mrb[0].mxu0
    %v5730 = vadd.f32 0.0, %v5729
    %v5731 = vpop.f32.mrb[0].mxu0
    %5732 = vdwg.mxu0
    %v5733 = vadd.f32 %v5603, %v5695
    %v5734 = vadd.f32 %v5604, %v5698
    %v5735 = vadd.f32 %v5605, %v5703
    %v5736 = vadd.f32 %v5606, %v5706
    %v5737 = vadd.f32 %v5607, %v5711
    %v5738 = vadd.f32 %v5608, %v5714
    %v5739 = vadd.f32 %v5609, %v5719
    %v5740 = vadd.f32 %v5610, %v5722
    %v5741 = vadd.f32 %v5611, %v5727
    %v5742 = vadd.f32 %v5612, %v5730
    %v5743 = vld [vmem:[#allocation3 + $0xb] sm:$0xff]
    %v5744 = vld [vmem:[#allocation3 + $0x13] sm:$0xff]
    %v5745 = vld [vmem:[#allocation3 + $0x1b] sm:$0xff]
    %v5746 = vld [vmem:[#allocation3 + $0x23] sm:$0xff]
    %v5747 = vld [vmem:[#allocation3 + $0x2b] sm:$0xff]
    %v5748 = vld [vmem:[#allocation3 + $0x33] sm:$0xff]
    %v5749 = vld [vmem:[#allocation3 + $0x3b] sm:$0xff]
    %v5750 = vld [vmem:[#allocation3 + $0x43] sm:$0xff]
    %v5751 = vld [vmem:[#allocation3 + $0x4b] sm:$0xff]
    %v5752 = vld [vmem:[#allocation3 + $0x53] sm:$0xff]
    %v5753 = vpack.c.bf16 %v5744, %v5743
    %v5754 = vpack.c.bf16 %v5746, %v5745
    %v5755 = vpack.c.bf16 %v5748, %v5747
    %v5756 = vpack.c.bf16 %v5750, %v5749
    %v5757 = vpack.c.bf16 %v5752, %v5751
    %s5758 = scalar_lea.vmem %s3, 64
    %v5759 = vld [vmem:[%s5758] sm:$0xf]
    %v5760 = vld [vmem:[%s5758 + $0x4] sm:$0xf]
    %v5761 = vld [vmem:[%s5758 + $0x8] sm:$0xf]
    %v5762 = vld [vmem:[%s5758 + $0xc] sm:$0xf]
    %v5767 = vunpack.c.l.b16 %v5759
    %v5768 = vunpack.c.l.b16 %v5760
    %v5769 = vunpack.c.l.b16 %v5761
    %v5770 = vunpack.c.l.b16 %v5762
    %v5771 = vpack.c.b16 %v5768, %v5767
    %v5772 = vpack.c.b16 %v5770, %v5769
    %v5776 = vsel %vm41, %v5753, 0
    %v5779 = vsel %vm41, %v5754, 0
    %v5782 = vsel %vm41, %v5755, 0
    %v5785 = vsel %vm41, %v5756, 0
    %v5788 = vsel %vm41, %v5757, 0
    %5790 = vmatprep.subr.bf16.mxu0 0
    %5791 = vmatpush1.bf16.msra.mxu0 %v5771
    %5792 = vmatprep.subr.bf16.mxu0 0
    %5793 = vmatpush1.bf16.msra.mxu0 %v5772
    %5794 = vmatprep.subr.bf16.mxu0 0
    %5795 = vmatpush1.bf16.msra.mxu0 0
    %5796 = vmatprep.subr.bf16.mxu0 0
    %5797 = vmatpush1.bf16.msra.mxu0 0
    %5798 = vmatprep.subr.bf16.mxu0 0
    %5799 = vmatpush1.bf16.msra.mxu0 0
    %5800 = vmatprep.subr.bf16.mxu0 0
    %5801 = vmatpush1.bf16.msra.mxu0 0
    %5802 = vmatprep.subr.bf16.mxu0 0
    %5803 = vmatpush1.bf16.msra.mxu0 0
    %5804 = vmatprep.subr.bf16.mxu0 0
    %5805 = vmatpush1.bf16.msra.mxu0 0
    %5806 = vmatprep.subr.bf16.mxu0 0
    %5807 = vmatpush1.bf16.msra.mxu0 0
    %5808 = vmatprep.subr.bf16.mxu0 0
    %5809 = vmatpush1.bf16.msra.mxu0 0
    %5810 = vmatprep.subr.bf16.mxu0 0
    %5811 = vmatpush1.bf16.msra.mxu0 0
    %5812 = vmatprep.subr.bf16.mxu0 0
    %5813 = vmatpush1.bf16.msra.mxu0 0
    %5814 = vmatprep.subr.bf16.mxu0 0
    %5815 = vmatpush1.bf16.msra.mxu0 0
    %5816 = vmatprep.subr.bf16.mxu0 0
    %5817 = vmatpush1.bf16.msra.mxu0 0
    %5818 = vmatprep.subr.bf16.mxu0 0
    %5819 = vmatpush1.bf16.msra.mxu0 0
    %5820 = vmatprep.subr.bf16.mxu0 0
    %5821 = vmatpush1.bf16.msra.mxu0 0
    %5822 = vmatprep.mubr.bf16.mxu0 0
    %5823 = vmatmul.mubr.bf16.gmra.mrb[0].mxu0 %v5776
    %v5824 = vpop.f32.mrb[0].mxu0
    %v5825 = vadd.f32 0.0, %v5824
    %v5826 = vpop.f32.mrb[0].mxu0
    %v5827 = vpop.f32.mrb[0].mxu0
    %v5828 = vadd.f32 0.0, %v5827
    %v5829 = vpop.f32.mrb[0].mxu0
    %5830 = vmatprep.mubr.bf16.mxu0 0
    %5831 = vmatmul.mubr.bf16.gmra.mrb[0].mxu0 %v5779
    %v5832 = vpop.f32.mrb[0].mxu0
    %v5833 = vadd.f32 0.0, %v5832
    %v5834 = vpop.f32.mrb[0].mxu0
    %v5835 = vpop.f32.mrb[0].mxu0
    %v5836 = vadd.f32 0.0, %v5835
    %v5837 = vpop.f32.mrb[0].mxu0
    %5838 = vmatprep.mubr.bf16.mxu0 0
    %5839 = vmatmul.mubr.bf16.gmra.mrb[0].mxu0 %v5782
    %v5840 = vpop.f32.mrb[0].mxu0
    %v5841 = vadd.f32 0.0, %v5840
    %v5842 = vpop.f32.mrb[0].mxu0
    %v5843 = vpop.f32.mrb[0].mxu0
    %v5844 = vadd.f32 0.0, %v5843
    %v5845 = vpop.f32.mrb[0].mxu0
    %5846 = vmatprep.mubr.bf16.mxu0 0
    %5847 = vmatmul.mubr.bf16.gmra.mrb[0].mxu0 %v5785
    %v5848 = vpop.f32.mrb[0].mxu0
    %v5849 = vadd.f32 0.0, %v5848
    %v5850 = vpop.f32.mrb[0].mxu0
    %v5851 = vpop.f32.mrb[0].mxu0
    %v5852 = vadd.f32 0.0, %v5851
    %v5853 = vpop.f32.mrb[0].mxu0
    %5854 = vmatprep.mubr.bf16.mxu0 0
    %5855 = vmatmul.mubr.bf16.gmra.mrb[0].mxu0 %v5788
    %v5856 = vpop.f32.mrb[0].mxu0
    %v5857 = vadd.f32 0.0, %v5856
    %v5858 = vpop.f32.mrb[0].mxu0
    %v5859 = vpop.f32.mrb[0].mxu0
    %v5860 = vadd.f32 0.0, %v5859
    %v5861 = vpop.f32.mrb[0].mxu0
    %5862 = vdwg.mxu0
    %v5863 = vadd.f32 %v5733, %v5825
    %v5864 = vadd.f32 %v5734, %v5828
    %v5865 = vadd.f32 %v5735, %v5833
    %v5866 = vadd.f32 %v5736, %v5836
    %v5867 = vadd.f32 %v5737, %v5841
    %v5868 = vadd.f32 %v5738, %v5844
    %v5869 = vadd.f32 %v5739, %v5849
    %v5870 = vadd.f32 %v5740, %v5852
    %v5871 = vadd.f32 %v5741, %v5857
    %v5872 = vadd.f32 %v5742, %v5860
    %v5873 = vld [vmem:[#allocation3 + $0xc] sm:$0xff]
    %v5874 = vld [vmem:[#allocation3 + $0x14] sm:$0xff]
    %v5875 = vld [vmem:[#allocation3 + $0x1c] sm:$0xff]
    %v5876 = vld [vmem:[#allocation3 + $0x24] sm:$0xff]
    %v5877 = vld [vmem:[#allocation3 + $0x2c] sm:$0xff]
    %v5878 = vld [vmem:[#allocation3 + $0x34] sm:$0xff]
    %v5879 = vld [vmem:[#allocation3 + $0x3c] sm:$0xff]
    %v5880 = vld [vmem:[#allocation3 + $0x44] sm:$0xff]
    %v5881 = vld [vmem:[#allocation3 + $0x4c] sm:$0xff]
    %v5882 = vld [vmem:[#allocation3 + $0x54] sm:$0xff]
    %v5883 = vpack.c.bf16 %v5874, %v5873
    %v5884 = vpack.c.bf16 %v5876, %v5875
    %v5885 = vpack.c.bf16 %v5878, %v5877
    %v5886 = vpack.c.bf16 %v5880, %v5879
    %v5887 = vpack.c.bf16 %v5882, %v5881
    %s5888 = scalar_lea.vmem %s3, 80
    %v5889 = vld [vmem:[%s5888] sm:$0xf]
    %v5890 = vld [vmem:[%s5888 + $0x4] sm:$0xf]
    %v5891 = vld [vmem:[%s5888 + $0x8] sm:$0xf]
    %v5892 = vld [vmem:[%s5888 + $0xc] sm:$0xf]
    %v5897 = vunpack.c.l.b16 %v5889
    %v5898 = vunpack.c.l.b16 %v5890
    %v5899 = vunpack.c.l.b16 %v5891
    %v5900 = vunpack.c.l.b16 %v5892
    %v5901 = vpack.c.b16 %v5898, %v5897
    %v5902 = vpack.c.b16 %v5900, %v5899
    %v5906 = vsel %vm41, %v5883, 0
    %v5909 = vsel %vm41, %v5884, 0
    %v5912 = vsel %vm41, %v5885, 0
    %v5915 = vsel %vm41, %v5886, 0
    %v5918 = vsel %vm41, %v5887, 0
    %5920 = vmatprep.subr.bf16.mxu0 0
    %5921 = vmatpush1.bf16.msra.mxu0 %v5901
    %5922 = vmatprep.subr.bf16.mxu0 0
    %5923 = vmatpush1.bf16.msra.mxu0 %v5902
    %5924 = vmatprep.subr.bf16.mxu0 0
    %5925 = vmatpush1.bf16.msra.mxu0 0
    %5926 = vmatprep.subr.bf16.mxu0 0
    %5927 = vmatpush1.bf16.msra.mxu0 0
    %5928 = vmatprep.subr.bf16.mxu0 0
    %5929 = vmatpush1.bf16.msra.mxu0 0
    %5930 = vmatprep.subr.bf16.mxu0 0
    %5931 = vmatpush1.bf16.msra.mxu0 0
    %5932 = vmatprep.subr.bf16.mxu0 0
    %5933 = vmatpush1.bf16.msra.mxu0 0
    %5934 = vmatprep.subr.bf16.mxu0 0
    %5935 = vmatpush1.bf16.msra.mxu0 0
    %5936 = vmatprep.subr.bf16.mxu0 0
    %5937 = vmatpush1.bf16.msra.mxu0 0
    %5938 = vmatprep.subr.bf16.mxu0 0
    %5939 = vmatpush1.bf16.msra.mxu0 0
    %5940 = vmatprep.subr.bf16.mxu0 0
    %5941 = vmatpush1.bf16.msra.mxu0 0
    %5942 = vmatprep.subr.bf16.mxu0 0
    %5943 = vmatpush1.bf16.msra.mxu0 0
    %5944 = vmatprep.subr.bf16.mxu0 0
    %5945 = vmatpush1.bf16.msra.mxu0 0
    %5946 = vmatprep.subr.bf16.mxu0 0
    %5947 = vmatpush1.bf16.msra.mxu0 0
    %5948 = vmatprep.subr.bf16.mxu0 0
    %5949 = vmatpush1.bf16.msra.mxu0 0
    %5950 = vmatprep.subr.bf16.mxu0 0
    %5951 = vmatpush1.bf16.msra.mxu0 0
    %5952 = vmatprep.mubr.bf16.mxu0 0
    %5953 = vmatmul.mubr.bf16.gmra.mrb[0].mxu0 %v5906
    %v5954 = vpop.f32.mrb[0].mxu0
    %v5955 = vadd.f32 0.0, %v5954
    %v5956 = vpop.f32.mrb[0].mxu0
    %v5957 = vpop.f32.mrb[0].mxu0
    %v5958 = vadd.f32 0.0, %v5957
    %v5959 = vpop.f32.mrb[0].mxu0
    %5960 = vmatprep.mubr.bf16.mxu0 0
    %5961 = vmatmul.mubr.bf16.gmra.mrb[0].mxu0 %v5909
    %v5962 = vpop.f32.mrb[0].mxu0
    %v5963 = vadd.f32 0.0, %v5962
    %v5964 = vpop.f32.mrb[0].mxu0
    %v5965 = vpop.f32.mrb[0].mxu0
    %v5966 = vadd.f32 0.0, %v5965
    %v5967 = vpop.f32.mrb[0].mxu0
    %5968 = vmatprep.mubr.bf16.mxu0 0
    %5969 = vmatmul.mubr.bf16.gmra.mrb[0].mxu0 %v5912
    %v5970 = vpop.f32.mrb[0].mxu0
    %v5971 = vadd.f32 0.0, %v5970
    %v5972 = vpop.f32.mrb[0].mxu0
    %v5973 = vpop.f32.mrb[0].mxu0
    %v5974 = vadd.f32 0.0, %v5973
    %v5975 = vpop.f32.mrb[0].mxu0
    %5976 = vmatprep.mubr.bf16.mxu0 0
    %5977 = vmatmul.mubr.bf16.gmra.mrb[0].mxu0 %v5915
    %v5978 = vpop.f32.mrb[0].mxu0
    %v5979 = vadd.f32 0.0, %v5978
    %v5980 = vpop.f32.mrb[0].mxu0
    %v5981 = vpop.f32.mrb[0].mxu0
    %v5982 = vadd.f32 0.0, %v5981
    %v5983 = vpop.f32.mrb[0].mxu0
    %5984 = vmatprep.mubr.bf16.mxu0 0
    %5985 = vmatmul.mubr.bf16.gmra.mrb[0].mxu0 %v5918
    %v5986 = vpop.f32.mrb[0].mxu0
    %v5987 = vadd.f32 0.0, %v5986
    %v5988 = vpop.f32.mrb[0].mxu0
    %v5989 = vpop.f32.mrb[0].mxu0
    %v5990 = vadd.f32 0.0, %v5989
    %v5991 = vpop.f32.mrb[0].mxu0
    %5992 = vdwg.mxu0
    %v5993 = vadd.f32 %v5863, %v5955
    %v5994 = vadd.f32 %v5864, %v5958
    %v5995 = vadd.f32 %v5865, %v5963
    %v5996 = vadd.f32 %v5866, %v5966
    %v5997 = vadd.f32 %v5867, %v5971
    %v5998 = vadd.f32 %v5868, %v5974
    %v5999 = vadd.f32 %v5869, %v5979
    %v6000 = vadd.f32 %v5870, %v5982
    %v6001 = vadd.f32 %v5871, %v5987
    %v6002 = vadd.f32 %v5872, %v5990
    %v6003 = vld [vmem:[#allocation3 + $0x14] sm:$0xff]
    %v6004 = vld [vmem:[#allocation3 + $0x1c] sm:$0xff]
    %v6005 = vld [vmem:[#allocation3 + $0x24] sm:$0xff]
    %v6006 = vld [vmem:[#allocation3 + $0x2c] sm:$0xff]
    %v6007 = vld [vmem:[#allocation3 + $0x34] sm:$0xff]
    %v6008 = vld [vmem:[#allocation3 + $0x3c] sm:$0xff]
    %v6009 = vld [vmem:[#allocation3 + $0x44] sm:$0xff]
    %v6010 = vld [vmem:[#allocation3 + $0x4c] sm:$0xff]
    %v6011 = vld [vmem:[#allocation3 + $0x54] sm:$0xff]
    %v6012 = vld [vmem:[#allocation3 + $0x5c] sm:$0xff]
    %v6013 = vpack.c.bf16 %v6004, %v6003
    %v6014 = vpack.c.bf16 %v6006, %v6005
    %v6015 = vpack.c.bf16 %v6008, %v6007
    %v6016 = vpack.c.bf16 %v6010, %v6009
    %v6017 = vpack.c.bf16 %v6012, %v6011
    %s6018 = scalar_lea.vmem %s3, 96
    %v6019 = vld [vmem:[%s6018] sm:$0xf]
    %v6020 = vld [vmem:[%s6018 + $0x4] sm:$0xf]
    %v6021 = vld [vmem:[%s6018 + $0x8] sm:$0xf]
    %v6022 = vld [vmem:[%s6018 + $0xc] sm:$0xf]
    %v6027 = vunpack.c.l.b16 %v6019
    %v6028 = vunpack.c.l.b16 %v6020
    %v6029 = vunpack.c.l.b16 %v6021
    %v6030 = vunpack.c.l.b16 %v6022
    %v6031 = vpack.c.b16 %v6028, %v6027
    %v6032 = vpack.c.b16 %v6030, %v6029
    %v6036 = vsel %vm41, %v6013, 0
    %v6039 = vsel %vm41, %v6014, 0
    %v6042 = vsel %vm41, %v6015, 0
    %v6045 = vsel %vm41, %v6016, 0
    %v6048 = vsel %vm41, %v6017, 0
    %6050 = vmatprep.subr.bf16.mxu0 0
    %6051 = vmatpush1.bf16.msra.mxu0 %v6031
    %6052 = vmatprep.subr.bf16.mxu0 0
    %6053 = vmatpush1.bf16.msra.mxu0 %v6032
    %6054 = vmatprep.subr.bf16.mxu0 0
    %6055 = vmatpush1.bf16.msra.mxu0 0
    %6056 = vmatprep.subr.bf16.mxu0 0
    %6057 = vmatpush1.bf16.msra.mxu0 0
    %6058 = vmatprep.subr.bf16.mxu0 0
    %6059 = vmatpush1.bf16.msra.mxu0 0
    %6060 = vmatprep.subr.bf16.mxu0 0
    %6061 = vmatpush1.bf16.msra.mxu0 0
    %6062 = vmatprep.subr.bf16.mxu0 0
    %6063 = vmatpush1.bf16.msra.mxu0 0
    %6064 = vmatprep.subr.bf16.mxu0 0
    %6065 = vmatpush1.bf16.msra.mxu0 0
    %6066 = vmatprep.subr.bf16.mxu0 0
    %6067 = vmatpush1.bf16.msra.mxu0 0
    %6068 = vmatprep.subr.bf16.mxu0 0
    %6069 = vmatpush1.bf16.msra.mxu0 0
    %6070 = vmatprep.subr.bf16.mxu0 0
    %6071 = vmatpush1.bf16.msra.mxu0 0
    %6072 = vmatprep.subr.bf16.mxu0 0
    %6073 = vmatpush1.bf16.msra.mxu0 0
    %6074 = vmatprep.subr.bf16.mxu0 0
    %6075 = vmatpush1.bf16.msra.mxu0 0
    %6076 = vmatprep.subr.bf16.mxu0 0
    %6077 = vmatpush1.bf16.msra.mxu0 0
    %6078 = vmatprep.subr.bf16.mxu0 0
    %6079 = vmatpush1.bf16.msra.mxu0 0
    %6080 = vmatprep.subr.bf16.mxu0 0
    %6081 = vmatpush1.bf16.msra.mxu0 0
    %6082 = vmatprep.mubr.bf16.mxu0 0
    %6083 = vmatmul.mubr.bf16.gmra.mrb[0].mxu0 %v6036
    %v6084 = vpop.f32.mrb[0].mxu0
    %v6085 = vadd.f32 0.0, %v6084
    %v6086 = vpop.f32.mrb[0].mxu0
    %v6087 = vpop.f32.mrb[0].mxu0
    %v6088 = vadd.f32 0.0, %v6087
    %v6089 = vpop.f32.mrb[0].mxu0
    %6090 = vmatprep.mubr.bf16.mxu0 0
    %6091 = vmatmul.mubr.bf16.gmra.mrb[0].mxu0 %v6039
    %v6092 = vpop.f32.mrb[0].mxu0
    %v6093 = vadd.f32 0.0, %v6092
    %v6094 = vpop.f32.mrb[0].mxu0
    %v6095 = vpop.f32.mrb[0].mxu0
    %v6096 = vadd.f32 0.0, %v6095
    %v6097 = vpop.f32.mrb[0].mxu0
    %6098 = vmatprep.mubr.bf16.mxu0 0
    %6099 = vmatmul.mubr.bf16.gmra.mrb[0].mxu0 %v6042
    %v6100 = vpop.f32.mrb[0].mxu0
    %v6101 = vadd.f32 0.0, %v6100
    %v6102 = vpop.f32.mrb[0].mxu0
    %v6103 = vpop.f32.mrb[0].mxu0
    %v6104 = vadd.f32 0.0, %v6103
    %v6105 = vpop.f32.mrb[0].mxu0
    %6106 = vmatprep.mubr.bf16.mxu0 0
    %6107 = vmatmul.mubr.bf16.gmra.mrb[0].mxu0 %v6045
    %v6108 = vpop.f32.mrb[0].mxu0
    %v6109 = vadd.f32 0.0, %v6108
    %v6110 = vpop.f32.mrb[0].mxu0
    %v6111 = vpop.f32.mrb[0].mxu0
    %v6112 = vadd.f32 0.0, %v6111
    %v6113 = vpop.f32.mrb[0].mxu0
    %6114 = vmatprep.mubr.bf16.mxu0 0
    %6115 = vmatmul.mubr.bf16.gmra.mrb[0].mxu0 %v6048
    %v6116 = vpop.f32.mrb[0].mxu0
    %v6117 = vadd.f32 0.0, %v6116
    %v6118 = vpop.f32.mrb[0].mxu0
    %v6119 = vpop.f32.mrb[0].mxu0
    %v6120 = vadd.f32 0.0, %v6119
    %v6121 = vpop.f32.mrb[0].mxu0
    %6122 = vdwg.mxu0
    %v6123 = vadd.f32 %v5993, %v6085
    %v6124 = vadd.f32 %v5994, %v6088
    %v6125 = vadd.f32 %v5995, %v6093
    %v6126 = vadd.f32 %v5996, %v6096
    %v6127 = vadd.f32 %v5997, %v6101
    %v6128 = vadd.f32 %v5998, %v6104
    %v6129 = vadd.f32 %v5999, %v6109
    %v6130 = vadd.f32 %v6000, %v6112
    %v6131 = vadd.f32 %v6001, %v6117
    %v6132 = vadd.f32 %v6002, %v6120
    %v6133 = vld [vmem:[#allocation3 + $0x15] sm:$0xff]
    %v6134 = vld [vmem:[#allocation3 + $0x1d] sm:$0xff]
    %v6135 = vld [vmem:[#allocation3 + $0x25] sm:$0xff]
    %v6136 = vld [vmem:[#allocation3 + $0x2d] sm:$0xff]
    %v6137 = vld [vmem:[#allocation3 + $0x35] sm:$0xff]
    %v6138 = vld [vmem:[#allocation3 + $0x3d] sm:$0xff]
    %v6139 = vld [vmem:[#allocation3 + $0x45] sm:$0xff]
    %v6140 = vld [vmem:[#allocation3 + $0x4d] sm:$0xff]
    %v6141 = vld [vmem:[#allocation3 + $0x55] sm:$0xff]
    %v6142 = vld [vmem:[#allocation3 + $0x5d] sm:$0xff]
    %v6143 = vpack.c.bf16 %v6134, %v6133
    %v6144 = vpack.c.bf16 %v6136, %v6135
    %v6145 = vpack.c.bf16 %v6138, %v6137
    %v6146 = vpack.c.bf16 %v6140, %v6139
    %v6147 = vpack.c.bf16 %v6142, %v6141
    %s6148 = scalar_lea.vmem %s3, 112
    %v6149 = vld [vmem:[%s6148] sm:$0xf]
    %v6150 = vld [vmem:[%s6148 + $0x4] sm:$0xf]
    %v6151 = vld [vmem:[%s6148 + $0x8] sm:$0xf]
    %v6152 = vld [vmem:[%s6148 + $0xc] sm:$0xf]
    %v6157 = vunpack.c.l.b16 %v6149
    %v6158 = vunpack.c.l.b16 %v6150
    %v6159 = vunpack.c.l.b16 %v6151
    %v6160 = vunpack.c.l.b16 %v6152
    %v6161 = vpack.c.b16 %v6158, %v6157
    %v6162 = vpack.c.b16 %v6160, %v6159
    %v6166 = vsel %vm41, %v6143, 0
    %v6169 = vsel %vm41, %v6144, 0
    %v6172 = vsel %vm41, %v6145, 0
    %v6175 = vsel %vm41, %v6146, 0
    %v6178 = vsel %vm41, %v6147, 0
    %6180 = vmatprep.subr.bf16.mxu0 0
    %6181 = vmatpush1.bf16.msra.mxu0 %v6161
    %6182 = vmatprep.subr.bf16.mxu0 0
    %6183 = vmatpush1.bf16.msra.mxu0 %v6162
    %6184 = vmatprep.subr.bf16.mxu0 0
    %6185 = vmatpush1.bf16.msra.mxu0 0
    %6186 = vmatprep.subr.bf16.mxu0 0
    %6187 = vmatpush1.bf16.msra.mxu0 0
    %6188 = vmatprep.subr.bf16.mxu0 0
    %6189 = vmatpush1.bf16.msra.mxu0 0
    %6190 = vmatprep.subr.bf16.mxu0 0
    %6191 = vmatpush1.bf16.msra.mxu0 0
    %6192 = vmatprep.subr.bf16.mxu0 0
    %6193 = vmatpush1.bf16.msra.mxu0 0
    %6194 = vmatprep.subr.bf16.mxu0 0
    %6195 = vmatpush1.bf16.msra.mxu0 0
    %6196 = vmatprep.subr.bf16.mxu0 0
    %6197 = vmatpush1.bf16.msra.mxu0 0
    %6198 = vmatprep.subr.bf16.mxu0 0
    %6199 = vmatpush1.bf16.msra.mxu0 0
    %6200 = vmatprep.subr.bf16.mxu0 0
    %6201 = vmatpush1.bf16.msra.mxu0 0
    %6202 = vmatprep.subr.bf16.mxu0 0
    %6203 = vmatpush1.bf16.msra.mxu0 0
    %6204 = vmatprep.subr.bf16.mxu0 0
    %6205 = vmatpush1.bf16.msra.mxu0 0
    %6206 = vmatprep.subr.bf16.mxu0 0
    %6207 = vmatpush1.bf16.msra.mxu0 0
    %6208 = vmatprep.subr.bf16.mxu0 0
    %6209 = vmatpush1.bf16.msra.mxu0 0
    %6210 = vmatprep.subr.bf16.mxu0 0
    %6211 = vmatpush1.bf16.msra.mxu0 0
    %6212 = vmatprep.mubr.bf16.mxu0 0
    %6213 = vmatmul.mubr.bf16.gmra.mrb[0].mxu0 %v6166
    %v6214 = vpop.f32.mrb[0].mxu0
    %v6215 = vadd.f32 0.0, %v6214
    %v6216 = vpop.f32.mrb[0].mxu0
    %v6217 = vpop.f32.mrb[0].mxu0
    %v6218 = vadd.f32 0.0, %v6217
    %v6219 = vpop.f32.mrb[0].mxu0
    %6220 = vmatprep.mubr.bf16.mxu0 0
    %6221 = vmatmul.mubr.bf16.gmra.mrb[0].mxu0 %v6169
    %v6222 = vpop.f32.mrb[0].mxu0
    %v6223 = vadd.f32 0.0, %v6222
    %v6224 = vpop.f32.mrb[0].mxu0
    %v6225 = vpop.f32.mrb[0].mxu0
    %v6226 = vadd.f32 0.0, %v6225
    %v6227 = vpop.f32.mrb[0].mxu0
    %6228 = vmatprep.mubr.bf16.mxu0 0
    %6229 = vmatmul.mubr.bf16.gmra.mrb[0].mxu0 %v6172
    %v6230 = vpop.f32.mrb[0].mxu0
    %v6231 = vadd.f32 0.0, %v6230
    %v6232 = vpop.f32.mrb[0].mxu0
    %v6233 = vpop.f32.mrb[0].mxu0
    %v6234 = vadd.f32 0.0, %v6233
    %v6235 = vpop.f32.mrb[0].mxu0
    %6236 = vmatprep.mubr.bf16.mxu0 0
    %6237 = vmatmul.mubr.bf16.gmra.mrb[0].mxu0 %v6175
    %v6238 = vpop.f32.mrb[0].mxu0
    %v6239 = vadd.f32 0.0, %v6238
    %v6240 = vpop.f32.mrb[0].mxu0
    %v6241 = vpop.f32.mrb[0].mxu0
    %v6242 = vadd.f32 0.0, %v6241
    %v6243 = vpop.f32.mrb[0].mxu0
    %6244 = vmatprep.mubr.bf16.mxu0 0
    %6245 = vmatmul.mubr.bf16.gmra.mrb[0].mxu0 %v6178
    %v6246 = vpop.f32.mrb[0].mxu0
    %v6247 = vadd.f32 0.0, %v6246
    %v6248 = vpop.f32.mrb[0].mxu0
    %v6249 = vpop.f32.mrb[0].mxu0
    %v6250 = vadd.f32 0.0, %v6249
    %v6251 = vpop.f32.mrb[0].mxu0
    %6252 = vdwg.mxu0
    %v6253 = vadd.f32 %v6123, %v6215
    %v6254 = vadd.f32 %v6124, %v6218
    %v6255 = vadd.f32 %v6125, %v6223
    %v6256 = vadd.f32 %v6126, %v6226
    %v6257 = vadd.f32 %v6127, %v6231
    %v6258 = vadd.f32 %v6128, %v6234
    %v6259 = vadd.f32 %v6129, %v6239
    %v6260 = vadd.f32 %v6130, %v6242
    %v6261 = vadd.f32 %v6131, %v6247
    %v6262 = vadd.f32 %v6132, %v6250
    %v6263 = vld [vmem:[#allocation3 + $0x16] sm:$0xff]
    %v6264 = vld [vmem:[#allocation3 + $0x1e] sm:$0xff]
    %v6265 = vld [vmem:[#allocation3 + $0x26] sm:$0xff]
    %v6266 = vld [vmem:[#allocation3 + $0x2e] sm:$0xff]
    %v6267 = vld [vmem:[#allocation3 + $0x36] sm:$0xff]
    %v6268 = vld [vmem:[#allocation3 + $0x3e] sm:$0xff]
    %v6269 = vld [vmem:[#allocation3 + $0x46] sm:$0xff]
    %v6270 = vld [vmem:[#allocation3 + $0x4e] sm:$0xff]
    %v6271 = vld [vmem:[#allocation3 + $0x56] sm:$0xff]
    %v6272 = vld [vmem:[#allocation3 + $0x5e] sm:$0xff]
    %v6273 = vpack.c.bf16 %v6264, %v6263
    %v6274 = vpack.c.bf16 %v6266, %v6265
    %v6275 = vpack.c.bf16 %v6268, %v6267
    %v6276 = vpack.c.bf16 %v6270, %v6269
    %v6277 = vpack.c.bf16 %v6272, %v6271
    %s6278 = scalar_lea.vmem %s3, 128
    %v6279 = vld [vmem:[%s6278] sm:$0xf]
    %v6280 = vld [vmem:[%s6278 + $0x4] sm:$0xf]
    %v6281 = vld [vmem:[%s6278 + $0x8] sm:$0xf]
    %v6282 = vld [vmem:[%s6278 + $0xc] sm:$0xf]
    %v6287 = vunpack.c.l.b16 %v6279
    %v6288 = vunpack.c.l.b16 %v6280
    %v6289 = vunpack.c.l.b16 %v6281
    %v6290 = vunpack.c.l.b16 %v6282
    %v6291 = vpack.c.b16 %v6288, %v6287
    %v6292 = vpack.c.b16 %v6290, %v6289
    %v6296 = vsel %vm41, %v6273, 0
    %v6299 = vsel %vm41, %v6274, 0
    %v6302 = vsel %vm41, %v6275, 0
    %v6305 = vsel %vm41, %v6276, 0
    %v6308 = vsel %vm41, %v6277, 0
    %6310 = vmatprep.subr.bf16.mxu0 0
    %6311 = vmatpush1.bf16.msra.mxu0 %v6291
    %6312 = vmatprep.subr.bf16.mxu0 0
    %6313 = vmatpush1.bf16.msra.mxu0 %v6292
    %6314 = vmatprep.subr.bf16.mxu0 0
    %6315 = vmatpush1.bf16.msra.mxu0 0
    %6316 = vmatprep.subr.bf16.mxu0 0
    %6317 = vmatpush1.bf16.msra.mxu0 0
    %6318 = vmatprep.subr.bf16.mxu0 0
    %6319 = vmatpush1.bf16.msra.mxu0 0
    %6320 = vmatprep.subr.bf16.mxu0 0
    %6321 = vmatpush1.bf16.msra.mxu0 0
    %6322 = vmatprep.subr.bf16.mxu0 0
    %6323 = vmatpush1.bf16.msra.mxu0 0
    %6324 = vmatprep.subr.bf16.mxu0 0
    %6325 = vmatpush1.bf16.msra.mxu0 0
    %6326 = vmatprep.subr.bf16.mxu0 0
    %6327 = vmatpush1.bf16.msra.mxu0 0
    %6328 = vmatprep.subr.bf16.mxu0 0
    %6329 = vmatpush1.bf16.msra.mxu0 0
    %6330 = vmatprep.subr.bf16.mxu0 0
    %6331 = vmatpush1.bf16.msra.mxu0 0
    %6332 = vmatprep.subr.bf16.mxu0 0
    %6333 = vmatpush1.bf16.msra.mxu0 0
    %6334 = vmatprep.subr.bf16.mxu0 0
    %6335 = vmatpush1.bf16.msra.mxu0 0
    %6336 = vmatprep.subr.bf16.mxu0 0
    %6337 = vmatpush1.bf16.msra.mxu0 0
    %6338 = vmatprep.subr.bf16.mxu0 0
    %6339 = vmatpush1.bf16.msra.mxu0 0
    %6340 = vmatprep.subr.bf16.mxu0 0
    %6341 = vmatpush1.bf16.msra.mxu0 0
    %6342 = vmatprep.mubr.bf16.mxu0 0
    %6343 = vmatmul.mubr.bf16.gmra.mrb[0].mxu0 %v6296
    %v6344 = vpop.f32.mrb[0].mxu0
    %v6345 = vadd.f32 0.0, %v6344
    %v6346 = vpop.f32.mrb[0].mxu0
    %v6347 = vpop.f32.mrb[0].mxu0
    %v6348 = vadd.f32 0.0, %v6347
    %v6349 = vpop.f32.mrb[0].mxu0
    %6350 = vmatprep.mubr.bf16.mxu0 0
    %6351 = vmatmul.mubr.bf16.gmra.mrb[0].mxu0 %v6299
    %v6352 = vpop.f32.mrb[0].mxu0
    %v6353 = vadd.f32 0.0, %v6352
    %v6354 = vpop.f32.mrb[0].mxu0
    %v6355 = vpop.f32.mrb[0].mxu0
    %v6356 = vadd.f32 0.0, %v6355
    %v6357 = vpop.f32.mrb[0].mxu0
    %6358 = vmatprep.mubr.bf16.mxu0 0
    %6359 = vmatmul.mubr.bf16.gmra.mrb[0].mxu0 %v6302
    %v6360 = vpop.f32.mrb[0].mxu0
    %v6361 = vadd.f32 0.0, %v6360
    %v6362 = vpop.f32.mrb[0].mxu0
    %v6363 = vpop.f32.mrb[0].mxu0
    %v6364 = vadd.f32 0.0, %v6363
    %v6365 = vpop.f32.mrb[0].mxu0
    %6366 = vmatprep.mubr.bf16.mxu0 0
    %6367 = vmatmul.mubr.bf16.gmra.mrb[0].mxu0 %v6305
    %v6368 = vpop.f32.mrb[0].mxu0
    %v6369 = vadd.f32 0.0, %v6368
    %v6370 = vpop.f32.mrb[0].mxu0
    %v6371 = vpop.f32.mrb[0].mxu0
    %v6372 = vadd.f32 0.0, %v6371
    %v6373 = vpop.f32.mrb[0].mxu0
    %6374 = vmatprep.mubr.bf16.mxu0 0
    %6375 = vmatmul.mubr.bf16.gmra.mrb[0].mxu0 %v6308
    %v6376 = vpop.f32.mrb[0].mxu0
    %v6377 = vadd.f32 0.0, %v6376
    %v6378 = vpop.f32.mrb[0].mxu0
    %v6379 = vpop.f32.mrb[0].mxu0
    %v6380 = vadd.f32 0.0, %v6379
    %v6381 = vpop.f32.mrb[0].mxu0
    %6382 = vdwg.mxu0
    %v6383 = vadd.f32 %v6253, %v6345
    %v6384 = vadd.f32 %v6254, %v6348
    %v6385 = vadd.f32 %v6255, %v6353
    %v6386 = vadd.f32 %v6256, %v6356
    %v6387 = vadd.f32 %v6257, %v6361
    %v6388 = vadd.f32 %v6258, %v6364
    %v6389 = vadd.f32 %v6259, %v6369
    %v6390 = vadd.f32 %v6260, %v6372
    %v6391 = vadd.f32 %v6261, %v6377
    %v6392 = vadd.f32 %v6262, %v6380
    %v6393 = vld [vmem:[%s4] sm:$0x1]
    %v6395 = vlaneseq
    %v6396 = vshrl.u32 %v6395, 7
    %v6397 = vsub.s32 0, %v6396
    %v6398 = vrot.slane %v6393, %v6397
    %v6400 = vadd.f32 %v6383, %v6398
    %v6401 = vadd.f32 %v6384, %v6398
    %v6402 = vadd.f32 %v6385, %v6398
    %v6403 = vadd.f32 %v6386, %v6398
    %v6404 = vadd.f32 %v6387, %v6398
    %v6405 = vadd.f32 %v6388, %v6398
    %v6406 = vadd.f32 %v6389, %v6398
    %v6407 = vadd.f32 %v6390, %v6398
    %v6408 = vadd.f32 %v6391, %v6398
    %v6409 = vadd.f32 %v6392, %v6398
    %v6410 = vmax.f32 %v6400, 0.0
    %v6411 = vmax.f32 %v6401, 0.0
    %v6412 = vmax.f32 %v6402, 0.0
    %v6413 = vmax.f32 %v6403, 0.0
    %v6414 = vmax.f32 %v6404, 0.0
    %v6415 = vmax.f32 %v6405, 0.0
    %v6416 = vmax.f32 %v6406, 0.0
    %v6417 = vmax.f32 %v6407, 0.0
    %v6418 = vmax.f32 %v6408, 0.0
    %v6419 = vmax.f32 %v6409, 0.0
    %6420 = vst.msk [vmem:[#allocation4] sm:$0xff] %vm55, %v6410
    %6421 = vst.msk [vmem:[#allocation4 + $0x8] sm:$0xff] %vm55, %v6411
    %6422 = vst.msk [vmem:[#allocation4 + $0x10] sm:$0xff] %vm55, %v6412
    %6423 = vst.msk [vmem:[#allocation4 + $0x18] sm:$0xff] %vm55, %v6413
    %6424 = vst.msk [vmem:[#allocation4 + $0x20] sm:$0xff] %vm55, %v6414
    %6425 = vst.msk [vmem:[#allocation4 + $0x28] sm:$0xff] %vm55, %v6415
    %6426 = vst.msk [vmem:[#allocation4 + $0x30] sm:$0xff] %vm55, %v6416
    %6427 = vst.msk [vmem:[#allocation4 + $0x38] sm:$0xff] %vm55, %v6417
    %6428 = vst.msk [vmem:[#allocation4 + $0x40] sm:$0xff] %vm55, %v6418
    %6429 = vst.msk [vmem:[#allocation4 + $0x48] sm:$0xff] %vm55, %v6419
    %v6430 = vld [vmem:[#allocation4] ss:$2 sm:$0xf]
    %s6431 = scalar_lea.vmem [#allocation4], 1
    %v6432 = vld [vmem:[%s6431] ss:$2 sm:$0xf]
    %v6433 = vmax.f32 %v6430, %v6432
    %s6434 = scalar_lea.vmem [#allocation4], 10
    %v6435 = vld [vmem:[%s6434] ss:$2 sm:$0xf]
    %s6436 = scalar_lea.vmem [#allocation4], 11
    %v6437 = vld [vmem:[%s6436] ss:$2 sm:$0xf]
    %v6438 = vmax.f32 %v6435, %v6437
    %v6439 = vmax.f32 %v6433, %v6438
    %vm6440 = vcmask 519168
    %6441 = vst.msk [vmem:[#allocation5 + $0x7] sm:$0xf] %vm6440, %v6439
    %s6442 = scalar_lea.vmem [#allocation4], 20
    %v6443 = vld [vmem:[%s6442] ss:$2 sm:$0xf]
    %s6444 = scalar_lea.vmem [#allocation4], 21
    %v6445 = vld [vmem:[%s6444] ss:$2 sm:$0xf]
    %v6446 = vmax.f32 %v6443, %v6445
    %s6447 = scalar_lea.vmem [#allocation4], 30
    %v6448 = vld [vmem:[%s6447] ss:$2 sm:$0xf]
    %s6449 = scalar_lea.vmem [#allocation4], 31
    %v6450 = vld [vmem:[%s6449] ss:$2 sm:$0xf]
    %v6451 = vmax.f32 %v6448, %v6450
    %v6452 = vmax.f32 %v6446, %v6451
    %6453 = vst.msk [vmem:[#allocation5 + $0xd] sm:$0xf] %vm6440, %v6452
    %s6454 = scalar_lea.vmem [#allocation4], 40
    %v6455 = vld [vmem:[%s6454] ss:$2 sm:$0xf]
    %s6456 = scalar_lea.vmem [#allocation4], 41
    %v6457 = vld [vmem:[%s6456] ss:$2 sm:$0xf]
    %v6458 = vmax.f32 %v6455, %v6457
    %s6459 = scalar_lea.vmem [#allocation4], 50
    %v6460 = vld [vmem:[%s6459] ss:$2 sm:$0xf]
    %s6461 = scalar_lea.vmem [#allocation4], 51
    %v6462 = vld [vmem:[%s6461] ss:$2 sm:$0xf]
    %v6463 = vmax.f32 %v6460, %v6462
    %v6464 = vmax.f32 %v6458, %v6463
    %6465 = vst.msk [vmem:[#allocation5 + $0x13] sm:$0xf] %vm6440, %v6464
    %s6466 = scalar_lea.vmem [#allocation4], 60
    %v6467 = vld [vmem:[%s6466] ss:$2 sm:$0xf]
    %s6468 = scalar_lea.vmem [#allocation4], 61
    %v6469 = vld [vmem:[%s6468] ss:$2 sm:$0xf]
    %v6470 = vmax.f32 %v6467, %v6469
    %s6471 = scalar_lea.vmem [#allocation4], 70
    %v6472 = vld [vmem:[%s6471] ss:$2 sm:$0xf]
    %s6473 = scalar_lea.vmem [#allocation4], 71
    %v6474 = vld [vmem:[%s6473] ss:$2 sm:$0xf]
    %v6475 = vmax.f32 %v6472, %v6474
    %v6476 = vmax.f32 %v6470, %v6475
    %6477 = vst.msk [vmem:[#allocation5 + $0x19] sm:$0xf] %vm6440, %v6476
    %v6478 = vld [vmem:[#allocation5] sm:$0xff]
    %v6479 = vld [vmem:[#allocation5 + $0x8] sm:$0xff]
    %v6480 = vld [vmem:[#allocation5 + $0x10] sm:$0xff]
    %v6481 = vpack.c.bf16 %v6479, %v6478
    %v6482 = vpack.c.bf16 %v6480, %v6480
    %v6483 = vld [vmem:[%s5] sm:$0xf]
    %v6484 = vld [vmem:[%s5 + $0x4] sm:$0xf]
    %v6485 = vld [vmem:[%s5 + $0x8] sm:$0xf]
    %v6486 = vld [vmem:[%s5 + $0xc] sm:$0xf]
    %v6487 = vld [vmem:[%s5 + $0x10] sm:$0xf]
    %v6488 = vld [vmem:[%s5 + $0x14] sm:$0xf]
    %v6489 = vld [vmem:[%s5 + $0x18] sm:$0xf]
    %v6490 = vld [vmem:[%s5 + $0x1c] sm:$0xf]
    %v6491 = vld [vmem:[#allocation5 + $0x1] sm:$0xff]
    %v6492 = vld [vmem:[#allocation5 + $0x9] sm:$0xff]
    %v6493 = vld [vmem:[#allocation5 + $0x11] sm:$0xff]
    %v6494 = vpack.c.bf16 %v6492, %v6491
    %v6495 = vpack.c.bf16 %v6493, %v6493
    %s6496 = scalar_lea.vmem %s5, 32
    %v6497 = vld [vmem:[%s6496] sm:$0xf]
    %v6498 = vld [vmem:[%s6496 + $0x4] sm:$0xf]
    %v6499 = vld [vmem:[%s6496 + $0x8] sm:$0xf]
    %v6500 = vld [vmem:[%s6496 + $0xc] sm:$0xf]
    %v6501 = vld [vmem:[%s6496 + $0x10] sm:$0xf]
    %v6502 = vld [vmem:[%s6496 + $0x14] sm:$0xf]
    %v6503 = vld [vmem:[%s6496 + $0x18] sm:$0xf]
    %v6504 = vld [vmem:[%s6496 + $0x1c] sm:$0xf]
    %v6513 = vunpack.c.l.b16 %v6497
    %v6514 = vunpack.c.l.b16 %v6498
    %v6515 = vunpack.c.l.b16 %v6499
    %v6516 = vunpack.c.l.b16 %v6500
    %v6517 = vunpack.c.l.b16 %v6501
    %v6518 = vunpack.c.l.b16 %v6502
    %v6519 = vunpack.c.l.b16 %v6503
    %v6520 = vunpack.c.l.b16 %v6504
    %v6521 = vpack.c.b16 %v6514, %v6513
    %v6522 = vpack.c.b16 %v6516, %v6515
    %v6523 = vpack.c.b16 %v6518, %v6517
    %v6524 = vpack.c.b16 %v6520, %v6519
    %v6530 = vsel %vm55, %v6494, 0
    %v6533 = vsel %vm55, %v6495, 0
    %6535 = vmatprep.subr.bf16.mxu0 0
    %6536 = vmatpush1.bf16.msra.mxu0 %v6521
    %6537 = vmatprep.subr.bf16.mxu0 0
    %6538 = vmatpush1.bf16.msra.mxu0 %v6522
    %6539 = vmatprep.subr.bf16.mxu0 0
    %6540 = vmatpush1.bf16.msra.mxu0 %v6523
    %6541 = vmatprep.subr.bf16.mxu0 0
    %6542 = vmatpush1.bf16.msra.mxu0 %v6524
    %6543 = vmatprep.subr.bf16.mxu0 0
    %6544 = vmatpush1.bf16.msra.mxu0 0
    %6545 = vmatprep.subr.bf16.mxu0 0
    %6546 = vmatpush1.bf16.msra.mxu0 0
    %6547 = vmatprep.subr.bf16.mxu0 0
    %6548 = vmatpush1.bf16.msra.mxu0 0
    %6549 = vmatprep.subr.bf16.mxu0 0
    %6550 = vmatpush1.bf16.msra.mxu0 0
    %6551 = vmatprep.subr.bf16.mxu0 0
    %6552 = vmatpush1.bf16.msra.mxu0 0
    %6553 = vmatprep.subr.bf16.mxu0 0
    %6554 = vmatpush1.bf16.msra.mxu0 0
    %6555 = vmatprep.subr.bf16.mxu0 0
    %6556 = vmatpush1.bf16.msra.mxu0 0
    %6557 = vmatprep.subr.bf16.mxu0 0
    %6558 = vmatpush1.bf16.msra.mxu0 0
    %6559 = vmatprep.subr.bf16.mxu0 0
    %6560 = vmatpush1.bf16.msra.mxu0 0
    %6561 = vmatprep.subr.bf16.mxu0 0
    %6562 = vmatpush1.bf16.msra.mxu0 0
    %6563 = vmatprep.subr.bf16.mxu0 0
    %6564 = vmatpush1.bf16.msra.mxu0 0
    %6565 = vmatprep.subr.bf16.mxu0 0
    %6566 = vmatpush1.bf16.msra.mxu0 0
    %6567 = vmatprep.mubr.bf16.mxu0 0
    %6568 = vmatmul.mubr.bf16.gmra.mrb[0].mxu0 %v6530
    %v6569 = vpop.f32.mrb[0].mxu0
    %v6570 = vadd.f32 0.0, %v6569
    %v6571 = vpop.f32.mrb[0].mxu0
    %v6572 = vpop.f32.mrb[0].mxu0
    %v6573 = vadd.f32 0.0, %v6572
    %v6574 = vpop.f32.mrb[0].mxu0
    %6575 = vmatprep.mubr.bf16.mxu0 0
    %6576 = vmatmul.mubr.bf16.gmra.mrb[0].mxu0 %v6533
    %v6577 = vpop.f32.mrb[0].mxu0
    %v6578 = vadd.f32 0.0, %v6577
    %v6579 = vpop.f32.mrb[0].mxu0
    %v6580 = vpop.f32.mrb[0].mxu0
    %v6581 = vpop.f32.mrb[0].mxu0
    %6582 = vdwg.mxu0
    %v6591 = vunpack.c.l.b16 %v6483
    %v6592 = vunpack.c.l.b16 %v6484
    %v6593 = vunpack.c.l.b16 %v6485
    %v6594 = vunpack.c.l.b16 %v6486
    %v6595 = vunpack.c.l.b16 %v6487
    %v6596 = vunpack.c.l.b16 %v6488
    %v6597 = vunpack.c.l.b16 %v6489
    %v6598 = vunpack.c.l.b16 %v6490
    %v6599 = vpack.c.b16 %v6592, %v6591
    %v6600 = vpack.c.b16 %v6594, %v6593
    %v6601 = vpack.c.b16 %v6596, %v6595
    %v6602 = vpack.c.b16 %v6598, %v6597
    %v6608 = vsel %vm55, %v6481, 0
    %v6611 = vsel %vm55, %v6482, 0
    %6613 = vmatprep.subr.bf16.mxu0 0
    %6614 = vmatpush1.bf16.msra.mxu0 %v6599
    %6615 = vmatprep.subr.bf16.mxu0 0
    %6616 = vmatpush1.bf16.msra.mxu0 %v6600
    %6617 = vmatprep.subr.bf16.mxu0 0
    %6618 = vmatpush1.bf16.msra.mxu0 %v6601
    %6619 = vmatprep.subr.bf16.mxu0 0
    %6620 = vmatpush1.bf16.msra.mxu0 %v6602
    %6621 = vmatprep.subr.bf16.mxu0 0
    %6622 = vmatpush1.bf16.msra.mxu0 0
    %6623 = vmatprep.subr.bf16.mxu0 0
    %6624 = vmatpush1.bf16.msra.mxu0 0
    %6625 = vmatprep.subr.bf16.mxu0 0
    %6626 = vmatpush1.bf16.msra.mxu0 0
    %6627 = vmatprep.subr.bf16.mxu0 0
    %6628 = vmatpush1.bf16.msra.mxu0 0
    %6629 = vmatprep.subr.bf16.mxu0 0
    %6630 = vmatpush1.bf16.msra.mxu0 0
    %6631 = vmatprep.subr.bf16.mxu0 0
    %6632 = vmatpush1.bf16.msra.mxu0 0
    %6633 = vmatprep.subr.bf16.mxu0 0
    %6634 = vmatpush1.bf16.msra.mxu0 0
    %6635 = vmatprep.subr.bf16.mxu0 0
    %6636 = vmatpush1.bf16.msra.mxu0 0
    %6637 = vmatprep.subr.bf16.mxu0 0
    %6638 = vmatpush1.bf16.msra.mxu0 0
    %6639 = vmatprep.subr.bf16.mxu0 0
    %6640 = vmatpush1.bf16.msra.mxu0 0
    %6641 = vmatprep.subr.bf16.mxu0 0
    %6642 = vmatpush1.bf16.msra.mxu0 0
    %6643 = vmatprep.subr.bf16.mxu0 0
    %6644 = vmatpush1.bf16.msra.mxu0 0
    %6645 = vmatprep.mubr.bf16.mxu0 0
    %6646 = vmatmul.mubr.bf16.gmra.mrb[0].mxu0 %v6608
    %v6647 = vpop.f32.mrb[0].mxu0
    %v6648 = vadd.f32 %v6570, %v6647
    %v6649 = vpop.f32.mrb[0].mxu0
    %v6650 = vpop.f32.mrb[0].mxu0
    %v6651 = vadd.f32 %v6573, %v6650
    %v6652 = vpop.f32.mrb[0].mxu0
    %6653 = vmatprep.mubr.bf16.mxu0 0
    %6654 = vmatmul.mubr.bf16.gmra.mrb[0].mxu0 %v6611
    %v6655 = vpop.f32.mrb[0].mxu0
    %v6656 = vadd.f32 %v6578, %v6655
    %v6657 = vpop.f32.mrb[0].mxu0
    %v6658 = vpop.f32.mrb[0].mxu0
    %v6659 = vpop.f32.mrb[0].mxu0
    %6660 = vdwg.mxu0
    %v6661 = vld [vmem:[#allocation5 + $0x2] sm:$0xff]
    %v6662 = vld [vmem:[#allocation5 + $0xa] sm:$0xff]
    %v6663 = vld [vmem:[#allocation5 + $0x12] sm:$0xff]
    %v6664 = vpack.c.bf16 %v6662, %v6661
    %v6665 = vpack.c.bf16 %v6663, %v6663
    %s6666 = scalar_lea.vmem %s5, 64
    %v6667 = vld [vmem:[%s6666] sm:$0xf]
    %v6668 = vld [vmem:[%s6666 + $0x4] sm:$0xf]
    %v6669 = vld [vmem:[%s6666 + $0x8] sm:$0xf]
    %v6670 = vld [vmem:[%s6666 + $0xc] sm:$0xf]
    %v6671 = vld [vmem:[%s6666 + $0x10] sm:$0xf]
    %v6672 = vld [vmem:[%s6666 + $0x14] sm:$0xf]
    %v6673 = vld [vmem:[%s6666 + $0x18] sm:$0xf]
    %v6674 = vld [vmem:[%s6666 + $0x1c] sm:$0xf]
    %v6683 = vunpack.c.l.b16 %v6667
    %v6684 = vunpack.c.l.b16 %v6668
    %v6685 = vunpack.c.l.b16 %v6669
    %v6686 = vunpack.c.l.b16 %v6670
    %v6687 = vunpack.c.l.b16 %v6671
    %v6688 = vunpack.c.l.b16 %v6672
    %v6689 = vunpack.c.l.b16 %v6673
    %v6690 = vunpack.c.l.b16 %v6674
    %v6691 = vpack.c.b16 %v6684, %v6683
    %v6692 = vpack.c.b16 %v6686, %v6685
    %v6693 = vpack.c.b16 %v6688, %v6687
    %v6694 = vpack.c.b16 %v6690, %v6689
    %v6700 = vsel %vm55, %v6664, 0
    %v6703 = vsel %vm55, %v6665, 0
    %6705 = vmatprep.subr.bf16.mxu0 0
    %6706 = vmatpush1.bf16.msra.mxu0 %v6691
    %6707 = vmatprep.subr.bf16.mxu0 0
    %6708 = vmatpush1.bf16.msra.mxu0 %v6692
    %6709 = vmatprep.subr.bf16.mxu0 0
    %6710 = vmatpush1.bf16.msra.mxu0 %v6693
    %6711 = vmatprep.subr.bf16.mxu0 0
    %6712 = vmatpush1.bf16.msra.mxu0 %v6694
    %6713 = vmatprep.subr.bf16.mxu0 0
    %6714 = vmatpush1.bf16.msra.mxu0 0
    %6715 = vmatprep.subr.bf16.mxu0 0
    %6716 = vmatpush1.bf16.msra.mxu0 0
    %6717 = vmatprep.subr.bf16.mxu0 0
    %6718 = vmatpush1.bf16.msra.mxu0 0
    %6719 = vmatprep.subr.bf16.mxu0 0
    %6720 = vmatpush1.bf16.msra.mxu0 0
    %6721 = vmatprep.subr.bf16.mxu0 0
    %6722 = vmatpush1.bf16.msra.mxu0 0
    %6723 = vmatprep.subr.bf16.mxu0 0
    %6724 = vmatpush1.bf16.msra.mxu0 0
    %6725 = vmatprep.subr.bf16.mxu0 0
    %6726 = vmatpush1.bf16.msra.mxu0 0
    %6727 = vmatprep.subr.bf16.mxu0 0
    %6728 = vmatpush1.bf16.msra.mxu0 0
    %6729 = vmatprep.subr.bf16.mxu0 0
    %6730 = vmatpush1.bf16.msra.mxu0 0
    %6731 = vmatprep.subr.bf16.mxu0 0
    %6732 = vmatpush1.bf16.msra.mxu0 0
    %6733 = vmatprep.subr.bf16.mxu0 0
    %6734 = vmatpush1.bf16.msra.mxu0 0
    %6735 = vmatprep.subr.bf16.mxu0 0
    %6736 = vmatpush1.bf16.msra.mxu0 0
    %6737 = vmatprep.mubr.bf16.mxu0 0
    %6738 = vmatmul.mubr.bf16.gmra.mrb[0].mxu0 %v6700
    %v6739 = vpop.f32.mrb[0].mxu0
    %v6740 = vadd.f32 0.0, %v6739
    %v6741 = vpop.f32.mrb[0].mxu0
    %v6742 = vpop.f32.mrb[0].mxu0
    %v6743 = vadd.f32 0.0, %v6742
    %v6744 = vpop.f32.mrb[0].mxu0
    %6745 = vmatprep.mubr.bf16.mxu0 0
    %6746 = vmatmul.mubr.bf16.gmra.mrb[0].mxu0 %v6703
    %v6747 = vpop.f32.mrb[0].mxu0
    %v6748 = vadd.f32 0.0, %v6747
    %v6749 = vpop.f32.mrb[0].mxu0
    %v6750 = vpop.f32.mrb[0].mxu0
    %v6751 = vpop.f32.mrb[0].mxu0
    %6752 = vdwg.mxu0
    %v6753 = vadd.f32 %v6648, %v6740
    %v6754 = vadd.f32 %v6651, %v6743
    %v6755 = vadd.f32 %v6656, %v6748
    %v6756 = vld [vmem:[#allocation5 + $0x6] sm:$0xff]
    %v6757 = vld [vmem:[#allocation5 + $0xe] sm:$0xff]
    %v6758 = vld [vmem:[#allocation5 + $0x16] sm:$0xff]
    %v6759 = vpack.c.bf16 %v6757, %v6756
    %v6760 = vpack.c.bf16 %v6758, %v6758
    %s6761 = scalar_lea.vmem %s5, 96
    %v6762 = vld [vmem:[%s6761] sm:$0xf]
    %v6763 = vld [vmem:[%s6761 + $0x4] sm:$0xf]
    %v6764 = vld [vmem:[%s6761 + $0x8] sm:$0xf]
    %v6765 = vld [vmem:[%s6761 + $0xc] sm:$0xf]
    %v6766 = vld [vmem:[%s6761 + $0x10] sm:$0xf]
    %v6767 = vld [vmem:[%s6761 + $0x14] sm:$0xf]
    %v6768 = vld [vmem:[%s6761 + $0x18] sm:$0xf]
    %v6769 = vld [vmem:[%s6761 + $0x1c] sm:$0xf]
    %v6778 = vunpack.c.l.b16 %v6762
    %v6779 = vunpack.c.l.b16 %v6763
    %v6780 = vunpack.c.l.b16 %v6764
    %v6781 = vunpack.c.l.b16 %v6765
    %v6782 = vunpack.c.l.b16 %v6766
    %v6783 = vunpack.c.l.b16 %v6767
    %v6784 = vunpack.c.l.b16 %v6768
    %v6785 = vunpack.c.l.b16 %v6769
    %v6786 = vpack.c.b16 %v6779, %v6778
    %v6787 = vpack.c.b16 %v6781, %v6780
    %v6788 = vpack.c.b16 %v6783, %v6782
    %v6789 = vpack.c.b16 %v6785, %v6784
    %v6795 = vsel %vm55, %v6759, 0
    %v6798 = vsel %vm55, %v6760, 0
    %6800 = vmatprep.subr.bf16.mxu0 0
    %6801 = vmatpush1.bf16.msra.mxu0 %v6786
    %6802 = vmatprep.subr.bf16.mxu0 0
    %6803 = vmatpush1.bf16.msra.mxu0 %v6787
    %6804 = vmatprep.subr.bf16.mxu0 0
    %6805 = vmatpush1.bf16.msra.mxu0 %v6788
    %6806 = vmatprep.subr.bf16.mxu0 0
    %6807 = vmatpush1.bf16.msra.mxu0 %v6789
    %6808 = vmatprep.subr.bf16.mxu0 0
    %6809 = vmatpush1.bf16.msra.mxu0 0
    %6810 = vmatprep.subr.bf16.mxu0 0
    %6811 = vmatpush1.bf16.msra.mxu0 0
    %6812 = vmatprep.subr.bf16.mxu0 0
    %6813 = vmatpush1.bf16.msra.mxu0 0
    %6814 = vmatprep.subr.bf16.mxu0 0
    %6815 = vmatpush1.bf16.msra.mxu0 0
    %6816 = vmatprep.subr.bf16.mxu0 0
    %6817 = vmatpush1.bf16.msra.mxu0 0
    %6818 = vmatprep.subr.bf16.mxu0 0
    %6819 = vmatpush1.bf16.msra.mxu0 0
    %6820 = vmatprep.subr.bf16.mxu0 0
    %6821 = vmatpush1.bf16.msra.mxu0 0
    %6822 = vmatprep.subr.bf16.mxu0 0
    %6823 = vmatpush1.bf16.msra.mxu0 0
    %6824 = vmatprep.subr.bf16.mxu0 0
    %6825 = vmatpush1.bf16.msra.mxu0 0
    %6826 = vmatprep.subr.bf16.mxu0 0
    %6827 = vmatpush1.bf16.msra.mxu0 0
    %6828 = vmatprep.subr.bf16.mxu0 0
    %6829 = vmatpush1.bf16.msra.mxu0 0
    %6830 = vmatprep.subr.bf16.mxu0 0
    %6831 = vmatpush1.bf16.msra.mxu0 0
    %6832 = vmatprep.mubr.bf16.mxu0 0
    %6833 = vmatmul.mubr.bf16.gmra.mrb[0].mxu0 %v6795
    %v6834 = vpop.f32.mrb[0].mxu0
    %v6835 = vadd.f32 0.0, %v6834
    %v6836 = vpop.f32.mrb[0].mxu0
    %v6837 = vpop.f32.mrb[0].mxu0
    %v6838 = vadd.f32 0.0, %v6837
    %v6839 = vpop.f32.mrb[0].mxu0
    %6840 = vmatprep.mubr.bf16.mxu0 0
    %6841 = vmatmul.mubr.bf16.gmra.mrb[0].mxu0 %v6798
    %v6842 = vpop.f32.mrb[0].mxu0
    %v6843 = vadd.f32 0.0, %v6842
    %v6844 = vpop.f32.mrb[0].mxu0
    %v6845 = vpop.f32.mrb[0].mxu0
    %v6846 = vpop.f32.mrb[0].mxu0
    %6847 = vdwg.mxu0
    %v6848 = vadd.f32 %v6753, %v6835
    %v6849 = vadd.f32 %v6754, %v6838
    %v6850 = vadd.f32 %v6755, %v6843
    %v6851 = vld [vmem:[#allocation5 + $0x7] sm:$0xff]
    %v6852 = vld [vmem:[#allocation5 + $0xf] sm:$0xff]
    %v6853 = vld [vmem:[#allocation5 + $0x17] sm:$0xff]
    %v6854 = vpack.c.bf16 %v6852, %v6851
    %v6855 = vpack.c.bf16 %v6853, %v6853
    %s6856 = scalar_lea.vmem %s5, 128
    %v6857 = vld [vmem:[%s6856] sm:$0xf]
    %v6858 = vld [vmem:[%s6856 + $0x4] sm:$0xf]
    %v6859 = vld [vmem:[%s6856 + $0x8] sm:$0xf]
    %v6860 = vld [vmem:[%s6856 + $0xc] sm:$0xf]
    %v6861 = vld [vmem:[%s6856 + $0x10] sm:$0xf]
    %v6862 = vld [vmem:[%s6856 + $0x14] sm:$0xf]
    %v6863 = vld [vmem:[%s6856 + $0x18] sm:$0xf]
    %v6864 = vld [vmem:[%s6856 + $0x1c] sm:$0xf]
    %v6873 = vunpack.c.l.b16 %v6857
    %v6874 = vunpack.c.l.b16 %v6858
    %v6875 = vunpack.c.l.b16 %v6859
    %v6876 = vunpack.c.l.b16 %v6860
    %v6877 = vunpack.c.l.b16 %v6861
    %v6878 = vunpack.c.l.b16 %v6862
    %v6879 = vunpack.c.l.b16 %v6863
    %v6880 = vunpack.c.l.b16 %v6864
    %v6881 = vpack.c.b16 %v6874, %v6873
    %v6882 = vpack.c.b16 %v6876, %v6875
    %v6883 = vpack.c.b16 %v6878, %v6877
    %v6884 = vpack.c.b16 %v6880, %v6879
    %v6890 = vsel %vm55, %v6854, 0
    %v6893 = vsel %vm55, %v6855, 0
    %6895 = vmatprep.subr.bf16.mxu0 0
    %6896 = vmatpush1.bf16.msra.mxu0 %v6881
    %6897 = vmatprep.subr.bf16.mxu0 0
    %6898 = vmatpush1.bf16.msra.mxu0 %v6882
    %6899 = vmatprep.subr.bf16.mxu0 0
    %6900 = vmatpush1.bf16.msra.mxu0 %v6883
    %6901 = vmatprep.subr.bf16.mxu0 0
    %6902 = vmatpush1.bf16.msra.mxu0 %v6884
    %6903 = vmatprep.subr.bf16.mxu0 0
    %6904 = vmatpush1.bf16.msra.mxu0 0
    %6905 = vmatprep.subr.bf16.mxu0 0
    %6906 = vmatpush1.bf16.msra.mxu0 0
    %6907 = vmatprep.subr.bf16.mxu0 0
    %6908 = vmatpush1.bf16.msra.mxu0 0
    %6909 = vmatprep.subr.bf16.mxu0 0
    %6910 = vmatpush1.bf16.msra.mxu0 0
    %6911 = vmatprep.subr.bf16.mxu0 0
    %6912 = vmatpush1.bf16.msra.mxu0 0
    %6913 = vmatprep.subr.bf16.mxu0 0
    %6914 = vmatpush1.bf16.msra.mxu0 0
    %6915 = vmatprep.subr.bf16.mxu0 0
    %6916 = vmatpush1.bf16.msra.mxu0 0
    %6917 = vmatprep.subr.bf16.mxu0 0
    %6918 = vmatpush1.bf16.msra.mxu0 0
    %6919 = vmatprep.subr.bf16.mxu0 0
    %6920 = vmatpush1.bf16.msra.mxu0 0
    %6921 = vmatprep.subr.bf16.mxu0 0
    %6922 = vmatpush1.bf16.msra.mxu0 0
    %6923 = vmatprep.subr.bf16.mxu0 0
    %6924 = vmatpush1.bf16.msra.mxu0 0
    %6925 = vmatprep.subr.bf16.mxu0 0
    %6926 = vmatpush1.bf16.msra.mxu0 0
    %6927 = vmatprep.mubr.bf16.mxu0 0
    %6928 = vmatmul.mubr.bf16.gmra.mrb[0].mxu0 %v6890
    %v6929 = vpop.f32.mrb[0].mxu0
    %v6930 = vadd.f32 0.0, %v6929
    %v6931 = vpop.f32.mrb[0].mxu0
    %v6932 = vpop.f32.mrb[0].mxu0
    %v6933 = vadd.f32 0.0, %v6932
    %v6934 = vpop.f32.mrb[0].mxu0
    %6935 = vmatprep.mubr.bf16.mxu0 0
    %6936 = vmatmul.mubr.bf16.gmra.mrb[0].mxu0 %v6893
    %v6937 = vpop.f32.mrb[0].mxu0
    %v6938 = vadd.f32 0.0, %v6937
    %v6939 = vpop.f32.mrb[0].mxu0
    %v6940 = vpop.f32.mrb[0].mxu0
    %v6941 = vpop.f32.mrb[0].mxu0
    %6942 = vdwg.mxu0
    %v6943 = vadd.f32 %v6848, %v6930
    %v6944 = vadd.f32 %v6849, %v6933
    %v6945 = vadd.f32 %v6850, %v6938
    %v6946 = vld [vmem:[#allocation5 + $0x8] sm:$0xff]
    %v6947 = vld [vmem:[#allocation5 + $0x10] sm:$0xff]
    %v6948 = vld [vmem:[#allocation5 + $0x18] sm:$0xff]
    %v6949 = vpack.c.bf16 %v6947, %v6946
    %v6950 = vpack.c.bf16 %v6948, %v6948
    %s6951 = scalar_lea.vmem %s5, 160
    %v6952 = vld [vmem:[%s6951] sm:$0xf]
    %v6953 = vld [vmem:[%s6951 + $0x4] sm:$0xf]
    %v6954 = vld [vmem:[%s6951 + $0x8] sm:$0xf]
    %v6955 = vld [vmem:[%s6951 + $0xc] sm:$0xf]
    %v6956 = vld [vmem:[%s6951 + $0x10] sm:$0xf]
    %v6957 = vld [vmem:[%s6951 + $0x14] sm:$0xf]
    %v6958 = vld [vmem:[%s6951 + $0x18] sm:$0xf]
    %v6959 = vld [vmem:[%s6951 + $0x1c] sm:$0xf]
    %v6968 = vunpack.c.l.b16 %v6952
    %v6969 = vunpack.c.l.b16 %v6953
    %v6970 = vunpack.c.l.b16 %v6954
    %v6971 = vunpack.c.l.b16 %v6955
    %v6972 = vunpack.c.l.b16 %v6956
    %v6973 = vunpack.c.l.b16 %v6957
    %v6974 = vunpack.c.l.b16 %v6958
    %v6975 = vunpack.c.l.b16 %v6959
    %v6976 = vpack.c.b16 %v6969, %v6968
    %v6977 = vpack.c.b16 %v6971, %v6970
    %v6978 = vpack.c.b16 %v6973, %v6972
    %v6979 = vpack.c.b16 %v6975, %v6974
    %v6985 = vsel %vm55, %v6949, 0
    %v6988 = vsel %vm55, %v6950, 0
    %6990 = vmatprep.subr.bf16.mxu0 0
    %6991 = vmatpush1.bf16.msra.mxu0 %v6976
    %6992 = vmatprep.subr.bf16.mxu0 0
    %6993 = vmatpush1.bf16.msra.mxu0 %v6977
    %6994 = vmatprep.subr.bf16.mxu0 0
    %6995 = vmatpush1.bf16.msra.mxu0 %v6978
    %6996 = vmatprep.subr.bf16.mxu0 0
    %6997 = vmatpush1.bf16.msra.mxu0 %v6979
    %6998 = vmatprep.subr.bf16.mxu0 0
    %6999 = vmatpush1.bf16.msra.mxu0 0
    %7000 = vmatprep.subr.bf16.mxu0 0
    %7001 = vmatpush1.bf16.msra.mxu0 0
    %7002 = vmatprep.subr.bf16.mxu0 0
    %7003 = vmatpush1.bf16.msra.mxu0 0
    %7004 = vmatprep.subr.bf16.mxu0 0
    %7005 = vmatpush1.bf16.msra.mxu0 0
    %7006 = vmatprep.subr.bf16.mxu0 0
    %7007 = vmatpush1.bf16.msra.mxu0 0
    %7008 = vmatprep.subr.bf16.mxu0 0
    %7009 = vmatpush1.bf16.msra.mxu0 0
    %7010 = vmatprep.subr.bf16.mxu0 0
    %7011 = vmatpush1.bf16.msra.mxu0 0
    %7012 = vmatprep.subr.bf16.mxu0 0
    %7013 = vmatpush1.bf16.msra.mxu0 0
    %7014 = vmatprep.subr.bf16.mxu0 0
    %7015 = vmatpush1.bf16.msra.mxu0 0
    %7016 = vmatprep.subr.bf16.mxu0 0
    %7017 = vmatpush1.bf16.msra.mxu0 0
    %7018 = vmatprep.subr.bf16.mxu0 0
    %7019 = vmatpush1.bf16.msra.mxu0 0
    %7020 = vmatprep.subr.bf16.mxu0 0
    %7021 = vmatpush1.bf16.msra.mxu0 0
    %7022 = vmatprep.mubr.bf16.mxu0 0
    %7023 = vmatmul.mubr.bf16.gmra.mrb[0].mxu0 %v6985
    %v7024 = vpop.f32.mrb[0].mxu0
    %v7025 = vadd.f32 0.0, %v7024
    %v7026 = vpop.f32.mrb[0].mxu0
    %v7027 = vpop.f32.mrb[0].mxu0
    %v7028 = vadd.f32 0.0, %v7027
    %v7029 = vpop.f32.mrb[0].mxu0
    %7030 = vmatprep.mubr.bf16.mxu0 0
    %7031 = vmatmul.mubr.bf16.gmra.mrb[0].mxu0 %v6988
    %v7032 = vpop.f32.mrb[0].mxu0
    %v7033 = vadd.f32 0.0, %v7032
    %v7034 = vpop.f32.mrb[0].mxu0
    %v7035 = vpop.f32.mrb[0].mxu0
    %v7036 = vpop.f32.mrb[0].mxu0
    %7037 = vdwg.mxu0
    %v7038 = vadd.f32 %v6943, %v7025
    %v7039 = vadd.f32 %v6944, %v7028
    %v7040 = vadd.f32 %v6945, %v7033
    %v7041 = vld [vmem:[#allocation5 + $0xc] sm:$0xff]
    %v7042 = vld [vmem:[#allocation5 + $0x14] sm:$0xff]
    %v7043 = vld [vmem:[#allocation5 + $0x1c] sm:$0xff]
    %v7044 = vpack.c.bf16 %v7042, %v7041
    %v7045 = vpack.c.bf16 %v7043, %v7043
    %s7046 = scalar_lea.vmem %s5, 192
    %v7047 = vld [vmem:[%s7046] sm:$0xf]
    %v7048 = vld [vmem:[%s7046 + $0x4] sm:$0xf]
    %v7049 = vld [vmem:[%s7046 + $0x8] sm:$0xf]
    %v7050 = vld [vmem:[%s7046 + $0xc] sm:$0xf]
    %v7051 = vld [vmem:[%s7046 + $0x10] sm:$0xf]
    %v7052 = vld [vmem:[%s7046 + $0x14] sm:$0xf]
    %v7053 = vld [vmem:[%s7046 + $0x18] sm:$0xf]
    %v7054 = vld [vmem:[%s7046 + $0x1c] sm:$0xf]
    %v7063 = vunpack.c.l.b16 %v7047
    %v7064 = vunpack.c.l.b16 %v7048
    %v7065 = vunpack.c.l.b16 %v7049
    %v7066 = vunpack.c.l.b16 %v7050
    %v7067 = vunpack.c.l.b16 %v7051
    %v7068 = vunpack.c.l.b16 %v7052
    %v7069 = vunpack.c.l.b16 %v7053
    %v7070 = vunpack.c.l.b16 %v7054
    %v7071 = vpack.c.b16 %v7064, %v7063
    %v7072 = vpack.c.b16 %v7066, %v7065
    %v7073 = vpack.c.b16 %v7068, %v7067
    %v7074 = vpack.c.b16 %v7070, %v7069
    %v7080 = vsel %vm55, %v7044, 0
    %v7083 = vsel %vm55, %v7045, 0
    %7085 = vmatprep.subr.bf16.mxu0 0
    %7086 = vmatpush1.bf16.msra.mxu0 %v7071
    %7087 = vmatprep.subr.bf16.mxu0 0
    %7088 = vmatpush1.bf16.msra.mxu0 %v7072
    %7089 = vmatprep.subr.bf16.mxu0 0
    %7090 = vmatpush1.bf16.msra.mxu0 %v7073
    %7091 = vmatprep.subr.bf16.mxu0 0
    %7092 = vmatpush1.bf16.msra.mxu0 %v7074
    %7093 = vmatprep.subr.bf16.mxu0 0
    %7094 = vmatpush1.bf16.msra.mxu0 0
    %7095 = vmatprep.subr.bf16.mxu0 0
    %7096 = vmatpush1.bf16.msra.mxu0 0
    %7097 = vmatprep.subr.bf16.mxu0 0
    %7098 = vmatpush1.bf16.msra.mxu0 0
    %7099 = vmatprep.subr.bf16.mxu0 0
    %7100 = vmatpush1.bf16.msra.mxu0 0
    %7101 = vmatprep.subr.bf16.mxu0 0
    %7102 = vmatpush1.bf16.msra.mxu0 0
    %7103 = vmatprep.subr.bf16.mxu0 0
    %7104 = vmatpush1.bf16.msra.mxu0 0
    %7105 = vmatprep.subr.bf16.mxu0 0
    %7106 = vmatpush1.bf16.msra.mxu0 0
    %7107 = vmatprep.subr.bf16.mxu0 0
    %7108 = vmatpush1.bf16.msra.mxu0 0
    %7109 = vmatprep.subr.bf16.mxu0 0
    %7110 = vmatpush1.bf16.msra.mxu0 0
    %7111 = vmatprep.subr.bf16.mxu0 0
    %7112 = vmatpush1.bf16.msra.mxu0 0
    %7113 = vmatprep.subr.bf16.mxu0 0
    %7114 = vmatpush1.bf16.msra.mxu0 0
    %7115 = vmatprep.subr.bf16.mxu0 0
    %7116 = vmatpush1.bf16.msra.mxu0 0
    %7117 = vmatprep.mubr.bf16.mxu0 0
    %7118 = vmatmul.mubr.bf16.gmra.mrb[0].mxu0 %v7080
    %v7119 = vpop.f32.mrb[0].mxu0
    %v7120 = vadd.f32 0.0, %v7119
    %v7121 = vpop.f32.mrb[0].mxu0
    %v7122 = vpop.f32.mrb[0].mxu0
    %v7123 = vadd.f32 0.0, %v7122
    %v7124 = vpop.f32.mrb[0].mxu0
    %7125 = vmatprep.mubr.bf16.mxu0 0
    %7126 = vmatmul.mubr.bf16.gmra.mrb[0].mxu0 %v7083
    %v7127 = vpop.f32.mrb[0].mxu0
    %v7128 = vadd.f32 0.0, %v7127
    %v7129 = vpop.f32.mrb[0].mxu0
    %v7130 = vpop.f32.mrb[0].mxu0
    %v7131 = vpop.f32.mrb[0].mxu0
    %7132 = vdwg.mxu0
    %v7133 = vadd.f32 %v7038, %v7120
    %v7134 = vadd.f32 %v7039, %v7123
    %v7135 = vadd.f32 %v7040, %v7128
    %v7136 = vld [vmem:[#allocation5 + $0xd] sm:$0xff]
    %v7137 = vld [vmem:[#allocation5 + $0x15] sm:$0xff]
    %v7138 = vld [vmem:[#allocation5 + $0x1d] sm:$0xff]
    %v7139 = vpack.c.bf16 %v7137, %v7136
    %v7140 = vpack.c.bf16 %v7138, %v7138
    %s7141 = scalar_lea.vmem %s5, 224
    %v7142 = vld [vmem:[%s7141] sm:$0xf]
    %v7143 = vld [vmem:[%s7141 + $0x4] sm:$0xf]
    %v7144 = vld [vmem:[%s7141 + $0x8] sm:$0xf]
    %v7145 = vld [vmem:[%s7141 + $0xc] sm:$0xf]
    %v7146 = vld [vmem:[%s7141 + $0x10] sm:$0xf]
    %v7147 = vld [vmem:[%s7141 + $0x14] sm:$0xf]
    %v7148 = vld [vmem:[%s7141 + $0x18] sm:$0xf]
    %v7149 = vld [vmem:[%s7141 + $0x1c] sm:$0xf]
    %v7158 = vunpack.c.l.b16 %v7142
    %v7159 = vunpack.c.l.b16 %v7143
    %v7160 = vunpack.c.l.b16 %v7144
    %v7161 = vunpack.c.l.b16 %v7145
    %v7162 = vunpack.c.l.b16 %v7146
    %v7163 = vunpack.c.l.b16 %v7147
    %v7164 = vunpack.c.l.b16 %v7148
    %v7165 = vunpack.c.l.b16 %v7149
    %v7166 = vpack.c.b16 %v7159, %v7158
    %v7167 = vpack.c.b16 %v7161, %v7160
    %v7168 = vpack.c.b16 %v7163, %v7162
    %v7169 = vpack.c.b16 %v7165, %v7164
    %v7175 = vsel %vm55, %v7139, 0
    %v7178 = vsel %vm55, %v7140, 0
    %7180 = vmatprep.subr.bf16.mxu0 0
    %7181 = vmatpush1.bf16.msra.mxu0 %v7166
    %7182 = vmatprep.subr.bf16.mxu0 0
    %7183 = vmatpush1.bf16.msra.mxu0 %v7167
    %7184 = vmatprep.subr.bf16.mxu0 0
    %7185 = vmatpush1.bf16.msra.mxu0 %v7168
    %7186 = vmatprep.subr.bf16.mxu0 0
    %7187 = vmatpush1.bf16.msra.mxu0 %v7169
    %7188 = vmatprep.subr.bf16.mxu0 0
    %7189 = vmatpush1.bf16.msra.mxu0 0
    %7190 = vmatprep.subr.bf16.mxu0 0
    %7191 = vmatpush1.bf16.msra.mxu0 0
    %7192 = vmatprep.subr.bf16.mxu0 0
    %7193 = vmatpush1.bf16.msra.mxu0 0
    %7194 = vmatprep.subr.bf16.mxu0 0
    %7195 = vmatpush1.bf16.msra.mxu0 0
    %7196 = vmatprep.subr.bf16.mxu0 0
    %7197 = vmatpush1.bf16.msra.mxu0 0
    %7198 = vmatprep.subr.bf16.mxu0 0
    %7199 = vmatpush1.bf16.msra.mxu0 0
    %7200 = vmatprep.subr.bf16.mxu0 0
    %7201 = vmatpush1.bf16.msra.mxu0 0
    %7202 = vmatprep.subr.bf16.mxu0 0
    %7203 = vmatpush1.bf16.msra.mxu0 0
    %7204 = vmatprep.subr.bf16.mxu0 0
    %7205 = vmatpush1.bf16.msra.mxu0 0
    %7206 = vmatprep.subr.bf16.mxu0 0
    %7207 = vmatpush1.bf16.msra.mxu0 0
    %7208 = vmatprep.subr.bf16.mxu0 0
    %7209 = vmatpush1.bf16.msra.mxu0 0
    %7210 = vmatprep.subr.bf16.mxu0 0
    %7211 = vmatpush1.bf16.msra.mxu0 0
    %7212 = vmatprep.mubr.bf16.mxu0 0
    %7213 = vmatmul.mubr.bf16.gmra.mrb[0].mxu0 %v7175
    %v7214 = vpop.f32.mrb[0].mxu0
    %v7215 = vadd.f32 0.0, %v7214
    %v7216 = vpop.f32.mrb[0].mxu0
    %v7217 = vpop.f32.mrb[0].mxu0
    %v7218 = vadd.f32 0.0, %v7217
    %v7219 = vpop.f32.mrb[0].mxu0
    %7220 = vmatprep.mubr.bf16.mxu0 0
    %7221 = vmatmul.mubr.bf16.gmra.mrb[0].mxu0 %v7178
    %v7222 = vpop.f32.mrb[0].mxu0
    %v7223 = vadd.f32 0.0, %v7222
    %v7224 = vpop.f32.mrb[0].mxu0
    %v7225 = vpop.f32.mrb[0].mxu0
    %v7226 = vpop.f32.mrb[0].mxu0
    %7227 = vdwg.mxu0
    %v7228 = vadd.f32 %v7133, %v7215
    %v7229 = vadd.f32 %v7134, %v7218
    %v7230 = vadd.f32 %v7135, %v7223
    %v7231 = vld [vmem:[#allocation5 + $0xe] sm:$0xff]
    %v7232 = vld [vmem:[#allocation5 + $0x16] sm:$0xff]
    %v7233 = vld [vmem:[#allocation5 + $0x1e] sm:$0xff]
    %v7234 = vpack.c.bf16 %v7232, %v7231
    %v7235 = vpack.c.bf16 %v7233, %v7233
    %s7236 = scalar_lea.vmem %s5, 256
    %v7237 = vld [vmem:[%s7236] sm:$0xf]
    %v7238 = vld [vmem:[%s7236 + $0x4] sm:$0xf]
    %v7239 = vld [vmem:[%s7236 + $0x8] sm:$0xf]
    %v7240 = vld [vmem:[%s7236 + $0xc] sm:$0xf]
    %v7241 = vld [vmem:[%s7236 + $0x10] sm:$0xf]
    %v7242 = vld [vmem:[%s7236 + $0x14] sm:$0xf]
    %v7243 = vld [vmem:[%s7236 + $0x18] sm:$0xf]
    %v7244 = vld [vmem:[%s7236 + $0x1c] sm:$0xf]
    %v7253 = vunpack.c.l.b16 %v7237
    %v7254 = vunpack.c.l.b16 %v7238
    %v7255 = vunpack.c.l.b16 %v7239
    %v7256 = vunpack.c.l.b16 %v7240
    %v7257 = vunpack.c.l.b16 %v7241
    %v7258 = vunpack.c.l.b16 %v7242
    %v7259 = vunpack.c.l.b16 %v7243
    %v7260 = vunpack.c.l.b16 %v7244
    %v7261 = vpack.c.b16 %v7254, %v7253
    %v7262 = vpack.c.b16 %v7256, %v7255
    %v7263 = vpack.c.b16 %v7258, %v7257
    %v7264 = vpack.c.b16 %v7260, %v7259
    %v7270 = vsel %vm55, %v7234, 0
    %v7273 = vsel %vm55, %v7235, 0
    %7275 = vmatprep.subr.bf16.mxu0 0
    %7276 = vmatpush1.bf16.msra.mxu0 %v7261
    %7277 = vmatprep.subr.bf16.mxu0 0
    %7278 = vmatpush1.bf16.msra.mxu0 %v7262
    %7279 = vmatprep.subr.bf16.mxu0 0
    %7280 = vmatpush1.bf16.msra.mxu0 %v7263
    %7281 = vmatprep.subr.bf16.mxu0 0
    %7282 = vmatpush1.bf16.msra.mxu0 %v7264
    %7283 = vmatprep.subr.bf16.mxu0 0
    %7284 = vmatpush1.bf16.msra.mxu0 0
    %7285 = vmatprep.subr.bf16.mxu0 0
    %7286 = vmatpush1.bf16.msra.mxu0 0
    %7287 = vmatprep.subr.bf16.mxu0 0
    %7288 = vmatpush1.bf16.msra.mxu0 0
    %7289 = vmatprep.subr.bf16.mxu0 0
    %7290 = vmatpush1.bf16.msra.mxu0 0
    %7291 = vmatprep.subr.bf16.mxu0 0
    %7292 = vmatpush1.bf16.msra.mxu0 0
    %7293 = vmatprep.subr.bf16.mxu0 0
    %7294 = vmatpush1.bf16.msra.mxu0 0
    %7295 = vmatprep.subr.bf16.mxu0 0
    %7296 = vmatpush1.bf16.msra.mxu0 0
    %7297 = vmatprep.subr.bf16.mxu0 0
    %7298 = vmatpush1.bf16.msra.mxu0 0
    %7299 = vmatprep.subr.bf16.mxu0 0
    %7300 = vmatpush1.bf16.msra.mxu0 0
    %7301 = vmatprep.subr.bf16.mxu0 0
    %7302 = vmatpush1.bf16.msra.mxu0 0
    %7303 = vmatprep.subr.bf16.mxu0 0
    %7304 = vmatpush1.bf16.msra.mxu0 0
    %7305 = vmatprep.subr.bf16.mxu0 0
    %7306 = vmatpush1.bf16.msra.mxu0 0
    %7307 = vmatprep.mubr.bf16.mxu0 0
    %7308 = vmatmul.mubr.bf16.gmra.mrb[0].mxu0 %v7270
    %v7309 = vpop.f32.mrb[0].mxu0
    %v7310 = vadd.f32 0.0, %v7309
    %v7311 = vpop.f32.mrb[0].mxu0
    %v7312 = vpop.f32.mrb[0].mxu0
    %v7313 = vadd.f32 0.0, %v7312
    %v7314 = vpop.f32.mrb[0].mxu0
    %7315 = vmatprep.mubr.bf16.mxu0 0
    %7316 = vmatmul.mubr.bf16.gmra.mrb[0].mxu0 %v7273
    %v7317 = vpop.f32.mrb[0].mxu0
    %v7318 = vadd.f32 0.0, %v7317
    %v7319 = vpop.f32.mrb[0].mxu0
    %v7320 = vpop.f32.mrb[0].mxu0
    %v7321 = vpop.f32.mrb[0].mxu0
    %7322 = vdwg.mxu0
    %v7323 = vadd.f32 %v7228, %v7310
    %v7324 = vadd.f32 %v7229, %v7313
    %v7325 = vadd.f32 %v7230, %v7318
    %v7326 = vld [vmem:[%s6] sm:$0x1]
    %v7328 = vlaneseq
    %v7329 = vshrl.u32 %v7328, 7
    %v7330 = vsub.s32 0, %v7329
    %v7331 = vrot.slane %v7326, %v7330
    %v7333 = vadd.f32 %v7323, %v7331
    %v7334 = vadd.f32 %v7324, %v7331
    %v7335 = vadd.f32 %v7325, %v7331
    %v7336 = vmax.f32 %v7333, 0.0
    %v7337 = vmax.f32 %v7334, 0.0
    %v7338 = vmax.f32 %v7335, 0.0
    %7339 = vst [vmem:[#allocation6] sm:$0xff] %v7336
    %7340 = vst [vmem:[#allocation6 + $0x8] sm:$0xff] %v7337
    %7341 = vst [vmem:[#allocation6 + $0x10] sm:$0xff] %v7338
    %v7342 = vld [vmem:[#allocation6] ss:$2 sm:$0x3]
    %s7343 = scalar_lea.vmem [#allocation6], 1
    %v7344 = vld [vmem:[%s7343] ss:$2 sm:$0x3]
    %v7345 = vmax.f32 %v7342, %v7344
    %s7346 = scalar_lea.vmem [#allocation6], 6
    %v7347 = vld [vmem:[%s7346] ss:$2 sm:$0x3]
    %s7348 = scalar_lea.vmem [#allocation6], 7
    %v7349 = vld [vmem:[%s7348] ss:$2 sm:$0x3]
    %v7350 = vmax.f32 %v7347, %v7349
    %v7351 = vmax.f32 %v7345, %v7350
    %s7352 = smul.u32 %s62, 4
    %s7353 = scalar_lea.vmem [#allocation7], %s7352
    %7354 = vst [vmem:[%s7353] sm:$0x3] %v7351
    %s7355 = scalar_lea.vmem [#allocation6], 12
    %v7356 = vld [vmem:[%s7355] ss:$2 sm:$0x3]
    %s7357 = scalar_lea.vmem [#allocation6], 13
    %v7358 = vld [vmem:[%s7357] ss:$2 sm:$0x3]
    %v7359 = vmax.f32 %v7356, %v7358
    %s7360 = scalar_lea.vmem [#allocation6], 18
    %v7361 = vld [vmem:[%s7360] ss:$2 sm:$0x3]
    %s7362 = scalar_lea.vmem [#allocation6], 19
    %v7363 = vld [vmem:[%s7362] ss:$2 sm:$0x3]
    %v7364 = vmax.f32 %v7361, %v7363
    %v7365 = vmax.f32 %v7359, %v7364
    %7366 = vst [vmem:[%s7353 + $0x2] sm:$0x3] %v7365
  $region50: #{cnn2d_forward.1} parent=0 // loop_footer
    %s66 = sadd.s32 1, %s62
  $region51: #{cnn2d_forward.1} parent=0 // loop_footer_branch
    %61 = sbr.rel target = $region47
  $region52: #{cnn2d_forward.1} parent=0 // loop_exit
    _
  %v7367 = vld [vmem:[#allocation7] sm:$0xf]
  %v7368 = vld [vmem:[#allocation7 + $0x4] sm:$0xf]
  %v7369 = vpack.c.bf16 %v7367, %v7367
  %v7370 = vpack.c.bf16 %v7368, %v7368
  %v7371 = vld [vmem:[%s8] sm:$0x1]
  %v7372 = vld [vmem:[%s7] sm:$0xf]
  %v7373 = vld [vmem:[%s7 + $0x4] sm:$0xf]
  %v7374 = vld [vmem:[%s7 + $0x8] sm:$0xf]
  %v7375 = vld [vmem:[%s7 + $0xc] sm:$0xf]
  %v7376 = vld [vmem:[%s7 + $0x10] sm:$0xf]
  %v7377 = vld [vmem:[%s7 + $0x14] sm:$0xf]
  %v7378 = vld [vmem:[%s7 + $0x18] sm:$0xf]
  %v7379 = vld [vmem:[%s7 + $0x1c] sm:$0xf]
  %v7380 = vld [vmem:[%s7 + $0x20] sm:$0xf]
  %v7381 = vld [vmem:[%s7 + $0x24] sm:$0xf]
  %v7382 = vld [vmem:[%s7 + $0x28] sm:$0xf]
  %v7383 = vld [vmem:[%s7 + $0x2c] sm:$0xf]
  %v7384 = vld [vmem:[%s7 + $0x30] sm:$0xf]
  %v7385 = vld [vmem:[%s7 + $0x34] sm:$0xf]
  %v7386 = vld [vmem:[%s7 + $0x38] sm:$0xf]
  %v7387 = vld [vmem:[%s7 + $0x3c] sm:$0xf]
  %v7390 = vunpack.c.l.b16 %v7369
  %v7391 = vunpack.c.l.b16 %v7370
  %v7392 = vrot.slane %v7391, 7
  %vm7393 = vcmask 1041409
  %v7394 = vsel %vm7393, %v7392, %v7390
  %v7395 = vpack.c.b16 %v7394, %v7394
  %v7413 = vunpack.c.l.b16 %v7372
  %v7414 = vunpack.c.l.b16 %v7373
  %v7415 = vunpack.c.l.b16 %v7374
  %v7416 = vunpack.c.l.b16 %v7375
  %v7417 = vunpack.c.l.b16 %v7376
  %v7418 = vunpack.c.l.b16 %v7377
  %v7419 = vunpack.c.l.b16 %v7378
  %v7420 = vunpack.c.l.b16 %v7379
  %v7421 = vunpack.c.l.b16 %v7380
  %v7422 = vunpack.c.l.b16 %v7381
  %v7423 = vunpack.c.l.b16 %v7382
  %v7424 = vunpack.c.l.b16 %v7383
  %v7425 = vunpack.c.l.b16 %v7384
  %v7426 = vunpack.c.l.b16 %v7385
  %v7427 = vunpack.c.l.b16 %v7386
  %v7428 = vunpack.c.l.b16 %v7387
  %v7429 = vpack.c.b16 %v7414, %v7413
  %v7430 = vpack.c.b16 %v7416, %v7415
  %v7431 = vpack.c.b16 %v7418, %v7417
  %v7432 = vpack.c.b16 %v7420, %v7419
  %v7433 = vpack.c.b16 %v7422, %v7421
  %v7434 = vpack.c.b16 %v7424, %v7423
  %v7435 = vpack.c.b16 %v7426, %v7425
  %v7436 = vpack.c.b16 %v7428, %v7427
  %7445 = vmatprep.subr.bf16.mxu0 0
  %7446 = vmatpush1.bf16.msra.mxu0 %v7429
  %7447 = vmatprep.subr.bf16.mxu0 0
  %7448 = vmatpush1.bf16.msra.mxu0 %v7430
  %7449 = vmatprep.subr.bf16.mxu0 0
  %7450 = vmatpush1.bf16.msra.mxu0 %v7431
  %7451 = vmatprep.subr.bf16.mxu0 0
  %7452 = vmatpush1.bf16.msra.mxu0 %v7432
  %7453 = vmatprep.subr.bf16.mxu0 0
  %7454 = vmatpush1.bf16.msra.mxu0 %v7433
  %7455 = vmatprep.subr.bf16.mxu0 0
  %7456 = vmatpush1.bf16.msra.mxu0 %v7434
  %7457 = vmatprep.subr.bf16.mxu0 0
  %7458 = vmatpush1.bf16.msra.mxu0 %v7435
  %7459 = vmatprep.subr.bf16.mxu0 0
  %7460 = vmatpush1.bf16.msra.mxu0 %v7436
  %7461 = vmatprep.subr.bf16.mxu0 0
  %7462 = vmatpush1.bf16.msra.mxu0 0
  %7463 = vmatprep.subr.bf16.mxu0 0
  %7464 = vmatpush1.bf16.msra.mxu0 0
  %7465 = vmatprep.subr.bf16.mxu0 0
  %7466 = vmatpush1.bf16.msra.mxu0 0
  %7467 = vmatprep.subr.bf16.mxu0 0
  %7468 = vmatpush1.bf16.msra.mxu0 0
  %7469 = vmatprep.subr.bf16.mxu0 0
  %7470 = vmatpush1.bf16.msra.mxu0 0
  %7471 = vmatprep.subr.bf16.mxu0 0
  %7472 = vmatpush1.bf16.msra.mxu0 0
  %7473 = vmatprep.subr.bf16.mxu0 0
  %7474 = vmatpush1.bf16.msra.mxu0 0
  %7475 = vmatprep.subr.bf16.mxu0 0
  %7476 = vmatpush1.bf16.msra.mxu0 0
  %7477 = vmatprep.mubr.bf16.mxu0 0
  %7478 = vmatmul.mubr.bf16.gmra.mrb[0].mxu0 %v7395
  %v7479 = vpop.f32.mrb[0].mxu0
  %v7480 = vadd.f32 0.0, %v7479
  %v7481 = vpop.f32.mrb[0].mxu0
  %v7482 = vpop.f32.mrb[0].mxu0
  %v7483 = vpop.f32.mrb[0].mxu0
  %7484 = vdwg.mxu0
  %v7486 = vlaneseq
  %v7487 = vshrl.u32 %v7486, 7
  %v7488 = vsub.s32 0, %v7487
  %v7489 = vrot.slane %v7371, %v7488
  %v7491 = vadd.f32 %v7489, %v7480
  %s7492 = scalar_lea.vmem %s7, 64
  %v7493 = vld [vmem:[%s7492] sm:$0xf]
  %v7494 = vld [vmem:[%s7492 + $0x4] sm:$0xf]
  %v7495 = vld [vmem:[%s7492 + $0x8] sm:$0xf]
  %v7496 = vld [vmem:[%s7492 + $0xc] sm:$0xf]
  %v7497 = vld [vmem:[%s7492 + $0x10] sm:$0xf]
  %v7498 = vld [vmem:[%s7492 + $0x14] sm:$0xf]
  %v7499 = vld [vmem:[%s7492 + $0x18] sm:$0xf]
  %v7500 = vld [vmem:[%s7492 + $0x1c] sm:$0xf]
  %v7501 = vld [vmem:[%s7492 + $0x20] sm:$0xf]
  %v7502 = vld [vmem:[%s7492 + $0x24] sm:$0xf]
  %v7503 = vld [vmem:[%s7492 + $0x28] sm:$0xf]
  %v7504 = vld [vmem:[%s7492 + $0x2c] sm:$0xf]
  %v7505 = vld [vmem:[%s7492 + $0x30] sm:$0xf]
  %v7506 = vld [vmem:[%s7492 + $0x34] sm:$0xf]
  %v7507 = vld [vmem:[%s7492 + $0x38] sm:$0xf]
  %v7508 = vld [vmem:[%s7492 + $0x3c] sm:$0xf]
  %v7509 = vrot.slane %v7390, 1
  %v7510 = vsel %vm7393, %v7391, %v7509
  %v7511 = vpack.c.b16 %v7510, %v7510
  %v7529 = vunpack.c.l.b16 %v7493
  %v7530 = vunpack.c.l.b16 %v7494
  %v7531 = vunpack.c.l.b16 %v7495
  %v7532 = vunpack.c.l.b16 %v7496
  %v7533 = vunpack.c.l.b16 %v7497
  %v7534 = vunpack.c.l.b16 %v7498
  %v7535 = vunpack.c.l.b16 %v7499
  %v7536 = vunpack.c.l.b16 %v7500
  %v7537 = vunpack.c.l.b16 %v7501
  %v7538 = vunpack.c.l.b16 %v7502
  %v7539 = vunpack.c.l.b16 %v7503
  %v7540 = vunpack.c.l.b16 %v7504
  %v7541 = vunpack.c.l.b16 %v7505
  %v7542 = vunpack.c.l.b16 %v7506
  %v7543 = vunpack.c.l.b16 %v7507
  %v7544 = vunpack.c.l.b16 %v7508
  %v7545 = vpack.c.b16 %v7530, %v7529
  %v7546 = vpack.c.b16 %v7532, %v7531
  %v7547 = vpack.c.b16 %v7534, %v7533
  %v7548 = vpack.c.b16 %v7536, %v7535
  %v7549 = vpack.c.b16 %v7538, %v7537
  %v7550 = vpack.c.b16 %v7540, %v7539
  %v7551 = vpack.c.b16 %v7542, %v7541
  %v7552 = vpack.c.b16 %v7544, %v7543
  %7561 = vmatprep.subr.bf16.mxu0 0
  %7562 = vmatpush1.bf16.msra.mxu0 %v7545
  %7563 = vmatprep.subr.bf16.mxu0 0
  %7564 = vmatpush1.bf16.msra.mxu0 %v7546
  %7565 = vmatprep.subr.bf16.mxu0 0
  %7566 = vmatpush1.bf16.msra.mxu0 %v7547
  %7567 = vmatprep.subr.bf16.mxu0 0
  %7568 = vmatpush1.bf16.msra.mxu0 %v7548
  %7569 = vmatprep.subr.bf16.mxu0 0
  %7570 = vmatpush1.bf16.msra.mxu0 %v7549
  %7571 = vmatprep.subr.bf16.mxu0 0
  %7572 = vmatpush1.bf16.msra.mxu0 %v7550
  %7573 = vmatprep.subr.bf16.mxu0 0
  %7574 = vmatpush1.bf16.msra.mxu0 %v7551
  %7575 = vmatprep.subr.bf16.mxu0 0
  %7576 = vmatpush1.bf16.msra.mxu0 %v7552
  %7577 = vmatprep.subr.bf16.mxu0 0
  %7578 = vmatpush1.bf16.msra.mxu0 0
  %7579 = vmatprep.subr.bf16.mxu0 0
  %7580 = vmatpush1.bf16.msra.mxu0 0
  %7581 = vmatprep.subr.bf16.mxu0 0
  %7582 = vmatpush1.bf16.msra.mxu0 0
  %7583 = vmatprep.subr.bf16.mxu0 0
  %7584 = vmatpush1.bf16.msra.mxu0 0
  %7585 = vmatprep.subr.bf16.mxu0 0
  %7586 = vmatpush1.bf16.msra.mxu0 0
  %7587 = vmatprep.subr.bf16.mxu0 0
  %7588 = vmatpush1.bf16.msra.mxu0 0
  %7589 = vmatprep.subr.bf16.mxu0 0
  %7590 = vmatpush1.bf16.msra.mxu0 0
  %7591 = vmatprep.subr.bf16.mxu0 0
  %7592 = vmatpush1.bf16.msra.mxu0 0
  %7593 = vmatprep.mubr.bf16.mxu0 0
  %7594 = vmatmul.mubr.bf16.gmra.mrb[0].mxu0 %v7511
  %v7595 = vpop.f32.mrb[0].mxu0
  %v7596 = vadd.f32 0.0, %v7595
  %v7597 = vpop.f32.mrb[0].mxu0
  %v7598 = vpop.f32.mrb[0].mxu0
  %v7599 = vpop.f32.mrb[0].mxu0
  %7600 = vdwg.mxu0
  %v7601 = vadd.f32 %v7491, %v7596
  %s7602 = scalar_lea.vmem %s7, 128
  %v7603 = vld [vmem:[%s7602] sm:$0xf]
  %v7604 = vld [vmem:[%s7602 + $0x4] sm:$0xf]
  %v7605 = vld [vmem:[%s7602 + $0x8] sm:$0xf]
  %v7606 = vld [vmem:[%s7602 + $0xc] sm:$0xf]
  %v7607 = vld [vmem:[%s7602 + $0x10] sm:$0xf]
  %v7608 = vld [vmem:[%s7602 + $0x14] sm:$0xf]
  %v7609 = vld [vmem:[%s7602 + $0x18] sm:$0xf]
  %v7610 = vld [vmem:[%s7602 + $0x1c] sm:$0xf]
  %v7611 = vld [vmem:[%s7602 + $0x20] sm:$0xf]
  %v7612 = vld [vmem:[%s7602 + $0x24] sm:$0xf]
  %v7613 = vld [vmem:[%s7602 + $0x28] sm:$0xf]
  %v7614 = vld [vmem:[%s7602 + $0x2c] sm:$0xf]
  %v7615 = vld [vmem:[%s7602 + $0x30] sm:$0xf]
  %v7616 = vld [vmem:[%s7602 + $0x34] sm:$0xf]
  %v7617 = vld [vmem:[%s7602 + $0x38] sm:$0xf]
  %v7618 = vld [vmem:[%s7602 + $0x3c] sm:$0xf]
  %v7619 = vrot.slane %v7390, 2
  %v7620 = vrot.slane %v7391, 1
  %v7621 = vsel %vm7393, %v7620, %v7619
  %v7622 = vpack.c.b16 %v7621, %v7621
  %v7640 = vunpack.c.l.b16 %v7603
  %v7641 = vunpack.c.l.b16 %v7604
  %v7642 = vunpack.c.l.b16 %v7605
  %v7643 = vunpack.c.l.b16 %v7606
  %v7644 = vunpack.c.l.b16 %v7607
  %v7645 = vunpack.c.l.b16 %v7608
  %v7646 = vunpack.c.l.b16 %v7609
  %v7647 = vunpack.c.l.b16 %v7610
  %v7648 = vunpack.c.l.b16 %v7611
  %v7649 = vunpack.c.l.b16 %v7612
  %v7650 = vunpack.c.l.b16 %v7613
  %v7651 = vunpack.c.l.b16 %v7614
  %v7652 = vunpack.c.l.b16 %v7615
  %v7653 = vunpack.c.l.b16 %v7616
  %v7654 = vunpack.c.l.b16 %v7617
  %v7655 = vunpack.c.l.b16 %v7618
  %v7656 = vpack.c.b16 %v7641, %v7640
  %v7657 = vpack.c.b16 %v7643, %v7642
  %v7658 = vpack.c.b16 %v7645, %v7644
  %v7659 = vpack.c.b16 %v7647, %v7646
  %v7660 = vpack.c.b16 %v7649, %v7648
  %v7661 = vpack.c.b16 %v7651, %v7650
  %v7662 = vpack.c.b16 %v7653, %v7652
  %v7663 = vpack.c.b16 %v7655, %v7654
  %7672 = vmatprep.subr.bf16.mxu0 0
  %7673 = vmatpush1.bf16.msra.mxu0 %v7656
  %7674 = vmatprep.subr.bf16.mxu0 0
  %7675 = vmatpush1.bf16.msra.mxu0 %v7657
  %7676 = vmatprep.subr.bf16.mxu0 0
  %7677 = vmatpush1.bf16.msra.mxu0 %v7658
  %7678 = vmatprep.subr.bf16.mxu0 0
  %7679 = vmatpush1.bf16.msra.mxu0 %v7659
  %7680 = vmatprep.subr.bf16.mxu0 0
  %7681 = vmatpush1.bf16.msra.mxu0 %v7660
  %7682 = vmatprep.subr.bf16.mxu0 0
  %7683 = vmatpush1.bf16.msra.mxu0 %v7661
  %7684 = vmatprep.subr.bf16.mxu0 0
  %7685 = vmatpush1.bf16.msra.mxu0 %v7662
  %7686 = vmatprep.subr.bf16.mxu0 0
  %7687 = vmatpush1.bf16.msra.mxu0 %v7663
  %7688 = vmatprep.subr.bf16.mxu0 0
  %7689 = vmatpush1.bf16.msra.mxu0 0
  %7690 = vmatprep.subr.bf16.mxu0 0
  %7691 = vmatpush1.bf16.msra.mxu0 0
  %7692 = vmatprep.subr.bf16.mxu0 0
  %7693 = vmatpush1.bf16.msra.mxu0 0
  %7694 = vmatprep.subr.bf16.mxu0 0
  %7695 = vmatpush1.bf16.msra.mxu0 0
  %7696 = vmatprep.subr.bf16.mxu0 0
  %7697 = vmatpush1.bf16.msra.mxu0 0
  %7698 = vmatprep.subr.bf16.mxu0 0
  %7699 = vmatpush1.bf16.msra.mxu0 0
  %7700 = vmatprep.subr.bf16.mxu0 0
  %7701 = vmatpush1.bf16.msra.mxu0 0
  %7702 = vmatprep.subr.bf16.mxu0 0
  %7703 = vmatpush1.bf16.msra.mxu0 0
  %7704 = vmatprep.mubr.bf16.mxu0 0
  %7705 = vmatmul.mubr.bf16.gmra.mrb[0].mxu0 %v7622
  %v7706 = vpop.f32.mrb[0].mxu0
  %v7707 = vadd.f32 0.0, %v7706
  %v7708 = vpop.f32.mrb[0].mxu0
  %v7709 = vpop.f32.mrb[0].mxu0
  %v7710 = vpop.f32.mrb[0].mxu0
  %7711 = vdwg.mxu0
  %v7712 = vadd.f32 %v7601, %v7707
  %s7713 = scalar_lea.vmem %s7, 192
  %v7714 = vld [vmem:[%s7713] sm:$0xf]
  %v7715 = vld [vmem:[%s7713 + $0x4] sm:$0xf]
  %v7716 = vld [vmem:[%s7713 + $0x8] sm:$0xf]
  %v7717 = vld [vmem:[%s7713 + $0xc] sm:$0xf]
  %v7718 = vld [vmem:[%s7713 + $0x10] sm:$0xf]
  %v7719 = vld [vmem:[%s7713 + $0x14] sm:$0xf]
  %v7720 = vld [vmem:[%s7713 + $0x18] sm:$0xf]
  %v7721 = vld [vmem:[%s7713 + $0x1c] sm:$0xf]
  %v7722 = vld [vmem:[%s7713 + $0x20] sm:$0xf]
  %v7723 = vld [vmem:[%s7713 + $0x24] sm:$0xf]
  %v7724 = vld [vmem:[%s7713 + $0x28] sm:$0xf]
  %v7725 = vld [vmem:[%s7713 + $0x2c] sm:$0xf]
  %v7726 = vld [vmem:[%s7713 + $0x30] sm:$0xf]
  %v7727 = vld [vmem:[%s7713 + $0x34] sm:$0xf]
  %v7728 = vld [vmem:[%s7713 + $0x38] sm:$0xf]
  %v7729 = vld [vmem:[%s7713 + $0x3c] sm:$0xf]
  %v7730 = vrot.slane %v7390, 3
  %v7731 = vrot.slane %v7391, 2
  %v7732 = vsel %vm7393, %v7731, %v7730
  %v7733 = vpack.c.b16 %v7732, %v7732
  %v7751 = vunpack.c.l.b16 %v7714
  %v7752 = vunpack.c.l.b16 %v7715
  %v7753 = vunpack.c.l.b16 %v7716
  %v7754 = vunpack.c.l.b16 %v7717
  %v7755 = vunpack.c.l.b16 %v7718
  %v7756 = vunpack.c.l.b16 %v7719
  %v7757 = vunpack.c.l.b16 %v7720
  %v7758 = vunpack.c.l.b16 %v7721
  %v7759 = vunpack.c.l.b16 %v7722
  %v7760 = vunpack.c.l.b16 %v7723
  %v7761 = vunpack.c.l.b16 %v7724
  %v7762 = vunpack.c.l.b16 %v7725
  %v7763 = vunpack.c.l.b16 %v7726
  %v7764 = vunpack.c.l.b16 %v7727
  %v7765 = vunpack.c.l.b16 %v7728
  %v7766 = vunpack.c.l.b16 %v7729
  %v7767 = vpack.c.b16 %v7752, %v7751
  %v7768 = vpack.c.b16 %v7754, %v7753
  %v7769 = vpack.c.b16 %v7756, %v7755
  %v7770 = vpack.c.b16 %v7758, %v7757
  %v7771 = vpack.c.b16 %v7760, %v7759
  %v7772 = vpack.c.b16 %v7762, %v7761
  %v7773 = vpack.c.b16 %v7764, %v7763
  %v7774 = vpack.c.b16 %v7766, %v7765
  %7783 = vmatprep.subr.bf16.mxu0 0
  %7784 = vmatpush1.bf16.msra.mxu0 %v7767
  %7785 = vmatprep.subr.bf16.mxu0 0
  %7786 = vmatpush1.bf16.msra.mxu0 %v7768
  %7787 = vmatprep.subr.bf16.mxu0 0
  %7788 = vmatpush1.bf16.msra.mxu0 %v7769
  %7789 = vmatprep.subr.bf16.mxu0 0
  %7790 = vmatpush1.bf16.msra.mxu0 %v7770
  %7791 = vmatprep.subr.bf16.mxu0 0
  %7792 = vmatpush1.bf16.msra.mxu0 %v7771
  %7793 = vmatprep.subr.bf16.mxu0 0
  %7794 = vmatpush1.bf16.msra.mxu0 %v7772
  %7795 = vmatprep.subr.bf16.mxu0 0
  %7796 = vmatpush1.bf16.msra.mxu0 %v7773
  %7797 = vmatprep.subr.bf16.mxu0 0
  %7798 = vmatpush1.bf16.msra.mxu0 %v7774
  %7799 = vmatprep.subr.bf16.mxu0 0
  %7800 = vmatpush1.bf16.msra.mxu0 0
  %7801 = vmatprep.subr.bf16.mxu0 0
  %7802 = vmatpush1.bf16.msra.mxu0 0
  %7803 = vmatprep.subr.bf16.mxu0 0
  %7804 = vmatpush1.bf16.msra.mxu0 0
  %7805 = vmatprep.subr.bf16.mxu0 0
  %7806 = vmatpush1.bf16.msra.mxu0 0
  %7807 = vmatprep.subr.bf16.mxu0 0
  %7808 = vmatpush1.bf16.msra.mxu0 0
  %7809 = vmatprep.subr.bf16.mxu0 0
  %7810 = vmatpush1.bf16.msra.mxu0 0
  %7811 = vmatprep.subr.bf16.mxu0 0
  %7812 = vmatpush1.bf16.msra.mxu0 0
  %7813 = vmatprep.subr.bf16.mxu0 0
  %7814 = vmatpush1.bf16.msra.mxu0 0
  %7815 = vmatprep.mubr.bf16.mxu0 0
  %7816 = vmatmul.mubr.bf16.gmra.mrb[0].mxu0 %v7733
  %v7817 = vpop.f32.mrb[0].mxu0
  %v7818 = vadd.f32 0.0, %v7817
  %v7819 = vpop.f32.mrb[0].mxu0
  %v7820 = vpop.f32.mrb[0].mxu0
  %v7821 = vpop.f32.mrb[0].mxu0
  %7822 = vdwg.mxu0
  %v7823 = vadd.f32 %v7712, %v7818
  %v7824 = vmax.f32 %v7823, 0.0
  %v7825 = vld [vmem:[%s9] sm:$0x1]
  %v7827 = vlaneseq
  %v7828 = vshrl.u32 %v7827, 7
  %v7829 = vsub.s32 0, %v7828
  %v7830 = vrot.slane %v7825, %v7829
  %v7832 = vmul.f32 %v7824, %v7830
  %vm7833 = vcmask 254976
  %v7834 = vsel %vm7833, %v7832, 0.0
  %7835 = vadd.xlane.f32.xlu0 %v7834
  %v7836 = vpop.xlane.xlu0 %7835
  %v7837 = vld [vmem:[#allocation8] sm:$0x1]
  %v7839 = vlaneseq
  %v7840 = vshrl.u32 %v7839, 7
  %v7841 = vsub.s32 0, %v7840
  %v7842 = vrot.slane %v7837, %v7841
  %v7844 = vadd.f32 %v7836, %v7842
  %v7845 = vsub.f32 0.0, %v7844
  %v7846 = vmul.f32 %v7845, 1.442695
  %v7847 = vpow.pop %v7846
  %v7848 = vadd.f32 %v7847, 1.0
  %v7849 = vrcp.pop %v7848
  %v7850 = vmul.f32 1.0, %v7849
  %vm7851 = vcmask 1024
  %7852 = vst.msk [vmem:[%s11] sm:$0x3] %vm7851, %v7850
  // Predicated region
  $region53: #{cnn2d_forward.1} parent=0 // pred_check
    _
  $region54: #{cnn2d_forward.1} parent=0 // pred_check_branch
    %7854 = sbr.rel (0) target = $region56
  $region55: #{cnn2d_forward.1} parent=0 // pred_region
    _
  $region56: #{cnn2d_forward.1} parent=0 // pred_fallthru
    _
  // Predicated region
  $region57: #{cnn2d_forward.1} parent=0 // pred_check
    _
  $region58: #{cnn2d_forward.1} parent=0 // pred_check_branch
    %7856 = sbr.rel (0) target = $region60
  $region59: #{cnn2d_forward.1} parent=0 // pred_region
    _
  $region60: #{cnn2d_forward.1} parent=0 // pred_fallthru
    _

</llo_original>
